<compile_context>
chip_gen: v6e
topology: v6e:2x2x1
jax: 0.10.0
libtpu: 0.0.40
codegen_flags: <defaults>
</compile_context>

<pallas_src>
import numpy as np
import jax
import jax.numpy as jnp
from jax.experimental import pallas as pl
from jax.experimental.pallas import tpu as pltpu

HIDDEN = 256
IN_FEATS = 97
NEG = -1000000000.0

# packed-head column layout (total width 54, padded to 128)
HEAD_W = 54
HEAD_PAD = 128
HEAD_SLICES = {
    'call':       (0, 2),
    'call_set':   (2, 11),
    'call_cards': (11, 35),
    'ask_person': (35, 39),
    'ask_set':    (39, 48),
    'ask_card':   (48, 54),
}


def qnet_kernel(
    # ---- inputs ----
    x_ref,                       # (T, 256) f32   (x zero-padded 97 -> 256)
    wx_ref, wh_ref, b_ref,       # (256,1024) bf16, (256,1024) bf16, (1,1024) f32  (layer l)
    w4_ref, b4_ref,              # (256,128) bf16, (1,128) f32
    w5_ref, b5_ref,              # (128,128) bf16, (1,128) f32   (fc5 padded 64->128)
    w6_ref, b6_ref,              # (128,128) bf16, (1,128) f32   (fc6 padded 32->128)
    wheads_ref, bheads_ref,      # (128,128) bf16, (1,128) f32   (corrections folded in)
    mask_ref,                    # (T, 128) f32
    # ---- outputs ----
    out_ref,                     # (T, 128) f32
    # ---- scratch (persist across the layer grid) ----
    gates_scr,                   # (T, 1024) f32
    seq_scr,                     # (T, 256)  f32
):
    l = pl.program_id(0)
    T = x_ref.shape[0]
    H = HIDDEN

    # Layer 0 reads the padded input; later layers read the previous layer's
    # h-sequence, which is already sitting in seq_scr from the previous grid step.
    @pl.when(l == 0)
    def _():
        seq_scr[...] = x_ref[...]

    # (1) Batched input-to-hidden projection for ALL timesteps at once
    #     (bias folded in).  NOTE: seq_scr is fully read here BEFORE the
    #     recurrence below starts overwriting it -- keep this ordering.
    gates_scr[...] = (
        jnp.dot(seq_scr[...].astype(jnp.bfloat16), wx_ref[...],
                preferred_element_type=jnp.float32)
        + b_ref[...])

    # (2) Serial recurrence: only h_{t-1} @ Wh (bf16, f32 accumulation) per step.
    #     Gate columns were reordered at pack time to [i | f | o | g].
    def step(t, carry):
        h, c = carry
        g = gates_scr[pl.ds(t, 1), :] + jnp.dot(
            h.astype(jnp.bfloat16), wh_ref[...],
            preferred_element_type=jnp.float32)
        ifo = jax.nn.sigmoid(g[:, :3 * H])
        gg = jnp.tanh(g[:, 3 * H:])
        c_new = ifo[:, H:2 * H] * c + ifo[:, :H] * gg
        h_new = ifo[:, 2 * H:3 * H] * jnp.tanh(c_new)
        seq_scr[pl.ds(t, 1), :] = h_new
        return h_new, c_new

    z = jnp.zeros((1, H), jnp.float32)
    # T is static; fully unroll for small T so the LLO scheduler sees across
    # steps, bound code size for longer sequences.
    jax.lax.fori_loop(0, T, step, (z, z), unroll=True if T <= 16 else 4)

    # (3) Trunk + fused heads epilogue, only after the last LSTM layer.
    @pl.when(l == pl.num_programs(0) - 1)
    def _():
        out = seq_scr[...]                                   # (T, 256)

        def dense(v, w_r, b_r):
            return jnp.dot(v.astype(jnp.bfloat16), w_r[...],
                           preferred_element_type=jnp.float32) + b_r[...]

        h4 = jnp.maximum(dense(out, w4_ref, b4_ref), 0.0)    # (T, 128)
        h5 = jnp.maximum(dense(h4, w5_ref, b5_ref), 0.0)     # (T, 128), cols 64+ are 0
        h6 = jnp.maximum(dense(h5, w6_ref, b6_ref), 0.0)     # (T, 128), cols 32+ are 0

        # all six heads (concat-input corrections already folded into the
        # weights) -> one lane-dense (T, 128) slab
        slab = dense(h6, wheads_ref, bheads_ref)             # (T, 128)

        # masked_fill(~mask, -1e9) === where(mask, val, -1e9); unmasked heads
        # and padding columns carry mask == 1.
        out_ref[...] = jnp.where(mask_ref[...] > 0, slab, NEG)


def pack_params(p):
    """Transform PyTorch-layout parameters into the kernel's packed layout."""
    H = HIDDEN
    f32, bf16 = jnp.float32, jnp.bfloat16

    def reorder(w):  # gate columns [i|f|g|o] -> [i|f|o|g] along the last axis
        return jnp.concatenate(
            [w[..., :2 * H], w[..., 3 * H:], w[..., 2 * H:3 * H]], axis=-1)

    kp = {}
    # Layer-stacked LSTM weights (layer-major).  wx0 is zero-padded 97 -> 256
    # rows so every layer's projection has identical shape; all matmul weights
    # are bf16 (f32 accumulation in-kernel).
    wx0 = jnp.pad(reorder(p["wx0"]), ((0, H - IN_FEATS), (0, 0)))
    kp["wx"] = jnp.stack([wx0, reorder(p["wx1"]), reorder(p["wx2"])]).astype(bf16)
    kp["wh"] = jnp.stack([reorder(p["wh0"]), reorder(p["wh1"]),
                          reorder(p["wh2"])]).astype(bf16)
    kp["b"] = jnp.stack([reorder(p["b0"]), reorder(p["b1"]),
                         reorder(p["b2"])]).astype(f32)

    # Trunk, zero-padded so every intermediate is a lane-dense 128-wide vreg.
    kp["w4"] = p["w4"].astype(bf16)                                    # (256,128)
    kp["b4"] = p["b4"].astype(f32)
    kp["w5"] = jnp.pad(p["w5"], ((0, 0), (0, 128 - 64))).astype(bf16)  # (128,128)
    kp["b5"] = jnp.pad(p["b5"], ((0, 0), (0, 128 - 64))).astype(f32)
    kp["w6"] = jnp.pad(p["w6"], ((0, 128 - 64), (0, 128 - 32))).astype(bf16)
    kp["b6"] = jnp.pad(p["b6"], ((0, 0), (0, 128 - 32))).astype(f32)

    # Fused head weight/bias: [wtc | wcs | wcc_h | wp | was_h | wac_h], padded,
    # with the two concat-input "correction" matmuls folded in at pack time:
    #   slab = (h @ W + b) @ (I + wc1) @ (I + wc2)   (exact algebra)
    w_heads = jnp.concatenate(
        [p["wtc"], p["wcs"], p["wcc_h"], p["wp"], p["was_h"], p["wac_h"]], axis=1)
    b_heads = jnp.concatenate(
        [p["btc"], p["bcs"], p["bcc"], p["bp"], p["bas"], p["bac"]], axis=1)
    w_heads = jnp.pad(w_heads.astype(f32),
                      ((0, HEAD_PAD - 32), (0, HEAD_PAD - HEAD_W)))
    b_heads = jnp.pad(b_heads.astype(f32), ((0, 0), (0, HEAD_PAD - HEAD_W)))

    wc1 = jnp.zeros((HEAD_PAD, HEAD_PAD), f32)
    wc1 = wc1.at[2:11, 11:35].set(p["wcc_cs"])     # call_set   -> call_cards
    wc1 = wc1.at[35:39, 39:48].set(p["was_p"])     # ask_person -> ask_set
    wc1 = wc1.at[35:39, 48:54].set(p["wac_p"])     # ask_person -> ask_card
    wc2 = jnp.zeros((HEAD_PAD, HEAD_PAD), f32)
    wc2 = wc2.at[39:48, 48:54].set(p["wac_s"])     # ask_set    -> ask_card
    eye = jnp.eye(HEAD_PAD, dtype=f32)
    fold = (eye + wc1) @ (eye + wc2)

    kp["w_heads"] = (w_heads @ fold).astype(bf16)
    kp["b_heads"] = (b_heads @ fold).astype(f32)
    return kp


def qnetwork_forward(x, kp, masks):
    T = x.shape[0]
    f32 = jnp.float32

    x_pad = jnp.pad(x.astype(f32), ((0, 0), (0, HIDDEN - IN_FEATS)))

    # Pack the four action masks (plus all-ones for unmasked heads / padding)
    # into one lane-dense (T, 128) float slab matching HEAD_SLICES.
    mask_slab = jnp.concatenate([
        jnp.ones((T, 2), f32),                                # to_call: unmasked
        masks['call_set'].astype(f32),                        # (T, 9)
        masks['call_cards'].astype(f32).reshape(T, 24),       # (T, 24) row-major
        masks['ask_person'].astype(f32),                      # (T, 4)
        masks['ask_set'].astype(f32),                         # (T, 9)
        jnp.ones((T, 6), f32),                                # ask_card: unmasked
        jnp.ones((T, HEAD_PAD - HEAD_W), f32),                # padding
    ], axis=1)

    ins = (
        x_pad,
        kp["wx"], kp["wh"], kp["b"],
        kp["w4"], kp["b4"], kp["w5"], kp["b5"], kp["w6"], kp["b6"],
        kp["w_heads"], kp["b_heads"],
        mask_slab,
    )

    def full_spec(shape):
        zeros = (0,) * len(shape)
        return pl.BlockSpec(shape, lambda l, _z=zeros: _z)

    lstm_w_spec = pl.BlockSpec((None, HIDDEN, 4 * HIDDEN), lambda l: (l, 0, 0))
    lstm_b_spec = pl.BlockSpec((None, 1, 4 * HIDDEN), lambda l: (l, 0, 0))

    in_specs = [
        full_spec((T, HIDDEN)),                 # x (resident across layers)
        lstm_w_spec, lstm_w_spec, lstm_b_spec,  # per-layer Wx / Wh / b (pipelined)
        full_spec((HIDDEN, 128)), full_spec((1, 128)),     # fc4
        full_spec((128, 128)), full_spec((1, 128)),        # fc5 (padded)
        full_spec((128, 128)), full_spec((1, 128)),        # fc6 (padded)
        full_spec((128, HEAD_PAD)), full_spec((1, HEAD_PAD)),  # fused heads
        full_spec((T, HEAD_PAD)),               # mask slab
    ]

    slab = pl.pallas_call(
        qnet_kernel,
        out_shape=jax.ShapeDtypeStruct((T, HEAD_PAD), jnp.float32),
        grid=(3,),                               # one grid step per LSTM layer
        in_specs=in_specs,
        out_specs=pl.BlockSpec((T, HEAD_PAD), lambda l: (0, 0)),
        scratch_shapes=[
            pltpu.VMEM((T, 4 * HIDDEN), jnp.float32),  # per-layer gate inputs
            pltpu.VMEM((T, HIDDEN), jnp.float32),      # h sequence (carried)
        ],
        compiler_params=pltpu.CompilerParams(
            dimension_semantics=("arbitrary",)),
    )(*ins)

    s = HEAD_SLICES
    return {
        'call':       slab[:, s['call'][0]:s['call'][1]],
        'call_set':   slab[:, s['call_set'][0]:s['call_set'][1]],
        'call_cards': slab[:, s['call_cards'][0]:s['call_cards'][1]].reshape(T, 6, 4),
        'ask_person': slab[:, s['ask_person'][0]:s['ask_person'][1]],
        'ask_set':    slab[:, s['ask_set'][0]:s['ask_set'][1]],
        'ask_card':   slab[:, s['ask_card'][0]:s['ask_card'][1]],
    }


def init_params(key):
    keys = jax.random.split(key, 64)
    it = iter(keys)

    def uniform(shape, bound):
        return jax.random.uniform(next(it), shape, jnp.float32, -bound, bound)

    H = HIDDEN
    k = 1.0 / np.sqrt(H)
    p = {}
    # LSTM layer 0 (input 97), layers 1-2 (input 256); biases fused (b_ih + b_hh);
    # PyTorch gate order (i, f, g, o) along the 4H axis, weights pre-transposed.
    p["wx0"] = uniform((IN_FEATS, 4 * H), k)
    p["wh0"] = uniform((H, 4 * H), k)
    p["b0"] = uniform((1, 4 * H), k) + uniform((1, 4 * H), k)
    for l in (1, 2):
        p[f"wx{l}"] = uniform((H, 4 * H), k)
        p[f"wh{l}"] = uniform((H, 4 * H), k)
        p[f"b{l}"] = uniform((1, 4 * H), k) + uniform((1, 4 * H), k)

    def linear(in_f, out_f):
        b = 1.0 / np.sqrt(in_f)
        return uniform((in_f, out_f), b), uniform((1, out_f), b)

    p["w4"], p["b4"] = linear(256, 128)
    p["w5"], p["b5"] = linear(128, 64)
    p["w6"], p["b6"] = linear(64, 32)
    p["wtc"], p["btc"] = linear(32, 2)
    p["wcs"], p["bcs"] = linear(32, 9)
    wcc, p["bcc"] = linear(32 + 9, 24)
    p["wcc_h"], p["wcc_cs"] = wcc[:32], wcc[32:]
    p["wp"], p["bp"] = linear(32, 4)
    was, p["bas"] = linear(32 + 4, 9)
    p["was_h"], p["was_p"] = was[:32], was[32:]
    wac, p["bac"] = linear(32 + 4 + 9, 6)
    p["wac_h"], p["wac_p"], p["wac_s"] = wac[:32], wac[32:36], wac[36:]
    return p


def reference_forward(x, p, masks):
    """Pure-JAX f32 reference mirroring the PyTorch module exactly."""
    H = HIDDEN
    T = x.shape[0]

    def lstm_layer(inp, wx, wh, b):
        def step(carry, xt):
            h, c = carry
            g = xt @ wx + h @ wh + b[0]
            i = jax.nn.sigmoid(g[:H])
            f = jax.nn.sigmoid(g[H:2 * H])
            gg = jnp.tanh(g[2 * H:3 * H])
            o = jax.nn.sigmoid(g[3 * H:])
            c = f * c + i * gg
            h = o * jnp.tanh(c)
            return (h, c), h
        (_, _), hs = jax.lax.scan(step, (jnp.zeros(H), jnp.zeros(H)), inp)
        return hs

    h0 = lstm_layer(x, p["wx0"], p["wh0"], p["b0"])
    h1 = lstm_layer(h0, p["wx1"], p["wh1"], p["b1"])
    out = lstm_layer(h1, p["wx2"], p["wh2"], p["b2"])

    h = jax.nn.relu(out @ p["w4"] + p["b4"])
    h = jax.nn.relu(h @ p["w5"] + p["b5"])
    h = jax.nn.relu(h @ p["w6"] + p["b6"])

    to_call = h @ p["wtc"] + p["btc"]
    call_set = h @ p["wcs"] + p["bcs"]
    call_cards = (h @ p["wcc_h"] + call_set @ p["wcc_cs"] + p["bcc"]).reshape(T, 6, 4)
    ask_person = h @ p["wp"] + p["bp"]
    ask_set = h @ p["was_h"] + ask_person @ p["was_p"] + p["bas"]
    ask_card = (h @ p["wac_h"] + ask_person @ p["wac_p"]
                + ask_set @ p["wac_s"] + p["bac"])

    return {
        'call': to_call,
        'call_set': jnp.where(masks['call_set'], call_set, NEG),
        'call_cards': jnp.where(masks['call_cards'], call_cards, NEG),
        'ask_person': jnp.where(masks['ask_person'], ask_person, NEG),
        'ask_set': jnp.where(masks['ask_set'], ask_set, NEG),
        'ask_card': ask_card,
    }


if __name__ == "__main__":
    key = jax.random.PRNGKey(0)
    kparam, kx, km = jax.random.split(key, 3)
    params = init_params(kparam)
    kp = pack_params(params)

    T = 8  # sequence length (small, consistent with unbatched LSTM input [T, 97])
    x = jax.random.normal(kx, (T, IN_FEATS), jnp.float32)

    mk = jax.random.split(km, 4)
    action_masks = {
        'call_set': jax.random.bernoulli(mk[0], 0.7, (T, 9)),
        'call_cards': jax.random.bernoulli(mk[1], 0.7, (T, 6, 4)),
        'ask_person': jax.random.bernoulli(mk[2], 0.7, (T, 4)),
        'ask_set': jax.random.bernoulli(mk[3], 0.7, (T, 9)),
    }

    out = qnetwork_forward(x, kp, action_masks)
    jax.block_until_ready(out)

    # shape sanity
    assert out['call'].shape == (T, 2)
    assert out['call_set'].shape == (T, 9)
    assert out['call_cards'].shape == (T, 6, 4)
    assert out['ask_person'].shape == (T, 4)
    assert out['ask_set'].shape == (T, 9)
    assert out['ask_card'].shape == (T, 6)

    # numeric sanity vs pure-JAX f32 reference (loose tolerance: all matmul
    # weights run in bf16 with f32 accumulation inside the kernel)
    ref = reference_forward(x, params, action_masks)
    for k in out:
        np.testing.assert_allclose(np.asarray(out[k]), np.asarray(ref[k]),
                                    rtol=5e-2, atol=5e-2)

    print("KERNEL_OK")
</pallas_src>

<mosaic_0001>
module attributes {stable_mosaic.version = 11 : i64} {
  func.func @qnet_kernel(%arg0: i32, %arg1: memref<8x256xf32, #tpu.memory_space<vmem>>, %arg2: memref<1x256x1024xbf16, #tpu.memory_space<vmem>>, %arg3: memref<1x256x1024xbf16, #tpu.memory_space<vmem>>, %arg4: memref<1x1x1024xf32, #tpu.memory_space<vmem>>, %arg5: memref<256x128xbf16, #tpu.memory_space<vmem>>, %arg6: memref<1x128xf32, #tpu.memory_space<vmem>>, %arg7: memref<128x128xbf16, #tpu.memory_space<vmem>>, %arg8: memref<1x128xf32, #tpu.memory_space<vmem>>, %arg9: memref<128x128xbf16, #tpu.memory_space<vmem>>, %arg10: memref<1x128xf32, #tpu.memory_space<vmem>>, %arg11: memref<128x128xbf16, #tpu.memory_space<vmem>>, %arg12: memref<1x128xf32, #tpu.memory_space<vmem>>, %arg13: memref<8x128xf32, #tpu.memory_space<vmem>>, %arg14: memref<8x128xf32, #tpu.memory_space<vmem>>, %arg15: memref<8x1024xf32, #tpu.memory_space<vmem>>, %arg16: memref<8x256xf32, #tpu.memory_space<vmem>>) attributes {dimension_semantics = [#tpu.dimension_semantics<arbitrary>], iteration_bounds = array<i64: 3>, scalar_prefetch = 0 : i64, scratch_operands = 2 : i64, tpu.core_type = #tpu.core_type<tc>, window_params = [{pipeline_mode = #tpu.pipeline_mode<synchronous>, transform_indices = @transform_0, window_bounds = array<i64: 8, 256>}, {transform_indices = @transform_1, window_bounds = array<i64: 1, 256, 1024>}, {transform_indices = @transform_2, window_bounds = array<i64: 1, 256, 1024>}, {transform_indices = @transform_3, window_bounds = array<i64: 1, 1, 1024>}, {pipeline_mode = #tpu.pipeline_mode<synchronous>, transform_indices = @transform_4, window_bounds = array<i64: 256, 128>}, {pipeline_mode = #tpu.pipeline_mode<synchronous>, transform_indices = @transform_5, window_bounds = array<i64: 1, 128>}, {pipeline_mode = #tpu.pipeline_mode<synchronous>, transform_indices = @transform_6, window_bounds = array<i64: 128, 128>}, {pipeline_mode = #tpu.pipeline_mode<synchronous>, transform_indices = @transform_7, window_bounds = array<i64: 1, 128>}, {pipeline_mode = #tpu.pipeline_mode<synchronous>, transform_indices = @transform_8, window_bounds = array<i64: 128, 128>}, {pipeline_mode = #tpu.pipeline_mode<synchronous>, transform_indices = @transform_9, window_bounds = array<i64: 1, 128>}, {pipeline_mode = #tpu.pipeline_mode<synchronous>, transform_indices = @transform_10, window_bounds = array<i64: 128, 128>}, {pipeline_mode = #tpu.pipeline_mode<synchronous>, transform_indices = @transform_11, window_bounds = array<i64: 1, 128>}, {pipeline_mode = #tpu.pipeline_mode<synchronous>, transform_indices = @transform_12, window_bounds = array<i64: 8, 128>}, {pipeline_mode = #tpu.pipeline_mode<synchronous>, transform_indices = @transform_13, window_bounds = array<i64: 8, 128>}]} {
    %c0_i32 = arith.constant 0 : i32
    %0 = arith.cmpi eq, %arg0, %c0_i32 : i32
    %1 = arith.extui %0 : i1 to i32
    %c0_i32_0 = arith.constant 0 : i32
    %2 = arith.cmpi ne, %1, %c0_i32_0 : i32
    scf.if %2 {
      %c0_70 = arith.constant 0 : index
      %c0_71 = arith.constant 0 : index
      %217 = vector.load %arg1[%c0_70, %c0_71] : memref<8x256xf32, #tpu.memory_space<vmem>>, vector<8x256xf32>
      %c0_72 = arith.constant 0 : index
      %c0_73 = arith.constant 0 : index
      %218 = vector.load %arg16[%c0_72, %c0_73] : memref<8x256xf32, #tpu.memory_space<vmem>>, vector<8x256xf32>
      tpu.vector_store %arg16[%c0_72, %c0_73], %217 {strides = array<i32>} : memref<8x256xf32, #tpu.memory_space<vmem>>, vector<8x256xf32>,
    } else {
    }
    %c0 = arith.constant 0 : index
    %c0_1 = arith.constant 0 : index
    %3 = vector.load %arg16[%c0, %c0_1] : memref<8x256xf32, #tpu.memory_space<vmem>>, vector<8x256xf32>
    %4 = arith.truncf %3 : vector<8x256xf32> to vector<8x256xbf16>
    %c0_2 = arith.constant 0 : index
    %c0_3 = arith.constant 0 : index
    %c0_4 = arith.constant 0 : index
    %5 = vector.load %arg2[%c0_2, %c0_3, %c0_4] : memref<1x256x1024xbf16, #tpu.memory_space<vmem>>, vector<1x256x1024xbf16>
    %6 = vector.shape_cast %5 : vector<1x256x1024xbf16> to vector<256x1024xbf16>
    %cst = arith.constant dense<0.000000e+00> : vector<8x1024xf32>
    %7 = tpu.matmul %4, %6, %cst {dimension_numbers = #tpu.dot_dimension_numbers<[1], [0], [0], [1], [0, 0, 1, 1], [], []>} : vector<8x256xbf16>, vector<256x1024xbf16>, vector<8x1024xf32> -> vector<8x1024xf32>
    %c0_5 = arith.constant 0 : index
    %c0_6 = arith.constant 0 : index
    %c0_7 = arith.constant 0 : index
    %8 = vector.load %arg4[%c0_5, %c0_6, %c0_7] : memref<1x1x1024xf32, #tpu.memory_space<vmem>>, vector<1x1x1024xf32>
    %9 = vector.shape_cast %8 : vector<1x1x1024xf32> to vector<1x1024xf32>
    %10 = vector.broadcast %9 : vector<1x1024xf32> to vector<8x1024xf32>
    %11 = arith.addf %7, %10 : vector<8x1024xf32>
    %c0_8 = arith.constant 0 : index
    %c0_9 = arith.constant 0 : index
    %12 = vector.load %arg15[%c0_8, %c0_9] : memref<8x1024xf32, #tpu.memory_space<vmem>>, vector<8x1024xf32>
    tpu.vector_store %arg15[%c0_8, %c0_9], %11 {strides = array<i32>} : memref<8x1024xf32, #tpu.memory_space<vmem>>, vector<8x1024xf32>,
    %cst_10 = arith.constant 0.000000e+00 : f32
    %13 = vector.broadcast %cst_10 : f32 to vector<1x256xf32>
    %c0_i32_11 = arith.constant 0 : i32
    %14 = arith.index_cast %c0_i32_11 : i32 to index
    %c0_12 = arith.constant 0 : index
    %15 = vector.load %arg15[%14, %c0_12] : memref<8x1024xf32, #tpu.memory_space<vmem>>, vector<1x1024xf32>
    %16 = arith.truncf %13 : vector<1x256xf32> to vector<1x256xbf16>
    %c0_13 = arith.constant 0 : index
    %c0_14 = arith.constant 0 : index
    %c0_15 = arith.constant 0 : index
    %17 = vector.load %arg3[%c0_13, %c0_14, %c0_15] : memref<1x256x1024xbf16, #tpu.memory_space<vmem>>, vector<1x256x1024xbf16>
    %18 = vector.shape_cast %17 : vector<1x256x1024xbf16> to vector<256x1024xbf16>
    %cst_16 = arith.constant dense<0.000000e+00> : vector<1x1024xf32>
    %19 = tpu.matmul %16, %18, %cst_16 {dimension_numbers = #tpu.dot_dimension_numbers<[1], [0], [0], [1], [0, 0, 1, 1], [], []>} : vector<1x256xbf16>, vector<256x1024xbf16>, vector<1x1024xf32> -> vector<1x1024xf32>
    %20 = arith.addf %15, %19 : vector<1x1024xf32>
    %21 = vector.extract_strided_slice %20 {offsets = [0, 0], sizes = [1, 768], strides = [1, 1]} : vector<1x1024xf32> to vector<1x768xf32>
    %22 = arith.negf %21 : vector<1x768xf32>
    %23 = math.exp %22 : vector<1x768xf32>
    %cst_17 = arith.constant 1.000000e+00 : f32
    %24 = vector.broadcast %cst_17 : f32 to vector<1x768xf32>
    %25 = arith.addf %24, %23 : vector<1x768xf32>
    %26 = arith.divf %24, %25 : vector<1x768xf32>
    %27 = vector.extract_strided_slice %20 {offsets = [0, 768], sizes = [1, 256], strides = [1, 1]} : vector<1x1024xf32> to vector<1x256xf32>
    %28 = math.tanh %27 : vector<1x256xf32>
    %29 = vector.extract_strided_slice %26 {offsets = [0, 256], sizes = [1, 256], strides = [1, 1]} : vector<1x768xf32> to vector<1x256xf32>
    %30 = arith.mulf %29, %13 : vector<1x256xf32>
    %31 = vector.extract_strided_slice %26 {offsets = [0, 0], sizes = [1, 256], strides = [1, 1]} : vector<1x768xf32> to vector<1x256xf32>
    %32 = arith.mulf %31, %28 : vector<1x256xf32>
    %33 = arith.addf %30, %32 : vector<1x256xf32>
    %34 = vector.extract_strided_slice %26 {offsets = [0, 512], sizes = [1, 256], strides = [1, 1]} : vector<1x768xf32> to vector<1x256xf32>
    %35 = math.tanh %33 : vector<1x256xf32>
    %36 = arith.mulf %34, %35 : vector<1x256xf32>
    %37 = arith.index_cast %c0_i32_11 : i32 to index
    %c0_18 = arith.constant 0 : index
    %38 = vector.load %arg16[%37, %c0_18] : memref<8x256xf32, #tpu.memory_space<vmem>>, vector<1x256xf32>
    tpu.vector_store %arg16[%37, %c0_18], %36 {strides = array<i32>} : memref<8x256xf32, #tpu.memory_space<vmem>>, vector<1x256xf32>,
    %c1_i32 = arith.constant 1 : i32
    %39 = arith.index_cast %c1_i32 : i32 to index
    %c0_19 = arith.constant 0 : index
    %40 = vector.load %arg15[%39, %c0_19] : memref<8x1024xf32, #tpu.memory_space<vmem>>, vector<1x1024xf32>
    %41 = arith.truncf %36 : vector<1x256xf32> to vector<1x256xbf16>
    %c0_20 = arith.constant 0 : index
    %c0_21 = arith.constant 0 : index
    %c0_22 = arith.constant 0 : index
    %42 = vector.load %arg3[%c0_20, %c0_21, %c0_22] : memref<1x256x1024xbf16, #tpu.memory_space<vmem>>, vector<1x256x1024xbf16>
    %43 = vector.shape_cast %42 : vector<1x256x1024xbf16> to vector<256x1024xbf16>
    %cst_23 = arith.constant dense<0.000000e+00> : vector<1x1024xf32>
    %44 = tpu.matmul %41, %43, %cst_23 {dimension_numbers = #tpu.dot_dimension_numbers<[1], [0], [0], [1], [0, 0, 1, 1], [], []>} : vector<1x256xbf16>, vector<256x1024xbf16>, vector<1x1024xf32> -> vector<1x1024xf32>
    %45 = arith.addf %40, %44 : vector<1x1024xf32>
    %46 = vector.extract_strided_slice %45 {offsets = [0, 0], sizes = [1, 768], strides = [1, 1]} : vector<1x1024xf32> to vector<1x768xf32>
    %47 = arith.negf %46 : vector<1x768xf32>
    %48 = math.exp %47 : vector<1x768xf32>
    %cst_24 = arith.constant 1.000000e+00 : f32
    %49 = vector.broadcast %cst_24 : f32 to vector<1x768xf32>
    %50 = arith.addf %49, %48 : vector<1x768xf32>
    %51 = arith.divf %49, %50 : vector<1x768xf32>
    %52 = vector.extract_strided_slice %45 {offsets = [0, 768], sizes = [1, 256], strides = [1, 1]} : vector<1x1024xf32> to vector<1x256xf32>
    %53 = math.tanh %52 : vector<1x256xf32>
    %54 = vector.extract_strided_slice %51 {offsets = [0, 256], sizes = [1, 256], strides = [1, 1]} : vector<1x768xf32> to vector<1x256xf32>
    %55 = arith.mulf %54, %33 : vector<1x256xf32>
    %56 = vector.extract_strided_slice %51 {offsets = [0, 0], sizes = [1, 256], strides = [1, 1]} : vector<1x768xf32> to vector<1x256xf32>
    %57 = arith.mulf %56, %53 : vector<1x256xf32>
    %58 = arith.addf %55, %57 : vector<1x256xf32>
    %59 = vector.extract_strided_slice %51 {offsets = [0, 512], sizes = [1, 256], strides = [1, 1]} : vector<1x768xf32> to vector<1x256xf32>
    %60 = math.tanh %58 : vector<1x256xf32>
    %61 = arith.mulf %59, %60 : vector<1x256xf32>
    %62 = arith.index_cast %c1_i32 : i32 to index
    %c0_25 = arith.constant 0 : index
    %63 = vector.load %arg16[%62, %c0_25] : memref<8x256xf32, #tpu.memory_space<vmem>>, vector<1x256xf32>
    tpu.vector_store %arg16[%62, %c0_25], %61 {strides = array<i32>} : memref<8x256xf32, #tpu.memory_space<vmem>>, vector<1x256xf32>,
    %c2_i32 = arith.constant 2 : i32
    %64 = arith.index_cast %c2_i32 : i32 to index
    %c0_26 = arith.constant 0 : index
    %65 = vector.load %arg15[%64, %c0_26] : memref<8x1024xf32, #tpu.memory_space<vmem>>, vector<1x1024xf32>
    %66 = arith.truncf %61 : vector<1x256xf32> to vector<1x256xbf16>
    %c0_27 = arith.constant 0 : index
    %c0_28 = arith.constant 0 : index
    %c0_29 = arith.constant 0 : index
    %67 = vector.load %arg3[%c0_27, %c0_28, %c0_29] : memref<1x256x1024xbf16, #tpu.memory_space<vmem>>, vector<1x256x1024xbf16>
    %68 = vector.shape_cast %67 : vector<1x256x1024xbf16> to vector<256x1024xbf16>
    %cst_30 = arith.constant dense<0.000000e+00> : vector<1x1024xf32>
    %69 = tpu.matmul %66, %68, %cst_30 {dimension_numbers = #tpu.dot_dimension_numbers<[1], [0], [0], [1], [0, 0, 1, 1], [], []>} : vector<1x256xbf16>, vector<256x1024xbf16>, vector<1x1024xf32> -> vector<1x1024xf32>
    %70 = arith.addf %65, %69 : vector<1x1024xf32>
    %71 = vector.extract_strided_slice %70 {offsets = [0, 0], sizes = [1, 768], strides = [1, 1]} : vector<1x1024xf32> to vector<1x768xf32>
    %72 = arith.negf %71 : vector<1x768xf32>
    %73 = math.exp %72 : vector<1x768xf32>
    %cst_31 = arith.constant 1.000000e+00 : f32
    %74 = vector.broadcast %cst_31 : f32 to vector<1x768xf32>
    %75 = arith.addf %74, %73 : vector<1x768xf32>
    %76 = arith.divf %74, %75 : vector<1x768xf32>
    %77 = vector.extract_strided_slice %70 {offsets = [0, 768], sizes = [1, 256], strides = [1, 1]} : vector<1x1024xf32> to vector<1x256xf32>
    %78 = math.tanh %77 : vector<1x256xf32>
    %79 = vector.extract_strided_slice %76 {offsets = [0, 256], sizes = [1, 256], strides = [1, 1]} : vector<1x768xf32> to vector<1x256xf32>
    %80 = arith.mulf %79, %58 : vector<1x256xf32>
    %81 = vector.extract_strided_slice %76 {offsets = [0, 0], sizes = [1, 256], strides = [1, 1]} : vector<1x768xf32> to vector<1x256xf32>
    %82 = arith.mulf %81, %78 : vector<1x256xf32>
    %83 = arith.addf %80, %82 : vector<1x256xf32>
    %84 = vector.extract_strided_slice %76 {offsets = [0, 512], sizes = [1, 256], strides = [1, 1]} : vector<1x768xf32> to vector<1x256xf32>
    %85 = math.tanh %83 : vector<1x256xf32>
    %86 = arith.mulf %84, %85 : vector<1x256xf32>
    %87 = arith.index_cast %c2_i32 : i32 to index
    %c0_32 = arith.constant 0 : index
    %88 = vector.load %arg16[%87, %c0_32] : memref<8x256xf32, #tpu.memory_space<vmem>>, vector<1x256xf32>
    tpu.vector_store %arg16[%87, %c0_32], %86 {strides = array<i32>} : memref<8x256xf32, #tpu.memory_space<vmem>>, vector<1x256xf32>,
    %c3_i32 = arith.constant 3 : i32
    %89 = arith.index_cast %c3_i32 : i32 to index
    %c0_33 = arith.constant 0 : index
    %90 = vector.load %arg15[%89, %c0_33] : memref<8x1024xf32, #tpu.memory_space<vmem>>, vector<1x1024xf32>
    %91 = arith.truncf %86 : vector<1x256xf32> to vector<1x256xbf16>
    %c0_34 = arith.constant 0 : index
    %c0_35 = arith.constant 0 : index
    %c0_36 = arith.constant 0 : index
    %92 = vector.load %arg3[%c0_34, %c0_35, %c0_36] : memref<1x256x1024xbf16, #tpu.memory_space<vmem>>, vector<1x256x1024xbf16>
    %93 = vector.shape_cast %92 : vector<1x256x1024xbf16> to vector<256x1024xbf16>
    %cst_37 = arith.constant dense<0.000000e+00> : vector<1x1024xf32>
    %94 = tpu.matmul %91, %93, %cst_37 {dimension_numbers = #tpu.dot_dimension_numbers<[1], [0], [0], [1], [0, 0, 1, 1], [], []>} : vector<1x256xbf16>, vector<256x1024xbf16>, vector<1x1024xf32> -> vector<1x1024xf32>
    %95 = arith.addf %90, %94 : vector<1x1024xf32>
    %96 = vector.extract_strided_slice %95 {offsets = [0, 0], sizes = [1, 768], strides = [1, 1]} : vector<1x1024xf32> to vector<1x768xf32>
    %97 = arith.negf %96 : vector<1x768xf32>
    %98 = math.exp %97 : vector<1x768xf32>
    %cst_38 = arith.constant 1.000000e+00 : f32
    %99 = vector.broadcast %cst_38 : f32 to vector<1x768xf32>
    %100 = arith.addf %99, %98 : vector<1x768xf32>
    %101 = arith.divf %99, %100 : vector<1x768xf32>
    %102 = vector.extract_strided_slice %95 {offsets = [0, 768], sizes = [1, 256], strides = [1, 1]} : vector<1x1024xf32> to vector<1x256xf32>
    %103 = math.tanh %102 : vector<1x256xf32>
    %104 = vector.extract_strided_slice %101 {offsets = [0, 256], sizes = [1, 256], strides = [1, 1]} : vector<1x768xf32> to vector<1x256xf32>
    %105 = arith.mulf %104, %83 : vector<1x256xf32>
    %106 = vector.extract_strided_slice %101 {offsets = [0, 0], sizes = [1, 256], strides = [1, 1]} : vector<1x768xf32> to vector<1x256xf32>
    %107 = arith.mulf %106, %103 : vector<1x256xf32>
    %108 = arith.addf %105, %107 : vector<1x256xf32>
    %109 = vector.extract_strided_slice %101 {offsets = [0, 512], sizes = [1, 256], strides = [1, 1]} : vector<1x768xf32> to vector<1x256xf32>
    %110 = math.tanh %108 : vector<1x256xf32>
    %111 = arith.mulf %109, %110 : vector<1x256xf32>
    %112 = arith.index_cast %c3_i32 : i32 to index
    %c0_39 = arith.constant 0 : index
    %113 = vector.load %arg16[%112, %c0_39] : memref<8x256xf32, #tpu.memory_space<vmem>>, vector<1x256xf32>
    tpu.vector_store %arg16[%112, %c0_39], %111 {strides = array<i32>} : memref<8x256xf32, #tpu.memory_space<vmem>>, vector<1x256xf32>,
    %c4_i32 = arith.constant 4 : i32
    %114 = arith.index_cast %c4_i32 : i32 to index
    %c0_40 = arith.constant 0 : index
    %115 = vector.load %arg15[%114, %c0_40] : memref<8x1024xf32, #tpu.memory_space<vmem>>, vector<1x1024xf32>
    %116 = arith.truncf %111 : vector<1x256xf32> to vector<1x256xbf16>
    %c0_41 = arith.constant 0 : index
    %c0_42 = arith.constant 0 : index
    %c0_43 = arith.constant 0 : index
    %117 = vector.load %arg3[%c0_41, %c0_42, %c0_43] : memref<1x256x1024xbf16, #tpu.memory_space<vmem>>, vector<1x256x1024xbf16>
    %118 = vector.shape_cast %117 : vector<1x256x1024xbf16> to vector<256x1024xbf16>
    %cst_44 = arith.constant dense<0.000000e+00> : vector<1x1024xf32>
    %119 = tpu.matmul %116, %118, %cst_44 {dimension_numbers = #tpu.dot_dimension_numbers<[1], [0], [0], [1], [0, 0, 1, 1], [], []>} : vector<1x256xbf16>, vector<256x1024xbf16>, vector<1x1024xf32> -> vector<1x1024xf32>
    %120 = arith.addf %115, %119 : vector<1x1024xf32>
    %121 = vector.extract_strided_slice %120 {offsets = [0, 0], sizes = [1, 768], strides = [1, 1]} : vector<1x1024xf32> to vector<1x768xf32>
    %122 = arith.negf %121 : vector<1x768xf32>
    %123 = math.exp %122 : vector<1x768xf32>
    %cst_45 = arith.constant 1.000000e+00 : f32
    %124 = vector.broadcast %cst_45 : f32 to vector<1x768xf32>
    %125 = arith.addf %124, %123 : vector<1x768xf32>
    %126 = arith.divf %124, %125 : vector<1x768xf32>
    %127 = vector.extract_strided_slice %120 {offsets = [0, 768], sizes = [1, 256], strides = [1, 1]} : vector<1x1024xf32> to vector<1x256xf32>
    %128 = math.tanh %127 : vector<1x256xf32>
    %129 = vector.extract_strided_slice %126 {offsets = [0, 256], sizes = [1, 256], strides = [1, 1]} : vector<1x768xf32> to vector<1x256xf32>
    %130 = arith.mulf %129, %108 : vector<1x256xf32>
    %131 = vector.extract_strided_slice %126 {offsets = [0, 0], sizes = [1, 256], strides = [1, 1]} : vector<1x768xf32> to vector<1x256xf32>
    %132 = arith.mulf %131, %128 : vector<1x256xf32>
    %133 = arith.addf %130, %132 : vector<1x256xf32>
    %134 = vector.extract_strided_slice %126 {offsets = [0, 512], sizes = [1, 256], strides = [1, 1]} : vector<1x768xf32> to vector<1x256xf32>
    %135 = math.tanh %133 : vector<1x256xf32>
    %136 = arith.mulf %134, %135 : vector<1x256xf32>
    %137 = arith.index_cast %c4_i32 : i32 to index
    %c0_46 = arith.constant 0 : index
    %138 = vector.load %arg16[%137, %c0_46] : memref<8x256xf32, #tpu.memory_space<vmem>>, vector<1x256xf32>
    tpu.vector_store %arg16[%137, %c0_46], %136 {strides = array<i32>} : memref<8x256xf32, #tpu.memory_space<vmem>>, vector<1x256xf32>,
    %c5_i32 = arith.constant 5 : i32
    %139 = arith.index_cast %c5_i32 : i32 to index
    %c0_47 = arith.constant 0 : index
    %140 = vector.load %arg15[%139, %c0_47] : memref<8x1024xf32, #tpu.memory_space<vmem>>, vector<1x1024xf32>
    %141 = arith.truncf %136 : vector<1x256xf32> to vector<1x256xbf16>
    %c0_48 = arith.constant 0 : index
    %c0_49 = arith.constant 0 : index
    %c0_50 = arith.constant 0 : index
    %142 = vector.load %arg3[%c0_48, %c0_49, %c0_50] : memref<1x256x1024xbf16, #tpu.memory_space<vmem>>, vector<1x256x1024xbf16>
    %143 = vector.shape_cast %142 : vector<1x256x1024xbf16> to vector<256x1024xbf16>
    %cst_51 = arith.constant dense<0.000000e+00> : vector<1x1024xf32>
    %144 = tpu.matmul %141, %143, %cst_51 {dimension_numbers = #tpu.dot_dimension_numbers<[1], [0], [0], [1], [0, 0, 1, 1], [], []>} : vector<1x256xbf16>, vector<256x1024xbf16>, vector<1x1024xf32> -> vector<1x1024xf32>
    %145 = arith.addf %140, %144 : vector<1x1024xf32>
    %146 = vector.extract_strided_slice %145 {offsets = [0, 0], sizes = [1, 768], strides = [1, 1]} : vector<1x1024xf32> to vector<1x768xf32>
    %147 = arith.negf %146 : vector<1x768xf32>
    %148 = math.exp %147 : vector<1x768xf32>
    %cst_52 = arith.constant 1.000000e+00 : f32
    %149 = vector.broadcast %cst_52 : f32 to vector<1x768xf32>
    %150 = arith.addf %149, %148 : vector<1x768xf32>
    %151 = arith.divf %149, %150 : vector<1x768xf32>
    %152 = vector.extract_strided_slice %145 {offsets = [0, 768], sizes = [1, 256], strides = [1, 1]} : vector<1x1024xf32> to vector<1x256xf32>
    %153 = math.tanh %152 : vector<1x256xf32>
    %154 = vector.extract_strided_slice %151 {offsets = [0, 256], sizes = [1, 256], strides = [1, 1]} : vector<1x768xf32> to vector<1x256xf32>
    %155 = arith.mulf %154, %133 : vector<1x256xf32>
    %156 = vector.extract_strided_slice %151 {offsets = [0, 0], sizes = [1, 256], strides = [1, 1]} : vector<1x768xf32> to vector<1x256xf32>
    %157 = arith.mulf %156, %153 : vector<1x256xf32>
    %158 = arith.addf %155, %157 : vector<1x256xf32>
    %159 = vector.extract_strided_slice %151 {offsets = [0, 512], sizes = [1, 256], strides = [1, 1]} : vector<1x768xf32> to vector<1x256xf32>
    %160 = math.tanh %158 : vector<1x256xf32>
    %161 = arith.mulf %159, %160 : vector<1x256xf32>
    %162 = arith.index_cast %c5_i32 : i32 to index
    %c0_53 = arith.constant 0 : index
    %163 = vector.load %arg16[%162, %c0_53] : memref<8x256xf32, #tpu.memory_space<vmem>>, vector<1x256xf32>
    tpu.vector_store %arg16[%162, %c0_53], %161 {strides = array<i32>} : memref<8x256xf32, #tpu.memory_space<vmem>>, vector<1x256xf32>,
    %c6_i32 = arith.constant 6 : i32
    %164 = arith.index_cast %c6_i32 : i32 to index
    %c0_54 = arith.constant 0 : index
    %165 = vector.load %arg15[%164, %c0_54] : memref<8x1024xf32, #tpu.memory_space<vmem>>, vector<1x1024xf32>
    %166 = arith.truncf %161 : vector<1x256xf32> to vector<1x256xbf16>
    %c0_55 = arith.constant 0 : index
    %c0_56 = arith.constant 0 : index
    %c0_57 = arith.constant 0 : index
    %167 = vector.load %arg3[%c0_55, %c0_56, %c0_57] : memref<1x256x1024xbf16, #tpu.memory_space<vmem>>, vector<1x256x1024xbf16>
    %168 = vector.shape_cast %167 : vector<1x256x1024xbf16> to vector<256x1024xbf16>
    %cst_58 = arith.constant dense<0.000000e+00> : vector<1x1024xf32>
    %169 = tpu.matmul %166, %168, %cst_58 {dimension_numbers = #tpu.dot_dimension_numbers<[1], [0], [0], [1], [0, 0, 1, 1], [], []>} : vector<1x256xbf16>, vector<256x1024xbf16>, vector<1x1024xf32> -> vector<1x1024xf32>
    %170 = arith.addf %165, %169 : vector<1x1024xf32>
    %171 = vector.extract_strided_slice %170 {offsets = [0, 0], sizes = [1, 768], strides = [1, 1]} : vector<1x1024xf32> to vector<1x768xf32>
    %172 = arith.negf %171 : vector<1x768xf32>
    %173 = math.exp %172 : vector<1x768xf32>
    %cst_59 = arith.constant 1.000000e+00 : f32
    %174 = vector.broadcast %cst_59 : f32 to vector<1x768xf32>
    %175 = arith.addf %174, %173 : vector<1x768xf32>
    %176 = arith.divf %174, %175 : vector<1x768xf32>
    %177 = vector.extract_strided_slice %170 {offsets = [0, 768], sizes = [1, 256], strides = [1, 1]} : vector<1x1024xf32> to vector<1x256xf32>
    %178 = math.tanh %177 : vector<1x256xf32>
    %179 = vector.extract_strided_slice %176 {offsets = [0, 256], sizes = [1, 256], strides = [1, 1]} : vector<1x768xf32> to vector<1x256xf32>
    %180 = arith.mulf %179, %158 : vector<1x256xf32>
    %181 = vector.extract_strided_slice %176 {offsets = [0, 0], sizes = [1, 256], strides = [1, 1]} : vector<1x768xf32> to vector<1x256xf32>
    %182 = arith.mulf %181, %178 : vector<1x256xf32>
    %183 = arith.addf %180, %182 : vector<1x256xf32>
    %184 = vector.extract_strided_slice %176 {offsets = [0, 512], sizes = [1, 256], strides = [1, 1]} : vector<1x768xf32> to vector<1x256xf32>
    %185 = math.tanh %183 : vector<1x256xf32>
    %186 = arith.mulf %184, %185 : vector<1x256xf32>
    %187 = arith.index_cast %c6_i32 : i32 to index
    %c0_60 = arith.constant 0 : index
    %188 = vector.load %arg16[%187, %c0_60] : memref<8x256xf32, #tpu.memory_space<vmem>>, vector<1x256xf32>
    tpu.vector_store %arg16[%187, %c0_60], %186 {strides = array<i32>} : memref<8x256xf32, #tpu.memory_space<vmem>>, vector<1x256xf32>,
    %c7_i32 = arith.constant 7 : i32
    %189 = arith.index_cast %c7_i32 : i32 to index
    %c0_61 = arith.constant 0 : index
    %190 = vector.load %arg15[%189, %c0_61] : memref<8x1024xf32, #tpu.memory_space<vmem>>, vector<1x1024xf32>
    %191 = arith.truncf %186 : vector<1x256xf32> to vector<1x256xbf16>
    %c0_62 = arith.constant 0 : index
    %c0_63 = arith.constant 0 : index
    %c0_64 = arith.constant 0 : index
    %192 = vector.load %arg3[%c0_62, %c0_63, %c0_64] : memref<1x256x1024xbf16, #tpu.memory_space<vmem>>, vector<1x256x1024xbf16>
    %193 = vector.shape_cast %192 : vector<1x256x1024xbf16> to vector<256x1024xbf16>
    %cst_65 = arith.constant dense<0.000000e+00> : vector<1x1024xf32>
    %194 = tpu.matmul %191, %193, %cst_65 {dimension_numbers = #tpu.dot_dimension_numbers<[1], [0], [0], [1], [0, 0, 1, 1], [], []>} : vector<1x256xbf16>, vector<256x1024xbf16>, vector<1x1024xf32> -> vector<1x1024xf32>
    %195 = arith.addf %190, %194 : vector<1x1024xf32>
    %196 = vector.extract_strided_slice %195 {offsets = [0, 0], sizes = [1, 768], strides = [1, 1]} : vector<1x1024xf32> to vector<1x768xf32>
    %197 = arith.negf %196 : vector<1x768xf32>
    %198 = math.exp %197 : vector<1x768xf32>
    %cst_66 = arith.constant 1.000000e+00 : f32
    %199 = vector.broadcast %cst_66 : f32 to vector<1x768xf32>
    %200 = arith.addf %199, %198 : vector<1x768xf32>
    %201 = arith.divf %199, %200 : vector<1x768xf32>
    %202 = vector.extract_strided_slice %195 {offsets = [0, 768], sizes = [1, 256], strides = [1, 1]} : vector<1x1024xf32> to vector<1x256xf32>
    %203 = math.tanh %202 : vector<1x256xf32>
    %204 = vector.extract_strided_slice %201 {offsets = [0, 256], sizes = [1, 256], strides = [1, 1]} : vector<1x768xf32> to vector<1x256xf32>
    %205 = arith.mulf %204, %183 : vector<1x256xf32>
    %206 = vector.extract_strided_slice %201 {offsets = [0, 0], sizes = [1, 256], strides = [1, 1]} : vector<1x768xf32> to vector<1x256xf32>
    %207 = arith.mulf %206, %203 : vector<1x256xf32>
    %208 = arith.addf %205, %207 : vector<1x256xf32>
    %209 = vector.extract_strided_slice %201 {offsets = [0, 512], sizes = [1, 256], strides = [1, 1]} : vector<1x768xf32> to vector<1x256xf32>
    %210 = math.tanh %208 : vector<1x256xf32>
    %211 = arith.mulf %209, %210 : vector<1x256xf32>
    %212 = arith.index_cast %c7_i32 : i32 to index
    %c0_67 = arith.constant 0 : index
    %213 = vector.load %arg16[%212, %c0_67] : memref<8x256xf32, #tpu.memory_space<vmem>>, vector<1x256xf32>
    tpu.vector_store %arg16[%212, %c0_67], %211 {strides = array<i32>} : memref<8x256xf32, #tpu.memory_space<vmem>>, vector<1x256xf32>,
    %c8_i32 = arith.constant 8 : i32
    %c2_i32_68 = arith.constant 2 : i32
    %214 = arith.cmpi eq, %arg0, %c2_i32_68 : i32
    %215 = arith.extui %214 : i1 to i32
    %c0_i32_69 = arith.constant 0 : i32
    %216 = arith.cmpi ne, %215, %c0_i32_69 : i32
    scf.if %216 {
      %c0_70 = arith.constant 0 : index
      %c0_71 = arith.constant 0 : index
      %217 = vector.load %arg16[%c0_70, %c0_71] : memref<8x256xf32, #tpu.memory_space<vmem>>, vector<8x256xf32>
      %218 = arith.truncf %217 : vector<8x256xf32> to vector<8x256xbf16>
      %c0_72 = arith.constant 0 : index
      %c0_73 = arith.constant 0 : index
      %219 = vector.load %arg5[%c0_72, %c0_73] : memref<256x128xbf16, #tpu.memory_space<vmem>>, vector<256x128xbf16>
      %cst_74 = arith.constant dense<0.000000e+00> : vector<8x128xf32>
      %220 = tpu.matmul %218, %219, %cst_74 {dimension_numbers = #tpu.dot_dimension_numbers<[1], [0], [0], [1], [0, 0, 1, 1], [], []>} : vector<8x256xbf16>, vector<256x128xbf16>, vector<8x128xf32> -> vector<8x128xf32>
      %c0_75 = arith.constant 0 : index
      %c0_76 = arith.constant 0 : index
      %221 = vector.load %arg6[%c0_75, %c0_76] : memref<1x128xf32, #tpu.memory_space<vmem>>, vector<1x128xf32>
      %222 = vector.broadcast %221 : vector<1x128xf32> to vector<8x128xf32>
      %223 = arith.addf %220, %222 : vector<8x128xf32>
      %cst_77 = arith.constant 0.000000e+00 : f32
      %224 = vector.broadcast %cst_77 : f32 to vector<8x128xf32>
      %225 = arith.maximumf %223, %224 : vector<8x128xf32>
      %226 = arith.truncf %225 : vector<8x128xf32> to vector<8x128xbf16>
      %c0_78 = arith.constant 0 : index
      %c0_79 = arith.constant 0 : index
      %227 = vector.load %arg7[%c0_78, %c0_79] : memref<128x128xbf16, #tpu.memory_space<vmem>>, vector<128x128xbf16>
      %cst_80 = arith.constant dense<0.000000e+00> : vector<8x128xf32>
      %228 = tpu.matmul %226, %227, %cst_80 {dimension_numbers = #tpu.dot_dimension_numbers<[1], [0], [0], [1], [0, 0, 1, 1], [], []>} : vector<8x128xbf16>, vector<128x128xbf16>, vector<8x128xf32> -> vector<8x128xf32>
      %c0_81 = arith.constant 0 : index
      %c0_82 = arith.constant 0 : index
      %229 = vector.load %arg8[%c0_81, %c0_82] : memref<1x128xf32, #tpu.memory_space<vmem>>, vector<1x128xf32>
      %230 = vector.broadcast %229 : vector<1x128xf32> to vector<8x128xf32>
      %231 = arith.addf %228, %230 : vector<8x128xf32>
      %cst_83 = arith.constant 0.000000e+00 : f32
      %232 = vector.broadcast %cst_83 : f32 to vector<8x128xf32>
      %233 = arith.maximumf %231, %232 : vector<8x128xf32>
      %234 = arith.truncf %233 : vector<8x128xf32> to vector<8x128xbf16>
      %c0_84 = arith.constant 0 : index
      %c0_85 = arith.constant 0 : index
      %235 = vector.load %arg9[%c0_84, %c0_85] : memref<128x128xbf16, #tpu.memory_space<vmem>>, vector<128x128xbf16>
      %cst_86 = arith.constant dense<0.000000e+00> : vector<8x128xf32>
      %236 = tpu.matmul %234, %235, %cst_86 {dimension_numbers = #tpu.dot_dimension_numbers<[1], [0], [0], [1], [0, 0, 1, 1], [], []>} : vector<8x128xbf16>, vector<128x128xbf16>, vector<8x128xf32> -> vector<8x128xf32>
      %c0_87 = arith.constant 0 : index
      %c0_88 = arith.constant 0 : index
      %237 = vector.load %arg10[%c0_87, %c0_88] : memref<1x128xf32, #tpu.memory_space<vmem>>, vector<1x128xf32>
      %238 = vector.broadcast %237 : vector<1x128xf32> to vector<8x128xf32>
      %239 = arith.addf %236, %238 : vector<8x128xf32>
      %cst_89 = arith.constant 0.000000e+00 : f32
      %240 = vector.broadcast %cst_89 : f32 to vector<8x128xf32>
      %241 = arith.maximumf %239, %240 : vector<8x128xf32>
      %242 = arith.truncf %241 : vector<8x128xf32> to vector<8x128xbf16>
      %c0_90 = arith.constant 0 : index
      %c0_91 = arith.constant 0 : index
      %243 = vector.load %arg11[%c0_90, %c0_91] : memref<128x128xbf16, #tpu.memory_space<vmem>>, vector<128x128xbf16>
      %cst_92 = arith.constant dense<0.000000e+00> : vector<8x128xf32>
      %244 = tpu.matmul %242, %243, %cst_92 {dimension_numbers = #tpu.dot_dimension_numbers<[1], [0], [0], [1], [0, 0, 1, 1], [], []>} : vector<8x128xbf16>, vector<128x128xbf16>, vector<8x128xf32> -> vector<8x128xf32>
      %c0_93 = arith.constant 0 : index
      %c0_94 = arith.constant 0 : index
      %245 = vector.load %arg12[%c0_93, %c0_94] : memref<1x128xf32, #tpu.memory_space<vmem>>, vector<1x128xf32>
      %246 = vector.broadcast %245 : vector<1x128xf32> to vector<8x128xf32>
      %247 = arith.addf %244, %246 : vector<8x128xf32>
      %c0_95 = arith.constant 0 : index
      %c0_96 = arith.constant 0 : index
      %248 = vector.load %arg13[%c0_95, %c0_96] : memref<8x128xf32, #tpu.memory_space<vmem>>, vector<8x128xf32>
      %cst_97 = arith.constant 0.000000e+00 : f32
      %249 = vector.broadcast %cst_97 : f32 to vector<8x128xf32>
      %250 = arith.cmpf ogt, %248, %249 : vector<8x128xf32>
      %cst_98 = arith.constant -1.000000e+09 : f32
      %251 = vector.broadcast %cst_98 : f32 to vector<8x128xf32>
      %252 = arith.select %250, %247, %251 : vector<8x128xi1>, vector<8x128xf32>
      %c0_99 = arith.constant 0 : index
      %c0_100 = arith.constant 0 : index
      %253 = vector.load %arg14[%c0_99, %c0_100] : memref<8x128xf32, #tpu.memory_space<vmem>>, vector<8x128xf32>
      tpu.vector_store %arg14[%c0_99, %c0_100], %252 {strides = array<i32>} : memref<8x128xf32, #tpu.memory_space<vmem>>, vector<8x128xf32>,
    } else {
    }
    return
  }
  func.func @transform_0(%arg0: i32) -> (i32, i32) {
    %c0_i32 = arith.constant 0 : i32
    %c0_i32_0 = arith.constant 0 : i32
    %c0_i32_1 = arith.constant 0 : i32
    return %c0_i32, %c0_i32_0 : i32, i32
  }
  func.func @transform_1(%arg0: i32) -> (i32, i32, i32) {
    %c0_i32 = arith.constant 0 : i32
    %c0_i32_0 = arith.constant 0 : i32
    %c0_i32_1 = arith.constant 0 : i32
    return %arg0, %c0_i32, %c0_i32_0 : i32, i32, i32
  }
  func.func @transform_2(%arg0: i32) -> (i32, i32, i32) {
    %c0_i32 = arith.constant 0 : i32
    %c0_i32_0 = arith.constant 0 : i32
    %c0_i32_1 = arith.constant 0 : i32
    return %arg0, %c0_i32, %c0_i32_0 : i32, i32, i32
  }
  func.func @transform_3(%arg0: i32) -> (i32, i32, i32) {
    %c0_i32 = arith.constant 0 : i32
    %c0_i32_0 = arith.constant 0 : i32
    %c0_i32_1 = arith.constant 0 : i32
    return %arg0, %c0_i32, %c0_i32_0 : i32, i32, i32
  }
  func.func @transform_4(%arg0: i32) -> (i32, i32) {
    %c0_i32 = arith.constant 0 : i32
    %c0_i32_0 = arith.constant 0 : i32
    %c0_i32_1 = arith.constant 0 : i32
    return %c0_i32, %c0_i32_0 : i32, i32
  }
  func.func @transform_5(%arg0: i32) -> (i32, i32) {
    %c0_i32 = arith.constant 0 : i32
    %c0_i32_0 = arith.constant 0 : i32
    %c0_i32_1 = arith.constant 0 : i32
    return %c0_i32, %c0_i32_0 : i32, i32
  }
  func.func @transform_6(%arg0: i32) -> (i32, i32) {
    %c0_i32 = arith.constant 0 : i32
    %c0_i32_0 = arith.constant 0 : i32
    %c0_i32_1 = arith.constant 0 : i32
    return %c0_i32, %c0_i32_0 : i32, i32
  }
  func.func @transform_7(%arg0: i32) -> (i32, i32) {
    %c0_i32 = arith.constant 0 : i32
    %c0_i32_0 = arith.constant 0 : i32
    %c0_i32_1 = arith.constant 0 : i32
    return %c0_i32, %c0_i32_0 : i32, i32
  }
  func.func @transform_8(%arg0: i32) -> (i32, i32) {
    %c0_i32 = arith.constant 0 : i32
    %c0_i32_0 = arith.constant 0 : i32
    %c0_i32_1 = arith.constant 0 : i32
    return %c0_i32, %c0_i32_0 : i32, i32
  }
  func.func @transform_9(%arg0: i32) -> (i32, i32) {
    %c0_i32 = arith.constant 0 : i32
    %c0_i32_0 = arith.constant 0 : i32
    %c0_i32_1 = arith.constant 0 : i32
    return %c0_i32, %c0_i32_0 : i32, i32
  }
  func.func @transform_10(%arg0: i32) -> (i32, i32) {
    %c0_i32 = arith.constant 0 : i32
    %c0_i32_0 = arith.constant 0 : i32
    %c0_i32_1 = arith.constant 0 : i32
    return %c0_i32, %c0_i32_0 : i32, i32
  }
  func.func @transform_11(%arg0: i32) -> (i32, i32) {
    %c0_i32 = arith.constant 0 : i32
    %c0_i32_0 = arith.constant 0 : i32
    %c0_i32_1 = arith.constant 0 : i32
    return %c0_i32, %c0_i32_0 : i32, i32
  }
  func.func @transform_12(%arg0: i32) -> (i32, i32) {
    %c0_i32 = arith.constant 0 : i32
    %c0_i32_0 = arith.constant 0 : i32
    %c0_i32_1 = arith.constant 0 : i32
    return %c0_i32, %c0_i32_0 : i32, i32
  }
  func.func @transform_13(%arg0: i32) -> (i32, i32) {
    %c0_i32 = arith.constant 0 : i32
    %c0_i32_0 = arith.constant 0 : i32
    %c0_i32_1 = arith.constant 0 : i32
    return %c0_i32, %c0_i32_0 : i32, i32
  }
}

</mosaic_0001>

<llo_original>
// kernel: tpu_custom_call.1
$region0: #{tpu_custom_call.1}
  #allocation0 [shape = 'u32[]', space=smem, size = 0x4, offset = 0x4, fixed_abs, tag = 'smem constant byte address 0x4 - core index']
  #allocation1 [shape = 'u32[144,128]{1,0:T(1,128)}', space=vmem, size = 0x12000, scoped, tag = 'internal scratch']
  #allocation2 [shape = 'f32[8,1024]{1,0:T(8,128)}', space=vmem, size = 0x8000, scoped, tag = 'scratch operand']
  #allocation3 [shape = 'f32[8,256]{1,0:T(8,128)}', space=vmem, size = 0x2000, scoped, tag = 'scratch operand']
  %s0 = inlined_call_operand.hbm [shape: f32[8,256], index: 0, kind: input, shape index: {}]
  %s1 = inlined_call_operand.hbm [shape: bf16[3,256,1024], index: 1, kind: input, shape index: {}]
  %s2 = inlined_call_operand.hbm [shape: bf16[3,256,1024], index: 2, kind: input, shape index: {}]
  %s3 = inlined_call_operand.hbm [shape: f32[3,1,1024], index: 3, kind: input, shape index: {}]
  %s4 = inlined_call_operand.hbm [shape: bf16[256,128], index: 4, kind: input, shape index: {}]
  %s5 = inlined_call_operand.hbm [shape: f32[1,128], index: 5, kind: input, shape index: {}]
  %s6 = inlined_call_operand.hbm [shape: bf16[128,128], index: 6, kind: input, shape index: {}]
  %s7 = inlined_call_operand.hbm [shape: f32[1,128], index: 7, kind: input, shape index: {}]
  %s8 = inlined_call_operand.hbm [shape: bf16[128,128], index: 8, kind: input, shape index: {}]
  %s9 = inlined_call_operand.hbm [shape: f32[1,128], index: 9, kind: input, shape index: {}]
  %s10 = inlined_call_operand.hbm [shape: bf16[128,128], index: 10, kind: input, shape index: {}]
  %s11 = inlined_call_operand.hbm [shape: f32[1,128], index: 11, kind: input, shape index: {}]
  %s12 = inlined_call_operand.hbm [shape: f32[8,128], index: 12, kind: input, shape index: {}]
  %s13 = inlined_call_operand.hbm [shape: f32[8,128], index: 13, kind: output, shape index: {}]
  %s14 = sld [smem:[#allocation0]]
  $region145: #{tpu_custom_call.1} parent=0
    _
  %s16 = ssub.s32 1, %s14
  %s17 = scalar_select 0, %s16, %s14
  $region1: #{tpu_custom_call.1} parent=0
    #allocation4 [shape = 'u8[8192]{0}', space=vmem, size = 0x2000, scoped, tag = 'input window, operand 0, single buffered']
    #allocation5 [shape = 's32[2]{0}', space=sflag, size = 0x8, scoped, tag = 'scoped memory for tpu_custom_call.1']
    #allocation6 [shape = 's32[2]{0}', space=sflag, size = 0x8, scoped, tag = 'scoped memory for tpu_custom_call.1']
    #allocation7 [shape = 'u8[1048576]{0}', space=vmem, size = 0x100000, scoped, tag = 'input window, operand 1']
    #allocation8 [shape = 's32[2]{0}', space=sflag, size = 0x8, scoped, tag = 'scoped memory for tpu_custom_call.1']
    #allocation9 [shape = 'u8[1048576]{0}', space=vmem, size = 0x100000, scoped, tag = 'input window, operand 2']
    #allocation10 [shape = 'u8[8192]{0}', space=vmem, size = 0x2000, scoped, tag = 'input window, operand 3']
    #allocation11 [shape = 's32[2]{0}', space=sflag, size = 0x8, scoped, tag = 'scoped memory for tpu_custom_call.1']
    #allocation12 [shape = 'u8[65536]{0}', space=vmem, size = 0x10000, scoped, tag = 'input window, operand 4, single buffered']
    #allocation13 [shape = 'u8[512]{0}', space=vmem, size = 0x400, scoped, tag = 'input window, operand 5, single buffered']
    #allocation14 [shape = 's32[1]{0}', space=sflag, size = 0x4, scoped, tag = 'scoped memory for tpu_custom_call.1']
    #allocation15 [shape = 'u8[32768]{0}', space=vmem, size = 0x8000, scoped, tag = 'input window, operand 6, single buffered']
    #allocation16 [shape = 'u8[512]{0}', space=vmem, size = 0x400, scoped, tag = 'input window, operand 7, single buffered']
    #allocation17 [shape = 's32[1]{0}', space=sflag, size = 0x4, scoped, tag = 'scoped memory for tpu_custom_call.1']
    #allocation18 [shape = 'u8[32768]{0}', space=vmem, size = 0x8000, scoped, tag = 'input window, operand 8, single buffered']
    #allocation19 [shape = 'u8[512]{0}', space=vmem, size = 0x400, scoped, tag = 'input window, operand 9, single buffered']
    #allocation20 [shape = 's32[1]{0}', space=sflag, size = 0x4, scoped, tag = 'scoped memory for tpu_custom_call.1']
    #allocation21 [shape = 'u8[32768]{0}', space=vmem, size = 0x8000, scoped, tag = 'input window, operand 10, single buffered']
    #allocation22 [shape = 'u8[512]{0}', space=vmem, size = 0x400, scoped, tag = 'input window, operand 11, single buffered']
    #allocation23 [shape = 's32[1]{0}', space=sflag, size = 0x4, scoped, tag = 'scoped memory for tpu_custom_call.1']
    #allocation24 [shape = 'u8[4096]{0}', space=vmem, size = 0x1000, scoped, tag = 'input window, operand 12, single buffered']
    #allocation25 [shape = 'u8[4096]{0}', space=vmem, size = 0x1000, scoped, tag = 'output window, operand 0, single buffered']
    %18 = vsyncpa [#allocation5], 0
    %19 = vsyncpa [#allocation8], 0
    %s20 = scalar_lea.sflag [#allocation8], 1
    %21 = vsyncpa %s20, 0
    %22 = vsyncpa [#allocation11], 0
    %s23 = scalar_lea.sflag [#allocation11], 1
    %24 = vsyncpa %s23, 0
    %25 = vsyncpa [#allocation14], 0
    %26 = vsyncpa [#allocation17], 0
    %27 = vsyncpa [#allocation20], 0
    %28 = vsyncpa [#allocation23], 0
    %29 = vsyncpa [#allocation6], 0
    loop: start=0, step=1, limit=5
    $region2: #{tpu_custom_call.1} parent=1 // loop_pre_header
      _
    $region3: #{tpu_custom_call.1} parent=1 // loop_header
      %s31 = sphi 0, %s35
      %p32 = scmp.ge.s32.totalorder %s31, 5
      %s39 = sphi 0, %s39
      %s41 = sphi 0, %s39
      %s42 = sphi 0, %s41
      %s56 = sphi 0, %s42
      %s62 = sphi 0, %s64
      %s65 = sphi 0, %s62
      %s66 = sphi 0, %s65
      %s82 = sphi 0, %s66
      %s88 = sphi 0, %s90
      %s91 = sphi 0, %s88
      %s92 = sphi 0, %s91
      %s108 = sphi 0, %s92
      %s114 = sphi 0, %s116
      %s117 = sphi 0, %s114
      %s118 = sphi 0, %s117
      %s134 = sphi 0, %s118
      %s138 = sphi 0, %s138
      %s140 = sphi 0, %s138
      %s141 = sphi 0, %s140
      %s155 = sphi 0, %s141
      %s159 = sphi 0, %s159
      %s161 = sphi 0, %s159
      %s162 = sphi 0, %s161
      %s176 = sphi 0, %s162
      %s180 = sphi 0, %s180
      %s182 = sphi 0, %s180
      %s183 = sphi 0, %s182
      %s197 = sphi 0, %s183
      %s201 = sphi 0, %s201
      %s203 = sphi 0, %s201
      %s204 = sphi 0, %s203
      %s218 = sphi 0, %s204
      %s222 = sphi 0, %s222
      %s224 = sphi 0, %s222
      %s225 = sphi 0, %s224
      %s239 = sphi 0, %s225
      %s243 = sphi 0, %s243
      %s245 = sphi 0, %s243
      %s246 = sphi 0, %s245
      %s260 = sphi 0, %s246
      %s264 = sphi 0, %s264
      %s266 = sphi 0, %s264
      %s267 = sphi 0, %s266
      %s281 = sphi 0, %s267
      %s285 = sphi 0, %s285
      %s287 = sphi 0, %s285
      %s288 = sphi 0, %s287
      %s302 = sphi 0, %s288
      %s306 = sphi 0, %s306
      %s308 = sphi 0, %s306
      %s309 = sphi 0, %s308
      %s323 = sphi 0, %s309
      %s327 = sphi 0, %s327
      %s329 = sphi 0, %s327
      %s330 = sphi 0, %s329
      %s344 = sphi 0, %s330
    $region4: #{tpu_custom_call.1} parent=1 // loop_header_branch
      %34 = sbr.rel (%p32) target = $region8
    $region5: #{tpu_custom_call.1} parent=1 // loop_body
      %s36 = ssub.s32 %s31, 1
      %s37 = ssub.s32 %s31, 2
      %s38 = sadd.s32 %s31, 1
      %s40 = sadd.s32 %s39, 1
      %p43 = scmp.eq.s32.totalorder %s31, 2
      %p44 = scmp.ne.s32.totalorder %s39, %s41
      %p45 = scmp.eq.s32.totalorder %s31, 0
      %p46 = por %p44, %p45
      %p47 = scmp.ne.s32.totalorder %s39, %s41
      %p48 = scmp.eq.s32.totalorder %s36, 2
      %p49 = por %p47, %p48
      %p50 = scmp.ne.s32.totalorder %s41, %s42
      %p51 = scmp.eq.s32.totalorder %s36, 0
      %p52 = por %p50, %p51
      %p53 = scmp.ne.s32.totalorder %s41, %s42
      %p54 = scmp.eq.s32.totalorder %s37, 2
      %p55 = por %p53, %p54
      %p57 = scmp.ne.s32.totalorder %s42, %s56
      %p58 = scmp.eq.s32.totalorder %s37, 0
      %p59 = por %p57, %p58
      %s60 = ssub.s32 %s31, %s38
      %p61 = scmp.eq.s32.totalorder %s60, 0
      %s63 = sadd.s32 %s62, 1
      %s64 = scalar_select %p61, %s62, %s63
      %p67 = pneg %p61
      %p68 = scmp.eq.s32.totalorder %s31, 2
      %p69 = por %p67, %p68
      %p70 = scmp.ne.s32.totalorder %s62, %s65
      %p71 = scmp.eq.s32.totalorder %s31, 0
      %p72 = por %p70, %p71
      %p73 = scmp.ne.s32.totalorder %s62, %s65
      %p74 = scmp.eq.s32.totalorder %s36, 2
      %p75 = por %p73, %p74
      %p76 = scmp.ne.s32.totalorder %s65, %s66
      %p77 = scmp.eq.s32.totalorder %s36, 0
      %p78 = por %p76, %p77
      %p79 = scmp.ne.s32.totalorder %s65, %s66
      %p80 = scmp.eq.s32.totalorder %s37, 2
      %p81 = por %p79, %p80
      %p83 = scmp.ne.s32.totalorder %s66, %s82
      %p84 = scmp.eq.s32.totalorder %s37, 0
      %p85 = por %p83, %p84
      %s86 = ssub.s32 %s31, %s38
      %p87 = scmp.eq.s32.totalorder %s86, 0
      %s89 = sadd.s32 %s88, 1
      %s90 = scalar_select %p87, %s88, %s89
      %p93 = pneg %p87
      %p94 = scmp.eq.s32.totalorder %s31, 2
      %p95 = por %p93, %p94
      %p96 = scmp.ne.s32.totalorder %s88, %s91
      %p97 = scmp.eq.s32.totalorder %s31, 0
      %p98 = por %p96, %p97
      %p99 = scmp.ne.s32.totalorder %s88, %s91
      %p100 = scmp.eq.s32.totalorder %s36, 2
      %p101 = por %p99, %p100
      %p102 = scmp.ne.s32.totalorder %s91, %s92
      %p103 = scmp.eq.s32.totalorder %s36, 0
      %p104 = por %p102, %p103
      %p105 = scmp.ne.s32.totalorder %s91, %s92
      %p106 = scmp.eq.s32.totalorder %s37, 2
      %p107 = por %p105, %p106
      %p109 = scmp.ne.s32.totalorder %s92, %s108
      %p110 = scmp.eq.s32.totalorder %s37, 0
      %p111 = por %p109, %p110
      %s112 = ssub.s32 %s31, %s38
      %p113 = scmp.eq.s32.totalorder %s112, 0
      %s115 = sadd.s32 %s114, 1
      %s116 = scalar_select %p113, %s114, %s115
      %p119 = pneg %p113
      %p120 = scmp.eq.s32.totalorder %s31, 2
      %p121 = por %p119, %p120
      %p122 = scmp.ne.s32.totalorder %s114, %s117
      %p123 = scmp.eq.s32.totalorder %s31, 0
      %p124 = por %p122, %p123
      %p125 = scmp.ne.s32.totalorder %s114, %s117
      %p126 = scmp.eq.s32.totalorder %s36, 2
      %p127 = por %p125, %p126
      %p128 = scmp.ne.s32.totalorder %s117, %s118
      %p129 = scmp.eq.s32.totalorder %s36, 0
      %p130 = por %p128, %p129
      %p131 = scmp.ne.s32.totalorder %s117, %s118
      %p132 = scmp.eq.s32.totalorder %s37, 2
      %p133 = por %p131, %p132
      %p135 = scmp.ne.s32.totalorder %s118, %s134
      %p136 = scmp.eq.s32.totalorder %s37, 0
      %p137 = por %p135, %p136
      %s139 = sadd.s32 %s138, 1
      %p142 = scmp.eq.s32.totalorder %s31, 2
      %p143 = scmp.ne.s32.totalorder %s138, %s140
      %p144 = scmp.eq.s32.totalorder %s31, 0
      %p145 = por %p143, %p144
      %p146 = scmp.ne.s32.totalorder %s138, %s140
      %p147 = scmp.eq.s32.totalorder %s36, 2
      %p148 = por %p146, %p147
      %p149 = scmp.ne.s32.totalorder %s140, %s141
      %p150 = scmp.eq.s32.totalorder %s36, 0
      %p151 = por %p149, %p150
      %p152 = scmp.ne.s32.totalorder %s140, %s141
      %p153 = scmp.eq.s32.totalorder %s37, 2
      %p154 = por %p152, %p153
      %p156 = scmp.ne.s32.totalorder %s141, %s155
      %p157 = scmp.eq.s32.totalorder %s37, 0
      %p158 = por %p156, %p157
      %s160 = sadd.s32 %s159, 1
      %p163 = scmp.eq.s32.totalorder %s31, 2
      %p164 = scmp.ne.s32.totalorder %s159, %s161
      %p165 = scmp.eq.s32.totalorder %s31, 0
      %p166 = por %p164, %p165
      %p167 = scmp.ne.s32.totalorder %s159, %s161
      %p168 = scmp.eq.s32.totalorder %s36, 2
      %p169 = por %p167, %p168
      %p170 = scmp.ne.s32.totalorder %s161, %s162
      %p171 = scmp.eq.s32.totalorder %s36, 0
      %p172 = por %p170, %p171
      %p173 = scmp.ne.s32.totalorder %s161, %s162
      %p174 = scmp.eq.s32.totalorder %s37, 2
      %p175 = por %p173, %p174
      %p177 = scmp.ne.s32.totalorder %s162, %s176
      %p178 = scmp.eq.s32.totalorder %s37, 0
      %p179 = por %p177, %p178
      %s181 = sadd.s32 %s180, 1
      %p184 = scmp.eq.s32.totalorder %s31, 2
      %p185 = scmp.ne.s32.totalorder %s180, %s182
      %p186 = scmp.eq.s32.totalorder %s31, 0
      %p187 = por %p185, %p186
      %p188 = scmp.ne.s32.totalorder %s180, %s182
      %p189 = scmp.eq.s32.totalorder %s36, 2
      %p190 = por %p188, %p189
      %p191 = scmp.ne.s32.totalorder %s182, %s183
      %p192 = scmp.eq.s32.totalorder %s36, 0
      %p193 = por %p191, %p192
      %p194 = scmp.ne.s32.totalorder %s182, %s183
      %p195 = scmp.eq.s32.totalorder %s37, 2
      %p196 = por %p194, %p195
      %p198 = scmp.ne.s32.totalorder %s183, %s197
      %p199 = scmp.eq.s32.totalorder %s37, 0
      %p200 = por %p198, %p199
      %s202 = sadd.s32 %s201, 1
      %p205 = scmp.eq.s32.totalorder %s31, 2
      %p206 = scmp.ne.s32.totalorder %s201, %s203
      %p207 = scmp.eq.s32.totalorder %s31, 0
      %p208 = por %p206, %p207
      %p209 = scmp.ne.s32.totalorder %s201, %s203
      %p210 = scmp.eq.s32.totalorder %s36, 2
      %p211 = por %p209, %p210
      %p212 = scmp.ne.s32.totalorder %s203, %s204
      %p213 = scmp.eq.s32.totalorder %s36, 0
      %p214 = por %p212, %p213
      %p215 = scmp.ne.s32.totalorder %s203, %s204
      %p216 = scmp.eq.s32.totalorder %s37, 2
      %p217 = por %p215, %p216
      %p219 = scmp.ne.s32.totalorder %s204, %s218
      %p220 = scmp.eq.s32.totalorder %s37, 0
      %p221 = por %p219, %p220
      %s223 = sadd.s32 %s222, 1
      %p226 = scmp.eq.s32.totalorder %s31, 2
      %p227 = scmp.ne.s32.totalorder %s222, %s224
      %p228 = scmp.eq.s32.totalorder %s31, 0
      %p229 = por %p227, %p228
      %p230 = scmp.ne.s32.totalorder %s222, %s224
      %p231 = scmp.eq.s32.totalorder %s36, 2
      %p232 = por %p230, %p231
      %p233 = scmp.ne.s32.totalorder %s224, %s225
      %p234 = scmp.eq.s32.totalorder %s36, 0
      %p235 = por %p233, %p234
      %p236 = scmp.ne.s32.totalorder %s224, %s225
      %p237 = scmp.eq.s32.totalorder %s37, 2
      %p238 = por %p236, %p237
      %p240 = scmp.ne.s32.totalorder %s225, %s239
      %p241 = scmp.eq.s32.totalorder %s37, 0
      %p242 = por %p240, %p241
      %s244 = sadd.s32 %s243, 1
      %p247 = scmp.eq.s32.totalorder %s31, 2
      %p248 = scmp.ne.s32.totalorder %s243, %s245
      %p249 = scmp.eq.s32.totalorder %s31, 0
      %p250 = por %p248, %p249
      %p251 = scmp.ne.s32.totalorder %s243, %s245
      %p252 = scmp.eq.s32.totalorder %s36, 2
      %p253 = por %p251, %p252
      %p254 = scmp.ne.s32.totalorder %s245, %s246
      %p255 = scmp.eq.s32.totalorder %s36, 0
      %p256 = por %p254, %p255
      %p257 = scmp.ne.s32.totalorder %s245, %s246
      %p258 = scmp.eq.s32.totalorder %s37, 2
      %p259 = por %p257, %p258
      %p261 = scmp.ne.s32.totalorder %s246, %s260
      %p262 = scmp.eq.s32.totalorder %s37, 0
      %p263 = por %p261, %p262
      %s265 = sadd.s32 %s264, 1
      %p268 = scmp.eq.s32.totalorder %s31, 2
      %p269 = scmp.ne.s32.totalorder %s264, %s266
      %p270 = scmp.eq.s32.totalorder %s31, 0
      %p271 = por %p269, %p270
      %p272 = scmp.ne.s32.totalorder %s264, %s266
      %p273 = scmp.eq.s32.totalorder %s36, 2
      %p274 = por %p272, %p273
      %p275 = scmp.ne.s32.totalorder %s266, %s267
      %p276 = scmp.eq.s32.totalorder %s36, 0
      %p277 = por %p275, %p276
      %p278 = scmp.ne.s32.totalorder %s266, %s267
      %p279 = scmp.eq.s32.totalorder %s37, 2
      %p280 = por %p278, %p279
      %p282 = scmp.ne.s32.totalorder %s267, %s281
      %p283 = scmp.eq.s32.totalorder %s37, 0
      %p284 = por %p282, %p283
      %s286 = sadd.s32 %s285, 1
      %p289 = scmp.eq.s32.totalorder %s31, 2
      %p290 = scmp.ne.s32.totalorder %s285, %s287
      %p291 = scmp.eq.s32.totalorder %s31, 0
      %p292 = por %p290, %p291
      %p293 = scmp.ne.s32.totalorder %s285, %s287
      %p294 = scmp.eq.s32.totalorder %s36, 2
      %p295 = por %p293, %p294
      %p296 = scmp.ne.s32.totalorder %s287, %s288
      %p297 = scmp.eq.s32.totalorder %s36, 0
      %p298 = por %p296, %p297
      %p299 = scmp.ne.s32.totalorder %s287, %s288
      %p300 = scmp.eq.s32.totalorder %s37, 2
      %p301 = por %p299, %p300
      %p303 = scmp.ne.s32.totalorder %s288, %s302
      %p304 = scmp.eq.s32.totalorder %s37, 0
      %p305 = por %p303, %p304
      %s307 = sadd.s32 %s306, 1
      %p310 = scmp.eq.s32.totalorder %s31, 2
      %p311 = scmp.ne.s32.totalorder %s306, %s308
      %p312 = scmp.eq.s32.totalorder %s31, 0
      %p313 = por %p311, %p312
      %p314 = scmp.ne.s32.totalorder %s306, %s308
      %p315 = scmp.eq.s32.totalorder %s36, 2
      %p316 = por %p314, %p315
      %p317 = scmp.ne.s32.totalorder %s308, %s309
      %p318 = scmp.eq.s32.totalorder %s36, 0
      %p319 = por %p317, %p318
      %p320 = scmp.ne.s32.totalorder %s308, %s309
      %p321 = scmp.eq.s32.totalorder %s37, 2
      %p322 = por %p320, %p321
      %p324 = scmp.ne.s32.totalorder %s309, %s323
      %p325 = scmp.eq.s32.totalorder %s37, 0
      %p326 = por %p324, %p325
      %s328 = sadd.s32 %s327, 1
      %p331 = scmp.eq.s32.totalorder %s31, 2
      %p332 = scmp.ne.s32.totalorder %s327, %s329
      %p333 = scmp.eq.s32.totalorder %s31, 0
      %p334 = por %p332, %p333
      %p335 = scmp.ne.s32.totalorder %s327, %s329
      %p336 = scmp.eq.s32.totalorder %s36, 2
      %p337 = por %p335, %p336
      %p338 = scmp.ne.s32.totalorder %s329, %s330
      %p339 = scmp.eq.s32.totalorder %s36, 0
      %p340 = por %p338, %p339
      %p341 = scmp.ne.s32.totalorder %s329, %s330
      %p342 = scmp.eq.s32.totalorder %s37, 2
      %p343 = por %p341, %p342
      %p345 = scmp.ne.s32.totalorder %s330, %s344
      %p346 = scmp.eq.s32.totalorder %s37, 0
      %p347 = por %p345, %p346
      %p348 = scmp.le.s32.totalorder 1, %s31
      %p349 = scmp.lt.s32.totalorder %s31, 4
      %p350 = pnand %p348, %p349
      %p351 = pneg %p350
      // Predicated region
      $region9: #{tpu_custom_call.1} parent=5 // pred_check
        _
      $region10: #{tpu_custom_call.1} parent=5 // pred_check_branch
        %353 = sbr.rel (%p350) target = $region12
      $region11: #{tpu_custom_call.1} parent=5 // pred_region
        %s354 = ssub.s32 %s31, 1
        // Predicated region
        $region13: #{tpu_custom_call.1} parent=11 // pred_check
          %p355 = pneg %p52
        $region14: #{tpu_custom_call.1} parent=11 // pred_check_branch
          %357 = sbr.rel (%p355) target = $region16
        $region15: #{tpu_custom_call.1} parent=11 // pred_region
          %s359 = ssub.s32 256, 256
          %360 = vsyncadd [#allocation5], %s359
          %s362 = sshll.u32 [#allocation4], 4
          %s363 = int_to_ptr.vmem [resolvable:$true] %s362
          %365 = dma.hbm_to_vmem [thread:$0]  %s0, 256, %s363, [#allocation5]
        $region16: #{tpu_custom_call.1} parent=11 // pred_fallthru
          _
        // Predicated region
        $region17: #{tpu_custom_call.1} parent=11 // pred_check
          %p366 = pneg %p151
        $region18: #{tpu_custom_call.1} parent=11 // pred_check_branch
          %368 = sbr.rel (%p366) target = $region20
        $region19: #{tpu_custom_call.1} parent=11 // pred_region
          %s370 = ssub.s32 2048, 2048
          %371 = vsyncadd [#allocation11], %s370
          %s372 = sshll.u32 [#allocation12], 4
          %s373 = int_to_ptr.vmem [resolvable:$true] %s372
          %378 = dma.hbm_to_vmem [thread:$0]  %s4, 2048, %s373, [#allocation11], 64, 64, 4
        $region20: #{tpu_custom_call.1} parent=11 // pred_fallthru
          _
        // Predicated region
        $region21: #{tpu_custom_call.1} parent=11 // pred_check
          %p379 = pneg %p172
        $region22: #{tpu_custom_call.1} parent=11 // pred_check_branch
          %381 = sbr.rel (%p379) target = $region24
        $region23: #{tpu_custom_call.1} parent=11 // pred_region
          %s383 = ssub.s32 16, 16
          %384 = vsyncadd [#allocation14], %s383
          %s386 = sshll.u32 [#allocation13], 4
          %s387 = int_to_ptr.vmem [resolvable:$true] %s386
          %389 = dma.hbm_to_vmem [thread:$0]  %s5, 16, %s387, [#allocation14]
        $region24: #{tpu_custom_call.1} parent=11 // pred_fallthru
          _
        // Predicated region
        $region25: #{tpu_custom_call.1} parent=11 // pred_check
          %p390 = pneg %p193
        $region26: #{tpu_custom_call.1} parent=11 // pred_check_branch
          %392 = sbr.rel (%p390) target = $region28
        $region27: #{tpu_custom_call.1} parent=11 // pred_region
          %s394 = ssub.s32 1024, 1024
          %395 = vsyncadd [#allocation14], %s394
          %s396 = sshll.u32 [#allocation15], 4
          %s397 = int_to_ptr.vmem [resolvable:$true] %s396
          %402 = dma.hbm_to_vmem [thread:$0]  %s6, 1024, %s397, [#allocation14], 64, 64, 4
        $region28: #{tpu_custom_call.1} parent=11 // pred_fallthru
          _
        // Predicated region
        $region29: #{tpu_custom_call.1} parent=11 // pred_check
          %p403 = pneg %p214
        $region30: #{tpu_custom_call.1} parent=11 // pred_check_branch
          %405 = sbr.rel (%p403) target = $region32
        $region31: #{tpu_custom_call.1} parent=11 // pred_region
          %s407 = ssub.s32 16, 16
          %408 = vsyncadd [#allocation17], %s407
          %s410 = sshll.u32 [#allocation16], 4
          %s411 = int_to_ptr.vmem [resolvable:$true] %s410
          %413 = dma.hbm_to_vmem [thread:$0]  %s7, 16, %s411, [#allocation17]
        $region32: #{tpu_custom_call.1} parent=11 // pred_fallthru
          _
        // Predicated region
        $region33: #{tpu_custom_call.1} parent=11 // pred_check
          %p414 = pneg %p235
        $region34: #{tpu_custom_call.1} parent=11 // pred_check_branch
          %416 = sbr.rel (%p414) target = $region36
        $region35: #{tpu_custom_call.1} parent=11 // pred_region
          %s418 = ssub.s32 1024, 1024
          %419 = vsyncadd [#allocation17], %s418
          %s420 = sshll.u32 [#allocation18], 4
          %s421 = int_to_ptr.vmem [resolvable:$true] %s420
          %426 = dma.hbm_to_vmem [thread:$0]  %s8, 1024, %s421, [#allocation17], 64, 64, 4
        $region36: #{tpu_custom_call.1} parent=11 // pred_fallthru
          _
        // Predicated region
        $region37: #{tpu_custom_call.1} parent=11 // pred_check
          %p427 = pneg %p256
        $region38: #{tpu_custom_call.1} parent=11 // pred_check_branch
          %429 = sbr.rel (%p427) target = $region40
        $region39: #{tpu_custom_call.1} parent=11 // pred_region
          %s431 = ssub.s32 16, 16
          %432 = vsyncadd [#allocation20], %s431
          %s434 = sshll.u32 [#allocation19], 4
          %s435 = int_to_ptr.vmem [resolvable:$true] %s434
          %437 = dma.hbm_to_vmem [thread:$0]  %s9, 16, %s435, [#allocation20]
        $region40: #{tpu_custom_call.1} parent=11 // pred_fallthru
          _
        // Predicated region
        $region41: #{tpu_custom_call.1} parent=11 // pred_check
          %p438 = pneg %p277
        $region42: #{tpu_custom_call.1} parent=11 // pred_check_branch
          %440 = sbr.rel (%p438) target = $region44
        $region43: #{tpu_custom_call.1} parent=11 // pred_region
          %s442 = ssub.s32 1024, 1024
          %443 = vsyncadd [#allocation20], %s442
          %s444 = sshll.u32 [#allocation21], 4
          %s445 = int_to_ptr.vmem [resolvable:$true] %s444
          %450 = dma.hbm_to_vmem [thread:$0]  %s10, 1024, %s445, [#allocation20], 64, 64, 4
        $region44: #{tpu_custom_call.1} parent=11 // pred_fallthru
          _
        // Predicated region
        $region45: #{tpu_custom_call.1} parent=11 // pred_check
          %p451 = pneg %p298
        $region46: #{tpu_custom_call.1} parent=11 // pred_check_branch
          %453 = sbr.rel (%p451) target = $region48
        $region47: #{tpu_custom_call.1} parent=11 // pred_region
          %s455 = ssub.s32 16, 16
          %456 = vsyncadd [#allocation23], %s455
          %s458 = sshll.u32 [#allocation22], 4
          %s459 = int_to_ptr.vmem [resolvable:$true] %s458
          %461 = dma.hbm_to_vmem [thread:$0]  %s11, 16, %s459, [#allocation23]
        $region48: #{tpu_custom_call.1} parent=11 // pred_fallthru
          _
        // Predicated region
        $region49: #{tpu_custom_call.1} parent=11 // pred_check
          %p462 = pneg %p319
        $region50: #{tpu_custom_call.1} parent=11 // pred_check_branch
          %464 = sbr.rel (%p462) target = $region52
        $region51: #{tpu_custom_call.1} parent=11 // pred_region
          %s466 = ssub.s32 128, 128
          %467 = vsyncadd [#allocation23], %s466
          %s469 = sshll.u32 [#allocation24], 4
          %s470 = int_to_ptr.vmem [resolvable:$true] %s469
          %472 = dma.hbm_to_vmem [thread:$0]  %s12, 128, %s470, [#allocation23]
        $region52: #{tpu_custom_call.1} parent=11 // pred_fallthru
          _
      $region12: #{tpu_custom_call.1} parent=5 // pred_fallthru
        _
      %p473 = scmp.lt.s32.totalorder %s31, 3
      // Predicated region
      $region53: #{tpu_custom_call.1} parent=5 // pred_check
        %p474 = pneg %p473
      $region54: #{tpu_custom_call.1} parent=5 // pred_check_branch
        %476 = sbr.rel (%p474) target = $region56
      $region55: #{tpu_custom_call.1} parent=5 // pred_region
        // Predicated region
        $region57: #{tpu_custom_call.1} parent=55 // pred_check
          %p477 = pneg %p72
        $region58: #{tpu_custom_call.1} parent=55 // pred_check_branch
          %479 = sbr.rel (%p477) target = $region60
        $region59: #{tpu_custom_call.1} parent=55 // pred_region
          %s480 = sand.u32 %s31, 1
          %s481 = scalar_lea.sflag [#allocation8], %s480
          %s482 = sand.u32 %s62, 1
          %s483 = smul.addr %s482, 1024
          %s484 = scalar_lea.vmem [#allocation7], %s483
          %s486 = ssub.s32 16384, 16384
          %487 = vsyncadd %s481, %s486
          %s488 = smul.addr %s31, 256
          %s489 = smul.addr %s488, 64
          %s490 = scalar_lea.hbm %s1, %s489
          %s491 = sshll.u32 %s484, 4
          %s492 = int_to_ptr.vmem [resolvable:$true] %s491
          %497 = dma.hbm_to_vmem [thread:$0]  %s490, 16384, %s492, %s481, 512, 512, 32
        $region60: #{tpu_custom_call.1} parent=55 // pred_fallthru
          _
        // Predicated region
        $region61: #{tpu_custom_call.1} parent=55 // pred_check
          %p498 = pneg %p98
        $region62: #{tpu_custom_call.1} parent=55 // pred_check_branch
          %500 = sbr.rel (%p498) target = $region64
        $region63: #{tpu_custom_call.1} parent=55 // pred_region
          %s501 = sand.u32 %s31, 1
          %s502 = scalar_lea.sflag [#allocation8], %s501
          %s503 = sand.u32 %s88, 1
          %s504 = smul.addr %s503, 1024
          %s505 = scalar_lea.vmem [#allocation9], %s504
          %s507 = ssub.s32 16384, 16384
          %508 = vsyncadd %s502, %s507
          %s509 = smul.addr %s31, 256
          %s510 = smul.addr %s509, 64
          %s511 = scalar_lea.hbm %s2, %s510
          %s512 = sshll.u32 %s505, 4
          %s513 = int_to_ptr.vmem [resolvable:$true] %s512
          %518 = dma.hbm_to_vmem [thread:$0]  %s511, 16384, %s513, %s502, 512, 512, 32
        $region64: #{tpu_custom_call.1} parent=55 // pred_fallthru
          _
        // Predicated region
        $region65: #{tpu_custom_call.1} parent=55 // pred_check
          %p519 = pneg %p124
        $region66: #{tpu_custom_call.1} parent=55 // pred_check_branch
          %521 = sbr.rel (%p519) target = $region68
        $region67: #{tpu_custom_call.1} parent=55 // pred_region
          %s522 = sand.u32 %s31, 1
          %s523 = scalar_lea.sflag [#allocation11], %s522
          %s524 = sand.u32 %s114, 1
          %s525 = smul.addr %s524, 8
          %s526 = scalar_lea.vmem [#allocation10], %s525
          %s528 = ssub.s32 128, 128
          %529 = vsyncadd %s523, %s528
          %s530 = smul.addr %s31, 8
          %s531 = smul.addr %s530, 16
          %s532 = scalar_lea.hbm %s3, %s531
          %s534 = sshll.u32 %s526, 4
          %s535 = int_to_ptr.vmem [resolvable:$true] %s534
          %537 = dma.hbm_to_vmem [thread:$0]  %s532, 128, %s535, %s523
        $region68: #{tpu_custom_call.1} parent=55 // pred_fallthru
          _
      $region56: #{tpu_custom_call.1} parent=5 // pred_fallthru
        _
      %p538 = scmp.le.s32.totalorder 1, %s31
      %p539 = scmp.lt.s32.totalorder %s31, 4
      %p540 = pnand %p538, %p539
      %p541 = pneg %p540
      // Predicated region
      $region69: #{tpu_custom_call.1} parent=5 // pred_check
        _
      $region70: #{tpu_custom_call.1} parent=5 // pred_check_branch
        %543 = sbr.rel (%p540) target = $region72
      $region71: #{tpu_custom_call.1} parent=5 // pred_region
        %s544 = ssub.s32 %s31, 1
        // Predicated region
        $region73: #{tpu_custom_call.1} parent=71 // pred_check
          %p545 = pneg %p52
        $region74: #{tpu_custom_call.1} parent=71 // pred_check_branch
          %547 = sbr.rel (%p545) target = $region76
        $region75: #{tpu_custom_call.1} parent=71 // pred_region
          %548 = dma.done [#allocation5], 256
        $region76: #{tpu_custom_call.1} parent=71 // pred_fallthru
          _
        %s549 = sand.u32 %s36, 1
        %s550 = scalar_lea.sflag [#allocation8], %s549
        %s551 = sand.u32 %s65, 1
        %s552 = smul.addr %s551, 1024
        %s553 = scalar_lea.vmem [#allocation7], %s552
        // Predicated region
        $region77: #{tpu_custom_call.1} parent=71 // pred_check
          %p554 = pneg %p78
        $region78: #{tpu_custom_call.1} parent=71 // pred_check_branch
          %556 = sbr.rel (%p554) target = $region80
        $region79: #{tpu_custom_call.1} parent=71 // pred_region
          %557 = dma.done %s550, 16384
        $region80: #{tpu_custom_call.1} parent=71 // pred_fallthru
          _
        %s558 = sand.u32 %s36, 1
        %s559 = scalar_lea.sflag [#allocation8], %s558
        %s560 = sand.u32 %s91, 1
        %s561 = smul.addr %s560, 1024
        %s562 = scalar_lea.vmem [#allocation9], %s561
        // Predicated region
        $region81: #{tpu_custom_call.1} parent=71 // pred_check
          %p563 = pneg %p104
        $region82: #{tpu_custom_call.1} parent=71 // pred_check_branch
          %565 = sbr.rel (%p563) target = $region84
        $region83: #{tpu_custom_call.1} parent=71 // pred_region
          %566 = dma.done %s559, 16384
        $region84: #{tpu_custom_call.1} parent=71 // pred_fallthru
          _
        %s567 = sand.u32 %s36, 1
        %s568 = scalar_lea.sflag [#allocation11], %s567
        %s569 = sand.u32 %s117, 1
        %s570 = smul.addr %s569, 8
        %s571 = scalar_lea.vmem [#allocation10], %s570
        // Predicated region
        $region85: #{tpu_custom_call.1} parent=71 // pred_check
          %p572 = pneg %p130
        $region86: #{tpu_custom_call.1} parent=71 // pred_check_branch
          %574 = sbr.rel (%p572) target = $region88
        $region87: #{tpu_custom_call.1} parent=71 // pred_region
          %575 = dma.done %s568, 128
        $region88: #{tpu_custom_call.1} parent=71 // pred_fallthru
          _
        // Predicated region
        $region89: #{tpu_custom_call.1} parent=71 // pred_check
          %p576 = pneg %p151
        $region90: #{tpu_custom_call.1} parent=71 // pred_check_branch
          %578 = sbr.rel (%p576) target = $region92
        $region91: #{tpu_custom_call.1} parent=71 // pred_region
          %579 = dma.done [#allocation11], 2048
        $region92: #{tpu_custom_call.1} parent=71 // pred_fallthru
          _
        // Predicated region
        $region93: #{tpu_custom_call.1} parent=71 // pred_check
          %p580 = pneg %p172
        $region94: #{tpu_custom_call.1} parent=71 // pred_check_branch
          %582 = sbr.rel (%p580) target = $region96
        $region95: #{tpu_custom_call.1} parent=71 // pred_region
          %583 = dma.done [#allocation14], 16
        $region96: #{tpu_custom_call.1} parent=71 // pred_fallthru
          _
        // Predicated region
        $region97: #{tpu_custom_call.1} parent=71 // pred_check
          %p584 = pneg %p193
        $region98: #{tpu_custom_call.1} parent=71 // pred_check_branch
          %586 = sbr.rel (%p584) target = $region100
        $region99: #{tpu_custom_call.1} parent=71 // pred_region
          %587 = dma.done [#allocation14], 1024
        $region100: #{tpu_custom_call.1} parent=71 // pred_fallthru
          _
        // Predicated region
        $region101: #{tpu_custom_call.1} parent=71 // pred_check
          %p588 = pneg %p214
        $region102: #{tpu_custom_call.1} parent=71 // pred_check_branch
          %590 = sbr.rel (%p588) target = $region104
        $region103: #{tpu_custom_call.1} parent=71 // pred_region
          %591 = dma.done [#allocation17], 16
        $region104: #{tpu_custom_call.1} parent=71 // pred_fallthru
          _
        // Predicated region
        $region105: #{tpu_custom_call.1} parent=71 // pred_check
          %p592 = pneg %p235
        $region106: #{tpu_custom_call.1} parent=71 // pred_check_branch
          %594 = sbr.rel (%p592) target = $region108
        $region107: #{tpu_custom_call.1} parent=71 // pred_region
          %595 = dma.done [#allocation17], 1024
        $region108: #{tpu_custom_call.1} parent=71 // pred_fallthru
          _
        // Predicated region
        $region109: #{tpu_custom_call.1} parent=71 // pred_check
          %p596 = pneg %p256
        $region110: #{tpu_custom_call.1} parent=71 // pred_check_branch
          %598 = sbr.rel (%p596) target = $region112
        $region111: #{tpu_custom_call.1} parent=71 // pred_region
          %599 = dma.done [#allocation20], 16
        $region112: #{tpu_custom_call.1} parent=71 // pred_fallthru
          _
        // Predicated region
        $region113: #{tpu_custom_call.1} parent=71 // pred_check
          %p600 = pneg %p277
        $region114: #{tpu_custom_call.1} parent=71 // pred_check_branch
          %602 = sbr.rel (%p600) target = $region116
        $region115: #{tpu_custom_call.1} parent=71 // pred_region
          %603 = dma.done [#allocation20], 1024
        $region116: #{tpu_custom_call.1} parent=71 // pred_fallthru
          _
        // Predicated region
        $region117: #{tpu_custom_call.1} parent=71 // pred_check
          %p604 = pneg %p298
        $region118: #{tpu_custom_call.1} parent=71 // pred_check_branch
          %606 = sbr.rel (%p604) target = $region120
        $region119: #{tpu_custom_call.1} parent=71 // pred_region
          %607 = dma.done [#allocation23], 16
        $region120: #{tpu_custom_call.1} parent=71 // pred_fallthru
          _
        // Predicated region
        $region121: #{tpu_custom_call.1} parent=71 // pred_check
          %p608 = pneg %p319
        $region122: #{tpu_custom_call.1} parent=71 // pred_check_branch
          %610 = sbr.rel (%p608) target = $region124
        $region123: #{tpu_custom_call.1} parent=71 // pred_region
          %611 = dma.done [#allocation23], 128
        $region124: #{tpu_custom_call.1} parent=71 // pred_fallthru
          _
        %p612 = pneg %p52
        %p613 = pneg %p49
        %s614 = sand.u32 %s36, 1
        %s615 = scalar_lea.sflag [#allocation8], %s614
        %s616 = sand.u32 %s65, 1
        %s617 = smul.addr %s616, 1024
        %s618 = scalar_lea.vmem [#allocation7], %s617
        %p619 = pneg %p78
        %p620 = pneg %p75
        %s621 = sand.u32 %s36, 1
        %s622 = scalar_lea.sflag [#allocation8], %s621
        %s623 = sand.u32 %s91, 1
        %s624 = smul.addr %s623, 1024
        %s625 = scalar_lea.vmem [#allocation9], %s624
        %p626 = pneg %p104
        %p627 = pneg %p101
        %s628 = sand.u32 %s36, 1
        %s629 = scalar_lea.sflag [#allocation11], %s628
        %s630 = sand.u32 %s117, 1
        %s631 = smul.addr %s630, 8
        %s632 = scalar_lea.vmem [#allocation10], %s631
        %p633 = pneg %p130
        %p634 = pneg %p127
        %p635 = pneg %p151
        %p636 = pneg %p148
        %p637 = pneg %p172
        %p638 = pneg %p169
        %p639 = pneg %p193
        %p640 = pneg %p190
        %p641 = pneg %p214
        %p642 = pneg %p211
        %p643 = pneg %p235
        %p644 = pneg %p232
        %p645 = pneg %p256
        %p646 = pneg %p253
        %p647 = pneg %p277
        %p648 = pneg %p274
        %p649 = pneg %p298
        %p650 = pneg %p295
        %p651 = pneg %p319
        %p652 = pneg %p316
        %p653 = pneg %p340
        %p654 = pneg %p337
        %p656 = scmp.eq.s32.totalorder %s36, 0
        // Predicated region
        $region125: #{tpu_custom_call.1} parent=71 // pred_check
          %p657 = pneg %p656
        $region126: #{tpu_custom_call.1} parent=71 // pred_check_branch
          %659 = sbr.rel (%p657) target = $region128
        $region127: #{tpu_custom_call.1} parent=71 // pred_region
          %v660 = vld [vmem:[#allocation4] sm:$0xff]
          %v661 = vld [vmem:[#allocation4 + $0x8] sm:$0xff]
          %662 = vst [vmem:[#allocation3] sm:$0xff] %v660
          %663 = vst [vmem:[#allocation3 + $0x8] sm:$0xff] %v661
        $region128: #{tpu_custom_call.1} parent=71 // pred_fallthru
          _
        %v664 = vld [vmem:[#allocation3] sm:$0xff]
        %v665 = vld [vmem:[#allocation3 + $0x8] sm:$0xff]
        %v666 = vpack.c.bf16 %v664, %v664
        %v667 = vpack.c.bf16 %v665, %v665
        %v668 = vld [vmem:[%s553] sm:$0xff]
        %v669 = vld [vmem:[%s553 + $0x8] sm:$0xff]
        %v670 = vld [vmem:[%s553 + $0x10] sm:$0xff]
        %v671 = vld [vmem:[%s553 + $0x18] sm:$0xff]
        %v672 = vld [vmem:[%s553 + $0x20] sm:$0xff]
        %v673 = vld [vmem:[%s553 + $0x28] sm:$0xff]
        %v674 = vld [vmem:[%s553 + $0x30] sm:$0xff]
        %v675 = vld [vmem:[%s553 + $0x38] sm:$0xff]
        %v676 = vld [vmem:[%s553 + $0x40] sm:$0xff]
        %v677 = vld [vmem:[%s553 + $0x48] sm:$0xff]
        %v678 = vld [vmem:[%s553 + $0x50] sm:$0xff]
        %v679 = vld [vmem:[%s553 + $0x58] sm:$0xff]
        %v680 = vld [vmem:[%s553 + $0x60] sm:$0xff]
        %v681 = vld [vmem:[%s553 + $0x68] sm:$0xff]
        %v682 = vld [vmem:[%s553 + $0x70] sm:$0xff]
        %v683 = vld [vmem:[%s553 + $0x78] sm:$0xff]
        %v684 = vld [vmem:[%s553 + $0x80] sm:$0xff]
        %v685 = vld [vmem:[%s553 + $0x88] sm:$0xff]
        %v686 = vld [vmem:[%s553 + $0x90] sm:$0xff]
        %v687 = vld [vmem:[%s553 + $0x98] sm:$0xff]
        %v688 = vld [vmem:[%s553 + $0xa0] sm:$0xff]
        %v689 = vld [vmem:[%s553 + $0xa8] sm:$0xff]
        %v690 = vld [vmem:[%s553 + $0xb0] sm:$0xff]
        %v691 = vld [vmem:[%s553 + $0xb8] sm:$0xff]
        %v692 = vld [vmem:[%s553 + $0xc0] sm:$0xff]
        %v693 = vld [vmem:[%s553 + $0xc8] sm:$0xff]
        %v694 = vld [vmem:[%s553 + $0xd0] sm:$0xff]
        %v695 = vld [vmem:[%s553 + $0xd8] sm:$0xff]
        %v696 = vld [vmem:[%s553 + $0xe0] sm:$0xff]
        %v697 = vld [vmem:[%s553 + $0xe8] sm:$0xff]
        %v698 = vld [vmem:[%s553 + $0xf0] sm:$0xff]
        %v699 = vld [vmem:[%s553 + $0xf8] sm:$0xff]
        %v700 = vld [vmem:[%s553 + $0x100] sm:$0xff]
        %v701 = vld [vmem:[%s553 + $0x108] sm:$0xff]
        %v702 = vld [vmem:[%s553 + $0x110] sm:$0xff]
        %v703 = vld [vmem:[%s553 + $0x118] sm:$0xff]
        %v704 = vld [vmem:[%s553 + $0x120] sm:$0xff]
        %v705 = vld [vmem:[%s553 + $0x128] sm:$0xff]
        %v706 = vld [vmem:[%s553 + $0x130] sm:$0xff]
        %v707 = vld [vmem:[%s553 + $0x138] sm:$0xff]
        %v708 = vld [vmem:[%s553 + $0x140] sm:$0xff]
        %v709 = vld [vmem:[%s553 + $0x148] sm:$0xff]
        %v710 = vld [vmem:[%s553 + $0x150] sm:$0xff]
        %v711 = vld [vmem:[%s553 + $0x158] sm:$0xff]
        %v712 = vld [vmem:[%s553 + $0x160] sm:$0xff]
        %v713 = vld [vmem:[%s553 + $0x168] sm:$0xff]
        %v714 = vld [vmem:[%s553 + $0x170] sm:$0xff]
        %v715 = vld [vmem:[%s553 + $0x178] sm:$0xff]
        %v716 = vld [vmem:[%s553 + $0x180] sm:$0xff]
        %v717 = vld [vmem:[%s553 + $0x188] sm:$0xff]
        %v718 = vld [vmem:[%s553 + $0x190] sm:$0xff]
        %v719 = vld [vmem:[%s553 + $0x198] sm:$0xff]
        %v720 = vld [vmem:[%s553 + $0x1a0] sm:$0xff]
        %v721 = vld [vmem:[%s553 + $0x1a8] sm:$0xff]
        %v722 = vld [vmem:[%s553 + $0x1b0] sm:$0xff]
        %v723 = vld [vmem:[%s553 + $0x1b8] sm:$0xff]
        %v724 = vld [vmem:[%s553 + $0x1c0] sm:$0xff]
        %v725 = vld [vmem:[%s553 + $0x1c8] sm:$0xff]
        %v726 = vld [vmem:[%s553 + $0x1d0] sm:$0xff]
        %v727 = vld [vmem:[%s553 + $0x1d8] sm:$0xff]
        %v728 = vld [vmem:[%s553 + $0x1e0] sm:$0xff]
        %v729 = vld [vmem:[%s553 + $0x1e8] sm:$0xff]
        %v730 = vld [vmem:[%s553 + $0x1f0] sm:$0xff]
        %v731 = vld [vmem:[%s553 + $0x1f8] sm:$0xff]
        %v732 = vld [vmem:[%s553 + $0x200] sm:$0xff]
        %v733 = vld [vmem:[%s553 + $0x208] sm:$0xff]
        %v734 = vld [vmem:[%s553 + $0x210] sm:$0xff]
        %v735 = vld [vmem:[%s553 + $0x218] sm:$0xff]
        %v736 = vld [vmem:[%s553 + $0x220] sm:$0xff]
        %v737 = vld [vmem:[%s553 + $0x228] sm:$0xff]
        %v738 = vld [vmem:[%s553 + $0x230] sm:$0xff]
        %v739 = vld [vmem:[%s553 + $0x238] sm:$0xff]
        %v740 = vld [vmem:[%s553 + $0x240] sm:$0xff]
        %v741 = vld [vmem:[%s553 + $0x248] sm:$0xff]
        %v742 = vld [vmem:[%s553 + $0x250] sm:$0xff]
        %v743 = vld [vmem:[%s553 + $0x258] sm:$0xff]
        %v744 = vld [vmem:[%s553 + $0x260] sm:$0xff]
        %v745 = vld [vmem:[%s553 + $0x268] sm:$0xff]
        %v746 = vld [vmem:[%s553 + $0x270] sm:$0xff]
        %v747 = vld [vmem:[%s553 + $0x278] sm:$0xff]
        %v748 = vld [vmem:[%s553 + $0x280] sm:$0xff]
        %v749 = vld [vmem:[%s553 + $0x288] sm:$0xff]
        %v750 = vld [vmem:[%s553 + $0x290] sm:$0xff]
        %v751 = vld [vmem:[%s553 + $0x298] sm:$0xff]
        %v752 = vld [vmem:[%s553 + $0x2a0] sm:$0xff]
        %v753 = vld [vmem:[%s553 + $0x2a8] sm:$0xff]
        %v754 = vld [vmem:[%s553 + $0x2b0] sm:$0xff]
        %v755 = vld [vmem:[%s553 + $0x2b8] sm:$0xff]
        %v756 = vld [vmem:[%s553 + $0x2c0] sm:$0xff]
        %v757 = vld [vmem:[%s553 + $0x2c8] sm:$0xff]
        %v758 = vld [vmem:[%s553 + $0x2d0] sm:$0xff]
        %v759 = vld [vmem:[%s553 + $0x2d8] sm:$0xff]
        %v760 = vld [vmem:[%s553 + $0x2e0] sm:$0xff]
        %v761 = vld [vmem:[%s553 + $0x2e8] sm:$0xff]
        %v762 = vld [vmem:[%s553 + $0x2f0] sm:$0xff]
        %v763 = vld [vmem:[%s553 + $0x2f8] sm:$0xff]
        %v764 = vld [vmem:[%s553 + $0x300] sm:$0xff]
        %v765 = vld [vmem:[%s553 + $0x308] sm:$0xff]
        %v766 = vld [vmem:[%s553 + $0x310] sm:$0xff]
        %v767 = vld [vmem:[%s553 + $0x318] sm:$0xff]
        %v768 = vld [vmem:[%s553 + $0x320] sm:$0xff]
        %v769 = vld [vmem:[%s553 + $0x328] sm:$0xff]
        %v770 = vld [vmem:[%s553 + $0x330] sm:$0xff]
        %v771 = vld [vmem:[%s553 + $0x338] sm:$0xff]
        %v772 = vld [vmem:[%s553 + $0x340] sm:$0xff]
        %v773 = vld [vmem:[%s553 + $0x348] sm:$0xff]
        %v774 = vld [vmem:[%s553 + $0x350] sm:$0xff]
        %v775 = vld [vmem:[%s553 + $0x358] sm:$0xff]
        %v776 = vld [vmem:[%s553 + $0x360] sm:$0xff]
        %v777 = vld [vmem:[%s553 + $0x368] sm:$0xff]
        %v778 = vld [vmem:[%s553 + $0x370] sm:$0xff]
        %v779 = vld [vmem:[%s553 + $0x378] sm:$0xff]
        %v780 = vld [vmem:[%s553 + $0x380] sm:$0xff]
        %v781 = vld [vmem:[%s553 + $0x388] sm:$0xff]
        %v782 = vld [vmem:[%s553 + $0x390] sm:$0xff]
        %v783 = vld [vmem:[%s553 + $0x398] sm:$0xff]
        %v784 = vld [vmem:[%s553 + $0x3a0] sm:$0xff]
        %v785 = vld [vmem:[%s553 + $0x3a8] sm:$0xff]
        %v786 = vld [vmem:[%s553 + $0x3b0] sm:$0xff]
        %v787 = vld [vmem:[%s553 + $0x3b8] sm:$0xff]
        %v788 = vld [vmem:[%s553 + $0x3c0] sm:$0xff]
        %v789 = vld [vmem:[%s553 + $0x3c8] sm:$0xff]
        %v790 = vld [vmem:[%s553 + $0x3d0] sm:$0xff]
        %v791 = vld [vmem:[%s553 + $0x3d8] sm:$0xff]
        %v792 = vld [vmem:[%s553 + $0x3e0] sm:$0xff]
        %v793 = vld [vmem:[%s553 + $0x3e8] sm:$0xff]
        %v794 = vld [vmem:[%s553 + $0x3f0] sm:$0xff]
        %v795 = vld [vmem:[%s553 + $0x3f8] sm:$0xff]
        %v796 = vld [vmem:[%s571] sm:$0xff]
        %v798 = vlaneseq
        %v799 = vshrl.u32 %v798, 7
        %v800 = vsub.s32 0, %v799
        %v801 = vrot.slane %v796, %v800
        %v802 = vlaneseq
        %v803 = vshrl.u32 %v802, 7
        %v804 = vsub.s32 1, %v803
        %v805 = vrot.slane %v796, %v804
        %v806 = vlaneseq
        %v807 = vshrl.u32 %v806, 7
        %v808 = vsub.s32 2, %v807
        %v809 = vrot.slane %v796, %v808
        %v810 = vlaneseq
        %v811 = vshrl.u32 %v810, 7
        %v812 = vsub.s32 3, %v811
        %v813 = vrot.slane %v796, %v812
        %v814 = vlaneseq
        %v815 = vshrl.u32 %v814, 7
        %v816 = vsub.s32 4, %v815
        %v817 = vrot.slane %v796, %v816
        %v818 = vlaneseq
        %v819 = vshrl.u32 %v818, 7
        %v820 = vsub.s32 5, %v819
        %v821 = vrot.slane %v796, %v820
        %v822 = vlaneseq
        %v823 = vshrl.u32 %v822, 7
        %v824 = vsub.s32 6, %v823
        %v825 = vrot.slane %v796, %v824
        %v826 = vlaneseq
        %v827 = vshrl.u32 %v826, 7
        %v828 = vsub.s32 7, %v827
        %v829 = vrot.slane %v796, %v828
        %v966 = vunpack.c.l.b16 %v668
        %v967 = vunpack.c.h.b16 %v668
        %v968 = vunpack.c.l.b16 %v669
        %v969 = vunpack.c.h.b16 %v669
        %v970 = vunpack.c.l.b16 %v670
        %v971 = vunpack.c.h.b16 %v670
        %v972 = vunpack.c.l.b16 %v671
        %v973 = vunpack.c.h.b16 %v671
        %v974 = vunpack.c.l.b16 %v672
        %v975 = vunpack.c.h.b16 %v672
        %v976 = vunpack.c.l.b16 %v673
        %v977 = vunpack.c.h.b16 %v673
        %v978 = vunpack.c.l.b16 %v674
        %v979 = vunpack.c.h.b16 %v674
        %v980 = vunpack.c.l.b16 %v675
        %v981 = vunpack.c.h.b16 %v675
        %v982 = vunpack.c.l.b16 %v676
        %v983 = vunpack.c.h.b16 %v676
        %v984 = vunpack.c.l.b16 %v677
        %v985 = vunpack.c.h.b16 %v677
        %v986 = vunpack.c.l.b16 %v678
        %v987 = vunpack.c.h.b16 %v678
        %v988 = vunpack.c.l.b16 %v679
        %v989 = vunpack.c.h.b16 %v679
        %v990 = vunpack.c.l.b16 %v680
        %v991 = vunpack.c.h.b16 %v680
        %v992 = vunpack.c.l.b16 %v681
        %v993 = vunpack.c.h.b16 %v681
        %v994 = vunpack.c.l.b16 %v682
        %v995 = vunpack.c.h.b16 %v682
        %v996 = vunpack.c.l.b16 %v683
        %v997 = vunpack.c.h.b16 %v683
        %v998 = vunpack.c.l.b16 %v684
        %v999 = vunpack.c.h.b16 %v684
        %v1000 = vunpack.c.l.b16 %v685
        %v1001 = vunpack.c.h.b16 %v685
        %v1002 = vunpack.c.l.b16 %v686
        %v1003 = vunpack.c.h.b16 %v686
        %v1004 = vunpack.c.l.b16 %v687
        %v1005 = vunpack.c.h.b16 %v687
        %v1006 = vunpack.c.l.b16 %v688
        %v1007 = vunpack.c.h.b16 %v688
        %v1008 = vunpack.c.l.b16 %v689
        %v1009 = vunpack.c.h.b16 %v689
        %v1010 = vunpack.c.l.b16 %v690
        %v1011 = vunpack.c.h.b16 %v690
        %v1012 = vunpack.c.l.b16 %v691
        %v1013 = vunpack.c.h.b16 %v691
        %v1014 = vunpack.c.l.b16 %v692
        %v1015 = vunpack.c.h.b16 %v692
        %v1016 = vunpack.c.l.b16 %v693
        %v1017 = vunpack.c.h.b16 %v693
        %v1018 = vunpack.c.l.b16 %v694
        %v1019 = vunpack.c.h.b16 %v694
        %v1020 = vunpack.c.l.b16 %v695
        %v1021 = vunpack.c.h.b16 %v695
        %v1022 = vunpack.c.l.b16 %v696
        %v1023 = vunpack.c.h.b16 %v696
        %v1024 = vunpack.c.l.b16 %v697
        %v1025 = vunpack.c.h.b16 %v697
        %v1026 = vunpack.c.l.b16 %v698
        %v1027 = vunpack.c.h.b16 %v698
        %v1028 = vunpack.c.l.b16 %v699
        %v1029 = vunpack.c.h.b16 %v699
        %v1030 = vunpack.c.l.b16 %v700
        %v1031 = vunpack.c.h.b16 %v700
        %v1032 = vunpack.c.l.b16 %v701
        %v1033 = vunpack.c.h.b16 %v701
        %v1034 = vunpack.c.l.b16 %v702
        %v1035 = vunpack.c.h.b16 %v702
        %v1036 = vunpack.c.l.b16 %v703
        %v1037 = vunpack.c.h.b16 %v703
        %v1038 = vunpack.c.l.b16 %v704
        %v1039 = vunpack.c.h.b16 %v704
        %v1040 = vunpack.c.l.b16 %v705
        %v1041 = vunpack.c.h.b16 %v705
        %v1042 = vunpack.c.l.b16 %v706
        %v1043 = vunpack.c.h.b16 %v706
        %v1044 = vunpack.c.l.b16 %v707
        %v1045 = vunpack.c.h.b16 %v707
        %v1046 = vunpack.c.l.b16 %v708
        %v1047 = vunpack.c.h.b16 %v708
        %v1048 = vunpack.c.l.b16 %v709
        %v1049 = vunpack.c.h.b16 %v709
        %v1050 = vunpack.c.l.b16 %v710
        %v1051 = vunpack.c.h.b16 %v710
        %v1052 = vunpack.c.l.b16 %v711
        %v1053 = vunpack.c.h.b16 %v711
        %v1054 = vunpack.c.l.b16 %v712
        %v1055 = vunpack.c.h.b16 %v712
        %v1056 = vunpack.c.l.b16 %v713
        %v1057 = vunpack.c.h.b16 %v713
        %v1058 = vunpack.c.l.b16 %v714
        %v1059 = vunpack.c.h.b16 %v714
        %v1060 = vunpack.c.l.b16 %v715
        %v1061 = vunpack.c.h.b16 %v715
        %v1062 = vunpack.c.l.b16 %v716
        %v1063 = vunpack.c.h.b16 %v716
        %v1064 = vunpack.c.l.b16 %v717
        %v1065 = vunpack.c.h.b16 %v717
        %v1066 = vunpack.c.l.b16 %v718
        %v1067 = vunpack.c.h.b16 %v718
        %v1068 = vunpack.c.l.b16 %v719
        %v1069 = vunpack.c.h.b16 %v719
        %v1070 = vunpack.c.l.b16 %v720
        %v1071 = vunpack.c.h.b16 %v720
        %v1072 = vunpack.c.l.b16 %v721
        %v1073 = vunpack.c.h.b16 %v721
        %v1074 = vunpack.c.l.b16 %v722
        %v1075 = vunpack.c.h.b16 %v722
        %v1076 = vunpack.c.l.b16 %v723
        %v1077 = vunpack.c.h.b16 %v723
        %v1078 = vunpack.c.l.b16 %v724
        %v1079 = vunpack.c.h.b16 %v724
        %v1080 = vunpack.c.l.b16 %v725
        %v1081 = vunpack.c.h.b16 %v725
        %v1082 = vunpack.c.l.b16 %v726
        %v1083 = vunpack.c.h.b16 %v726
        %v1084 = vunpack.c.l.b16 %v727
        %v1085 = vunpack.c.h.b16 %v727
        %v1086 = vunpack.c.l.b16 %v728
        %v1087 = vunpack.c.h.b16 %v728
        %v1088 = vunpack.c.l.b16 %v729
        %v1089 = vunpack.c.h.b16 %v729
        %v1090 = vunpack.c.l.b16 %v730
        %v1091 = vunpack.c.h.b16 %v730
        %v1092 = vunpack.c.l.b16 %v731
        %v1093 = vunpack.c.h.b16 %v731
        %v1094 = vunpack.c.l.b16 %v732
        %v1095 = vunpack.c.h.b16 %v732
        %v1096 = vunpack.c.l.b16 %v733
        %v1097 = vunpack.c.h.b16 %v733
        %v1098 = vunpack.c.l.b16 %v734
        %v1099 = vunpack.c.h.b16 %v734
        %v1100 = vunpack.c.l.b16 %v735
        %v1101 = vunpack.c.h.b16 %v735
        %v1102 = vunpack.c.l.b16 %v736
        %v1103 = vunpack.c.h.b16 %v736
        %v1104 = vunpack.c.l.b16 %v737
        %v1105 = vunpack.c.h.b16 %v737
        %v1106 = vunpack.c.l.b16 %v738
        %v1107 = vunpack.c.h.b16 %v738
        %v1108 = vunpack.c.l.b16 %v739
        %v1109 = vunpack.c.h.b16 %v739
        %v1110 = vunpack.c.l.b16 %v740
        %v1111 = vunpack.c.h.b16 %v740
        %v1112 = vunpack.c.l.b16 %v741
        %v1113 = vunpack.c.h.b16 %v741
        %v1114 = vunpack.c.l.b16 %v742
        %v1115 = vunpack.c.h.b16 %v742
        %v1116 = vunpack.c.l.b16 %v743
        %v1117 = vunpack.c.h.b16 %v743
        %v1118 = vunpack.c.l.b16 %v744
        %v1119 = vunpack.c.h.b16 %v744
        %v1120 = vunpack.c.l.b16 %v745
        %v1121 = vunpack.c.h.b16 %v745
        %v1122 = vunpack.c.l.b16 %v746
        %v1123 = vunpack.c.h.b16 %v746
        %v1124 = vunpack.c.l.b16 %v747
        %v1125 = vunpack.c.h.b16 %v747
        %v1126 = vunpack.c.l.b16 %v748
        %v1127 = vunpack.c.h.b16 %v748
        %v1128 = vunpack.c.l.b16 %v749
        %v1129 = vunpack.c.h.b16 %v749
        %v1130 = vunpack.c.l.b16 %v750
        %v1131 = vunpack.c.h.b16 %v750
        %v1132 = vunpack.c.l.b16 %v751
        %v1133 = vunpack.c.h.b16 %v751
        %v1134 = vunpack.c.l.b16 %v752
        %v1135 = vunpack.c.h.b16 %v752
        %v1136 = vunpack.c.l.b16 %v753
        %v1137 = vunpack.c.h.b16 %v753
        %v1138 = vunpack.c.l.b16 %v754
        %v1139 = vunpack.c.h.b16 %v754
        %v1140 = vunpack.c.l.b16 %v755
        %v1141 = vunpack.c.h.b16 %v755
        %v1142 = vunpack.c.l.b16 %v756
        %v1143 = vunpack.c.h.b16 %v756
        %v1144 = vunpack.c.l.b16 %v757
        %v1145 = vunpack.c.h.b16 %v757
        %v1146 = vunpack.c.l.b16 %v758
        %v1147 = vunpack.c.h.b16 %v758
        %v1148 = vunpack.c.l.b16 %v759
        %v1149 = vunpack.c.h.b16 %v759
        %v1150 = vunpack.c.l.b16 %v760
        %v1151 = vunpack.c.h.b16 %v760
        %v1152 = vunpack.c.l.b16 %v761
        %v1153 = vunpack.c.h.b16 %v761
        %v1154 = vunpack.c.l.b16 %v762
        %v1155 = vunpack.c.h.b16 %v762
        %v1156 = vunpack.c.l.b16 %v763
        %v1157 = vunpack.c.h.b16 %v763
        %v1158 = vunpack.c.l.b16 %v764
        %v1159 = vunpack.c.h.b16 %v764
        %v1160 = vunpack.c.l.b16 %v765
        %v1161 = vunpack.c.h.b16 %v765
        %v1162 = vunpack.c.l.b16 %v766
        %v1163 = vunpack.c.h.b16 %v766
        %v1164 = vunpack.c.l.b16 %v767
        %v1165 = vunpack.c.h.b16 %v767
        %v1166 = vunpack.c.l.b16 %v768
        %v1167 = vunpack.c.h.b16 %v768
        %v1168 = vunpack.c.l.b16 %v769
        %v1169 = vunpack.c.h.b16 %v769
        %v1170 = vunpack.c.l.b16 %v770
        %v1171 = vunpack.c.h.b16 %v770
        %v1172 = vunpack.c.l.b16 %v771
        %v1173 = vunpack.c.h.b16 %v771
        %v1174 = vunpack.c.l.b16 %v772
        %v1175 = vunpack.c.h.b16 %v772
        %v1176 = vunpack.c.l.b16 %v773
        %v1177 = vunpack.c.h.b16 %v773
        %v1178 = vunpack.c.l.b16 %v774
        %v1179 = vunpack.c.h.b16 %v774
        %v1180 = vunpack.c.l.b16 %v775
        %v1181 = vunpack.c.h.b16 %v775
        %v1182 = vunpack.c.l.b16 %v776
        %v1183 = vunpack.c.h.b16 %v776
        %v1184 = vunpack.c.l.b16 %v777
        %v1185 = vunpack.c.h.b16 %v777
        %v1186 = vunpack.c.l.b16 %v778
        %v1187 = vunpack.c.h.b16 %v778
        %v1188 = vunpack.c.l.b16 %v779
        %v1189 = vunpack.c.h.b16 %v779
        %v1190 = vunpack.c.l.b16 %v780
        %v1191 = vunpack.c.h.b16 %v780
        %v1192 = vunpack.c.l.b16 %v781
        %v1193 = vunpack.c.h.b16 %v781
        %v1194 = vunpack.c.l.b16 %v782
        %v1195 = vunpack.c.h.b16 %v782
        %v1196 = vunpack.c.l.b16 %v783
        %v1197 = vunpack.c.h.b16 %v783
        %v1198 = vunpack.c.l.b16 %v784
        %v1199 = vunpack.c.h.b16 %v784
        %v1200 = vunpack.c.l.b16 %v785
        %v1201 = vunpack.c.h.b16 %v785
        %v1202 = vunpack.c.l.b16 %v786
        %v1203 = vunpack.c.h.b16 %v786
        %v1204 = vunpack.c.l.b16 %v787
        %v1205 = vunpack.c.h.b16 %v787
        %v1206 = vunpack.c.l.b16 %v788
        %v1207 = vunpack.c.h.b16 %v788
        %v1208 = vunpack.c.l.b16 %v789
        %v1209 = vunpack.c.h.b16 %v789
        %v1210 = vunpack.c.l.b16 %v790
        %v1211 = vunpack.c.h.b16 %v790
        %v1212 = vunpack.c.l.b16 %v791
        %v1213 = vunpack.c.h.b16 %v791
        %v1214 = vunpack.c.l.b16 %v792
        %v1215 = vunpack.c.h.b16 %v792
        %v1216 = vunpack.c.l.b16 %v793
        %v1217 = vunpack.c.h.b16 %v793
        %v1218 = vunpack.c.l.b16 %v794
        %v1219 = vunpack.c.h.b16 %v794
        %v1220 = vunpack.c.l.b16 %v795
        %v1221 = vunpack.c.h.b16 %v795
        %v1222 = vpack.c.b16 %v974, %v966
        %v1223 = vpack.c.b16 %v975, %v967
        %v1224 = vpack.c.b16 %v976, %v968
        %v1225 = vpack.c.b16 %v977, %v969
        %v1226 = vpack.c.b16 %v978, %v970
        %v1227 = vpack.c.b16 %v979, %v971
        %v1228 = vpack.c.b16 %v980, %v972
        %v1229 = vpack.c.b16 %v981, %v973
        %v1230 = vpack.c.b16 %v990, %v982
        %v1231 = vpack.c.b16 %v991, %v983
        %v1232 = vpack.c.b16 %v992, %v984
        %v1233 = vpack.c.b16 %v993, %v985
        %v1234 = vpack.c.b16 %v994, %v986
        %v1235 = vpack.c.b16 %v995, %v987
        %v1236 = vpack.c.b16 %v996, %v988
        %v1237 = vpack.c.b16 %v997, %v989
        %v1238 = vpack.c.b16 %v1006, %v998
        %v1239 = vpack.c.b16 %v1007, %v999
        %v1240 = vpack.c.b16 %v1008, %v1000
        %v1241 = vpack.c.b16 %v1009, %v1001
        %v1242 = vpack.c.b16 %v1010, %v1002
        %v1243 = vpack.c.b16 %v1011, %v1003
        %v1244 = vpack.c.b16 %v1012, %v1004
        %v1245 = vpack.c.b16 %v1013, %v1005
        %v1246 = vpack.c.b16 %v1022, %v1014
        %v1247 = vpack.c.b16 %v1023, %v1015
        %v1248 = vpack.c.b16 %v1024, %v1016
        %v1249 = vpack.c.b16 %v1025, %v1017
        %v1250 = vpack.c.b16 %v1026, %v1018
        %v1251 = vpack.c.b16 %v1027, %v1019
        %v1252 = vpack.c.b16 %v1028, %v1020
        %v1253 = vpack.c.b16 %v1029, %v1021
        %v1254 = vpack.c.b16 %v1038, %v1030
        %v1255 = vpack.c.b16 %v1039, %v1031
        %v1256 = vpack.c.b16 %v1040, %v1032
        %v1257 = vpack.c.b16 %v1041, %v1033
        %v1258 = vpack.c.b16 %v1042, %v1034
        %v1259 = vpack.c.b16 %v1043, %v1035
        %v1260 = vpack.c.b16 %v1044, %v1036
        %v1261 = vpack.c.b16 %v1045, %v1037
        %v1262 = vpack.c.b16 %v1054, %v1046
        %v1263 = vpack.c.b16 %v1055, %v1047
        %v1264 = vpack.c.b16 %v1056, %v1048
        %v1265 = vpack.c.b16 %v1057, %v1049
        %v1266 = vpack.c.b16 %v1058, %v1050
        %v1267 = vpack.c.b16 %v1059, %v1051
        %v1268 = vpack.c.b16 %v1060, %v1052
        %v1269 = vpack.c.b16 %v1061, %v1053
        %v1270 = vpack.c.b16 %v1070, %v1062
        %v1271 = vpack.c.b16 %v1071, %v1063
        %v1272 = vpack.c.b16 %v1072, %v1064
        %v1273 = vpack.c.b16 %v1073, %v1065
        %v1274 = vpack.c.b16 %v1074, %v1066
        %v1275 = vpack.c.b16 %v1075, %v1067
        %v1276 = vpack.c.b16 %v1076, %v1068
        %v1277 = vpack.c.b16 %v1077, %v1069
        %v1278 = vpack.c.b16 %v1086, %v1078
        %v1279 = vpack.c.b16 %v1087, %v1079
        %v1280 = vpack.c.b16 %v1088, %v1080
        %v1281 = vpack.c.b16 %v1089, %v1081
        %v1282 = vpack.c.b16 %v1090, %v1082
        %v1283 = vpack.c.b16 %v1091, %v1083
        %v1284 = vpack.c.b16 %v1092, %v1084
        %v1285 = vpack.c.b16 %v1093, %v1085
        %v1286 = vpack.c.b16 %v1102, %v1094
        %v1287 = vpack.c.b16 %v1103, %v1095
        %v1288 = vpack.c.b16 %v1104, %v1096
        %v1289 = vpack.c.b16 %v1105, %v1097
        %v1290 = vpack.c.b16 %v1106, %v1098
        %v1291 = vpack.c.b16 %v1107, %v1099
        %v1292 = vpack.c.b16 %v1108, %v1100
        %v1293 = vpack.c.b16 %v1109, %v1101
        %v1294 = vpack.c.b16 %v1118, %v1110
        %v1295 = vpack.c.b16 %v1119, %v1111
        %v1296 = vpack.c.b16 %v1120, %v1112
        %v1297 = vpack.c.b16 %v1121, %v1113
        %v1298 = vpack.c.b16 %v1122, %v1114
        %v1299 = vpack.c.b16 %v1123, %v1115
        %v1300 = vpack.c.b16 %v1124, %v1116
        %v1301 = vpack.c.b16 %v1125, %v1117
        %v1302 = vpack.c.b16 %v1134, %v1126
        %v1303 = vpack.c.b16 %v1135, %v1127
        %v1304 = vpack.c.b16 %v1136, %v1128
        %v1305 = vpack.c.b16 %v1137, %v1129
        %v1306 = vpack.c.b16 %v1138, %v1130
        %v1307 = vpack.c.b16 %v1139, %v1131
        %v1308 = vpack.c.b16 %v1140, %v1132
        %v1309 = vpack.c.b16 %v1141, %v1133
        %v1310 = vpack.c.b16 %v1150, %v1142
        %v1311 = vpack.c.b16 %v1151, %v1143
        %v1312 = vpack.c.b16 %v1152, %v1144
        %v1313 = vpack.c.b16 %v1153, %v1145
        %v1314 = vpack.c.b16 %v1154, %v1146
        %v1315 = vpack.c.b16 %v1155, %v1147
        %v1316 = vpack.c.b16 %v1156, %v1148
        %v1317 = vpack.c.b16 %v1157, %v1149
        %v1318 = vpack.c.b16 %v1166, %v1158
        %v1319 = vpack.c.b16 %v1167, %v1159
        %v1320 = vpack.c.b16 %v1168, %v1160
        %v1321 = vpack.c.b16 %v1169, %v1161
        %v1322 = vpack.c.b16 %v1170, %v1162
        %v1323 = vpack.c.b16 %v1171, %v1163
        %v1324 = vpack.c.b16 %v1172, %v1164
        %v1325 = vpack.c.b16 %v1173, %v1165
        %v1326 = vpack.c.b16 %v1182, %v1174
        %v1327 = vpack.c.b16 %v1183, %v1175
        %v1328 = vpack.c.b16 %v1184, %v1176
        %v1329 = vpack.c.b16 %v1185, %v1177
        %v1330 = vpack.c.b16 %v1186, %v1178
        %v1331 = vpack.c.b16 %v1187, %v1179
        %v1332 = vpack.c.b16 %v1188, %v1180
        %v1333 = vpack.c.b16 %v1189, %v1181
        %v1334 = vpack.c.b16 %v1198, %v1190
        %v1335 = vpack.c.b16 %v1199, %v1191
        %v1336 = vpack.c.b16 %v1200, %v1192
        %v1337 = vpack.c.b16 %v1201, %v1193
        %v1338 = vpack.c.b16 %v1202, %v1194
        %v1339 = vpack.c.b16 %v1203, %v1195
        %v1340 = vpack.c.b16 %v1204, %v1196
        %v1341 = vpack.c.b16 %v1205, %v1197
        %v1342 = vpack.c.b16 %v1214, %v1206
        %v1343 = vpack.c.b16 %v1215, %v1207
        %v1344 = vpack.c.b16 %v1216, %v1208
        %v1345 = vpack.c.b16 %v1217, %v1209
        %v1346 = vpack.c.b16 %v1218, %v1210
        %v1347 = vpack.c.b16 %v1219, %v1211
        %v1348 = vpack.c.b16 %v1220, %v1212
        %v1349 = vpack.c.b16 %v1221, %v1213
        %1478 = vmatprep.subr.bf16.mxu0 %v1279
        %1479 = vmatpush1.bf16.msra.mxu0 %v1278
        %1480 = vmatprep.subr.bf16.mxu0 %v1271
        %1481 = vmatpush1.bf16.msra.mxu0 %v1270
        %1482 = vmatprep.subr.bf16.mxu0 %v1263
        %1483 = vmatpush1.bf16.msra.mxu0 %v1262
        %1484 = vmatprep.subr.bf16.mxu0 %v1255
        %1485 = vmatpush1.bf16.msra.mxu0 %v1254
        %1486 = vmatprep.subr.bf16.mxu0 %v1247
        %1487 = vmatpush1.bf16.msra.mxu0 %v1246
        %1488 = vmatprep.subr.bf16.mxu0 %v1239
        %1489 = vmatpush1.bf16.msra.mxu0 %v1238
        %1490 = vmatprep.subr.bf16.mxu0 %v1231
        %1491 = vmatpush1.bf16.msra.mxu0 %v1230
        %1492 = vmatprep.subr.bf16.mxu0 %v1223
        %1493 = vmatpush1.bf16.msra.mxu0 %v1222
        %1494 = vmatprep.subr.bf16.mxu0 %v1343
        %1495 = vmatpush2.bf16.msra.mxu0 %v1342
        %1496 = vmatprep.subr.bf16.mxu0 %v1335
        %1497 = vmatpush2.bf16.msra.mxu0 %v1334
        %1498 = vmatprep.subr.bf16.mxu0 %v1327
        %1499 = vmatpush2.bf16.msra.mxu0 %v1326
        %1500 = vmatprep.subr.bf16.mxu0 %v1319
        %1501 = vmatpush2.bf16.msra.mxu0 %v1318
        %1502 = vmatprep.subr.bf16.mxu0 %v1311
        %1503 = vmatpush2.bf16.msra.mxu0 %v1310
        %1504 = vmatprep.subr.bf16.mxu0 %v1303
        %1505 = vmatpush2.bf16.msra.mxu0 %v1302
        %1506 = vmatprep.subr.bf16.mxu0 %v1295
        %1507 = vmatpush2.bf16.msra.mxu0 %v1294
        %1508 = vmatprep.subr.bf16.mxu0 %v1287
        %1509 = vmatpush2.bf16.msra.mxu0 %v1286
        %1510 = vmatprep.mubr.bf16.mxu0 %v667
        %1511 = vmatmul.mubr.bf16.gmra.mxu0 %v666
        %v1512 = vpop.f32.mrf.mxu0
        %v1513 = vadd.f32 %v801, %v1512
        %v1514 = vpop.f32.mrf.mxu0
        %v1515 = vadd.f32 %v805, %v1514
        %v1516 = vpop.f32.mrf.mxu0
        %v1517 = vpop.f32.mrf.mxu0
        %1518 = vdwg.mxu0
        %1519 = vmatprep.subr.bf16.mxu0 %v1281
        %1520 = vmatpush1.bf16.msra.mxu0 %v1280
        %1521 = vmatprep.subr.bf16.mxu0 %v1273
        %1522 = vmatpush1.bf16.msra.mxu0 %v1272
        %1523 = vmatprep.subr.bf16.mxu0 %v1265
        %1524 = vmatpush1.bf16.msra.mxu0 %v1264
        %1525 = vmatprep.subr.bf16.mxu0 %v1257
        %1526 = vmatpush1.bf16.msra.mxu0 %v1256
        %1527 = vmatprep.subr.bf16.mxu0 %v1249
        %1528 = vmatpush1.bf16.msra.mxu0 %v1248
        %1529 = vmatprep.subr.bf16.mxu0 %v1241
        %1530 = vmatpush1.bf16.msra.mxu0 %v1240
        %1531 = vmatprep.subr.bf16.mxu0 %v1233
        %1532 = vmatpush1.bf16.msra.mxu0 %v1232
        %1533 = vmatprep.subr.bf16.mxu0 %v1225
        %1534 = vmatpush1.bf16.msra.mxu0 %v1224
        %1535 = vmatprep.subr.bf16.mxu0 %v1345
        %1536 = vmatpush2.bf16.msra.mxu0 %v1344
        %1537 = vmatprep.subr.bf16.mxu0 %v1337
        %1538 = vmatpush2.bf16.msra.mxu0 %v1336
        %1539 = vmatprep.subr.bf16.mxu0 %v1329
        %1540 = vmatpush2.bf16.msra.mxu0 %v1328
        %1541 = vmatprep.subr.bf16.mxu0 %v1321
        %1542 = vmatpush2.bf16.msra.mxu0 %v1320
        %1543 = vmatprep.subr.bf16.mxu0 %v1313
        %1544 = vmatpush2.bf16.msra.mxu0 %v1312
        %1545 = vmatprep.subr.bf16.mxu0 %v1305
        %1546 = vmatpush2.bf16.msra.mxu0 %v1304
        %1547 = vmatprep.subr.bf16.mxu0 %v1297
        %1548 = vmatpush2.bf16.msra.mxu0 %v1296
        %1549 = vmatprep.subr.bf16.mxu0 %v1289
        %1550 = vmatpush2.bf16.msra.mxu0 %v1288
        %1551 = vmatprep.mubr.bf16.mxu0 %v667
        %1552 = vmatmul.mubr.bf16.gmra.mxu0 %v666
        %v1553 = vpop.f32.mrf.mxu0
        %v1554 = vadd.f32 %v809, %v1553
        %v1555 = vpop.f32.mrf.mxu0
        %v1556 = vadd.f32 %v813, %v1555
        %v1557 = vpop.f32.mrf.mxu0
        %v1558 = vpop.f32.mrf.mxu0
        %1559 = vdwg.mxu0
        %1560 = vmatprep.subr.bf16.mxu0 %v1283
        %1561 = vmatpush1.bf16.msra.mxu0 %v1282
        %1562 = vmatprep.subr.bf16.mxu0 %v1275
        %1563 = vmatpush1.bf16.msra.mxu0 %v1274
        %1564 = vmatprep.subr.bf16.mxu0 %v1267
        %1565 = vmatpush1.bf16.msra.mxu0 %v1266
        %1566 = vmatprep.subr.bf16.mxu0 %v1259
        %1567 = vmatpush1.bf16.msra.mxu0 %v1258
        %1568 = vmatprep.subr.bf16.mxu0 %v1251
        %1569 = vmatpush1.bf16.msra.mxu0 %v1250
        %1570 = vmatprep.subr.bf16.mxu0 %v1243
        %1571 = vmatpush1.bf16.msra.mxu0 %v1242
        %1572 = vmatprep.subr.bf16.mxu0 %v1235
        %1573 = vmatpush1.bf16.msra.mxu0 %v1234
        %1574 = vmatprep.subr.bf16.mxu0 %v1227
        %1575 = vmatpush1.bf16.msra.mxu0 %v1226
        %1576 = vmatprep.subr.bf16.mxu0 %v1347
        %1577 = vmatpush2.bf16.msra.mxu0 %v1346
        %1578 = vmatprep.subr.bf16.mxu0 %v1339
        %1579 = vmatpush2.bf16.msra.mxu0 %v1338
        %1580 = vmatprep.subr.bf16.mxu0 %v1331
        %1581 = vmatpush2.bf16.msra.mxu0 %v1330
        %1582 = vmatprep.subr.bf16.mxu0 %v1323
        %1583 = vmatpush2.bf16.msra.mxu0 %v1322
        %1584 = vmatprep.subr.bf16.mxu0 %v1315
        %1585 = vmatpush2.bf16.msra.mxu0 %v1314
        %1586 = vmatprep.subr.bf16.mxu0 %v1307
        %1587 = vmatpush2.bf16.msra.mxu0 %v1306
        %1588 = vmatprep.subr.bf16.mxu0 %v1299
        %1589 = vmatpush2.bf16.msra.mxu0 %v1298
        %1590 = vmatprep.subr.bf16.mxu0 %v1291
        %1591 = vmatpush2.bf16.msra.mxu0 %v1290
        %1592 = vmatprep.mubr.bf16.mxu0 %v667
        %1593 = vmatmul.mubr.bf16.gmra.mxu0 %v666
        %v1594 = vpop.f32.mrf.mxu0
        %v1595 = vadd.f32 %v817, %v1594
        %v1596 = vpop.f32.mrf.mxu0
        %v1597 = vadd.f32 %v821, %v1596
        %v1598 = vpop.f32.mrf.mxu0
        %v1599 = vpop.f32.mrf.mxu0
        %1600 = vdwg.mxu0
        %1601 = vmatprep.subr.bf16.mxu0 %v1285
        %1602 = vmatpush1.bf16.msra.mxu0 %v1284
        %1603 = vmatprep.subr.bf16.mxu0 %v1277
        %1604 = vmatpush1.bf16.msra.mxu0 %v1276
        %1605 = vmatprep.subr.bf16.mxu0 %v1269
        %1606 = vmatpush1.bf16.msra.mxu0 %v1268
        %1607 = vmatprep.subr.bf16.mxu0 %v1261
        %1608 = vmatpush1.bf16.msra.mxu0 %v1260
        %1609 = vmatprep.subr.bf16.mxu0 %v1253
        %1610 = vmatpush1.bf16.msra.mxu0 %v1252
        %1611 = vmatprep.subr.bf16.mxu0 %v1245
        %1612 = vmatpush1.bf16.msra.mxu0 %v1244
        %1613 = vmatprep.subr.bf16.mxu0 %v1237
        %1614 = vmatpush1.bf16.msra.mxu0 %v1236
        %1615 = vmatprep.subr.bf16.mxu0 %v1229
        %1616 = vmatpush1.bf16.msra.mxu0 %v1228
        %1617 = vmatprep.subr.bf16.mxu0 %v1349
        %1618 = vmatpush2.bf16.msra.mxu0 %v1348
        %1619 = vmatprep.subr.bf16.mxu0 %v1341
        %1620 = vmatpush2.bf16.msra.mxu0 %v1340
        %1621 = vmatprep.subr.bf16.mxu0 %v1333
        %1622 = vmatpush2.bf16.msra.mxu0 %v1332
        %1623 = vmatprep.subr.bf16.mxu0 %v1325
        %1624 = vmatpush2.bf16.msra.mxu0 %v1324
        %1625 = vmatprep.subr.bf16.mxu0 %v1317
        %1626 = vmatpush2.bf16.msra.mxu0 %v1316
        %1627 = vmatprep.subr.bf16.mxu0 %v1309
        %1628 = vmatpush2.bf16.msra.mxu0 %v1308
        %1629 = vmatprep.subr.bf16.mxu0 %v1301
        %1630 = vmatpush2.bf16.msra.mxu0 %v1300
        %1631 = vmatprep.subr.bf16.mxu0 %v1293
        %1632 = vmatpush2.bf16.msra.mxu0 %v1292
        %1633 = vmatprep.mubr.bf16.mxu0 %v667
        %1634 = vmatmul.mubr.bf16.gmra.mxu0 %v666
        %v1635 = vpop.f32.mrf.mxu0
        %v1636 = vadd.f32 %v825, %v1635
        %v1637 = vpop.f32.mrf.mxu0
        %v1638 = vadd.f32 %v829, %v1637
        %v1639 = vpop.f32.mrf.mxu0
        %v1640 = vpop.f32.mrf.mxu0
        %1641 = vdwg.mxu0
        %1642 = vst [vmem:[#allocation2] sm:$0xff] %v1513
        %1643 = vst [vmem:[#allocation2 + $0x8] sm:$0xff] %v1515
        %1644 = vst [vmem:[#allocation2 + $0x10] sm:$0xff] %v1554
        %1645 = vst [vmem:[#allocation2 + $0x18] sm:$0xff] %v1556
        %1646 = vst [vmem:[#allocation2 + $0x20] sm:$0xff] %v1595
        %1647 = vst [vmem:[#allocation2 + $0x28] sm:$0xff] %v1597
        %1648 = vst [vmem:[#allocation2 + $0x30] sm:$0xff] %v1636
        %1649 = vst [vmem:[#allocation2 + $0x38] sm:$0xff] %v1638
        %v1650 = vld [vmem:[#allocation2] ss:$8 sm:$0xf]
        %v1651 = vld [vmem:[#allocation2] ss:$8 sm:$0xf0]
        %v1652 = vor.u32 %v1650, %v1651
        %v1653 = vld [vmem:[%s562] sm:$0xff]
        %v1654 = vld [vmem:[%s562 + $0x8] sm:$0xff]
        %v1655 = vld [vmem:[%s562 + $0x10] sm:$0xff]
        %v1656 = vld [vmem:[%s562 + $0x18] sm:$0xff]
        %v1657 = vld [vmem:[%s562 + $0x20] sm:$0xff]
        %v1658 = vld [vmem:[%s562 + $0x28] sm:$0xff]
        %v1659 = vld [vmem:[%s562 + $0x30] sm:$0xff]
        %v1660 = vld [vmem:[%s562 + $0x38] sm:$0xff]
        %v1661 = vld [vmem:[%s562 + $0x40] sm:$0xff]
        %v1662 = vld [vmem:[%s562 + $0x48] sm:$0xff]
        %v1663 = vld [vmem:[%s562 + $0x50] sm:$0xff]
        %v1664 = vld [vmem:[%s562 + $0x58] sm:$0xff]
        %v1665 = vld [vmem:[%s562 + $0x60] sm:$0xff]
        %v1666 = vld [vmem:[%s562 + $0x68] sm:$0xff]
        %v1667 = vld [vmem:[%s562 + $0x70] sm:$0xff]
        %v1668 = vld [vmem:[%s562 + $0x78] sm:$0xff]
        %v1669 = vld [vmem:[%s562 + $0x80] sm:$0xff]
        %v1670 = vld [vmem:[%s562 + $0x88] sm:$0xff]
        %v1671 = vld [vmem:[%s562 + $0x90] sm:$0xff]
        %v1672 = vld [vmem:[%s562 + $0x98] sm:$0xff]
        %v1673 = vld [vmem:[%s562 + $0xa0] sm:$0xff]
        %v1674 = vld [vmem:[%s562 + $0xa8] sm:$0xff]
        %v1675 = vld [vmem:[%s562 + $0xb0] sm:$0xff]
        %v1676 = vld [vmem:[%s562 + $0xb8] sm:$0xff]
        %v1677 = vld [vmem:[%s562 + $0xc0] sm:$0xff]
        %v1678 = vld [vmem:[%s562 + $0xc8] sm:$0xff]
        %v1679 = vld [vmem:[%s562 + $0xd0] sm:$0xff]
        %v1680 = vld [vmem:[%s562 + $0xd8] sm:$0xff]
        %v1681 = vld [vmem:[%s562 + $0xe0] sm:$0xff]
        %v1682 = vld [vmem:[%s562 + $0xe8] sm:$0xff]
        %v1683 = vld [vmem:[%s562 + $0xf0] sm:$0xff]
        %v1684 = vld [vmem:[%s562 + $0xf8] sm:$0xff]
        %v1685 = vld [vmem:[%s562 + $0x100] sm:$0xff]
        %v1686 = vld [vmem:[%s562 + $0x108] sm:$0xff]
        %v1687 = vld [vmem:[%s562 + $0x110] sm:$0xff]
        %v1688 = vld [vmem:[%s562 + $0x118] sm:$0xff]
        %v1689 = vld [vmem:[%s562 + $0x120] sm:$0xff]
        %v1690 = vld [vmem:[%s562 + $0x128] sm:$0xff]
        %v1691 = vld [vmem:[%s562 + $0x130] sm:$0xff]
        %v1692 = vld [vmem:[%s562 + $0x138] sm:$0xff]
        %v1693 = vld [vmem:[%s562 + $0x140] sm:$0xff]
        %v1694 = vld [vmem:[%s562 + $0x148] sm:$0xff]
        %v1695 = vld [vmem:[%s562 + $0x150] sm:$0xff]
        %v1696 = vld [vmem:[%s562 + $0x158] sm:$0xff]
        %v1697 = vld [vmem:[%s562 + $0x160] sm:$0xff]
        %v1698 = vld [vmem:[%s562 + $0x168] sm:$0xff]
        %v1699 = vld [vmem:[%s562 + $0x170] sm:$0xff]
        %v1700 = vld [vmem:[%s562 + $0x178] sm:$0xff]
        %v1701 = vld [vmem:[%s562 + $0x180] sm:$0xff]
        %v1702 = vld [vmem:[%s562 + $0x188] sm:$0xff]
        %v1703 = vld [vmem:[%s562 + $0x190] sm:$0xff]
        %v1704 = vld [vmem:[%s562 + $0x198] sm:$0xff]
        %v1705 = vld [vmem:[%s562 + $0x1a0] sm:$0xff]
        %v1706 = vld [vmem:[%s562 + $0x1a8] sm:$0xff]
        %v1707 = vld [vmem:[%s562 + $0x1b0] sm:$0xff]
        %v1708 = vld [vmem:[%s562 + $0x1b8] sm:$0xff]
        %v1709 = vld [vmem:[%s562 + $0x1c0] sm:$0xff]
        %v1710 = vld [vmem:[%s562 + $0x1c8] sm:$0xff]
        %v1711 = vld [vmem:[%s562 + $0x1d0] sm:$0xff]
        %v1712 = vld [vmem:[%s562 + $0x1d8] sm:$0xff]
        %v1713 = vld [vmem:[%s562 + $0x1e0] sm:$0xff]
        %v1714 = vld [vmem:[%s562 + $0x1e8] sm:$0xff]
        %v1715 = vld [vmem:[%s562 + $0x1f0] sm:$0xff]
        %v1716 = vld [vmem:[%s562 + $0x1f8] sm:$0xff]
        %v1717 = vld [vmem:[%s562 + $0x200] sm:$0xff]
        %v1718 = vld [vmem:[%s562 + $0x208] sm:$0xff]
        %v1719 = vld [vmem:[%s562 + $0x210] sm:$0xff]
        %v1720 = vld [vmem:[%s562 + $0x218] sm:$0xff]
        %v1721 = vld [vmem:[%s562 + $0x220] sm:$0xff]
        %v1722 = vld [vmem:[%s562 + $0x228] sm:$0xff]
        %v1723 = vld [vmem:[%s562 + $0x230] sm:$0xff]
        %v1724 = vld [vmem:[%s562 + $0x238] sm:$0xff]
        %v1725 = vld [vmem:[%s562 + $0x240] sm:$0xff]
        %v1726 = vld [vmem:[%s562 + $0x248] sm:$0xff]
        %v1727 = vld [vmem:[%s562 + $0x250] sm:$0xff]
        %v1728 = vld [vmem:[%s562 + $0x258] sm:$0xff]
        %v1729 = vld [vmem:[%s562 + $0x260] sm:$0xff]
        %v1730 = vld [vmem:[%s562 + $0x268] sm:$0xff]
        %v1731 = vld [vmem:[%s562 + $0x270] sm:$0xff]
        %v1732 = vld [vmem:[%s562 + $0x278] sm:$0xff]
        %v1733 = vld [vmem:[%s562 + $0x280] sm:$0xff]
        %v1734 = vld [vmem:[%s562 + $0x288] sm:$0xff]
        %v1735 = vld [vmem:[%s562 + $0x290] sm:$0xff]
        %v1736 = vld [vmem:[%s562 + $0x298] sm:$0xff]
        %v1737 = vld [vmem:[%s562 + $0x2a0] sm:$0xff]
        %v1738 = vld [vmem:[%s562 + $0x2a8] sm:$0xff]
        %v1739 = vld [vmem:[%s562 + $0x2b0] sm:$0xff]
        %v1740 = vld [vmem:[%s562 + $0x2b8] sm:$0xff]
        %v1741 = vld [vmem:[%s562 + $0x2c0] sm:$0xff]
        %v1742 = vld [vmem:[%s562 + $0x2c8] sm:$0xff]
        %v1743 = vld [vmem:[%s562 + $0x2d0] sm:$0xff]
        %v1744 = vld [vmem:[%s562 + $0x2d8] sm:$0xff]
        %v1745 = vld [vmem:[%s562 + $0x2e0] sm:$0xff]
        %v1746 = vld [vmem:[%s562 + $0x2e8] sm:$0xff]
        %v1747 = vld [vmem:[%s562 + $0x2f0] sm:$0xff]
        %v1748 = vld [vmem:[%s562 + $0x2f8] sm:$0xff]
        %v1749 = vld [vmem:[%s562 + $0x300] sm:$0xff]
        %v1750 = vld [vmem:[%s562 + $0x308] sm:$0xff]
        %v1751 = vld [vmem:[%s562 + $0x310] sm:$0xff]
        %v1752 = vld [vmem:[%s562 + $0x318] sm:$0xff]
        %v1753 = vld [vmem:[%s562 + $0x320] sm:$0xff]
        %v1754 = vld [vmem:[%s562 + $0x328] sm:$0xff]
        %v1755 = vld [vmem:[%s562 + $0x330] sm:$0xff]
        %v1756 = vld [vmem:[%s562 + $0x338] sm:$0xff]
        %v1757 = vld [vmem:[%s562 + $0x340] sm:$0xff]
        %v1758 = vld [vmem:[%s562 + $0x348] sm:$0xff]
        %v1759 = vld [vmem:[%s562 + $0x350] sm:$0xff]
        %v1760 = vld [vmem:[%s562 + $0x358] sm:$0xff]
        %v1761 = vld [vmem:[%s562 + $0x360] sm:$0xff]
        %v1762 = vld [vmem:[%s562 + $0x368] sm:$0xff]
        %v1763 = vld [vmem:[%s562 + $0x370] sm:$0xff]
        %v1764 = vld [vmem:[%s562 + $0x378] sm:$0xff]
        %v1765 = vld [vmem:[%s562 + $0x380] sm:$0xff]
        %v1766 = vld [vmem:[%s562 + $0x388] sm:$0xff]
        %v1767 = vld [vmem:[%s562 + $0x390] sm:$0xff]
        %v1768 = vld [vmem:[%s562 + $0x398] sm:$0xff]
        %v1769 = vld [vmem:[%s562 + $0x3a0] sm:$0xff]
        %v1770 = vld [vmem:[%s562 + $0x3a8] sm:$0xff]
        %v1771 = vld [vmem:[%s562 + $0x3b0] sm:$0xff]
        %v1772 = vld [vmem:[%s562 + $0x3b8] sm:$0xff]
        %v1773 = vld [vmem:[%s562 + $0x3c0] sm:$0xff]
        %v1774 = vld [vmem:[%s562 + $0x3c8] sm:$0xff]
        %v1775 = vld [vmem:[%s562 + $0x3d0] sm:$0xff]
        %v1776 = vld [vmem:[%s562 + $0x3d8] sm:$0xff]
        %v1777 = vld [vmem:[%s562 + $0x3e0] sm:$0xff]
        %v1778 = vld [vmem:[%s562 + $0x3e8] sm:$0xff]
        %v1779 = vld [vmem:[%s562 + $0x3f0] sm:$0xff]
        %v1780 = vld [vmem:[%s562 + $0x3f8] sm:$0xff]
        %v1909 = vunpack.c.l.b16 %v1653
        %v1910 = vunpack.c.h.b16 %v1653
        %v1911 = vunpack.c.l.b16 %v1654
        %v1912 = vunpack.c.h.b16 %v1654
        %v1913 = vunpack.c.l.b16 %v1655
        %v1914 = vunpack.c.h.b16 %v1655
        %v1915 = vunpack.c.l.b16 %v1656
        %v1916 = vunpack.c.h.b16 %v1656
        %v1917 = vunpack.c.l.b16 %v1657
        %v1918 = vunpack.c.h.b16 %v1657
        %v1919 = vunpack.c.l.b16 %v1658
        %v1920 = vunpack.c.h.b16 %v1658
        %v1921 = vunpack.c.l.b16 %v1659
        %v1922 = vunpack.c.h.b16 %v1659
        %v1923 = vunpack.c.l.b16 %v1660
        %v1924 = vunpack.c.h.b16 %v1660
        %v1925 = vunpack.c.l.b16 %v1661
        %v1926 = vunpack.c.h.b16 %v1661
        %v1927 = vunpack.c.l.b16 %v1662
        %v1928 = vunpack.c.h.b16 %v1662
        %v1929 = vunpack.c.l.b16 %v1663
        %v1930 = vunpack.c.h.b16 %v1663
        %v1931 = vunpack.c.l.b16 %v1664
        %v1932 = vunpack.c.h.b16 %v1664
        %v1933 = vunpack.c.l.b16 %v1665
        %v1934 = vunpack.c.h.b16 %v1665
        %v1935 = vunpack.c.l.b16 %v1666
        %v1936 = vunpack.c.h.b16 %v1666
        %v1937 = vunpack.c.l.b16 %v1667
        %v1938 = vunpack.c.h.b16 %v1667
        %v1939 = vunpack.c.l.b16 %v1668
        %v1940 = vunpack.c.h.b16 %v1668
        %v1941 = vunpack.c.l.b16 %v1669
        %v1942 = vunpack.c.h.b16 %v1669
        %v1943 = vunpack.c.l.b16 %v1670
        %v1944 = vunpack.c.h.b16 %v1670
        %v1945 = vunpack.c.l.b16 %v1671
        %v1946 = vunpack.c.h.b16 %v1671
        %v1947 = vunpack.c.l.b16 %v1672
        %v1948 = vunpack.c.h.b16 %v1672
        %v1949 = vunpack.c.l.b16 %v1673
        %v1950 = vunpack.c.h.b16 %v1673
        %v1951 = vunpack.c.l.b16 %v1674
        %v1952 = vunpack.c.h.b16 %v1674
        %v1953 = vunpack.c.l.b16 %v1675
        %v1954 = vunpack.c.h.b16 %v1675
        %v1955 = vunpack.c.l.b16 %v1676
        %v1956 = vunpack.c.h.b16 %v1676
        %v1957 = vunpack.c.l.b16 %v1677
        %v1958 = vunpack.c.h.b16 %v1677
        %v1959 = vunpack.c.l.b16 %v1678
        %v1960 = vunpack.c.h.b16 %v1678
        %v1961 = vunpack.c.l.b16 %v1679
        %v1962 = vunpack.c.h.b16 %v1679
        %v1963 = vunpack.c.l.b16 %v1680
        %v1964 = vunpack.c.h.b16 %v1680
        %v1965 = vunpack.c.l.b16 %v1681
        %v1966 = vunpack.c.h.b16 %v1681
        %v1967 = vunpack.c.l.b16 %v1682
        %v1968 = vunpack.c.h.b16 %v1682
        %v1969 = vunpack.c.l.b16 %v1683
        %v1970 = vunpack.c.h.b16 %v1683
        %v1971 = vunpack.c.l.b16 %v1684
        %v1972 = vunpack.c.h.b16 %v1684
        %v1973 = vunpack.c.l.b16 %v1685
        %v1974 = vunpack.c.h.b16 %v1685
        %v1975 = vunpack.c.l.b16 %v1686
        %v1976 = vunpack.c.h.b16 %v1686
        %v1977 = vunpack.c.l.b16 %v1687
        %v1978 = vunpack.c.h.b16 %v1687
        %v1979 = vunpack.c.l.b16 %v1688
        %v1980 = vunpack.c.h.b16 %v1688
        %v1981 = vunpack.c.l.b16 %v1689
        %v1982 = vunpack.c.h.b16 %v1689
        %v1983 = vunpack.c.l.b16 %v1690
        %v1984 = vunpack.c.h.b16 %v1690
        %v1985 = vunpack.c.l.b16 %v1691
        %v1986 = vunpack.c.h.b16 %v1691
        %v1987 = vunpack.c.l.b16 %v1692
        %v1988 = vunpack.c.h.b16 %v1692
        %v1989 = vunpack.c.l.b16 %v1693
        %v1990 = vunpack.c.h.b16 %v1693
        %v1991 = vunpack.c.l.b16 %v1694
        %v1992 = vunpack.c.h.b16 %v1694
        %v1993 = vunpack.c.l.b16 %v1695
        %v1994 = vunpack.c.h.b16 %v1695
        %v1995 = vunpack.c.l.b16 %v1696
        %v1996 = vunpack.c.h.b16 %v1696
        %v1997 = vunpack.c.l.b16 %v1697
        %v1998 = vunpack.c.h.b16 %v1697
        %v1999 = vunpack.c.l.b16 %v1698
        %v2000 = vunpack.c.h.b16 %v1698
        %v2001 = vunpack.c.l.b16 %v1699
        %v2002 = vunpack.c.h.b16 %v1699
        %v2003 = vunpack.c.l.b16 %v1700
        %v2004 = vunpack.c.h.b16 %v1700
        %v2005 = vunpack.c.l.b16 %v1701
        %v2006 = vunpack.c.h.b16 %v1701
        %v2007 = vunpack.c.l.b16 %v1702
        %v2008 = vunpack.c.h.b16 %v1702
        %v2009 = vunpack.c.l.b16 %v1703
        %v2010 = vunpack.c.h.b16 %v1703
        %v2011 = vunpack.c.l.b16 %v1704
        %v2012 = vunpack.c.h.b16 %v1704
        %v2013 = vunpack.c.l.b16 %v1705
        %v2014 = vunpack.c.h.b16 %v1705
        %v2015 = vunpack.c.l.b16 %v1706
        %v2016 = vunpack.c.h.b16 %v1706
        %v2017 = vunpack.c.l.b16 %v1707
        %v2018 = vunpack.c.h.b16 %v1707
        %v2019 = vunpack.c.l.b16 %v1708
        %v2020 = vunpack.c.h.b16 %v1708
        %v2021 = vunpack.c.l.b16 %v1709
        %v2022 = vunpack.c.h.b16 %v1709
        %v2023 = vunpack.c.l.b16 %v1710
        %v2024 = vunpack.c.h.b16 %v1710
        %v2025 = vunpack.c.l.b16 %v1711
        %v2026 = vunpack.c.h.b16 %v1711
        %v2027 = vunpack.c.l.b16 %v1712
        %v2028 = vunpack.c.h.b16 %v1712
        %v2029 = vunpack.c.l.b16 %v1713
        %v2030 = vunpack.c.h.b16 %v1713
        %v2031 = vunpack.c.l.b16 %v1714
        %v2032 = vunpack.c.h.b16 %v1714
        %v2033 = vunpack.c.l.b16 %v1715
        %v2034 = vunpack.c.h.b16 %v1715
        %v2035 = vunpack.c.l.b16 %v1716
        %v2036 = vunpack.c.h.b16 %v1716
        %v2037 = vunpack.c.l.b16 %v1717
        %v2038 = vunpack.c.h.b16 %v1717
        %v2039 = vunpack.c.l.b16 %v1718
        %v2040 = vunpack.c.h.b16 %v1718
        %v2041 = vunpack.c.l.b16 %v1719
        %v2042 = vunpack.c.h.b16 %v1719
        %v2043 = vunpack.c.l.b16 %v1720
        %v2044 = vunpack.c.h.b16 %v1720
        %v2045 = vunpack.c.l.b16 %v1721
        %v2046 = vunpack.c.h.b16 %v1721
        %v2047 = vunpack.c.l.b16 %v1722
        %v2048 = vunpack.c.h.b16 %v1722
        %v2049 = vunpack.c.l.b16 %v1723
        %v2050 = vunpack.c.h.b16 %v1723
        %v2051 = vunpack.c.l.b16 %v1724
        %v2052 = vunpack.c.h.b16 %v1724
        %v2053 = vunpack.c.l.b16 %v1725
        %v2054 = vunpack.c.h.b16 %v1725
        %v2055 = vunpack.c.l.b16 %v1726
        %v2056 = vunpack.c.h.b16 %v1726
        %v2057 = vunpack.c.l.b16 %v1727
        %v2058 = vunpack.c.h.b16 %v1727
        %v2059 = vunpack.c.l.b16 %v1728
        %v2060 = vunpack.c.h.b16 %v1728
        %v2061 = vunpack.c.l.b16 %v1729
        %v2062 = vunpack.c.h.b16 %v1729
        %v2063 = vunpack.c.l.b16 %v1730
        %v2064 = vunpack.c.h.b16 %v1730
        %v2065 = vunpack.c.l.b16 %v1731
        %v2066 = vunpack.c.h.b16 %v1731
        %v2067 = vunpack.c.l.b16 %v1732
        %v2068 = vunpack.c.h.b16 %v1732
        %v2069 = vunpack.c.l.b16 %v1733
        %v2070 = vunpack.c.h.b16 %v1733
        %v2071 = vunpack.c.l.b16 %v1734
        %v2072 = vunpack.c.h.b16 %v1734
        %v2073 = vunpack.c.l.b16 %v1735
        %v2074 = vunpack.c.h.b16 %v1735
        %v2075 = vunpack.c.l.b16 %v1736
        %v2076 = vunpack.c.h.b16 %v1736
        %v2077 = vunpack.c.l.b16 %v1737
        %v2078 = vunpack.c.h.b16 %v1737
        %v2079 = vunpack.c.l.b16 %v1738
        %v2080 = vunpack.c.h.b16 %v1738
        %v2081 = vunpack.c.l.b16 %v1739
        %v2082 = vunpack.c.h.b16 %v1739
        %v2083 = vunpack.c.l.b16 %v1740
        %v2084 = vunpack.c.h.b16 %v1740
        %v2085 = vunpack.c.l.b16 %v1741
        %v2086 = vunpack.c.h.b16 %v1741
        %v2087 = vunpack.c.l.b16 %v1742
        %v2088 = vunpack.c.h.b16 %v1742
        %v2089 = vunpack.c.l.b16 %v1743
        %v2090 = vunpack.c.h.b16 %v1743
        %v2091 = vunpack.c.l.b16 %v1744
        %v2092 = vunpack.c.h.b16 %v1744
        %v2093 = vunpack.c.l.b16 %v1745
        %v2094 = vunpack.c.h.b16 %v1745
        %v2095 = vunpack.c.l.b16 %v1746
        %v2096 = vunpack.c.h.b16 %v1746
        %v2097 = vunpack.c.l.b16 %v1747
        %v2098 = vunpack.c.h.b16 %v1747
        %v2099 = vunpack.c.l.b16 %v1748
        %v2100 = vunpack.c.h.b16 %v1748
        %v2101 = vunpack.c.l.b16 %v1749
        %v2102 = vunpack.c.h.b16 %v1749
        %v2103 = vunpack.c.l.b16 %v1750
        %v2104 = vunpack.c.h.b16 %v1750
        %v2105 = vunpack.c.l.b16 %v1751
        %v2106 = vunpack.c.h.b16 %v1751
        %v2107 = vunpack.c.l.b16 %v1752
        %v2108 = vunpack.c.h.b16 %v1752
        %v2109 = vunpack.c.l.b16 %v1753
        %v2110 = vunpack.c.h.b16 %v1753
        %v2111 = vunpack.c.l.b16 %v1754
        %v2112 = vunpack.c.h.b16 %v1754
        %v2113 = vunpack.c.l.b16 %v1755
        %v2114 = vunpack.c.h.b16 %v1755
        %v2115 = vunpack.c.l.b16 %v1756
        %v2116 = vunpack.c.h.b16 %v1756
        %v2117 = vunpack.c.l.b16 %v1757
        %v2118 = vunpack.c.h.b16 %v1757
        %v2119 = vunpack.c.l.b16 %v1758
        %v2120 = vunpack.c.h.b16 %v1758
        %v2121 = vunpack.c.l.b16 %v1759
        %v2122 = vunpack.c.h.b16 %v1759
        %v2123 = vunpack.c.l.b16 %v1760
        %v2124 = vunpack.c.h.b16 %v1760
        %v2125 = vunpack.c.l.b16 %v1761
        %v2126 = vunpack.c.h.b16 %v1761
        %v2127 = vunpack.c.l.b16 %v1762
        %v2128 = vunpack.c.h.b16 %v1762
        %v2129 = vunpack.c.l.b16 %v1763
        %v2130 = vunpack.c.h.b16 %v1763
        %v2131 = vunpack.c.l.b16 %v1764
        %v2132 = vunpack.c.h.b16 %v1764
        %v2133 = vunpack.c.l.b16 %v1765
        %v2134 = vunpack.c.h.b16 %v1765
        %v2135 = vunpack.c.l.b16 %v1766
        %v2136 = vunpack.c.h.b16 %v1766
        %v2137 = vunpack.c.l.b16 %v1767
        %v2138 = vunpack.c.h.b16 %v1767
        %v2139 = vunpack.c.l.b16 %v1768
        %v2140 = vunpack.c.h.b16 %v1768
        %v2141 = vunpack.c.l.b16 %v1769
        %v2142 = vunpack.c.h.b16 %v1769
        %v2143 = vunpack.c.l.b16 %v1770
        %v2144 = vunpack.c.h.b16 %v1770
        %v2145 = vunpack.c.l.b16 %v1771
        %v2146 = vunpack.c.h.b16 %v1771
        %v2147 = vunpack.c.l.b16 %v1772
        %v2148 = vunpack.c.h.b16 %v1772
        %v2149 = vunpack.c.l.b16 %v1773
        %v2150 = vunpack.c.h.b16 %v1773
        %v2151 = vunpack.c.l.b16 %v1774
        %v2152 = vunpack.c.h.b16 %v1774
        %v2153 = vunpack.c.l.b16 %v1775
        %v2154 = vunpack.c.h.b16 %v1775
        %v2155 = vunpack.c.l.b16 %v1776
        %v2156 = vunpack.c.h.b16 %v1776
        %v2157 = vunpack.c.l.b16 %v1777
        %v2158 = vunpack.c.h.b16 %v1777
        %v2159 = vunpack.c.l.b16 %v1778
        %v2160 = vunpack.c.h.b16 %v1778
        %v2161 = vunpack.c.l.b16 %v1779
        %v2162 = vunpack.c.h.b16 %v1779
        %v2163 = vunpack.c.l.b16 %v1780
        %v2164 = vunpack.c.h.b16 %v1780
        %v2165 = vpack.c.b16 %v1917, %v1909
        %v2166 = vpack.c.b16 %v1918, %v1910
        %v2167 = vpack.c.b16 %v1919, %v1911
        %v2168 = vpack.c.b16 %v1920, %v1912
        %v2169 = vpack.c.b16 %v1921, %v1913
        %v2170 = vpack.c.b16 %v1922, %v1914
        %v2171 = vpack.c.b16 %v1923, %v1915
        %v2172 = vpack.c.b16 %v1924, %v1916
        %v2173 = vpack.c.b16 %v1933, %v1925
        %v2174 = vpack.c.b16 %v1934, %v1926
        %v2175 = vpack.c.b16 %v1935, %v1927
        %v2176 = vpack.c.b16 %v1936, %v1928
        %v2177 = vpack.c.b16 %v1937, %v1929
        %v2178 = vpack.c.b16 %v1938, %v1930
        %v2179 = vpack.c.b16 %v1939, %v1931
        %v2180 = vpack.c.b16 %v1940, %v1932
        %v2181 = vpack.c.b16 %v1949, %v1941
        %v2182 = vpack.c.b16 %v1950, %v1942
        %v2183 = vpack.c.b16 %v1951, %v1943
        %v2184 = vpack.c.b16 %v1952, %v1944
        %v2185 = vpack.c.b16 %v1953, %v1945
        %v2186 = vpack.c.b16 %v1954, %v1946
        %v2187 = vpack.c.b16 %v1955, %v1947
        %v2188 = vpack.c.b16 %v1956, %v1948
        %v2189 = vpack.c.b16 %v1965, %v1957
        %v2190 = vpack.c.b16 %v1966, %v1958
        %v2191 = vpack.c.b16 %v1967, %v1959
        %v2192 = vpack.c.b16 %v1968, %v1960
        %v2193 = vpack.c.b16 %v1969, %v1961
        %v2194 = vpack.c.b16 %v1970, %v1962
        %v2195 = vpack.c.b16 %v1971, %v1963
        %v2196 = vpack.c.b16 %v1972, %v1964
        %v2197 = vpack.c.b16 %v1981, %v1973
        %v2198 = vpack.c.b16 %v1982, %v1974
        %v2199 = vpack.c.b16 %v1983, %v1975
        %v2200 = vpack.c.b16 %v1984, %v1976
        %v2201 = vpack.c.b16 %v1985, %v1977
        %v2202 = vpack.c.b16 %v1986, %v1978
        %v2203 = vpack.c.b16 %v1987, %v1979
        %v2204 = vpack.c.b16 %v1988, %v1980
        %v2205 = vpack.c.b16 %v1997, %v1989
        %v2206 = vpack.c.b16 %v1998, %v1990
        %v2207 = vpack.c.b16 %v1999, %v1991
        %v2208 = vpack.c.b16 %v2000, %v1992
        %v2209 = vpack.c.b16 %v2001, %v1993
        %v2210 = vpack.c.b16 %v2002, %v1994
        %v2211 = vpack.c.b16 %v2003, %v1995
        %v2212 = vpack.c.b16 %v2004, %v1996
        %v2213 = vpack.c.b16 %v2013, %v2005
        %v2214 = vpack.c.b16 %v2014, %v2006
        %v2215 = vpack.c.b16 %v2015, %v2007
        %v2216 = vpack.c.b16 %v2016, %v2008
        %v2217 = vpack.c.b16 %v2017, %v2009
        %v2218 = vpack.c.b16 %v2018, %v2010
        %v2219 = vpack.c.b16 %v2019, %v2011
        %v2220 = vpack.c.b16 %v2020, %v2012
        %v2221 = vpack.c.b16 %v2029, %v2021
        %v2222 = vpack.c.b16 %v2030, %v2022
        %v2223 = vpack.c.b16 %v2031, %v2023
        %v2224 = vpack.c.b16 %v2032, %v2024
        %v2225 = vpack.c.b16 %v2033, %v2025
        %v2226 = vpack.c.b16 %v2034, %v2026
        %v2227 = vpack.c.b16 %v2035, %v2027
        %v2228 = vpack.c.b16 %v2036, %v2028
        %v2229 = vpack.c.b16 %v2045, %v2037
        %v2230 = vpack.c.b16 %v2046, %v2038
        %v2231 = vpack.c.b16 %v2047, %v2039
        %v2232 = vpack.c.b16 %v2048, %v2040
        %v2233 = vpack.c.b16 %v2049, %v2041
        %v2234 = vpack.c.b16 %v2050, %v2042
        %v2235 = vpack.c.b16 %v2051, %v2043
        %v2236 = vpack.c.b16 %v2052, %v2044
        %v2237 = vpack.c.b16 %v2061, %v2053
        %v2238 = vpack.c.b16 %v2062, %v2054
        %v2239 = vpack.c.b16 %v2063, %v2055
        %v2240 = vpack.c.b16 %v2064, %v2056
        %v2241 = vpack.c.b16 %v2065, %v2057
        %v2242 = vpack.c.b16 %v2066, %v2058
        %v2243 = vpack.c.b16 %v2067, %v2059
        %v2244 = vpack.c.b16 %v2068, %v2060
        %v2245 = vpack.c.b16 %v2077, %v2069
        %v2246 = vpack.c.b16 %v2078, %v2070
        %v2247 = vpack.c.b16 %v2079, %v2071
        %v2248 = vpack.c.b16 %v2080, %v2072
        %v2249 = vpack.c.b16 %v2081, %v2073
        %v2250 = vpack.c.b16 %v2082, %v2074
        %v2251 = vpack.c.b16 %v2083, %v2075
        %v2252 = vpack.c.b16 %v2084, %v2076
        %v2253 = vpack.c.b16 %v2093, %v2085
        %v2254 = vpack.c.b16 %v2094, %v2086
        %v2255 = vpack.c.b16 %v2095, %v2087
        %v2256 = vpack.c.b16 %v2096, %v2088
        %v2257 = vpack.c.b16 %v2097, %v2089
        %v2258 = vpack.c.b16 %v2098, %v2090
        %v2259 = vpack.c.b16 %v2099, %v2091
        %v2260 = vpack.c.b16 %v2100, %v2092
        %v2261 = vpack.c.b16 %v2109, %v2101
        %v2262 = vpack.c.b16 %v2110, %v2102
        %v2263 = vpack.c.b16 %v2111, %v2103
        %v2264 = vpack.c.b16 %v2112, %v2104
        %v2265 = vpack.c.b16 %v2113, %v2105
        %v2266 = vpack.c.b16 %v2114, %v2106
        %v2267 = vpack.c.b16 %v2115, %v2107
        %v2268 = vpack.c.b16 %v2116, %v2108
        %v2269 = vpack.c.b16 %v2125, %v2117
        %v2270 = vpack.c.b16 %v2126, %v2118
        %v2271 = vpack.c.b16 %v2127, %v2119
        %v2272 = vpack.c.b16 %v2128, %v2120
        %v2273 = vpack.c.b16 %v2129, %v2121
        %v2274 = vpack.c.b16 %v2130, %v2122
        %v2275 = vpack.c.b16 %v2131, %v2123
        %v2276 = vpack.c.b16 %v2132, %v2124
        %v2277 = vpack.c.b16 %v2141, %v2133
        %v2278 = vpack.c.b16 %v2142, %v2134
        %v2279 = vpack.c.b16 %v2143, %v2135
        %v2280 = vpack.c.b16 %v2144, %v2136
        %v2281 = vpack.c.b16 %v2145, %v2137
        %v2282 = vpack.c.b16 %v2146, %v2138
        %v2283 = vpack.c.b16 %v2147, %v2139
        %v2284 = vpack.c.b16 %v2148, %v2140
        %v2285 = vpack.c.b16 %v2157, %v2149
        %v2286 = vpack.c.b16 %v2158, %v2150
        %v2287 = vpack.c.b16 %v2159, %v2151
        %v2288 = vpack.c.b16 %v2160, %v2152
        %v2289 = vpack.c.b16 %v2161, %v2153
        %v2290 = vpack.c.b16 %v2162, %v2154
        %v2291 = vpack.c.b16 %v2163, %v2155
        %v2292 = vpack.c.b16 %v2164, %v2156
        %2421 = vmatprep.subr.bf16.mxu0 %v2222
        %2422 = vmatpush1.bf16.msra.mxu0 %v2221
        %2423 = vmatprep.subr.bf16.mxu0 %v2214
        %2424 = vmatpush1.bf16.msra.mxu0 %v2213
        %2425 = vmatprep.subr.bf16.mxu0 %v2206
        %2426 = vmatpush1.bf16.msra.mxu0 %v2205
        %2427 = vmatprep.subr.bf16.mxu0 %v2198
        %2428 = vmatpush1.bf16.msra.mxu0 %v2197
        %2429 = vmatprep.subr.bf16.mxu0 %v2190
        %2430 = vmatpush1.bf16.msra.mxu0 %v2189
        %2431 = vmatprep.subr.bf16.mxu0 %v2182
        %2432 = vmatpush1.bf16.msra.mxu0 %v2181
        %2433 = vmatprep.subr.bf16.mxu0 %v2174
        %2434 = vmatpush1.bf16.msra.mxu0 %v2173
        %2435 = vmatprep.subr.bf16.mxu0 %v2166
        %2436 = vmatpush1.bf16.msra.mxu0 %v2165
        %2437 = vmatprep.subr.bf16.mxu0 %v2286
        %2438 = vmatpush2.bf16.msra.mxu0 %v2285
        %2439 = vmatprep.subr.bf16.mxu0 %v2278
        %2440 = vmatpush2.bf16.msra.mxu0 %v2277
        %2441 = vmatprep.subr.bf16.mxu0 %v2270
        %2442 = vmatpush2.bf16.msra.mxu0 %v2269
        %2443 = vmatprep.subr.bf16.mxu0 %v2262
        %2444 = vmatpush2.bf16.msra.mxu0 %v2261
        %2445 = vmatprep.subr.bf16.mxu0 %v2254
        %2446 = vmatpush2.bf16.msra.mxu0 %v2253
        %2447 = vmatprep.subr.bf16.mxu0 %v2246
        %2448 = vmatpush2.bf16.msra.mxu0 %v2245
        %2449 = vmatprep.subr.bf16.mxu0 %v2238
        %2450 = vmatpush2.bf16.msra.mxu0 %v2237
        %2451 = vmatprep.subr.bf16.mxu0 %v2230
        %2452 = vmatpush2.bf16.msra.mxu0 %v2229
        %2453 = vmatprep.mubr.bf16.mxu0 0
        %2454 = vmatmul.mubr.bf16.gmra.mxu0 0
        %v2455 = vpop.f32.mrf.mxu0
        %v2456 = vadd.f32 0.0, %v2455
        %v2457 = vpop.f32.mrf.mxu0
        %v2458 = vadd.f32 0.0, %v2457
        %v2459 = vpop.f32.mrf.mxu0
        %v2460 = vpop.f32.mrf.mxu0
        %2461 = vdwg.mxu0
        %2462 = vmatprep.subr.bf16.mxu0 %v2224
        %2463 = vmatpush1.bf16.msra.mxu0 %v2223
        %2464 = vmatprep.subr.bf16.mxu0 %v2216
        %2465 = vmatpush1.bf16.msra.mxu0 %v2215
        %2466 = vmatprep.subr.bf16.mxu0 %v2208
        %2467 = vmatpush1.bf16.msra.mxu0 %v2207
        %2468 = vmatprep.subr.bf16.mxu0 %v2200
        %2469 = vmatpush1.bf16.msra.mxu0 %v2199
        %2470 = vmatprep.subr.bf16.mxu0 %v2192
        %2471 = vmatpush1.bf16.msra.mxu0 %v2191
        %2472 = vmatprep.subr.bf16.mxu0 %v2184
        %2473 = vmatpush1.bf16.msra.mxu0 %v2183
        %2474 = vmatprep.subr.bf16.mxu0 %v2176
        %2475 = vmatpush1.bf16.msra.mxu0 %v2175
        %2476 = vmatprep.subr.bf16.mxu0 %v2168
        %2477 = vmatpush1.bf16.msra.mxu0 %v2167
        %2478 = vmatprep.subr.bf16.mxu0 %v2288
        %2479 = vmatpush2.bf16.msra.mxu0 %v2287
        %2480 = vmatprep.subr.bf16.mxu0 %v2280
        %2481 = vmatpush2.bf16.msra.mxu0 %v2279
        %2482 = vmatprep.subr.bf16.mxu0 %v2272
        %2483 = vmatpush2.bf16.msra.mxu0 %v2271
        %2484 = vmatprep.subr.bf16.mxu0 %v2264
        %2485 = vmatpush2.bf16.msra.mxu0 %v2263
        %2486 = vmatprep.subr.bf16.mxu0 %v2256
        %2487 = vmatpush2.bf16.msra.mxu0 %v2255
        %2488 = vmatprep.subr.bf16.mxu0 %v2248
        %2489 = vmatpush2.bf16.msra.mxu0 %v2247
        %2490 = vmatprep.subr.bf16.mxu0 %v2240
        %2491 = vmatpush2.bf16.msra.mxu0 %v2239
        %2492 = vmatprep.subr.bf16.mxu0 %v2232
        %2493 = vmatpush2.bf16.msra.mxu0 %v2231
        %2494 = vmatprep.mubr.bf16.mxu0 0
        %2495 = vmatmul.mubr.bf16.gmra.mxu0 0
        %v2496 = vpop.f32.mrf.mxu0
        %v2497 = vadd.f32 0.0, %v2496
        %v2498 = vpop.f32.mrf.mxu0
        %v2499 = vadd.f32 0.0, %v2498
        %v2500 = vpop.f32.mrf.mxu0
        %v2501 = vpop.f32.mrf.mxu0
        %2502 = vdwg.mxu0
        %2503 = vmatprep.subr.bf16.mxu0 %v2226
        %2504 = vmatpush1.bf16.msra.mxu0 %v2225
        %2505 = vmatprep.subr.bf16.mxu0 %v2218
        %2506 = vmatpush1.bf16.msra.mxu0 %v2217
        %2507 = vmatprep.subr.bf16.mxu0 %v2210
        %2508 = vmatpush1.bf16.msra.mxu0 %v2209
        %2509 = vmatprep.subr.bf16.mxu0 %v2202
        %2510 = vmatpush1.bf16.msra.mxu0 %v2201
        %2511 = vmatprep.subr.bf16.mxu0 %v2194
        %2512 = vmatpush1.bf16.msra.mxu0 %v2193
        %2513 = vmatprep.subr.bf16.mxu0 %v2186
        %2514 = vmatpush1.bf16.msra.mxu0 %v2185
        %2515 = vmatprep.subr.bf16.mxu0 %v2178
        %2516 = vmatpush1.bf16.msra.mxu0 %v2177
        %2517 = vmatprep.subr.bf16.mxu0 %v2170
        %2518 = vmatpush1.bf16.msra.mxu0 %v2169
        %2519 = vmatprep.subr.bf16.mxu0 %v2290
        %2520 = vmatpush2.bf16.msra.mxu0 %v2289
        %2521 = vmatprep.subr.bf16.mxu0 %v2282
        %2522 = vmatpush2.bf16.msra.mxu0 %v2281
        %2523 = vmatprep.subr.bf16.mxu0 %v2274
        %2524 = vmatpush2.bf16.msra.mxu0 %v2273
        %2525 = vmatprep.subr.bf16.mxu0 %v2266
        %2526 = vmatpush2.bf16.msra.mxu0 %v2265
        %2527 = vmatprep.subr.bf16.mxu0 %v2258
        %2528 = vmatpush2.bf16.msra.mxu0 %v2257
        %2529 = vmatprep.subr.bf16.mxu0 %v2250
        %2530 = vmatpush2.bf16.msra.mxu0 %v2249
        %2531 = vmatprep.subr.bf16.mxu0 %v2242
        %2532 = vmatpush2.bf16.msra.mxu0 %v2241
        %2533 = vmatprep.subr.bf16.mxu0 %v2234
        %2534 = vmatpush2.bf16.msra.mxu0 %v2233
        %2535 = vmatprep.mubr.bf16.mxu0 0
        %2536 = vmatmul.mubr.bf16.gmra.mxu0 0
        %v2537 = vpop.f32.mrf.mxu0
        %v2538 = vadd.f32 0.0, %v2537
        %v2539 = vpop.f32.mrf.mxu0
        %v2540 = vadd.f32 0.0, %v2539
        %v2541 = vpop.f32.mrf.mxu0
        %v2542 = vpop.f32.mrf.mxu0
        %2543 = vdwg.mxu0
        %2544 = vmatprep.subr.bf16.mxu0 %v2228
        %2545 = vmatpush1.bf16.msra.mxu0 %v2227
        %2546 = vmatprep.subr.bf16.mxu0 %v2220
        %2547 = vmatpush1.bf16.msra.mxu0 %v2219
        %2548 = vmatprep.subr.bf16.mxu0 %v2212
        %2549 = vmatpush1.bf16.msra.mxu0 %v2211
        %2550 = vmatprep.subr.bf16.mxu0 %v2204
        %2551 = vmatpush1.bf16.msra.mxu0 %v2203
        %2552 = vmatprep.subr.bf16.mxu0 %v2196
        %2553 = vmatpush1.bf16.msra.mxu0 %v2195
        %2554 = vmatprep.subr.bf16.mxu0 %v2188
        %2555 = vmatpush1.bf16.msra.mxu0 %v2187
        %2556 = vmatprep.subr.bf16.mxu0 %v2180
        %2557 = vmatpush1.bf16.msra.mxu0 %v2179
        %2558 = vmatprep.subr.bf16.mxu0 %v2172
        %2559 = vmatpush1.bf16.msra.mxu0 %v2171
        %2560 = vmatprep.subr.bf16.mxu0 %v2292
        %2561 = vmatpush2.bf16.msra.mxu0 %v2291
        %2562 = vmatprep.subr.bf16.mxu0 %v2284
        %2563 = vmatpush2.bf16.msra.mxu0 %v2283
        %2564 = vmatprep.subr.bf16.mxu0 %v2276
        %2565 = vmatpush2.bf16.msra.mxu0 %v2275
        %2566 = vmatprep.subr.bf16.mxu0 %v2268
        %2567 = vmatpush2.bf16.msra.mxu0 %v2267
        %2568 = vmatprep.subr.bf16.mxu0 %v2260
        %2569 = vmatpush2.bf16.msra.mxu0 %v2259
        %2570 = vmatprep.subr.bf16.mxu0 %v2252
        %2571 = vmatpush2.bf16.msra.mxu0 %v2251
        %2572 = vmatprep.subr.bf16.mxu0 %v2244
        %2573 = vmatpush2.bf16.msra.mxu0 %v2243
        %2574 = vmatprep.subr.bf16.mxu0 %v2236
        %2575 = vmatpush2.bf16.msra.mxu0 %v2235
        %2576 = vmatprep.mubr.bf16.mxu0 0
        %2577 = vmatmul.mubr.bf16.gmra.mxu0 0
        %v2578 = vpop.f32.mrf.mxu0
        %v2579 = vadd.f32 0.0, %v2578
        %v2580 = vpop.f32.mrf.mxu0
        %v2581 = vadd.f32 0.0, %v2580
        %v2582 = vpop.f32.mrf.mxu0
        %v2583 = vpop.f32.mrf.mxu0
        %2584 = vdwg.mxu0
        %v2593 = vcombine.low %v2456, %v2458
        %v2594 = vcombine.low %v2497, %v2499
        %v2595 = vcombine.low %v2538, %v2540
        %v2596 = vcombine.low %v2579, %v2581
        %v2598 = vunpack.c.l.s4 1966171168
        %v2599 = vunpack.c.0.s8 %v2598
        %v2600 = vlaneseq
        %v2601 = vshrl.u32 %v2600, 7
        %v2602 = vsub.s32 %v2599, %v2601
        %v2603 = vrot.slane %v2593, %v2602
        %v2605 = vunpack.c.l.s4 1966171168
        %v2606 = vunpack.c.0.s8 %v2605
        %v2607 = vlaneseq
        %v2608 = vshrl.u32 %v2607, 7
        %v2609 = vsub.s32 %v2606, %v2608
        %v2610 = vrot.slane %v2594, %v2609
        %v2612 = vunpack.c.l.s4 1966171168
        %v2613 = vunpack.c.0.s8 %v2612
        %v2614 = vlaneseq
        %v2615 = vshrl.u32 %v2614, 7
        %v2616 = vsub.s32 %v2613, %v2615
        %v2617 = vrot.slane %v2595, %v2616
        %v2619 = vunpack.c.l.s4 1966171168
        %v2620 = vunpack.c.0.s8 %v2619
        %v2621 = vlaneseq
        %v2622 = vshrl.u32 %v2621, 7
        %v2623 = vsub.s32 %v2620, %v2622
        %v2624 = vrot.slane %v2596, %v2623
        %v2625 = vcombine.low %v2603, %v2610
        %v2626 = vcombine.low %v2617, %v2624
        %v2628 = vunpack.c.l.s4 1966171168
        %v2629 = vunpack.c.0.s8 %v2628
        %v2630 = vlaneseq
        %v2631 = vshrl.u32 %v2630, 7
        %v2632 = vsub.s32 %v2629, %v2631
        %v2633 = vrot.slane %v2625, %v2632
        %v2635 = vunpack.c.l.s4 1966171168
        %v2636 = vunpack.c.0.s8 %v2635
        %v2637 = vlaneseq
        %v2638 = vshrl.u32 %v2637, 7
        %v2639 = vsub.s32 %v2636, %v2638
        %v2640 = vrot.slane %v2626, %v2639
        %v2641 = vcombine.low %v2633, %v2640
        %v2643 = vadd.f32 %v1652, %v2641
        %v2644 = vxor.u32 %v2643, 2147483648
        %v2645 = vmul.f32 %v2644, 1.442695
        %v2646 = vpow.pop %v2645
        %v2647 = vadd.f32 %v2646, 1.0
        %v2648 = vrcp.pop %v2647
        %v2649 = vmul.f32 1.0, %v2648
        %v2651 = vrot.slane %v2643, 6
        %v2653 = vtanh.pop %v2651
        %v2655 = vrot.slane %v2649, 2
        %v2657 = vmul.f32 %v2655, 0.0
        %v2658 = vmul.f32 %v2649, %v2653
        %v2659 = vadd.f32 %v2657, %v2658
        %v2660 = vtanh.pop %v2659
        %v2661 = vrot.slane %v2649, 4
        %v2663 = vmul.f32 %v2661, %v2660
        %v2664 = vlaneseq
        %vm2665 = vcmp.ge.s32.totalorder %v2664, 0
        %vm2666 = vcmp.lt.s32.totalorder %v2664, 256
        %vm2667 = vmand %vm2665, %vm2666
        %2668 = vst.msk [vmem:[#allocation3] ss:$8 sm:$0x3] %vm2667, %v2663
        %2669 = vst.msk [vmem:[#allocation3] ss:$8 sm:$0x0] %vm2667, %v2663
        %s2670 = scalar_lea.vmem [#allocation2], 1
        %v2671 = vld [vmem:[%s2670] ss:$8 sm:$0xf]
        %v2672 = vld [vmem:[%s2670] ss:$8 sm:$0xf0]
        %v2673 = vor.u32 %v2671, %v2672
        %v2675 = vlaneseq
        %v2676 = vshrl.u32 %v2675, 7
        %v2677 = vsub.s32 0, %v2676
        %v2678 = vrot.slane %v2663, %v2677
        %v2679 = vlaneseq
        %v2680 = vshrl.u32 %v2679, 7
        %v2681 = vsub.s32 1, %v2680
        %v2682 = vrot.slane %v2663, %v2681
        %v2685 = vpack.c.bf16 %v2678, %v2678
        %v2686 = vpack.c.bf16 %v2682, %v2682
        %v2687 = vld [vmem:[%s562] sm:$0xff]
        %v2688 = vld [vmem:[%s562 + $0x8] sm:$0xff]
        %v2689 = vld [vmem:[%s562 + $0x10] sm:$0xff]
        %v2690 = vld [vmem:[%s562 + $0x18] sm:$0xff]
        %v2691 = vld [vmem:[%s562 + $0x20] sm:$0xff]
        %v2692 = vld [vmem:[%s562 + $0x28] sm:$0xff]
        %v2693 = vld [vmem:[%s562 + $0x30] sm:$0xff]
        %v2694 = vld [vmem:[%s562 + $0x38] sm:$0xff]
        %v2695 = vld [vmem:[%s562 + $0x40] sm:$0xff]
        %v2696 = vld [vmem:[%s562 + $0x48] sm:$0xff]
        %v2697 = vld [vmem:[%s562 + $0x50] sm:$0xff]
        %v2698 = vld [vmem:[%s562 + $0x58] sm:$0xff]
        %v2699 = vld [vmem:[%s562 + $0x60] sm:$0xff]
        %v2700 = vld [vmem:[%s562 + $0x68] sm:$0xff]
        %v2701 = vld [vmem:[%s562 + $0x70] sm:$0xff]
        %v2702 = vld [vmem:[%s562 + $0x78] sm:$0xff]
        %v2703 = vld [vmem:[%s562 + $0x80] sm:$0xff]
        %v2704 = vld [vmem:[%s562 + $0x88] sm:$0xff]
        %v2705 = vld [vmem:[%s562 + $0x90] sm:$0xff]
        %v2706 = vld [vmem:[%s562 + $0x98] sm:$0xff]
        %v2707 = vld [vmem:[%s562 + $0xa0] sm:$0xff]
        %v2708 = vld [vmem:[%s562 + $0xa8] sm:$0xff]
        %v2709 = vld [vmem:[%s562 + $0xb0] sm:$0xff]
        %v2710 = vld [vmem:[%s562 + $0xb8] sm:$0xff]
        %v2711 = vld [vmem:[%s562 + $0xc0] sm:$0xff]
        %v2712 = vld [vmem:[%s562 + $0xc8] sm:$0xff]
        %v2713 = vld [vmem:[%s562 + $0xd0] sm:$0xff]
        %v2714 = vld [vmem:[%s562 + $0xd8] sm:$0xff]
        %v2715 = vld [vmem:[%s562 + $0xe0] sm:$0xff]
        %v2716 = vld [vmem:[%s562 + $0xe8] sm:$0xff]
        %v2717 = vld [vmem:[%s562 + $0xf0] sm:$0xff]
        %v2718 = vld [vmem:[%s562 + $0xf8] sm:$0xff]
        %v2719 = vld [vmem:[%s562 + $0x100] sm:$0xff]
        %v2720 = vld [vmem:[%s562 + $0x108] sm:$0xff]
        %v2721 = vld [vmem:[%s562 + $0x110] sm:$0xff]
        %v2722 = vld [vmem:[%s562 + $0x118] sm:$0xff]
        %v2723 = vld [vmem:[%s562 + $0x120] sm:$0xff]
        %v2724 = vld [vmem:[%s562 + $0x128] sm:$0xff]
        %v2725 = vld [vmem:[%s562 + $0x130] sm:$0xff]
        %v2726 = vld [vmem:[%s562 + $0x138] sm:$0xff]
        %v2727 = vld [vmem:[%s562 + $0x140] sm:$0xff]
        %v2728 = vld [vmem:[%s562 + $0x148] sm:$0xff]
        %v2729 = vld [vmem:[%s562 + $0x150] sm:$0xff]
        %v2730 = vld [vmem:[%s562 + $0x158] sm:$0xff]
        %v2731 = vld [vmem:[%s562 + $0x160] sm:$0xff]
        %v2732 = vld [vmem:[%s562 + $0x168] sm:$0xff]
        %v2733 = vld [vmem:[%s562 + $0x170] sm:$0xff]
        %v2734 = vld [vmem:[%s562 + $0x178] sm:$0xff]
        %v2735 = vld [vmem:[%s562 + $0x180] sm:$0xff]
        %v2736 = vld [vmem:[%s562 + $0x188] sm:$0xff]
        %v2737 = vld [vmem:[%s562 + $0x190] sm:$0xff]
        %v2738 = vld [vmem:[%s562 + $0x198] sm:$0xff]
        %v2739 = vld [vmem:[%s562 + $0x1a0] sm:$0xff]
        %v2740 = vld [vmem:[%s562 + $0x1a8] sm:$0xff]
        %v2741 = vld [vmem:[%s562 + $0x1b0] sm:$0xff]
        %v2742 = vld [vmem:[%s562 + $0x1b8] sm:$0xff]
        %v2743 = vld [vmem:[%s562 + $0x1c0] sm:$0xff]
        %v2744 = vld [vmem:[%s562 + $0x1c8] sm:$0xff]
        %v2745 = vld [vmem:[%s562 + $0x1d0] sm:$0xff]
        %v2746 = vld [vmem:[%s562 + $0x1d8] sm:$0xff]
        %v2747 = vld [vmem:[%s562 + $0x1e0] sm:$0xff]
        %v2748 = vld [vmem:[%s562 + $0x1e8] sm:$0xff]
        %v2749 = vld [vmem:[%s562 + $0x1f0] sm:$0xff]
        %v2750 = vld [vmem:[%s562 + $0x1f8] sm:$0xff]
        %v2751 = vld [vmem:[%s562 + $0x200] sm:$0xff]
        %v2752 = vld [vmem:[%s562 + $0x208] sm:$0xff]
        %v2753 = vld [vmem:[%s562 + $0x210] sm:$0xff]
        %v2754 = vld [vmem:[%s562 + $0x218] sm:$0xff]
        %v2755 = vld [vmem:[%s562 + $0x220] sm:$0xff]
        %v2756 = vld [vmem:[%s562 + $0x228] sm:$0xff]
        %v2757 = vld [vmem:[%s562 + $0x230] sm:$0xff]
        %v2758 = vld [vmem:[%s562 + $0x238] sm:$0xff]
        %v2759 = vld [vmem:[%s562 + $0x240] sm:$0xff]
        %v2760 = vld [vmem:[%s562 + $0x248] sm:$0xff]
        %v2761 = vld [vmem:[%s562 + $0x250] sm:$0xff]
        %v2762 = vld [vmem:[%s562 + $0x258] sm:$0xff]
        %v2763 = vld [vmem:[%s562 + $0x260] sm:$0xff]
        %v2764 = vld [vmem:[%s562 + $0x268] sm:$0xff]
        %v2765 = vld [vmem:[%s562 + $0x270] sm:$0xff]
        %v2766 = vld [vmem:[%s562 + $0x278] sm:$0xff]
        %v2767 = vld [vmem:[%s562 + $0x280] sm:$0xff]
        %v2768 = vld [vmem:[%s562 + $0x288] sm:$0xff]
        %v2769 = vld [vmem:[%s562 + $0x290] sm:$0xff]
        %v2770 = vld [vmem:[%s562 + $0x298] sm:$0xff]
        %v2771 = vld [vmem:[%s562 + $0x2a0] sm:$0xff]
        %v2772 = vld [vmem:[%s562 + $0x2a8] sm:$0xff]
        %v2773 = vld [vmem:[%s562 + $0x2b0] sm:$0xff]
        %v2774 = vld [vmem:[%s562 + $0x2b8] sm:$0xff]
        %v2775 = vld [vmem:[%s562 + $0x2c0] sm:$0xff]
        %v2776 = vld [vmem:[%s562 + $0x2c8] sm:$0xff]
        %v2777 = vld [vmem:[%s562 + $0x2d0] sm:$0xff]
        %v2778 = vld [vmem:[%s562 + $0x2d8] sm:$0xff]
        %v2779 = vld [vmem:[%s562 + $0x2e0] sm:$0xff]
        %v2780 = vld [vmem:[%s562 + $0x2e8] sm:$0xff]
        %v2781 = vld [vmem:[%s562 + $0x2f0] sm:$0xff]
        %v2782 = vld [vmem:[%s562 + $0x2f8] sm:$0xff]
        %v2783 = vld [vmem:[%s562 + $0x300] sm:$0xff]
        %v2784 = vld [vmem:[%s562 + $0x308] sm:$0xff]
        %v2785 = vld [vmem:[%s562 + $0x310] sm:$0xff]
        %v2786 = vld [vmem:[%s562 + $0x318] sm:$0xff]
        %v2787 = vld [vmem:[%s562 + $0x320] sm:$0xff]
        %v2788 = vld [vmem:[%s562 + $0x328] sm:$0xff]
        %v2789 = vld [vmem:[%s562 + $0x330] sm:$0xff]
        %v2790 = vld [vmem:[%s562 + $0x338] sm:$0xff]
        %v2791 = vld [vmem:[%s562 + $0x340] sm:$0xff]
        %v2792 = vld [vmem:[%s562 + $0x348] sm:$0xff]
        %v2793 = vld [vmem:[%s562 + $0x350] sm:$0xff]
        %v2794 = vld [vmem:[%s562 + $0x358] sm:$0xff]
        %v2795 = vld [vmem:[%s562 + $0x360] sm:$0xff]
        %v2796 = vld [vmem:[%s562 + $0x368] sm:$0xff]
        %v2797 = vld [vmem:[%s562 + $0x370] sm:$0xff]
        %v2798 = vld [vmem:[%s562 + $0x378] sm:$0xff]
        %v2799 = vld [vmem:[%s562 + $0x380] sm:$0xff]
        %v2800 = vld [vmem:[%s562 + $0x388] sm:$0xff]
        %v2801 = vld [vmem:[%s562 + $0x390] sm:$0xff]
        %v2802 = vld [vmem:[%s562 + $0x398] sm:$0xff]
        %v2803 = vld [vmem:[%s562 + $0x3a0] sm:$0xff]
        %v2804 = vld [vmem:[%s562 + $0x3a8] sm:$0xff]
        %v2805 = vld [vmem:[%s562 + $0x3b0] sm:$0xff]
        %v2806 = vld [vmem:[%s562 + $0x3b8] sm:$0xff]
        %v2807 = vld [vmem:[%s562 + $0x3c0] sm:$0xff]
        %v2808 = vld [vmem:[%s562 + $0x3c8] sm:$0xff]
        %v2809 = vld [vmem:[%s562 + $0x3d0] sm:$0xff]
        %v2810 = vld [vmem:[%s562 + $0x3d8] sm:$0xff]
        %v2811 = vld [vmem:[%s562 + $0x3e0] sm:$0xff]
        %v2812 = vld [vmem:[%s562 + $0x3e8] sm:$0xff]
        %v2813 = vld [vmem:[%s562 + $0x3f0] sm:$0xff]
        %v2814 = vld [vmem:[%s562 + $0x3f8] sm:$0xff]
        %v2943 = vunpack.c.l.b16 %v2687
        %v2944 = vunpack.c.h.b16 %v2687
        %v2945 = vunpack.c.l.b16 %v2688
        %v2946 = vunpack.c.h.b16 %v2688
        %v2947 = vunpack.c.l.b16 %v2689
        %v2948 = vunpack.c.h.b16 %v2689
        %v2949 = vunpack.c.l.b16 %v2690
        %v2950 = vunpack.c.h.b16 %v2690
        %v2951 = vunpack.c.l.b16 %v2691
        %v2952 = vunpack.c.h.b16 %v2691
        %v2953 = vunpack.c.l.b16 %v2692
        %v2954 = vunpack.c.h.b16 %v2692
        %v2955 = vunpack.c.l.b16 %v2693
        %v2956 = vunpack.c.h.b16 %v2693
        %v2957 = vunpack.c.l.b16 %v2694
        %v2958 = vunpack.c.h.b16 %v2694
        %v2959 = vunpack.c.l.b16 %v2695
        %v2960 = vunpack.c.h.b16 %v2695
        %v2961 = vunpack.c.l.b16 %v2696
        %v2962 = vunpack.c.h.b16 %v2696
        %v2963 = vunpack.c.l.b16 %v2697
        %v2964 = vunpack.c.h.b16 %v2697
        %v2965 = vunpack.c.l.b16 %v2698
        %v2966 = vunpack.c.h.b16 %v2698
        %v2967 = vunpack.c.l.b16 %v2699
        %v2968 = vunpack.c.h.b16 %v2699
        %v2969 = vunpack.c.l.b16 %v2700
        %v2970 = vunpack.c.h.b16 %v2700
        %v2971 = vunpack.c.l.b16 %v2701
        %v2972 = vunpack.c.h.b16 %v2701
        %v2973 = vunpack.c.l.b16 %v2702
        %v2974 = vunpack.c.h.b16 %v2702
        %v2975 = vunpack.c.l.b16 %v2703
        %v2976 = vunpack.c.h.b16 %v2703
        %v2977 = vunpack.c.l.b16 %v2704
        %v2978 = vunpack.c.h.b16 %v2704
        %v2979 = vunpack.c.l.b16 %v2705
        %v2980 = vunpack.c.h.b16 %v2705
        %v2981 = vunpack.c.l.b16 %v2706
        %v2982 = vunpack.c.h.b16 %v2706
        %v2983 = vunpack.c.l.b16 %v2707
        %v2984 = vunpack.c.h.b16 %v2707
        %v2985 = vunpack.c.l.b16 %v2708
        %v2986 = vunpack.c.h.b16 %v2708
        %v2987 = vunpack.c.l.b16 %v2709
        %v2988 = vunpack.c.h.b16 %v2709
        %v2989 = vunpack.c.l.b16 %v2710
        %v2990 = vunpack.c.h.b16 %v2710
        %v2991 = vunpack.c.l.b16 %v2711
        %v2992 = vunpack.c.h.b16 %v2711
        %v2993 = vunpack.c.l.b16 %v2712
        %v2994 = vunpack.c.h.b16 %v2712
        %v2995 = vunpack.c.l.b16 %v2713
        %v2996 = vunpack.c.h.b16 %v2713
        %v2997 = vunpack.c.l.b16 %v2714
        %v2998 = vunpack.c.h.b16 %v2714
        %v2999 = vunpack.c.l.b16 %v2715
        %v3000 = vunpack.c.h.b16 %v2715
        %v3001 = vunpack.c.l.b16 %v2716
        %v3002 = vunpack.c.h.b16 %v2716
        %v3003 = vunpack.c.l.b16 %v2717
        %v3004 = vunpack.c.h.b16 %v2717
        %v3005 = vunpack.c.l.b16 %v2718
        %v3006 = vunpack.c.h.b16 %v2718
        %v3007 = vunpack.c.l.b16 %v2719
        %v3008 = vunpack.c.h.b16 %v2719
        %v3009 = vunpack.c.l.b16 %v2720
        %v3010 = vunpack.c.h.b16 %v2720
        %v3011 = vunpack.c.l.b16 %v2721
        %v3012 = vunpack.c.h.b16 %v2721
        %v3013 = vunpack.c.l.b16 %v2722
        %v3014 = vunpack.c.h.b16 %v2722
        %v3015 = vunpack.c.l.b16 %v2723
        %v3016 = vunpack.c.h.b16 %v2723
        %v3017 = vunpack.c.l.b16 %v2724
        %v3018 = vunpack.c.h.b16 %v2724
        %v3019 = vunpack.c.l.b16 %v2725
        %v3020 = vunpack.c.h.b16 %v2725
        %v3021 = vunpack.c.l.b16 %v2726
        %v3022 = vunpack.c.h.b16 %v2726
        %v3023 = vunpack.c.l.b16 %v2727
        %v3024 = vunpack.c.h.b16 %v2727
        %v3025 = vunpack.c.l.b16 %v2728
        %v3026 = vunpack.c.h.b16 %v2728
        %v3027 = vunpack.c.l.b16 %v2729
        %v3028 = vunpack.c.h.b16 %v2729
        %v3029 = vunpack.c.l.b16 %v2730
        %v3030 = vunpack.c.h.b16 %v2730
        %v3031 = vunpack.c.l.b16 %v2731
        %v3032 = vunpack.c.h.b16 %v2731
        %v3033 = vunpack.c.l.b16 %v2732
        %v3034 = vunpack.c.h.b16 %v2732
        %v3035 = vunpack.c.l.b16 %v2733
        %v3036 = vunpack.c.h.b16 %v2733
        %v3037 = vunpack.c.l.b16 %v2734
        %v3038 = vunpack.c.h.b16 %v2734
        %v3039 = vunpack.c.l.b16 %v2735
        %v3040 = vunpack.c.h.b16 %v2735
        %v3041 = vunpack.c.l.b16 %v2736
        %v3042 = vunpack.c.h.b16 %v2736
        %v3043 = vunpack.c.l.b16 %v2737
        %v3044 = vunpack.c.h.b16 %v2737
        %v3045 = vunpack.c.l.b16 %v2738
        %v3046 = vunpack.c.h.b16 %v2738
        %v3047 = vunpack.c.l.b16 %v2739
        %v3048 = vunpack.c.h.b16 %v2739
        %v3049 = vunpack.c.l.b16 %v2740
        %v3050 = vunpack.c.h.b16 %v2740
        %v3051 = vunpack.c.l.b16 %v2741
        %v3052 = vunpack.c.h.b16 %v2741
        %v3053 = vunpack.c.l.b16 %v2742
        %v3054 = vunpack.c.h.b16 %v2742
        %v3055 = vunpack.c.l.b16 %v2743
        %v3056 = vunpack.c.h.b16 %v2743
        %v3057 = vunpack.c.l.b16 %v2744
        %v3058 = vunpack.c.h.b16 %v2744
        %v3059 = vunpack.c.l.b16 %v2745
        %v3060 = vunpack.c.h.b16 %v2745
        %v3061 = vunpack.c.l.b16 %v2746
        %v3062 = vunpack.c.h.b16 %v2746
        %v3063 = vunpack.c.l.b16 %v2747
        %v3064 = vunpack.c.h.b16 %v2747
        %v3065 = vunpack.c.l.b16 %v2748
        %v3066 = vunpack.c.h.b16 %v2748
        %v3067 = vunpack.c.l.b16 %v2749
        %v3068 = vunpack.c.h.b16 %v2749
        %v3069 = vunpack.c.l.b16 %v2750
        %v3070 = vunpack.c.h.b16 %v2750
        %v3071 = vunpack.c.l.b16 %v2751
        %v3072 = vunpack.c.h.b16 %v2751
        %v3073 = vunpack.c.l.b16 %v2752
        %v3074 = vunpack.c.h.b16 %v2752
        %v3075 = vunpack.c.l.b16 %v2753
        %v3076 = vunpack.c.h.b16 %v2753
        %v3077 = vunpack.c.l.b16 %v2754
        %v3078 = vunpack.c.h.b16 %v2754
        %v3079 = vunpack.c.l.b16 %v2755
        %v3080 = vunpack.c.h.b16 %v2755
        %v3081 = vunpack.c.l.b16 %v2756
        %v3082 = vunpack.c.h.b16 %v2756
        %v3083 = vunpack.c.l.b16 %v2757
        %v3084 = vunpack.c.h.b16 %v2757
        %v3085 = vunpack.c.l.b16 %v2758
        %v3086 = vunpack.c.h.b16 %v2758
        %v3087 = vunpack.c.l.b16 %v2759
        %v3088 = vunpack.c.h.b16 %v2759
        %v3089 = vunpack.c.l.b16 %v2760
        %v3090 = vunpack.c.h.b16 %v2760
        %v3091 = vunpack.c.l.b16 %v2761
        %v3092 = vunpack.c.h.b16 %v2761
        %v3093 = vunpack.c.l.b16 %v2762
        %v3094 = vunpack.c.h.b16 %v2762
        %v3095 = vunpack.c.l.b16 %v2763
        %v3096 = vunpack.c.h.b16 %v2763
        %v3097 = vunpack.c.l.b16 %v2764
        %v3098 = vunpack.c.h.b16 %v2764
        %v3099 = vunpack.c.l.b16 %v2765
        %v3100 = vunpack.c.h.b16 %v2765
        %v3101 = vunpack.c.l.b16 %v2766
        %v3102 = vunpack.c.h.b16 %v2766
        %v3103 = vunpack.c.l.b16 %v2767
        %v3104 = vunpack.c.h.b16 %v2767
        %v3105 = vunpack.c.l.b16 %v2768
        %v3106 = vunpack.c.h.b16 %v2768
        %v3107 = vunpack.c.l.b16 %v2769
        %v3108 = vunpack.c.h.b16 %v2769
        %v3109 = vunpack.c.l.b16 %v2770
        %v3110 = vunpack.c.h.b16 %v2770
        %v3111 = vunpack.c.l.b16 %v2771
        %v3112 = vunpack.c.h.b16 %v2771
        %v3113 = vunpack.c.l.b16 %v2772
        %v3114 = vunpack.c.h.b16 %v2772
        %v3115 = vunpack.c.l.b16 %v2773
        %v3116 = vunpack.c.h.b16 %v2773
        %v3117 = vunpack.c.l.b16 %v2774
        %v3118 = vunpack.c.h.b16 %v2774
        %v3119 = vunpack.c.l.b16 %v2775
        %v3120 = vunpack.c.h.b16 %v2775
        %v3121 = vunpack.c.l.b16 %v2776
        %v3122 = vunpack.c.h.b16 %v2776
        %v3123 = vunpack.c.l.b16 %v2777
        %v3124 = vunpack.c.h.b16 %v2777
        %v3125 = vunpack.c.l.b16 %v2778
        %v3126 = vunpack.c.h.b16 %v2778
        %v3127 = vunpack.c.l.b16 %v2779
        %v3128 = vunpack.c.h.b16 %v2779
        %v3129 = vunpack.c.l.b16 %v2780
        %v3130 = vunpack.c.h.b16 %v2780
        %v3131 = vunpack.c.l.b16 %v2781
        %v3132 = vunpack.c.h.b16 %v2781
        %v3133 = vunpack.c.l.b16 %v2782
        %v3134 = vunpack.c.h.b16 %v2782
        %v3135 = vunpack.c.l.b16 %v2783
        %v3136 = vunpack.c.h.b16 %v2783
        %v3137 = vunpack.c.l.b16 %v2784
        %v3138 = vunpack.c.h.b16 %v2784
        %v3139 = vunpack.c.l.b16 %v2785
        %v3140 = vunpack.c.h.b16 %v2785
        %v3141 = vunpack.c.l.b16 %v2786
        %v3142 = vunpack.c.h.b16 %v2786
        %v3143 = vunpack.c.l.b16 %v2787
        %v3144 = vunpack.c.h.b16 %v2787
        %v3145 = vunpack.c.l.b16 %v2788
        %v3146 = vunpack.c.h.b16 %v2788
        %v3147 = vunpack.c.l.b16 %v2789
        %v3148 = vunpack.c.h.b16 %v2789
        %v3149 = vunpack.c.l.b16 %v2790
        %v3150 = vunpack.c.h.b16 %v2790
        %v3151 = vunpack.c.l.b16 %v2791
        %v3152 = vunpack.c.h.b16 %v2791
        %v3153 = vunpack.c.l.b16 %v2792
        %v3154 = vunpack.c.h.b16 %v2792
        %v3155 = vunpack.c.l.b16 %v2793
        %v3156 = vunpack.c.h.b16 %v2793
        %v3157 = vunpack.c.l.b16 %v2794
        %v3158 = vunpack.c.h.b16 %v2794
        %v3159 = vunpack.c.l.b16 %v2795
        %v3160 = vunpack.c.h.b16 %v2795
        %v3161 = vunpack.c.l.b16 %v2796
        %v3162 = vunpack.c.h.b16 %v2796
        %v3163 = vunpack.c.l.b16 %v2797
        %v3164 = vunpack.c.h.b16 %v2797
        %v3165 = vunpack.c.l.b16 %v2798
        %v3166 = vunpack.c.h.b16 %v2798
        %v3167 = vunpack.c.l.b16 %v2799
        %v3168 = vunpack.c.h.b16 %v2799
        %v3169 = vunpack.c.l.b16 %v2800
        %v3170 = vunpack.c.h.b16 %v2800
        %v3171 = vunpack.c.l.b16 %v2801
        %v3172 = vunpack.c.h.b16 %v2801
        %v3173 = vunpack.c.l.b16 %v2802
        %v3174 = vunpack.c.h.b16 %v2802
        %v3175 = vunpack.c.l.b16 %v2803
        %v3176 = vunpack.c.h.b16 %v2803
        %v3177 = vunpack.c.l.b16 %v2804
        %v3178 = vunpack.c.h.b16 %v2804
        %v3179 = vunpack.c.l.b16 %v2805
        %v3180 = vunpack.c.h.b16 %v2805
        %v3181 = vunpack.c.l.b16 %v2806
        %v3182 = vunpack.c.h.b16 %v2806
        %v3183 = vunpack.c.l.b16 %v2807
        %v3184 = vunpack.c.h.b16 %v2807
        %v3185 = vunpack.c.l.b16 %v2808
        %v3186 = vunpack.c.h.b16 %v2808
        %v3187 = vunpack.c.l.b16 %v2809
        %v3188 = vunpack.c.h.b16 %v2809
        %v3189 = vunpack.c.l.b16 %v2810
        %v3190 = vunpack.c.h.b16 %v2810
        %v3191 = vunpack.c.l.b16 %v2811
        %v3192 = vunpack.c.h.b16 %v2811
        %v3193 = vunpack.c.l.b16 %v2812
        %v3194 = vunpack.c.h.b16 %v2812
        %v3195 = vunpack.c.l.b16 %v2813
        %v3196 = vunpack.c.h.b16 %v2813
        %v3197 = vunpack.c.l.b16 %v2814
        %v3198 = vunpack.c.h.b16 %v2814
        %v3199 = vpack.c.b16 %v2951, %v2943
        %v3200 = vpack.c.b16 %v2952, %v2944
        %v3201 = vpack.c.b16 %v2953, %v2945
        %v3202 = vpack.c.b16 %v2954, %v2946
        %v3203 = vpack.c.b16 %v2955, %v2947
        %v3204 = vpack.c.b16 %v2956, %v2948
        %v3205 = vpack.c.b16 %v2957, %v2949
        %v3206 = vpack.c.b16 %v2958, %v2950
        %v3207 = vpack.c.b16 %v2967, %v2959
        %v3208 = vpack.c.b16 %v2968, %v2960
        %v3209 = vpack.c.b16 %v2969, %v2961
        %v3210 = vpack.c.b16 %v2970, %v2962
        %v3211 = vpack.c.b16 %v2971, %v2963
        %v3212 = vpack.c.b16 %v2972, %v2964
        %v3213 = vpack.c.b16 %v2973, %v2965
        %v3214 = vpack.c.b16 %v2974, %v2966
        %v3215 = vpack.c.b16 %v2983, %v2975
        %v3216 = vpack.c.b16 %v2984, %v2976
        %v3217 = vpack.c.b16 %v2985, %v2977
        %v3218 = vpack.c.b16 %v2986, %v2978
        %v3219 = vpack.c.b16 %v2987, %v2979
        %v3220 = vpack.c.b16 %v2988, %v2980
        %v3221 = vpack.c.b16 %v2989, %v2981
        %v3222 = vpack.c.b16 %v2990, %v2982
        %v3223 = vpack.c.b16 %v2999, %v2991
        %v3224 = vpack.c.b16 %v3000, %v2992
        %v3225 = vpack.c.b16 %v3001, %v2993
        %v3226 = vpack.c.b16 %v3002, %v2994
        %v3227 = vpack.c.b16 %v3003, %v2995
        %v3228 = vpack.c.b16 %v3004, %v2996
        %v3229 = vpack.c.b16 %v3005, %v2997
        %v3230 = vpack.c.b16 %v3006, %v2998
        %v3231 = vpack.c.b16 %v3015, %v3007
        %v3232 = vpack.c.b16 %v3016, %v3008
        %v3233 = vpack.c.b16 %v3017, %v3009
        %v3234 = vpack.c.b16 %v3018, %v3010
        %v3235 = vpack.c.b16 %v3019, %v3011
        %v3236 = vpack.c.b16 %v3020, %v3012
        %v3237 = vpack.c.b16 %v3021, %v3013
        %v3238 = vpack.c.b16 %v3022, %v3014
        %v3239 = vpack.c.b16 %v3031, %v3023
        %v3240 = vpack.c.b16 %v3032, %v3024
        %v3241 = vpack.c.b16 %v3033, %v3025
        %v3242 = vpack.c.b16 %v3034, %v3026
        %v3243 = vpack.c.b16 %v3035, %v3027
        %v3244 = vpack.c.b16 %v3036, %v3028
        %v3245 = vpack.c.b16 %v3037, %v3029
        %v3246 = vpack.c.b16 %v3038, %v3030
        %v3247 = vpack.c.b16 %v3047, %v3039
        %v3248 = vpack.c.b16 %v3048, %v3040
        %v3249 = vpack.c.b16 %v3049, %v3041
        %v3250 = vpack.c.b16 %v3050, %v3042
        %v3251 = vpack.c.b16 %v3051, %v3043
        %v3252 = vpack.c.b16 %v3052, %v3044
        %v3253 = vpack.c.b16 %v3053, %v3045
        %v3254 = vpack.c.b16 %v3054, %v3046
        %v3255 = vpack.c.b16 %v3063, %v3055
        %v3256 = vpack.c.b16 %v3064, %v3056
        %v3257 = vpack.c.b16 %v3065, %v3057
        %v3258 = vpack.c.b16 %v3066, %v3058
        %v3259 = vpack.c.b16 %v3067, %v3059
        %v3260 = vpack.c.b16 %v3068, %v3060
        %v3261 = vpack.c.b16 %v3069, %v3061
        %v3262 = vpack.c.b16 %v3070, %v3062
        %v3263 = vpack.c.b16 %v3079, %v3071
        %v3264 = vpack.c.b16 %v3080, %v3072
        %v3265 = vpack.c.b16 %v3081, %v3073
        %v3266 = vpack.c.b16 %v3082, %v3074
        %v3267 = vpack.c.b16 %v3083, %v3075
        %v3268 = vpack.c.b16 %v3084, %v3076
        %v3269 = vpack.c.b16 %v3085, %v3077
        %v3270 = vpack.c.b16 %v3086, %v3078
        %v3271 = vpack.c.b16 %v3095, %v3087
        %v3272 = vpack.c.b16 %v3096, %v3088
        %v3273 = vpack.c.b16 %v3097, %v3089
        %v3274 = vpack.c.b16 %v3098, %v3090
        %v3275 = vpack.c.b16 %v3099, %v3091
        %v3276 = vpack.c.b16 %v3100, %v3092
        %v3277 = vpack.c.b16 %v3101, %v3093
        %v3278 = vpack.c.b16 %v3102, %v3094
        %v3279 = vpack.c.b16 %v3111, %v3103
        %v3280 = vpack.c.b16 %v3112, %v3104
        %v3281 = vpack.c.b16 %v3113, %v3105
        %v3282 = vpack.c.b16 %v3114, %v3106
        %v3283 = vpack.c.b16 %v3115, %v3107
        %v3284 = vpack.c.b16 %v3116, %v3108
        %v3285 = vpack.c.b16 %v3117, %v3109
        %v3286 = vpack.c.b16 %v3118, %v3110
        %v3287 = vpack.c.b16 %v3127, %v3119
        %v3288 = vpack.c.b16 %v3128, %v3120
        %v3289 = vpack.c.b16 %v3129, %v3121
        %v3290 = vpack.c.b16 %v3130, %v3122
        %v3291 = vpack.c.b16 %v3131, %v3123
        %v3292 = vpack.c.b16 %v3132, %v3124
        %v3293 = vpack.c.b16 %v3133, %v3125
        %v3294 = vpack.c.b16 %v3134, %v3126
        %v3295 = vpack.c.b16 %v3143, %v3135
        %v3296 = vpack.c.b16 %v3144, %v3136
        %v3297 = vpack.c.b16 %v3145, %v3137
        %v3298 = vpack.c.b16 %v3146, %v3138
        %v3299 = vpack.c.b16 %v3147, %v3139
        %v3300 = vpack.c.b16 %v3148, %v3140
        %v3301 = vpack.c.b16 %v3149, %v3141
        %v3302 = vpack.c.b16 %v3150, %v3142
        %v3303 = vpack.c.b16 %v3159, %v3151
        %v3304 = vpack.c.b16 %v3160, %v3152
        %v3305 = vpack.c.b16 %v3161, %v3153
        %v3306 = vpack.c.b16 %v3162, %v3154
        %v3307 = vpack.c.b16 %v3163, %v3155
        %v3308 = vpack.c.b16 %v3164, %v3156
        %v3309 = vpack.c.b16 %v3165, %v3157
        %v3310 = vpack.c.b16 %v3166, %v3158
        %v3311 = vpack.c.b16 %v3175, %v3167
        %v3312 = vpack.c.b16 %v3176, %v3168
        %v3313 = vpack.c.b16 %v3177, %v3169
        %v3314 = vpack.c.b16 %v3178, %v3170
        %v3315 = vpack.c.b16 %v3179, %v3171
        %v3316 = vpack.c.b16 %v3180, %v3172
        %v3317 = vpack.c.b16 %v3181, %v3173
        %v3318 = vpack.c.b16 %v3182, %v3174
        %v3319 = vpack.c.b16 %v3191, %v3183
        %v3320 = vpack.c.b16 %v3192, %v3184
        %v3321 = vpack.c.b16 %v3193, %v3185
        %v3322 = vpack.c.b16 %v3194, %v3186
        %v3323 = vpack.c.b16 %v3195, %v3187
        %v3324 = vpack.c.b16 %v3196, %v3188
        %v3325 = vpack.c.b16 %v3197, %v3189
        %v3326 = vpack.c.b16 %v3198, %v3190
        %3455 = vmatprep.subr.bf16.mxu0 %v3256
        %3456 = vmatpush1.bf16.msra.mxu0 %v3255
        %3457 = vmatprep.subr.bf16.mxu0 %v3248
        %3458 = vmatpush1.bf16.msra.mxu0 %v3247
        %3459 = vmatprep.subr.bf16.mxu0 %v3240
        %3460 = vmatpush1.bf16.msra.mxu0 %v3239
        %3461 = vmatprep.subr.bf16.mxu0 %v3232
        %3462 = vmatpush1.bf16.msra.mxu0 %v3231
        %3463 = vmatprep.subr.bf16.mxu0 %v3224
        %3464 = vmatpush1.bf16.msra.mxu0 %v3223
        %3465 = vmatprep.subr.bf16.mxu0 %v3216
        %3466 = vmatpush1.bf16.msra.mxu0 %v3215
        %3467 = vmatprep.subr.bf16.mxu0 %v3208
        %3468 = vmatpush1.bf16.msra.mxu0 %v3207
        %3469 = vmatprep.subr.bf16.mxu0 %v3200
        %3470 = vmatpush1.bf16.msra.mxu0 %v3199
        %3471 = vmatprep.subr.bf16.mxu0 %v3320
        %3472 = vmatpush2.bf16.msra.mxu0 %v3319
        %3473 = vmatprep.subr.bf16.mxu0 %v3312
        %3474 = vmatpush2.bf16.msra.mxu0 %v3311
        %3475 = vmatprep.subr.bf16.mxu0 %v3304
        %3476 = vmatpush2.bf16.msra.mxu0 %v3303
        %3477 = vmatprep.subr.bf16.mxu0 %v3296
        %3478 = vmatpush2.bf16.msra.mxu0 %v3295
        %3479 = vmatprep.subr.bf16.mxu0 %v3288
        %3480 = vmatpush2.bf16.msra.mxu0 %v3287
        %3481 = vmatprep.subr.bf16.mxu0 %v3280
        %3482 = vmatpush2.bf16.msra.mxu0 %v3279
        %3483 = vmatprep.subr.bf16.mxu0 %v3272
        %3484 = vmatpush2.bf16.msra.mxu0 %v3271
        %3485 = vmatprep.subr.bf16.mxu0 %v3264
        %3486 = vmatpush2.bf16.msra.mxu0 %v3263
        %3487 = vmatprep.mubr.bf16.mxu0 %v2686
        %3488 = vmatmul.mubr.bf16.gmra.mxu0 %v2685
        %v3489 = vpop.f32.mrf.mxu0
        %v3490 = vadd.f32 0.0, %v3489
        %v3491 = vpop.f32.mrf.mxu0
        %v3492 = vadd.f32 0.0, %v3491
        %v3493 = vpop.f32.mrf.mxu0
        %v3494 = vpop.f32.mrf.mxu0
        %3495 = vdwg.mxu0
        %3496 = vmatprep.subr.bf16.mxu0 %v3258
        %3497 = vmatpush1.bf16.msra.mxu0 %v3257
        %3498 = vmatprep.subr.bf16.mxu0 %v3250
        %3499 = vmatpush1.bf16.msra.mxu0 %v3249
        %3500 = vmatprep.subr.bf16.mxu0 %v3242
        %3501 = vmatpush1.bf16.msra.mxu0 %v3241
        %3502 = vmatprep.subr.bf16.mxu0 %v3234
        %3503 = vmatpush1.bf16.msra.mxu0 %v3233
        %3504 = vmatprep.subr.bf16.mxu0 %v3226
        %3505 = vmatpush1.bf16.msra.mxu0 %v3225
        %3506 = vmatprep.subr.bf16.mxu0 %v3218
        %3507 = vmatpush1.bf16.msra.mxu0 %v3217
        %3508 = vmatprep.subr.bf16.mxu0 %v3210
        %3509 = vmatpush1.bf16.msra.mxu0 %v3209
        %3510 = vmatprep.subr.bf16.mxu0 %v3202
        %3511 = vmatpush1.bf16.msra.mxu0 %v3201
        %3512 = vmatprep.subr.bf16.mxu0 %v3322
        %3513 = vmatpush2.bf16.msra.mxu0 %v3321
        %3514 = vmatprep.subr.bf16.mxu0 %v3314
        %3515 = vmatpush2.bf16.msra.mxu0 %v3313
        %3516 = vmatprep.subr.bf16.mxu0 %v3306
        %3517 = vmatpush2.bf16.msra.mxu0 %v3305
        %3518 = vmatprep.subr.bf16.mxu0 %v3298
        %3519 = vmatpush2.bf16.msra.mxu0 %v3297
        %3520 = vmatprep.subr.bf16.mxu0 %v3290
        %3521 = vmatpush2.bf16.msra.mxu0 %v3289
        %3522 = vmatprep.subr.bf16.mxu0 %v3282
        %3523 = vmatpush2.bf16.msra.mxu0 %v3281
        %3524 = vmatprep.subr.bf16.mxu0 %v3274
        %3525 = vmatpush2.bf16.msra.mxu0 %v3273
        %3526 = vmatprep.subr.bf16.mxu0 %v3266
        %3527 = vmatpush2.bf16.msra.mxu0 %v3265
        %3528 = vmatprep.mubr.bf16.mxu0 %v2686
        %3529 = vmatmul.mubr.bf16.gmra.mxu0 %v2685
        %v3530 = vpop.f32.mrf.mxu0
        %v3531 = vadd.f32 0.0, %v3530
        %v3532 = vpop.f32.mrf.mxu0
        %v3533 = vadd.f32 0.0, %v3532
        %v3534 = vpop.f32.mrf.mxu0
        %v3535 = vpop.f32.mrf.mxu0
        %3536 = vdwg.mxu0
        %3537 = vmatprep.subr.bf16.mxu0 %v3260
        %3538 = vmatpush1.bf16.msra.mxu0 %v3259
        %3539 = vmatprep.subr.bf16.mxu0 %v3252
        %3540 = vmatpush1.bf16.msra.mxu0 %v3251
        %3541 = vmatprep.subr.bf16.mxu0 %v3244
        %3542 = vmatpush1.bf16.msra.mxu0 %v3243
        %3543 = vmatprep.subr.bf16.mxu0 %v3236
        %3544 = vmatpush1.bf16.msra.mxu0 %v3235
        %3545 = vmatprep.subr.bf16.mxu0 %v3228
        %3546 = vmatpush1.bf16.msra.mxu0 %v3227
        %3547 = vmatprep.subr.bf16.mxu0 %v3220
        %3548 = vmatpush1.bf16.msra.mxu0 %v3219
        %3549 = vmatprep.subr.bf16.mxu0 %v3212
        %3550 = vmatpush1.bf16.msra.mxu0 %v3211
        %3551 = vmatprep.subr.bf16.mxu0 %v3204
        %3552 = vmatpush1.bf16.msra.mxu0 %v3203
        %3553 = vmatprep.subr.bf16.mxu0 %v3324
        %3554 = vmatpush2.bf16.msra.mxu0 %v3323
        %3555 = vmatprep.subr.bf16.mxu0 %v3316
        %3556 = vmatpush2.bf16.msra.mxu0 %v3315
        %3557 = vmatprep.subr.bf16.mxu0 %v3308
        %3558 = vmatpush2.bf16.msra.mxu0 %v3307
        %3559 = vmatprep.subr.bf16.mxu0 %v3300
        %3560 = vmatpush2.bf16.msra.mxu0 %v3299
        %3561 = vmatprep.subr.bf16.mxu0 %v3292
        %3562 = vmatpush2.bf16.msra.mxu0 %v3291
        %3563 = vmatprep.subr.bf16.mxu0 %v3284
        %3564 = vmatpush2.bf16.msra.mxu0 %v3283
        %3565 = vmatprep.subr.bf16.mxu0 %v3276
        %3566 = vmatpush2.bf16.msra.mxu0 %v3275
        %3567 = vmatprep.subr.bf16.mxu0 %v3268
        %3568 = vmatpush2.bf16.msra.mxu0 %v3267
        %3569 = vmatprep.mubr.bf16.mxu0 %v2686
        %3570 = vmatmul.mubr.bf16.gmra.mxu0 %v2685
        %v3571 = vpop.f32.mrf.mxu0
        %v3572 = vadd.f32 0.0, %v3571
        %v3573 = vpop.f32.mrf.mxu0
        %v3574 = vadd.f32 0.0, %v3573
        %v3575 = vpop.f32.mrf.mxu0
        %v3576 = vpop.f32.mrf.mxu0
        %3577 = vdwg.mxu0
        %3578 = vmatprep.subr.bf16.mxu0 %v3262
        %3579 = vmatpush1.bf16.msra.mxu0 %v3261
        %3580 = vmatprep.subr.bf16.mxu0 %v3254
        %3581 = vmatpush1.bf16.msra.mxu0 %v3253
        %3582 = vmatprep.subr.bf16.mxu0 %v3246
        %3583 = vmatpush1.bf16.msra.mxu0 %v3245
        %3584 = vmatprep.subr.bf16.mxu0 %v3238
        %3585 = vmatpush1.bf16.msra.mxu0 %v3237
        %3586 = vmatprep.subr.bf16.mxu0 %v3230
        %3587 = vmatpush1.bf16.msra.mxu0 %v3229
        %3588 = vmatprep.subr.bf16.mxu0 %v3222
        %3589 = vmatpush1.bf16.msra.mxu0 %v3221
        %3590 = vmatprep.subr.bf16.mxu0 %v3214
        %3591 = vmatpush1.bf16.msra.mxu0 %v3213
        %3592 = vmatprep.subr.bf16.mxu0 %v3206
        %3593 = vmatpush1.bf16.msra.mxu0 %v3205
        %3594 = vmatprep.subr.bf16.mxu0 %v3326
        %3595 = vmatpush2.bf16.msra.mxu0 %v3325
        %3596 = vmatprep.subr.bf16.mxu0 %v3318
        %3597 = vmatpush2.bf16.msra.mxu0 %v3317
        %3598 = vmatprep.subr.bf16.mxu0 %v3310
        %3599 = vmatpush2.bf16.msra.mxu0 %v3309
        %3600 = vmatprep.subr.bf16.mxu0 %v3302
        %3601 = vmatpush2.bf16.msra.mxu0 %v3301
        %3602 = vmatprep.subr.bf16.mxu0 %v3294
        %3603 = vmatpush2.bf16.msra.mxu0 %v3293
        %3604 = vmatprep.subr.bf16.mxu0 %v3286
        %3605 = vmatpush2.bf16.msra.mxu0 %v3285
        %3606 = vmatprep.subr.bf16.mxu0 %v3278
        %3607 = vmatpush2.bf16.msra.mxu0 %v3277
        %3608 = vmatprep.subr.bf16.mxu0 %v3270
        %3609 = vmatpush2.bf16.msra.mxu0 %v3269
        %3610 = vmatprep.mubr.bf16.mxu0 %v2686
        %3611 = vmatmul.mubr.bf16.gmra.mxu0 %v2685
        %v3612 = vpop.f32.mrf.mxu0
        %v3613 = vadd.f32 0.0, %v3612
        %v3614 = vpop.f32.mrf.mxu0
        %v3615 = vadd.f32 0.0, %v3614
        %v3616 = vpop.f32.mrf.mxu0
        %v3617 = vpop.f32.mrf.mxu0
        %3618 = vdwg.mxu0
        %v3627 = vcombine.low %v3490, %v3492
        %v3628 = vcombine.low %v3531, %v3533
        %v3629 = vcombine.low %v3572, %v3574
        %v3630 = vcombine.low %v3613, %v3615
        %v3632 = vunpack.c.l.s4 1966171168
        %v3633 = vunpack.c.0.s8 %v3632
        %v3634 = vlaneseq
        %v3635 = vshrl.u32 %v3634, 7
        %v3636 = vsub.s32 %v3633, %v3635
        %v3637 = vrot.slane %v3627, %v3636
        %v3639 = vunpack.c.l.s4 1966171168
        %v3640 = vunpack.c.0.s8 %v3639
        %v3641 = vlaneseq
        %v3642 = vshrl.u32 %v3641, 7
        %v3643 = vsub.s32 %v3640, %v3642
        %v3644 = vrot.slane %v3628, %v3643
        %v3646 = vunpack.c.l.s4 1966171168
        %v3647 = vunpack.c.0.s8 %v3646
        %v3648 = vlaneseq
        %v3649 = vshrl.u32 %v3648, 7
        %v3650 = vsub.s32 %v3647, %v3649
        %v3651 = vrot.slane %v3629, %v3650
        %v3653 = vunpack.c.l.s4 1966171168
        %v3654 = vunpack.c.0.s8 %v3653
        %v3655 = vlaneseq
        %v3656 = vshrl.u32 %v3655, 7
        %v3657 = vsub.s32 %v3654, %v3656
        %v3658 = vrot.slane %v3630, %v3657
        %v3659 = vcombine.low %v3637, %v3644
        %v3660 = vcombine.low %v3651, %v3658
        %v3662 = vunpack.c.l.s4 1966171168
        %v3663 = vunpack.c.0.s8 %v3662
        %v3664 = vlaneseq
        %v3665 = vshrl.u32 %v3664, 7
        %v3666 = vsub.s32 %v3663, %v3665
        %v3667 = vrot.slane %v3659, %v3666
        %v3669 = vunpack.c.l.s4 1966171168
        %v3670 = vunpack.c.0.s8 %v3669
        %v3671 = vlaneseq
        %v3672 = vshrl.u32 %v3671, 7
        %v3673 = vsub.s32 %v3670, %v3672
        %v3674 = vrot.slane %v3660, %v3673
        %v3675 = vcombine.low %v3667, %v3674
        %v3677 = vadd.f32 %v2673, %v3675
        %v3678 = vxor.u32 %v3677, 2147483648
        %v3679 = vmul.f32 %v3678, 1.442695
        %v3680 = vpow.pop %v3679
        %v3681 = vadd.f32 %v3680, 1.0
        %v3682 = vrcp.pop %v3681
        %v3683 = vmul.f32 1.0, %v3682
        %v3685 = vrot.slane %v3677, 6
        %v3687 = vtanh.pop %v3685
        %v3689 = vrot.slane %v3683, 2
        %v3691 = vmul.f32 %v3689, %v2659
        %v3692 = vmul.f32 %v3683, %v3687
        %v3693 = vadd.f32 %v3691, %v3692
        %v3694 = vtanh.pop %v3693
        %v3695 = vrot.slane %v3683, 4
        %v3697 = vmul.f32 %v3695, %v3694
        %s3698 = scalar_lea.vmem [#allocation3], 1
        %3699 = vst.msk [vmem:[%s3698] ss:$8 sm:$0x3] %vm2667, %v3697
        %3700 = vst.msk [vmem:[%s3698] ss:$8 sm:$0x0] %vm2667, %v3697
        %s3701 = scalar_lea.vmem [#allocation2], 2
        %v3702 = vld [vmem:[%s3701] ss:$8 sm:$0xf]
        %v3703 = vld [vmem:[%s3701] ss:$8 sm:$0xf0]
        %v3704 = vor.u32 %v3702, %v3703
        %v3706 = vlaneseq
        %v3707 = vshrl.u32 %v3706, 7
        %v3708 = vsub.s32 0, %v3707
        %v3709 = vrot.slane %v3697, %v3708
        %v3710 = vlaneseq
        %v3711 = vshrl.u32 %v3710, 7
        %v3712 = vsub.s32 1, %v3711
        %v3713 = vrot.slane %v3697, %v3712
        %v3716 = vpack.c.bf16 %v3709, %v3709
        %v3717 = vpack.c.bf16 %v3713, %v3713
        %v3718 = vld [vmem:[%s562] sm:$0xff]
        %v3719 = vld [vmem:[%s562 + $0x8] sm:$0xff]
        %v3720 = vld [vmem:[%s562 + $0x10] sm:$0xff]
        %v3721 = vld [vmem:[%s562 + $0x18] sm:$0xff]
        %v3722 = vld [vmem:[%s562 + $0x20] sm:$0xff]
        %v3723 = vld [vmem:[%s562 + $0x28] sm:$0xff]
        %v3724 = vld [vmem:[%s562 + $0x30] sm:$0xff]
        %v3725 = vld [vmem:[%s562 + $0x38] sm:$0xff]
        %v3726 = vld [vmem:[%s562 + $0x40] sm:$0xff]
        %v3727 = vld [vmem:[%s562 + $0x48] sm:$0xff]
        %v3728 = vld [vmem:[%s562 + $0x50] sm:$0xff]
        %v3729 = vld [vmem:[%s562 + $0x58] sm:$0xff]
        %v3730 = vld [vmem:[%s562 + $0x60] sm:$0xff]
        %v3731 = vld [vmem:[%s562 + $0x68] sm:$0xff]
        %v3732 = vld [vmem:[%s562 + $0x70] sm:$0xff]
        %v3733 = vld [vmem:[%s562 + $0x78] sm:$0xff]
        %v3734 = vld [vmem:[%s562 + $0x80] sm:$0xff]
        %v3735 = vld [vmem:[%s562 + $0x88] sm:$0xff]
        %v3736 = vld [vmem:[%s562 + $0x90] sm:$0xff]
        %v3737 = vld [vmem:[%s562 + $0x98] sm:$0xff]
        %v3738 = vld [vmem:[%s562 + $0xa0] sm:$0xff]
        %v3739 = vld [vmem:[%s562 + $0xa8] sm:$0xff]
        %v3740 = vld [vmem:[%s562 + $0xb0] sm:$0xff]
        %v3741 = vld [vmem:[%s562 + $0xb8] sm:$0xff]
        %v3742 = vld [vmem:[%s562 + $0xc0] sm:$0xff]
        %v3743 = vld [vmem:[%s562 + $0xc8] sm:$0xff]
        %v3744 = vld [vmem:[%s562 + $0xd0] sm:$0xff]
        %v3745 = vld [vmem:[%s562 + $0xd8] sm:$0xff]
        %v3746 = vld [vmem:[%s562 + $0xe0] sm:$0xff]
        %v3747 = vld [vmem:[%s562 + $0xe8] sm:$0xff]
        %v3748 = vld [vmem:[%s562 + $0xf0] sm:$0xff]
        %v3749 = vld [vmem:[%s562 + $0xf8] sm:$0xff]
        %v3750 = vld [vmem:[%s562 + $0x100] sm:$0xff]
        %v3751 = vld [vmem:[%s562 + $0x108] sm:$0xff]
        %v3752 = vld [vmem:[%s562 + $0x110] sm:$0xff]
        %v3753 = vld [vmem:[%s562 + $0x118] sm:$0xff]
        %v3754 = vld [vmem:[%s562 + $0x120] sm:$0xff]
        %v3755 = vld [vmem:[%s562 + $0x128] sm:$0xff]
        %v3756 = vld [vmem:[%s562 + $0x130] sm:$0xff]
        %v3757 = vld [vmem:[%s562 + $0x138] sm:$0xff]
        %v3758 = vld [vmem:[%s562 + $0x140] sm:$0xff]
        %v3759 = vld [vmem:[%s562 + $0x148] sm:$0xff]
        %v3760 = vld [vmem:[%s562 + $0x150] sm:$0xff]
        %v3761 = vld [vmem:[%s562 + $0x158] sm:$0xff]
        %v3762 = vld [vmem:[%s562 + $0x160] sm:$0xff]
        %v3763 = vld [vmem:[%s562 + $0x168] sm:$0xff]
        %v3764 = vld [vmem:[%s562 + $0x170] sm:$0xff]
        %v3765 = vld [vmem:[%s562 + $0x178] sm:$0xff]
        %v3766 = vld [vmem:[%s562 + $0x180] sm:$0xff]
        %v3767 = vld [vmem:[%s562 + $0x188] sm:$0xff]
        %v3768 = vld [vmem:[%s562 + $0x190] sm:$0xff]
        %v3769 = vld [vmem:[%s562 + $0x198] sm:$0xff]
        %v3770 = vld [vmem:[%s562 + $0x1a0] sm:$0xff]
        %v3771 = vld [vmem:[%s562 + $0x1a8] sm:$0xff]
        %v3772 = vld [vmem:[%s562 + $0x1b0] sm:$0xff]
        %v3773 = vld [vmem:[%s562 + $0x1b8] sm:$0xff]
        %v3774 = vld [vmem:[%s562 + $0x1c0] sm:$0xff]
        %v3775 = vld [vmem:[%s562 + $0x1c8] sm:$0xff]
        %v3776 = vld [vmem:[%s562 + $0x1d0] sm:$0xff]
        %v3777 = vld [vmem:[%s562 + $0x1d8] sm:$0xff]
        %v3778 = vld [vmem:[%s562 + $0x1e0] sm:$0xff]
        %v3779 = vld [vmem:[%s562 + $0x1e8] sm:$0xff]
        %v3780 = vld [vmem:[%s562 + $0x1f0] sm:$0xff]
        %v3781 = vld [vmem:[%s562 + $0x1f8] sm:$0xff]
        %v3782 = vld [vmem:[%s562 + $0x200] sm:$0xff]
        %v3783 = vld [vmem:[%s562 + $0x208] sm:$0xff]
        %v3784 = vld [vmem:[%s562 + $0x210] sm:$0xff]
        %v3785 = vld [vmem:[%s562 + $0x218] sm:$0xff]
        %v3786 = vld [vmem:[%s562 + $0x220] sm:$0xff]
        %v3787 = vld [vmem:[%s562 + $0x228] sm:$0xff]
        %v3788 = vld [vmem:[%s562 + $0x230] sm:$0xff]
        %v3789 = vld [vmem:[%s562 + $0x238] sm:$0xff]
        %v3790 = vld [vmem:[%s562 + $0x240] sm:$0xff]
        %v3791 = vld [vmem:[%s562 + $0x248] sm:$0xff]
        %v3792 = vld [vmem:[%s562 + $0x250] sm:$0xff]
        %v3793 = vld [vmem:[%s562 + $0x258] sm:$0xff]
        %v3794 = vld [vmem:[%s562 + $0x260] sm:$0xff]
        %v3795 = vld [vmem:[%s562 + $0x268] sm:$0xff]
        %v3796 = vld [vmem:[%s562 + $0x270] sm:$0xff]
        %v3797 = vld [vmem:[%s562 + $0x278] sm:$0xff]
        %v3798 = vld [vmem:[%s562 + $0x280] sm:$0xff]
        %v3799 = vld [vmem:[%s562 + $0x288] sm:$0xff]
        %v3800 = vld [vmem:[%s562 + $0x290] sm:$0xff]
        %v3801 = vld [vmem:[%s562 + $0x298] sm:$0xff]
        %v3802 = vld [vmem:[%s562 + $0x2a0] sm:$0xff]
        %v3803 = vld [vmem:[%s562 + $0x2a8] sm:$0xff]
        %v3804 = vld [vmem:[%s562 + $0x2b0] sm:$0xff]
        %v3805 = vld [vmem:[%s562 + $0x2b8] sm:$0xff]
        %v3806 = vld [vmem:[%s562 + $0x2c0] sm:$0xff]
        %v3807 = vld [vmem:[%s562 + $0x2c8] sm:$0xff]
        %v3808 = vld [vmem:[%s562 + $0x2d0] sm:$0xff]
        %v3809 = vld [vmem:[%s562 + $0x2d8] sm:$0xff]
        %v3810 = vld [vmem:[%s562 + $0x2e0] sm:$0xff]
        %v3811 = vld [vmem:[%s562 + $0x2e8] sm:$0xff]
        %v3812 = vld [vmem:[%s562 + $0x2f0] sm:$0xff]
        %v3813 = vld [vmem:[%s562 + $0x2f8] sm:$0xff]
        %v3814 = vld [vmem:[%s562 + $0x300] sm:$0xff]
        %v3815 = vld [vmem:[%s562 + $0x308] sm:$0xff]
        %v3816 = vld [vmem:[%s562 + $0x310] sm:$0xff]
        %v3817 = vld [vmem:[%s562 + $0x318] sm:$0xff]
        %v3818 = vld [vmem:[%s562 + $0x320] sm:$0xff]
        %v3819 = vld [vmem:[%s562 + $0x328] sm:$0xff]
        %v3820 = vld [vmem:[%s562 + $0x330] sm:$0xff]
        %v3821 = vld [vmem:[%s562 + $0x338] sm:$0xff]
        %v3822 = vld [vmem:[%s562 + $0x340] sm:$0xff]
        %v3823 = vld [vmem:[%s562 + $0x348] sm:$0xff]
        %v3824 = vld [vmem:[%s562 + $0x350] sm:$0xff]
        %v3825 = vld [vmem:[%s562 + $0x358] sm:$0xff]
        %v3826 = vld [vmem:[%s562 + $0x360] sm:$0xff]
        %v3827 = vld [vmem:[%s562 + $0x368] sm:$0xff]
        %v3828 = vld [vmem:[%s562 + $0x370] sm:$0xff]
        %v3829 = vld [vmem:[%s562 + $0x378] sm:$0xff]
        %v3830 = vld [vmem:[%s562 + $0x380] sm:$0xff]
        %v3831 = vld [vmem:[%s562 + $0x388] sm:$0xff]
        %v3832 = vld [vmem:[%s562 + $0x390] sm:$0xff]
        %v3833 = vld [vmem:[%s562 + $0x398] sm:$0xff]
        %v3834 = vld [vmem:[%s562 + $0x3a0] sm:$0xff]
        %v3835 = vld [vmem:[%s562 + $0x3a8] sm:$0xff]
        %v3836 = vld [vmem:[%s562 + $0x3b0] sm:$0xff]
        %v3837 = vld [vmem:[%s562 + $0x3b8] sm:$0xff]
        %v3838 = vld [vmem:[%s562 + $0x3c0] sm:$0xff]
        %v3839 = vld [vmem:[%s562 + $0x3c8] sm:$0xff]
        %v3840 = vld [vmem:[%s562 + $0x3d0] sm:$0xff]
        %v3841 = vld [vmem:[%s562 + $0x3d8] sm:$0xff]
        %v3842 = vld [vmem:[%s562 + $0x3e0] sm:$0xff]
        %v3843 = vld [vmem:[%s562 + $0x3e8] sm:$0xff]
        %v3844 = vld [vmem:[%s562 + $0x3f0] sm:$0xff]
        %v3845 = vld [vmem:[%s562 + $0x3f8] sm:$0xff]
        %v3974 = vunpack.c.l.b16 %v3718
        %v3975 = vunpack.c.h.b16 %v3718
        %v3976 = vunpack.c.l.b16 %v3719
        %v3977 = vunpack.c.h.b16 %v3719
        %v3978 = vunpack.c.l.b16 %v3720
        %v3979 = vunpack.c.h.b16 %v3720
        %v3980 = vunpack.c.l.b16 %v3721
        %v3981 = vunpack.c.h.b16 %v3721
        %v3982 = vunpack.c.l.b16 %v3722
        %v3983 = vunpack.c.h.b16 %v3722
        %v3984 = vunpack.c.l.b16 %v3723
        %v3985 = vunpack.c.h.b16 %v3723
        %v3986 = vunpack.c.l.b16 %v3724
        %v3987 = vunpack.c.h.b16 %v3724
        %v3988 = vunpack.c.l.b16 %v3725
        %v3989 = vunpack.c.h.b16 %v3725
        %v3990 = vunpack.c.l.b16 %v3726
        %v3991 = vunpack.c.h.b16 %v3726
        %v3992 = vunpack.c.l.b16 %v3727
        %v3993 = vunpack.c.h.b16 %v3727
        %v3994 = vunpack.c.l.b16 %v3728
        %v3995 = vunpack.c.h.b16 %v3728
        %v3996 = vunpack.c.l.b16 %v3729
        %v3997 = vunpack.c.h.b16 %v3729
        %v3998 = vunpack.c.l.b16 %v3730
        %v3999 = vunpack.c.h.b16 %v3730
        %v4000 = vunpack.c.l.b16 %v3731
        %v4001 = vunpack.c.h.b16 %v3731
        %v4002 = vunpack.c.l.b16 %v3732
        %v4003 = vunpack.c.h.b16 %v3732
        %v4004 = vunpack.c.l.b16 %v3733
        %v4005 = vunpack.c.h.b16 %v3733
        %v4006 = vunpack.c.l.b16 %v3734
        %v4007 = vunpack.c.h.b16 %v3734
        %v4008 = vunpack.c.l.b16 %v3735
        %v4009 = vunpack.c.h.b16 %v3735
        %v4010 = vunpack.c.l.b16 %v3736
        %v4011 = vunpack.c.h.b16 %v3736
        %v4012 = vunpack.c.l.b16 %v3737
        %v4013 = vunpack.c.h.b16 %v3737
        %v4014 = vunpack.c.l.b16 %v3738
        %v4015 = vunpack.c.h.b16 %v3738
        %v4016 = vunpack.c.l.b16 %v3739
        %v4017 = vunpack.c.h.b16 %v3739
        %v4018 = vunpack.c.l.b16 %v3740
        %v4019 = vunpack.c.h.b16 %v3740
        %v4020 = vunpack.c.l.b16 %v3741
        %v4021 = vunpack.c.h.b16 %v3741
        %v4022 = vunpack.c.l.b16 %v3742
        %v4023 = vunpack.c.h.b16 %v3742
        %v4024 = vunpack.c.l.b16 %v3743
        %v4025 = vunpack.c.h.b16 %v3743
        %v4026 = vunpack.c.l.b16 %v3744
        %v4027 = vunpack.c.h.b16 %v3744
        %v4028 = vunpack.c.l.b16 %v3745
        %v4029 = vunpack.c.h.b16 %v3745
        %v4030 = vunpack.c.l.b16 %v3746
        %v4031 = vunpack.c.h.b16 %v3746
        %v4032 = vunpack.c.l.b16 %v3747
        %v4033 = vunpack.c.h.b16 %v3747
        %v4034 = vunpack.c.l.b16 %v3748
        %v4035 = vunpack.c.h.b16 %v3748
        %v4036 = vunpack.c.l.b16 %v3749
        %v4037 = vunpack.c.h.b16 %v3749
        %v4038 = vunpack.c.l.b16 %v3750
        %v4039 = vunpack.c.h.b16 %v3750
        %v4040 = vunpack.c.l.b16 %v3751
        %v4041 = vunpack.c.h.b16 %v3751
        %v4042 = vunpack.c.l.b16 %v3752
        %v4043 = vunpack.c.h.b16 %v3752
        %v4044 = vunpack.c.l.b16 %v3753
        %v4045 = vunpack.c.h.b16 %v3753
        %v4046 = vunpack.c.l.b16 %v3754
        %v4047 = vunpack.c.h.b16 %v3754
        %v4048 = vunpack.c.l.b16 %v3755
        %v4049 = vunpack.c.h.b16 %v3755
        %v4050 = vunpack.c.l.b16 %v3756
        %v4051 = vunpack.c.h.b16 %v3756
        %v4052 = vunpack.c.l.b16 %v3757
        %v4053 = vunpack.c.h.b16 %v3757
        %v4054 = vunpack.c.l.b16 %v3758
        %v4055 = vunpack.c.h.b16 %v3758
        %v4056 = vunpack.c.l.b16 %v3759
        %v4057 = vunpack.c.h.b16 %v3759
        %v4058 = vunpack.c.l.b16 %v3760
        %v4059 = vunpack.c.h.b16 %v3760
        %v4060 = vunpack.c.l.b16 %v3761
        %v4061 = vunpack.c.h.b16 %v3761
        %v4062 = vunpack.c.l.b16 %v3762
        %v4063 = vunpack.c.h.b16 %v3762
        %v4064 = vunpack.c.l.b16 %v3763
        %v4065 = vunpack.c.h.b16 %v3763
        %v4066 = vunpack.c.l.b16 %v3764
        %v4067 = vunpack.c.h.b16 %v3764
        %v4068 = vunpack.c.l.b16 %v3765
        %v4069 = vunpack.c.h.b16 %v3765
        %v4070 = vunpack.c.l.b16 %v3766
        %v4071 = vunpack.c.h.b16 %v3766
        %v4072 = vunpack.c.l.b16 %v3767
        %v4073 = vunpack.c.h.b16 %v3767
        %v4074 = vunpack.c.l.b16 %v3768
        %v4075 = vunpack.c.h.b16 %v3768
        %v4076 = vunpack.c.l.b16 %v3769
        %v4077 = vunpack.c.h.b16 %v3769
        %v4078 = vunpack.c.l.b16 %v3770
        %v4079 = vunpack.c.h.b16 %v3770
        %v4080 = vunpack.c.l.b16 %v3771
        %v4081 = vunpack.c.h.b16 %v3771
        %v4082 = vunpack.c.l.b16 %v3772
        %v4083 = vunpack.c.h.b16 %v3772
        %v4084 = vunpack.c.l.b16 %v3773
        %v4085 = vunpack.c.h.b16 %v3773
        %v4086 = vunpack.c.l.b16 %v3774
        %v4087 = vunpack.c.h.b16 %v3774
        %v4088 = vunpack.c.l.b16 %v3775
        %v4089 = vunpack.c.h.b16 %v3775
        %v4090 = vunpack.c.l.b16 %v3776
        %v4091 = vunpack.c.h.b16 %v3776
        %v4092 = vunpack.c.l.b16 %v3777
        %v4093 = vunpack.c.h.b16 %v3777
        %v4094 = vunpack.c.l.b16 %v3778
        %v4095 = vunpack.c.h.b16 %v3778
        %v4096 = vunpack.c.l.b16 %v3779
        %v4097 = vunpack.c.h.b16 %v3779
        %v4098 = vunpack.c.l.b16 %v3780
        %v4099 = vunpack.c.h.b16 %v3780
        %v4100 = vunpack.c.l.b16 %v3781
        %v4101 = vunpack.c.h.b16 %v3781
        %v4102 = vunpack.c.l.b16 %v3782
        %v4103 = vunpack.c.h.b16 %v3782
        %v4104 = vunpack.c.l.b16 %v3783
        %v4105 = vunpack.c.h.b16 %v3783
        %v4106 = vunpack.c.l.b16 %v3784
        %v4107 = vunpack.c.h.b16 %v3784
        %v4108 = vunpack.c.l.b16 %v3785
        %v4109 = vunpack.c.h.b16 %v3785
        %v4110 = vunpack.c.l.b16 %v3786
        %v4111 = vunpack.c.h.b16 %v3786
        %v4112 = vunpack.c.l.b16 %v3787
        %v4113 = vunpack.c.h.b16 %v3787
        %v4114 = vunpack.c.l.b16 %v3788
        %v4115 = vunpack.c.h.b16 %v3788
        %v4116 = vunpack.c.l.b16 %v3789
        %v4117 = vunpack.c.h.b16 %v3789
        %v4118 = vunpack.c.l.b16 %v3790
        %v4119 = vunpack.c.h.b16 %v3790
        %v4120 = vunpack.c.l.b16 %v3791
        %v4121 = vunpack.c.h.b16 %v3791
        %v4122 = vunpack.c.l.b16 %v3792
        %v4123 = vunpack.c.h.b16 %v3792
        %v4124 = vunpack.c.l.b16 %v3793
        %v4125 = vunpack.c.h.b16 %v3793
        %v4126 = vunpack.c.l.b16 %v3794
        %v4127 = vunpack.c.h.b16 %v3794
        %v4128 = vunpack.c.l.b16 %v3795
        %v4129 = vunpack.c.h.b16 %v3795
        %v4130 = vunpack.c.l.b16 %v3796
        %v4131 = vunpack.c.h.b16 %v3796
        %v4132 = vunpack.c.l.b16 %v3797
        %v4133 = vunpack.c.h.b16 %v3797
        %v4134 = vunpack.c.l.b16 %v3798
        %v4135 = vunpack.c.h.b16 %v3798
        %v4136 = vunpack.c.l.b16 %v3799
        %v4137 = vunpack.c.h.b16 %v3799
        %v4138 = vunpack.c.l.b16 %v3800
        %v4139 = vunpack.c.h.b16 %v3800
        %v4140 = vunpack.c.l.b16 %v3801
        %v4141 = vunpack.c.h.b16 %v3801
        %v4142 = vunpack.c.l.b16 %v3802
        %v4143 = vunpack.c.h.b16 %v3802
        %v4144 = vunpack.c.l.b16 %v3803
        %v4145 = vunpack.c.h.b16 %v3803
        %v4146 = vunpack.c.l.b16 %v3804
        %v4147 = vunpack.c.h.b16 %v3804
        %v4148 = vunpack.c.l.b16 %v3805
        %v4149 = vunpack.c.h.b16 %v3805
        %v4150 = vunpack.c.l.b16 %v3806
        %v4151 = vunpack.c.h.b16 %v3806
        %v4152 = vunpack.c.l.b16 %v3807
        %v4153 = vunpack.c.h.b16 %v3807
        %v4154 = vunpack.c.l.b16 %v3808
        %v4155 = vunpack.c.h.b16 %v3808
        %v4156 = vunpack.c.l.b16 %v3809
        %v4157 = vunpack.c.h.b16 %v3809
        %v4158 = vunpack.c.l.b16 %v3810
        %v4159 = vunpack.c.h.b16 %v3810
        %v4160 = vunpack.c.l.b16 %v3811
        %v4161 = vunpack.c.h.b16 %v3811
        %v4162 = vunpack.c.l.b16 %v3812
        %v4163 = vunpack.c.h.b16 %v3812
        %v4164 = vunpack.c.l.b16 %v3813
        %v4165 = vunpack.c.h.b16 %v3813
        %v4166 = vunpack.c.l.b16 %v3814
        %v4167 = vunpack.c.h.b16 %v3814
        %v4168 = vunpack.c.l.b16 %v3815
        %v4169 = vunpack.c.h.b16 %v3815
        %v4170 = vunpack.c.l.b16 %v3816
        %v4171 = vunpack.c.h.b16 %v3816
        %v4172 = vunpack.c.l.b16 %v3817
        %v4173 = vunpack.c.h.b16 %v3817
        %v4174 = vunpack.c.l.b16 %v3818
        %v4175 = vunpack.c.h.b16 %v3818
        %v4176 = vunpack.c.l.b16 %v3819
        %v4177 = vunpack.c.h.b16 %v3819
        %v4178 = vunpack.c.l.b16 %v3820
        %v4179 = vunpack.c.h.b16 %v3820
        %v4180 = vunpack.c.l.b16 %v3821
        %v4181 = vunpack.c.h.b16 %v3821
        %v4182 = vunpack.c.l.b16 %v3822
        %v4183 = vunpack.c.h.b16 %v3822
        %v4184 = vunpack.c.l.b16 %v3823
        %v4185 = vunpack.c.h.b16 %v3823
        %v4186 = vunpack.c.l.b16 %v3824
        %v4187 = vunpack.c.h.b16 %v3824
        %v4188 = vunpack.c.l.b16 %v3825
        %v4189 = vunpack.c.h.b16 %v3825
        %v4190 = vunpack.c.l.b16 %v3826
        %v4191 = vunpack.c.h.b16 %v3826
        %v4192 = vunpack.c.l.b16 %v3827
        %v4193 = vunpack.c.h.b16 %v3827
        %v4194 = vunpack.c.l.b16 %v3828
        %v4195 = vunpack.c.h.b16 %v3828
        %v4196 = vunpack.c.l.b16 %v3829
        %v4197 = vunpack.c.h.b16 %v3829
        %v4198 = vunpack.c.l.b16 %v3830
        %v4199 = vunpack.c.h.b16 %v3830
        %v4200 = vunpack.c.l.b16 %v3831
        %v4201 = vunpack.c.h.b16 %v3831
        %v4202 = vunpack.c.l.b16 %v3832
        %v4203 = vunpack.c.h.b16 %v3832
        %v4204 = vunpack.c.l.b16 %v3833
        %v4205 = vunpack.c.h.b16 %v3833
        %v4206 = vunpack.c.l.b16 %v3834
        %v4207 = vunpack.c.h.b16 %v3834
        %v4208 = vunpack.c.l.b16 %v3835
        %v4209 = vunpack.c.h.b16 %v3835
        %v4210 = vunpack.c.l.b16 %v3836
        %v4211 = vunpack.c.h.b16 %v3836
        %v4212 = vunpack.c.l.b16 %v3837
        %v4213 = vunpack.c.h.b16 %v3837
        %v4214 = vunpack.c.l.b16 %v3838
        %v4215 = vunpack.c.h.b16 %v3838
        %v4216 = vunpack.c.l.b16 %v3839
        %v4217 = vunpack.c.h.b16 %v3839
        %v4218 = vunpack.c.l.b16 %v3840
        %v4219 = vunpack.c.h.b16 %v3840
        %v4220 = vunpack.c.l.b16 %v3841
        %v4221 = vunpack.c.h.b16 %v3841
        %v4222 = vunpack.c.l.b16 %v3842
        %v4223 = vunpack.c.h.b16 %v3842
        %v4224 = vunpack.c.l.b16 %v3843
        %v4225 = vunpack.c.h.b16 %v3843
        %v4226 = vunpack.c.l.b16 %v3844
        %v4227 = vunpack.c.h.b16 %v3844
        %v4228 = vunpack.c.l.b16 %v3845
        %v4229 = vunpack.c.h.b16 %v3845
        %v4230 = vpack.c.b16 %v3982, %v3974
        %v4231 = vpack.c.b16 %v3983, %v3975
        %v4232 = vpack.c.b16 %v3984, %v3976
        %v4233 = vpack.c.b16 %v3985, %v3977
        %v4234 = vpack.c.b16 %v3986, %v3978
        %v4235 = vpack.c.b16 %v3987, %v3979
        %v4236 = vpack.c.b16 %v3988, %v3980
        %v4237 = vpack.c.b16 %v3989, %v3981
        %v4238 = vpack.c.b16 %v3998, %v3990
        %v4239 = vpack.c.b16 %v3999, %v3991
        %v4240 = vpack.c.b16 %v4000, %v3992
        %v4241 = vpack.c.b16 %v4001, %v3993
        %v4242 = vpack.c.b16 %v4002, %v3994
        %v4243 = vpack.c.b16 %v4003, %v3995
        %v4244 = vpack.c.b16 %v4004, %v3996
        %v4245 = vpack.c.b16 %v4005, %v3997
        %v4246 = vpack.c.b16 %v4014, %v4006
        %v4247 = vpack.c.b16 %v4015, %v4007
        %v4248 = vpack.c.b16 %v4016, %v4008
        %v4249 = vpack.c.b16 %v4017, %v4009
        %v4250 = vpack.c.b16 %v4018, %v4010
        %v4251 = vpack.c.b16 %v4019, %v4011
        %v4252 = vpack.c.b16 %v4020, %v4012
        %v4253 = vpack.c.b16 %v4021, %v4013
        %v4254 = vpack.c.b16 %v4030, %v4022
        %v4255 = vpack.c.b16 %v4031, %v4023
        %v4256 = vpack.c.b16 %v4032, %v4024
        %v4257 = vpack.c.b16 %v4033, %v4025
        %v4258 = vpack.c.b16 %v4034, %v4026
        %v4259 = vpack.c.b16 %v4035, %v4027
        %v4260 = vpack.c.b16 %v4036, %v4028
        %v4261 = vpack.c.b16 %v4037, %v4029
        %v4262 = vpack.c.b16 %v4046, %v4038
        %v4263 = vpack.c.b16 %v4047, %v4039
        %v4264 = vpack.c.b16 %v4048, %v4040
        %v4265 = vpack.c.b16 %v4049, %v4041
        %v4266 = vpack.c.b16 %v4050, %v4042
        %v4267 = vpack.c.b16 %v4051, %v4043
        %v4268 = vpack.c.b16 %v4052, %v4044
        %v4269 = vpack.c.b16 %v4053, %v4045
        %v4270 = vpack.c.b16 %v4062, %v4054
        %v4271 = vpack.c.b16 %v4063, %v4055
        %v4272 = vpack.c.b16 %v4064, %v4056
        %v4273 = vpack.c.b16 %v4065, %v4057
        %v4274 = vpack.c.b16 %v4066, %v4058
        %v4275 = vpack.c.b16 %v4067, %v4059
        %v4276 = vpack.c.b16 %v4068, %v4060
        %v4277 = vpack.c.b16 %v4069, %v4061
        %v4278 = vpack.c.b16 %v4078, %v4070
        %v4279 = vpack.c.b16 %v4079, %v4071
        %v4280 = vpack.c.b16 %v4080, %v4072
        %v4281 = vpack.c.b16 %v4081, %v4073
        %v4282 = vpack.c.b16 %v4082, %v4074
        %v4283 = vpack.c.b16 %v4083, %v4075
        %v4284 = vpack.c.b16 %v4084, %v4076
        %v4285 = vpack.c.b16 %v4085, %v4077
        %v4286 = vpack.c.b16 %v4094, %v4086
        %v4287 = vpack.c.b16 %v4095, %v4087
        %v4288 = vpack.c.b16 %v4096, %v4088
        %v4289 = vpack.c.b16 %v4097, %v4089
        %v4290 = vpack.c.b16 %v4098, %v4090
        %v4291 = vpack.c.b16 %v4099, %v4091
        %v4292 = vpack.c.b16 %v4100, %v4092
        %v4293 = vpack.c.b16 %v4101, %v4093
        %v4294 = vpack.c.b16 %v4110, %v4102
        %v4295 = vpack.c.b16 %v4111, %v4103
        %v4296 = vpack.c.b16 %v4112, %v4104
        %v4297 = vpack.c.b16 %v4113, %v4105
        %v4298 = vpack.c.b16 %v4114, %v4106
        %v4299 = vpack.c.b16 %v4115, %v4107
        %v4300 = vpack.c.b16 %v4116, %v4108
        %v4301 = vpack.c.b16 %v4117, %v4109
        %v4302 = vpack.c.b16 %v4126, %v4118
        %v4303 = vpack.c.b16 %v4127, %v4119
        %v4304 = vpack.c.b16 %v4128, %v4120
        %v4305 = vpack.c.b16 %v4129, %v4121
        %v4306 = vpack.c.b16 %v4130, %v4122
        %v4307 = vpack.c.b16 %v4131, %v4123
        %v4308 = vpack.c.b16 %v4132, %v4124
        %v4309 = vpack.c.b16 %v4133, %v4125
        %v4310 = vpack.c.b16 %v4142, %v4134
        %v4311 = vpack.c.b16 %v4143, %v4135
        %v4312 = vpack.c.b16 %v4144, %v4136
        %v4313 = vpack.c.b16 %v4145, %v4137
        %v4314 = vpack.c.b16 %v4146, %v4138
        %v4315 = vpack.c.b16 %v4147, %v4139
        %v4316 = vpack.c.b16 %v4148, %v4140
        %v4317 = vpack.c.b16 %v4149, %v4141
        %v4318 = vpack.c.b16 %v4158, %v4150
        %v4319 = vpack.c.b16 %v4159, %v4151
        %v4320 = vpack.c.b16 %v4160, %v4152
        %v4321 = vpack.c.b16 %v4161, %v4153
        %v4322 = vpack.c.b16 %v4162, %v4154
        %v4323 = vpack.c.b16 %v4163, %v4155
        %v4324 = vpack.c.b16 %v4164, %v4156
        %v4325 = vpack.c.b16 %v4165, %v4157
        %v4326 = vpack.c.b16 %v4174, %v4166
        %v4327 = vpack.c.b16 %v4175, %v4167
        %v4328 = vpack.c.b16 %v4176, %v4168
        %v4329 = vpack.c.b16 %v4177, %v4169
        %v4330 = vpack.c.b16 %v4178, %v4170
        %v4331 = vpack.c.b16 %v4179, %v4171
        %v4332 = vpack.c.b16 %v4180, %v4172
        %v4333 = vpack.c.b16 %v4181, %v4173
        %v4334 = vpack.c.b16 %v4190, %v4182
        %v4335 = vpack.c.b16 %v4191, %v4183
        %v4336 = vpack.c.b16 %v4192, %v4184
        %v4337 = vpack.c.b16 %v4193, %v4185
        %v4338 = vpack.c.b16 %v4194, %v4186
        %v4339 = vpack.c.b16 %v4195, %v4187
        %v4340 = vpack.c.b16 %v4196, %v4188
        %v4341 = vpack.c.b16 %v4197, %v4189
        %v4342 = vpack.c.b16 %v4206, %v4198
        %v4343 = vpack.c.b16 %v4207, %v4199
        %v4344 = vpack.c.b16 %v4208, %v4200
        %v4345 = vpack.c.b16 %v4209, %v4201
        %v4346 = vpack.c.b16 %v4210, %v4202
        %v4347 = vpack.c.b16 %v4211, %v4203
        %v4348 = vpack.c.b16 %v4212, %v4204
        %v4349 = vpack.c.b16 %v4213, %v4205
        %v4350 = vpack.c.b16 %v4222, %v4214
        %v4351 = vpack.c.b16 %v4223, %v4215
        %v4352 = vpack.c.b16 %v4224, %v4216
        %v4353 = vpack.c.b16 %v4225, %v4217
        %v4354 = vpack.c.b16 %v4226, %v4218
        %v4355 = vpack.c.b16 %v4227, %v4219
        %v4356 = vpack.c.b16 %v4228, %v4220
        %v4357 = vpack.c.b16 %v4229, %v4221
        %4486 = vmatprep.subr.bf16.mxu0 %v4287
        %4487 = vmatpush1.bf16.msra.mxu0 %v4286
        %4488 = vmatprep.subr.bf16.mxu0 %v4279
        %4489 = vmatpush1.bf16.msra.mxu0 %v4278
        %4490 = vmatprep.subr.bf16.mxu0 %v4271
        %4491 = vmatpush1.bf16.msra.mxu0 %v4270
        %4492 = vmatprep.subr.bf16.mxu0 %v4263
        %4493 = vmatpush1.bf16.msra.mxu0 %v4262
        %4494 = vmatprep.subr.bf16.mxu0 %v4255
        %4495 = vmatpush1.bf16.msra.mxu0 %v4254
        %4496 = vmatprep.subr.bf16.mxu0 %v4247
        %4497 = vmatpush1.bf16.msra.mxu0 %v4246
        %4498 = vmatprep.subr.bf16.mxu0 %v4239
        %4499 = vmatpush1.bf16.msra.mxu0 %v4238
        %4500 = vmatprep.subr.bf16.mxu0 %v4231
        %4501 = vmatpush1.bf16.msra.mxu0 %v4230
        %4502 = vmatprep.subr.bf16.mxu0 %v4351
        %4503 = vmatpush2.bf16.msra.mxu0 %v4350
        %4504 = vmatprep.subr.bf16.mxu0 %v4343
        %4505 = vmatpush2.bf16.msra.mxu0 %v4342
        %4506 = vmatprep.subr.bf16.mxu0 %v4335
        %4507 = vmatpush2.bf16.msra.mxu0 %v4334
        %4508 = vmatprep.subr.bf16.mxu0 %v4327
        %4509 = vmatpush2.bf16.msra.mxu0 %v4326
        %4510 = vmatprep.subr.bf16.mxu0 %v4319
        %4511 = vmatpush2.bf16.msra.mxu0 %v4318
        %4512 = vmatprep.subr.bf16.mxu0 %v4311
        %4513 = vmatpush2.bf16.msra.mxu0 %v4310
        %4514 = vmatprep.subr.bf16.mxu0 %v4303
        %4515 = vmatpush2.bf16.msra.mxu0 %v4302
        %4516 = vmatprep.subr.bf16.mxu0 %v4295
        %4517 = vmatpush2.bf16.msra.mxu0 %v4294
        %4518 = vmatprep.mubr.bf16.mxu0 %v3717
        %4519 = vmatmul.mubr.bf16.gmra.mxu0 %v3716
        %v4520 = vpop.f32.mrf.mxu0
        %v4521 = vadd.f32 0.0, %v4520
        %v4522 = vpop.f32.mrf.mxu0
        %v4523 = vadd.f32 0.0, %v4522
        %v4524 = vpop.f32.mrf.mxu0
        %v4525 = vpop.f32.mrf.mxu0
        %4526 = vdwg.mxu0
        %4527 = vmatprep.subr.bf16.mxu0 %v4289
        %4528 = vmatpush1.bf16.msra.mxu0 %v4288
        %4529 = vmatprep.subr.bf16.mxu0 %v4281
        %4530 = vmatpush1.bf16.msra.mxu0 %v4280
        %4531 = vmatprep.subr.bf16.mxu0 %v4273
        %4532 = vmatpush1.bf16.msra.mxu0 %v4272
        %4533 = vmatprep.subr.bf16.mxu0 %v4265
        %4534 = vmatpush1.bf16.msra.mxu0 %v4264
        %4535 = vmatprep.subr.bf16.mxu0 %v4257
        %4536 = vmatpush1.bf16.msra.mxu0 %v4256
        %4537 = vmatprep.subr.bf16.mxu0 %v4249
        %4538 = vmatpush1.bf16.msra.mxu0 %v4248
        %4539 = vmatprep.subr.bf16.mxu0 %v4241
        %4540 = vmatpush1.bf16.msra.mxu0 %v4240
        %4541 = vmatprep.subr.bf16.mxu0 %v4233
        %4542 = vmatpush1.bf16.msra.mxu0 %v4232
        %4543 = vmatprep.subr.bf16.mxu0 %v4353
        %4544 = vmatpush2.bf16.msra.mxu0 %v4352
        %4545 = vmatprep.subr.bf16.mxu0 %v4345
        %4546 = vmatpush2.bf16.msra.mxu0 %v4344
        %4547 = vmatprep.subr.bf16.mxu0 %v4337
        %4548 = vmatpush2.bf16.msra.mxu0 %v4336
        %4549 = vmatprep.subr.bf16.mxu0 %v4329
        %4550 = vmatpush2.bf16.msra.mxu0 %v4328
        %4551 = vmatprep.subr.bf16.mxu0 %v4321
        %4552 = vmatpush2.bf16.msra.mxu0 %v4320
        %4553 = vmatprep.subr.bf16.mxu0 %v4313
        %4554 = vmatpush2.bf16.msra.mxu0 %v4312
        %4555 = vmatprep.subr.bf16.mxu0 %v4305
        %4556 = vmatpush2.bf16.msra.mxu0 %v4304
        %4557 = vmatprep.subr.bf16.mxu0 %v4297
        %4558 = vmatpush2.bf16.msra.mxu0 %v4296
        %4559 = vmatprep.mubr.bf16.mxu0 %v3717
        %4560 = vmatmul.mubr.bf16.gmra.mxu0 %v3716
        %v4561 = vpop.f32.mrf.mxu0
        %v4562 = vadd.f32 0.0, %v4561
        %v4563 = vpop.f32.mrf.mxu0
        %v4564 = vadd.f32 0.0, %v4563
        %v4565 = vpop.f32.mrf.mxu0
        %v4566 = vpop.f32.mrf.mxu0
        %4567 = vdwg.mxu0
        %4568 = vmatprep.subr.bf16.mxu0 %v4291
        %4569 = vmatpush1.bf16.msra.mxu0 %v4290
        %4570 = vmatprep.subr.bf16.mxu0 %v4283
        %4571 = vmatpush1.bf16.msra.mxu0 %v4282
        %4572 = vmatprep.subr.bf16.mxu0 %v4275
        %4573 = vmatpush1.bf16.msra.mxu0 %v4274
        %4574 = vmatprep.subr.bf16.mxu0 %v4267
        %4575 = vmatpush1.bf16.msra.mxu0 %v4266
        %4576 = vmatprep.subr.bf16.mxu0 %v4259
        %4577 = vmatpush1.bf16.msra.mxu0 %v4258
        %4578 = vmatprep.subr.bf16.mxu0 %v4251
        %4579 = vmatpush1.bf16.msra.mxu0 %v4250
        %4580 = vmatprep.subr.bf16.mxu0 %v4243
        %4581 = vmatpush1.bf16.msra.mxu0 %v4242
        %4582 = vmatprep.subr.bf16.mxu0 %v4235
        %4583 = vmatpush1.bf16.msra.mxu0 %v4234
        %4584 = vmatprep.subr.bf16.mxu0 %v4355
        %4585 = vmatpush2.bf16.msra.mxu0 %v4354
        %4586 = vmatprep.subr.bf16.mxu0 %v4347
        %4587 = vmatpush2.bf16.msra.mxu0 %v4346
        %4588 = vmatprep.subr.bf16.mxu0 %v4339
        %4589 = vmatpush2.bf16.msra.mxu0 %v4338
        %4590 = vmatprep.subr.bf16.mxu0 %v4331
        %4591 = vmatpush2.bf16.msra.mxu0 %v4330
        %4592 = vmatprep.subr.bf16.mxu0 %v4323
        %4593 = vmatpush2.bf16.msra.mxu0 %v4322
        %4594 = vmatprep.subr.bf16.mxu0 %v4315
        %4595 = vmatpush2.bf16.msra.mxu0 %v4314
        %4596 = vmatprep.subr.bf16.mxu0 %v4307
        %4597 = vmatpush2.bf16.msra.mxu0 %v4306
        %4598 = vmatprep.subr.bf16.mxu0 %v4299
        %4599 = vmatpush2.bf16.msra.mxu0 %v4298
        %4600 = vmatprep.mubr.bf16.mxu0 %v3717
        %4601 = vmatmul.mubr.bf16.gmra.mxu0 %v3716
        %v4602 = vpop.f32.mrf.mxu0
        %v4603 = vadd.f32 0.0, %v4602
        %v4604 = vpop.f32.mrf.mxu0
        %v4605 = vadd.f32 0.0, %v4604
        %v4606 = vpop.f32.mrf.mxu0
        %v4607 = vpop.f32.mrf.mxu0
        %4608 = vdwg.mxu0
        %4609 = vmatprep.subr.bf16.mxu0 %v4293
        %4610 = vmatpush1.bf16.msra.mxu0 %v4292
        %4611 = vmatprep.subr.bf16.mxu0 %v4285
        %4612 = vmatpush1.bf16.msra.mxu0 %v4284
        %4613 = vmatprep.subr.bf16.mxu0 %v4277
        %4614 = vmatpush1.bf16.msra.mxu0 %v4276
        %4615 = vmatprep.subr.bf16.mxu0 %v4269
        %4616 = vmatpush1.bf16.msra.mxu0 %v4268
        %4617 = vmatprep.subr.bf16.mxu0 %v4261
        %4618 = vmatpush1.bf16.msra.mxu0 %v4260
        %4619 = vmatprep.subr.bf16.mxu0 %v4253
        %4620 = vmatpush1.bf16.msra.mxu0 %v4252
        %4621 = vmatprep.subr.bf16.mxu0 %v4245
        %4622 = vmatpush1.bf16.msra.mxu0 %v4244
        %4623 = vmatprep.subr.bf16.mxu0 %v4237
        %4624 = vmatpush1.bf16.msra.mxu0 %v4236
        %4625 = vmatprep.subr.bf16.mxu0 %v4357
        %4626 = vmatpush2.bf16.msra.mxu0 %v4356
        %4627 = vmatprep.subr.bf16.mxu0 %v4349
        %4628 = vmatpush2.bf16.msra.mxu0 %v4348
        %4629 = vmatprep.subr.bf16.mxu0 %v4341
        %4630 = vmatpush2.bf16.msra.mxu0 %v4340
        %4631 = vmatprep.subr.bf16.mxu0 %v4333
        %4632 = vmatpush2.bf16.msra.mxu0 %v4332
        %4633 = vmatprep.subr.bf16.mxu0 %v4325
        %4634 = vmatpush2.bf16.msra.mxu0 %v4324
        %4635 = vmatprep.subr.bf16.mxu0 %v4317
        %4636 = vmatpush2.bf16.msra.mxu0 %v4316
        %4637 = vmatprep.subr.bf16.mxu0 %v4309
        %4638 = vmatpush2.bf16.msra.mxu0 %v4308
        %4639 = vmatprep.subr.bf16.mxu0 %v4301
        %4640 = vmatpush2.bf16.msra.mxu0 %v4300
        %4641 = vmatprep.mubr.bf16.mxu0 %v3717
        %4642 = vmatmul.mubr.bf16.gmra.mxu0 %v3716
        %v4643 = vpop.f32.mrf.mxu0
        %v4644 = vadd.f32 0.0, %v4643
        %v4645 = vpop.f32.mrf.mxu0
        %v4646 = vadd.f32 0.0, %v4645
        %v4647 = vpop.f32.mrf.mxu0
        %v4648 = vpop.f32.mrf.mxu0
        %4649 = vdwg.mxu0
        %v4658 = vcombine.low %v4521, %v4523
        %v4659 = vcombine.low %v4562, %v4564
        %v4660 = vcombine.low %v4603, %v4605
        %v4661 = vcombine.low %v4644, %v4646
        %v4663 = vunpack.c.l.s4 1966171168
        %v4664 = vunpack.c.0.s8 %v4663
        %v4665 = vlaneseq
        %v4666 = vshrl.u32 %v4665, 7
        %v4667 = vsub.s32 %v4664, %v4666
        %v4668 = vrot.slane %v4658, %v4667
        %v4670 = vunpack.c.l.s4 1966171168
        %v4671 = vunpack.c.0.s8 %v4670
        %v4672 = vlaneseq
        %v4673 = vshrl.u32 %v4672, 7
        %v4674 = vsub.s32 %v4671, %v4673
        %v4675 = vrot.slane %v4659, %v4674
        %v4677 = vunpack.c.l.s4 1966171168
        %v4678 = vunpack.c.0.s8 %v4677
        %v4679 = vlaneseq
        %v4680 = vshrl.u32 %v4679, 7
        %v4681 = vsub.s32 %v4678, %v4680
        %v4682 = vrot.slane %v4660, %v4681
        %v4684 = vunpack.c.l.s4 1966171168
        %v4685 = vunpack.c.0.s8 %v4684
        %v4686 = vlaneseq
        %v4687 = vshrl.u32 %v4686, 7
        %v4688 = vsub.s32 %v4685, %v4687
        %v4689 = vrot.slane %v4661, %v4688
        %v4690 = vcombine.low %v4668, %v4675
        %v4691 = vcombine.low %v4682, %v4689
        %v4693 = vunpack.c.l.s4 1966171168
        %v4694 = vunpack.c.0.s8 %v4693
        %v4695 = vlaneseq
        %v4696 = vshrl.u32 %v4695, 7
        %v4697 = vsub.s32 %v4694, %v4696
        %v4698 = vrot.slane %v4690, %v4697
        %v4700 = vunpack.c.l.s4 1966171168
        %v4701 = vunpack.c.0.s8 %v4700
        %v4702 = vlaneseq
        %v4703 = vshrl.u32 %v4702, 7
        %v4704 = vsub.s32 %v4701, %v4703
        %v4705 = vrot.slane %v4691, %v4704
        %v4706 = vcombine.low %v4698, %v4705
        %v4708 = vadd.f32 %v3704, %v4706
        %v4709 = vxor.u32 %v4708, 2147483648
        %v4710 = vmul.f32 %v4709, 1.442695
        %v4711 = vpow.pop %v4710
        %v4712 = vadd.f32 %v4711, 1.0
        %v4713 = vrcp.pop %v4712
        %v4714 = vmul.f32 1.0, %v4713
        %v4716 = vrot.slane %v4708, 6
        %v4718 = vtanh.pop %v4716
        %v4720 = vrot.slane %v4714, 2
        %v4722 = vmul.f32 %v4720, %v3693
        %v4723 = vmul.f32 %v4714, %v4718
        %v4724 = vadd.f32 %v4722, %v4723
        %v4725 = vtanh.pop %v4724
        %v4726 = vrot.slane %v4714, 4
        %v4728 = vmul.f32 %v4726, %v4725
        %s4729 = scalar_lea.vmem [#allocation3], 2
        %4730 = vst.msk [vmem:[%s4729] ss:$8 sm:$0x3] %vm2667, %v4728
        %4731 = vst.msk [vmem:[%s4729] ss:$8 sm:$0x0] %vm2667, %v4728
        %s4732 = scalar_lea.vmem [#allocation2], 3
        %v4733 = vld [vmem:[%s4732] ss:$8 sm:$0xf]
        %v4734 = vld [vmem:[%s4732] ss:$8 sm:$0xf0]
        %v4735 = vor.u32 %v4733, %v4734
        %v4737 = vlaneseq
        %v4738 = vshrl.u32 %v4737, 7
        %v4739 = vsub.s32 0, %v4738
        %v4740 = vrot.slane %v4728, %v4739
        %v4741 = vlaneseq
        %v4742 = vshrl.u32 %v4741, 7
        %v4743 = vsub.s32 1, %v4742
        %v4744 = vrot.slane %v4728, %v4743
        %v4747 = vpack.c.bf16 %v4740, %v4740
        %v4748 = vpack.c.bf16 %v4744, %v4744
        %v4749 = vld [vmem:[%s562] sm:$0xff]
        %v4750 = vld [vmem:[%s562 + $0x8] sm:$0xff]
        %v4751 = vld [vmem:[%s562 + $0x10] sm:$0xff]
        %v4752 = vld [vmem:[%s562 + $0x18] sm:$0xff]
        %v4753 = vld [vmem:[%s562 + $0x20] sm:$0xff]
        %v4754 = vld [vmem:[%s562 + $0x28] sm:$0xff]
        %v4755 = vld [vmem:[%s562 + $0x30] sm:$0xff]
        %v4756 = vld [vmem:[%s562 + $0x38] sm:$0xff]
        %v4757 = vld [vmem:[%s562 + $0x40] sm:$0xff]
        %v4758 = vld [vmem:[%s562 + $0x48] sm:$0xff]
        %v4759 = vld [vmem:[%s562 + $0x50] sm:$0xff]
        %v4760 = vld [vmem:[%s562 + $0x58] sm:$0xff]
        %v4761 = vld [vmem:[%s562 + $0x60] sm:$0xff]
        %v4762 = vld [vmem:[%s562 + $0x68] sm:$0xff]
        %v4763 = vld [vmem:[%s562 + $0x70] sm:$0xff]
        %v4764 = vld [vmem:[%s562 + $0x78] sm:$0xff]
        %v4765 = vld [vmem:[%s562 + $0x80] sm:$0xff]
        %v4766 = vld [vmem:[%s562 + $0x88] sm:$0xff]
        %v4767 = vld [vmem:[%s562 + $0x90] sm:$0xff]
        %v4768 = vld [vmem:[%s562 + $0x98] sm:$0xff]
        %v4769 = vld [vmem:[%s562 + $0xa0] sm:$0xff]
        %v4770 = vld [vmem:[%s562 + $0xa8] sm:$0xff]
        %v4771 = vld [vmem:[%s562 + $0xb0] sm:$0xff]
        %v4772 = vld [vmem:[%s562 + $0xb8] sm:$0xff]
        %v4773 = vld [vmem:[%s562 + $0xc0] sm:$0xff]
        %v4774 = vld [vmem:[%s562 + $0xc8] sm:$0xff]
        %v4775 = vld [vmem:[%s562 + $0xd0] sm:$0xff]
        %v4776 = vld [vmem:[%s562 + $0xd8] sm:$0xff]
        %v4777 = vld [vmem:[%s562 + $0xe0] sm:$0xff]
        %v4778 = vld [vmem:[%s562 + $0xe8] sm:$0xff]
        %v4779 = vld [vmem:[%s562 + $0xf0] sm:$0xff]
        %v4780 = vld [vmem:[%s562 + $0xf8] sm:$0xff]
        %v4781 = vld [vmem:[%s562 + $0x100] sm:$0xff]
        %v4782 = vld [vmem:[%s562 + $0x108] sm:$0xff]
        %v4783 = vld [vmem:[%s562 + $0x110] sm:$0xff]
        %v4784 = vld [vmem:[%s562 + $0x118] sm:$0xff]
        %v4785 = vld [vmem:[%s562 + $0x120] sm:$0xff]
        %v4786 = vld [vmem:[%s562 + $0x128] sm:$0xff]
        %v4787 = vld [vmem:[%s562 + $0x130] sm:$0xff]
        %v4788 = vld [vmem:[%s562 + $0x138] sm:$0xff]
        %v4789 = vld [vmem:[%s562 + $0x140] sm:$0xff]
        %v4790 = vld [vmem:[%s562 + $0x148] sm:$0xff]
        %v4791 = vld [vmem:[%s562 + $0x150] sm:$0xff]
        %v4792 = vld [vmem:[%s562 + $0x158] sm:$0xff]
        %v4793 = vld [vmem:[%s562 + $0x160] sm:$0xff]
        %v4794 = vld [vmem:[%s562 + $0x168] sm:$0xff]
        %v4795 = vld [vmem:[%s562 + $0x170] sm:$0xff]
        %v4796 = vld [vmem:[%s562 + $0x178] sm:$0xff]
        %v4797 = vld [vmem:[%s562 + $0x180] sm:$0xff]
        %v4798 = vld [vmem:[%s562 + $0x188] sm:$0xff]
        %v4799 = vld [vmem:[%s562 + $0x190] sm:$0xff]
        %v4800 = vld [vmem:[%s562 + $0x198] sm:$0xff]
        %v4801 = vld [vmem:[%s562 + $0x1a0] sm:$0xff]
        %v4802 = vld [vmem:[%s562 + $0x1a8] sm:$0xff]
        %v4803 = vld [vmem:[%s562 + $0x1b0] sm:$0xff]
        %v4804 = vld [vmem:[%s562 + $0x1b8] sm:$0xff]
        %v4805 = vld [vmem:[%s562 + $0x1c0] sm:$0xff]
        %v4806 = vld [vmem:[%s562 + $0x1c8] sm:$0xff]
        %v4807 = vld [vmem:[%s562 + $0x1d0] sm:$0xff]
        %v4808 = vld [vmem:[%s562 + $0x1d8] sm:$0xff]
        %v4809 = vld [vmem:[%s562 + $0x1e0] sm:$0xff]
        %v4810 = vld [vmem:[%s562 + $0x1e8] sm:$0xff]
        %v4811 = vld [vmem:[%s562 + $0x1f0] sm:$0xff]
        %v4812 = vld [vmem:[%s562 + $0x1f8] sm:$0xff]
        %v4813 = vld [vmem:[%s562 + $0x200] sm:$0xff]
        %v4814 = vld [vmem:[%s562 + $0x208] sm:$0xff]
        %v4815 = vld [vmem:[%s562 + $0x210] sm:$0xff]
        %v4816 = vld [vmem:[%s562 + $0x218] sm:$0xff]
        %v4817 = vld [vmem:[%s562 + $0x220] sm:$0xff]
        %v4818 = vld [vmem:[%s562 + $0x228] sm:$0xff]
        %v4819 = vld [vmem:[%s562 + $0x230] sm:$0xff]
        %v4820 = vld [vmem:[%s562 + $0x238] sm:$0xff]
        %v4821 = vld [vmem:[%s562 + $0x240] sm:$0xff]
        %v4822 = vld [vmem:[%s562 + $0x248] sm:$0xff]
        %v4823 = vld [vmem:[%s562 + $0x250] sm:$0xff]
        %v4824 = vld [vmem:[%s562 + $0x258] sm:$0xff]
        %v4825 = vld [vmem:[%s562 + $0x260] sm:$0xff]
        %v4826 = vld [vmem:[%s562 + $0x268] sm:$0xff]
        %v4827 = vld [vmem:[%s562 + $0x270] sm:$0xff]
        %v4828 = vld [vmem:[%s562 + $0x278] sm:$0xff]
        %v4829 = vld [vmem:[%s562 + $0x280] sm:$0xff]
        %v4830 = vld [vmem:[%s562 + $0x288] sm:$0xff]
        %v4831 = vld [vmem:[%s562 + $0x290] sm:$0xff]
        %v4832 = vld [vmem:[%s562 + $0x298] sm:$0xff]
        %v4833 = vld [vmem:[%s562 + $0x2a0] sm:$0xff]
        %v4834 = vld [vmem:[%s562 + $0x2a8] sm:$0xff]
        %v4835 = vld [vmem:[%s562 + $0x2b0] sm:$0xff]
        %v4836 = vld [vmem:[%s562 + $0x2b8] sm:$0xff]
        %v4837 = vld [vmem:[%s562 + $0x2c0] sm:$0xff]
        %v4838 = vld [vmem:[%s562 + $0x2c8] sm:$0xff]
        %v4839 = vld [vmem:[%s562 + $0x2d0] sm:$0xff]
        %v4840 = vld [vmem:[%s562 + $0x2d8] sm:$0xff]
        %v4841 = vld [vmem:[%s562 + $0x2e0] sm:$0xff]
        %v4842 = vld [vmem:[%s562 + $0x2e8] sm:$0xff]
        %v4843 = vld [vmem:[%s562 + $0x2f0] sm:$0xff]
        %v4844 = vld [vmem:[%s562 + $0x2f8] sm:$0xff]
        %v4845 = vld [vmem:[%s562 + $0x300] sm:$0xff]
        %v4846 = vld [vmem:[%s562 + $0x308] sm:$0xff]
        %v4847 = vld [vmem:[%s562 + $0x310] sm:$0xff]
        %v4848 = vld [vmem:[%s562 + $0x318] sm:$0xff]
        %v4849 = vld [vmem:[%s562 + $0x320] sm:$0xff]
        %v4850 = vld [vmem:[%s562 + $0x328] sm:$0xff]
        %v4851 = vld [vmem:[%s562 + $0x330] sm:$0xff]
        %v4852 = vld [vmem:[%s562 + $0x338] sm:$0xff]
        %v4853 = vld [vmem:[%s562 + $0x340] sm:$0xff]
        %v4854 = vld [vmem:[%s562 + $0x348] sm:$0xff]
        %v4855 = vld [vmem:[%s562 + $0x350] sm:$0xff]
        %v4856 = vld [vmem:[%s562 + $0x358] sm:$0xff]
        %v4857 = vld [vmem:[%s562 + $0x360] sm:$0xff]
        %v4858 = vld [vmem:[%s562 + $0x368] sm:$0xff]
        %v4859 = vld [vmem:[%s562 + $0x370] sm:$0xff]
        %v4860 = vld [vmem:[%s562 + $0x378] sm:$0xff]
        %v4861 = vld [vmem:[%s562 + $0x380] sm:$0xff]
        %v4862 = vld [vmem:[%s562 + $0x388] sm:$0xff]
        %v4863 = vld [vmem:[%s562 + $0x390] sm:$0xff]
        %v4864 = vld [vmem:[%s562 + $0x398] sm:$0xff]
        %v4865 = vld [vmem:[%s562 + $0x3a0] sm:$0xff]
        %v4866 = vld [vmem:[%s562 + $0x3a8] sm:$0xff]
        %v4867 = vld [vmem:[%s562 + $0x3b0] sm:$0xff]
        %v4868 = vld [vmem:[%s562 + $0x3b8] sm:$0xff]
        %v4869 = vld [vmem:[%s562 + $0x3c0] sm:$0xff]
        %v4870 = vld [vmem:[%s562 + $0x3c8] sm:$0xff]
        %v4871 = vld [vmem:[%s562 + $0x3d0] sm:$0xff]
        %v4872 = vld [vmem:[%s562 + $0x3d8] sm:$0xff]
        %v4873 = vld [vmem:[%s562 + $0x3e0] sm:$0xff]
        %v4874 = vld [vmem:[%s562 + $0x3e8] sm:$0xff]
        %v4875 = vld [vmem:[%s562 + $0x3f0] sm:$0xff]
        %v4876 = vld [vmem:[%s562 + $0x3f8] sm:$0xff]
        %v5005 = vunpack.c.l.b16 %v4749
        %v5006 = vunpack.c.h.b16 %v4749
        %v5007 = vunpack.c.l.b16 %v4750
        %v5008 = vunpack.c.h.b16 %v4750
        %v5009 = vunpack.c.l.b16 %v4751
        %v5010 = vunpack.c.h.b16 %v4751
        %v5011 = vunpack.c.l.b16 %v4752
        %v5012 = vunpack.c.h.b16 %v4752
        %v5013 = vunpack.c.l.b16 %v4753
        %v5014 = vunpack.c.h.b16 %v4753
        %v5015 = vunpack.c.l.b16 %v4754
        %v5016 = vunpack.c.h.b16 %v4754
        %v5017 = vunpack.c.l.b16 %v4755
        %v5018 = vunpack.c.h.b16 %v4755
        %v5019 = vunpack.c.l.b16 %v4756
        %v5020 = vunpack.c.h.b16 %v4756
        %v5021 = vunpack.c.l.b16 %v4757
        %v5022 = vunpack.c.h.b16 %v4757
        %v5023 = vunpack.c.l.b16 %v4758
        %v5024 = vunpack.c.h.b16 %v4758
        %v5025 = vunpack.c.l.b16 %v4759
        %v5026 = vunpack.c.h.b16 %v4759
        %v5027 = vunpack.c.l.b16 %v4760
        %v5028 = vunpack.c.h.b16 %v4760
        %v5029 = vunpack.c.l.b16 %v4761
        %v5030 = vunpack.c.h.b16 %v4761
        %v5031 = vunpack.c.l.b16 %v4762
        %v5032 = vunpack.c.h.b16 %v4762
        %v5033 = vunpack.c.l.b16 %v4763
        %v5034 = vunpack.c.h.b16 %v4763
        %v5035 = vunpack.c.l.b16 %v4764
        %v5036 = vunpack.c.h.b16 %v4764
        %v5037 = vunpack.c.l.b16 %v4765
        %v5038 = vunpack.c.h.b16 %v4765
        %v5039 = vunpack.c.l.b16 %v4766
        %v5040 = vunpack.c.h.b16 %v4766
        %v5041 = vunpack.c.l.b16 %v4767
        %v5042 = vunpack.c.h.b16 %v4767
        %v5043 = vunpack.c.l.b16 %v4768
        %v5044 = vunpack.c.h.b16 %v4768
        %v5045 = vunpack.c.l.b16 %v4769
        %v5046 = vunpack.c.h.b16 %v4769
        %v5047 = vunpack.c.l.b16 %v4770
        %v5048 = vunpack.c.h.b16 %v4770
        %v5049 = vunpack.c.l.b16 %v4771
        %v5050 = vunpack.c.h.b16 %v4771
        %v5051 = vunpack.c.l.b16 %v4772
        %v5052 = vunpack.c.h.b16 %v4772
        %v5053 = vunpack.c.l.b16 %v4773
        %v5054 = vunpack.c.h.b16 %v4773
        %v5055 = vunpack.c.l.b16 %v4774
        %v5056 = vunpack.c.h.b16 %v4774
        %v5057 = vunpack.c.l.b16 %v4775
        %v5058 = vunpack.c.h.b16 %v4775
        %v5059 = vunpack.c.l.b16 %v4776
        %v5060 = vunpack.c.h.b16 %v4776
        %v5061 = vunpack.c.l.b16 %v4777
        %v5062 = vunpack.c.h.b16 %v4777
        %v5063 = vunpack.c.l.b16 %v4778
        %v5064 = vunpack.c.h.b16 %v4778
        %v5065 = vunpack.c.l.b16 %v4779
        %v5066 = vunpack.c.h.b16 %v4779
        %v5067 = vunpack.c.l.b16 %v4780
        %v5068 = vunpack.c.h.b16 %v4780
        %v5069 = vunpack.c.l.b16 %v4781
        %v5070 = vunpack.c.h.b16 %v4781
        %v5071 = vunpack.c.l.b16 %v4782
        %v5072 = vunpack.c.h.b16 %v4782
        %v5073 = vunpack.c.l.b16 %v4783
        %v5074 = vunpack.c.h.b16 %v4783
        %v5075 = vunpack.c.l.b16 %v4784
        %v5076 = vunpack.c.h.b16 %v4784
        %v5077 = vunpack.c.l.b16 %v4785
        %v5078 = vunpack.c.h.b16 %v4785
        %v5079 = vunpack.c.l.b16 %v4786
        %v5080 = vunpack.c.h.b16 %v4786
        %v5081 = vunpack.c.l.b16 %v4787
        %v5082 = vunpack.c.h.b16 %v4787
        %v5083 = vunpack.c.l.b16 %v4788
        %v5084 = vunpack.c.h.b16 %v4788
        %v5085 = vunpack.c.l.b16 %v4789
        %v5086 = vunpack.c.h.b16 %v4789
        %v5087 = vunpack.c.l.b16 %v4790
        %v5088 = vunpack.c.h.b16 %v4790
        %v5089 = vunpack.c.l.b16 %v4791
        %v5090 = vunpack.c.h.b16 %v4791
        %v5091 = vunpack.c.l.b16 %v4792
        %v5092 = vunpack.c.h.b16 %v4792
        %v5093 = vunpack.c.l.b16 %v4793
        %v5094 = vunpack.c.h.b16 %v4793
        %v5095 = vunpack.c.l.b16 %v4794
        %v5096 = vunpack.c.h.b16 %v4794
        %v5097 = vunpack.c.l.b16 %v4795
        %v5098 = vunpack.c.h.b16 %v4795
        %v5099 = vunpack.c.l.b16 %v4796
        %v5100 = vunpack.c.h.b16 %v4796
        %v5101 = vunpack.c.l.b16 %v4797
        %v5102 = vunpack.c.h.b16 %v4797
        %v5103 = vunpack.c.l.b16 %v4798
        %v5104 = vunpack.c.h.b16 %v4798
        %v5105 = vunpack.c.l.b16 %v4799
        %v5106 = vunpack.c.h.b16 %v4799
        %v5107 = vunpack.c.l.b16 %v4800
        %v5108 = vunpack.c.h.b16 %v4800
        %v5109 = vunpack.c.l.b16 %v4801
        %v5110 = vunpack.c.h.b16 %v4801
        %v5111 = vunpack.c.l.b16 %v4802
        %v5112 = vunpack.c.h.b16 %v4802
        %v5113 = vunpack.c.l.b16 %v4803
        %v5114 = vunpack.c.h.b16 %v4803
        %v5115 = vunpack.c.l.b16 %v4804
        %v5116 = vunpack.c.h.b16 %v4804
        %v5117 = vunpack.c.l.b16 %v4805
        %v5118 = vunpack.c.h.b16 %v4805
        %v5119 = vunpack.c.l.b16 %v4806
        %v5120 = vunpack.c.h.b16 %v4806
        %v5121 = vunpack.c.l.b16 %v4807
        %v5122 = vunpack.c.h.b16 %v4807
        %v5123 = vunpack.c.l.b16 %v4808
        %v5124 = vunpack.c.h.b16 %v4808
        %v5125 = vunpack.c.l.b16 %v4809
        %v5126 = vunpack.c.h.b16 %v4809
        %v5127 = vunpack.c.l.b16 %v4810
        %v5128 = vunpack.c.h.b16 %v4810
        %v5129 = vunpack.c.l.b16 %v4811
        %v5130 = vunpack.c.h.b16 %v4811
        %v5131 = vunpack.c.l.b16 %v4812
        %v5132 = vunpack.c.h.b16 %v4812
        %v5133 = vunpack.c.l.b16 %v4813
        %v5134 = vunpack.c.h.b16 %v4813
        %v5135 = vunpack.c.l.b16 %v4814
        %v5136 = vunpack.c.h.b16 %v4814
        %v5137 = vunpack.c.l.b16 %v4815
        %v5138 = vunpack.c.h.b16 %v4815
        %v5139 = vunpack.c.l.b16 %v4816
        %v5140 = vunpack.c.h.b16 %v4816
        %v5141 = vunpack.c.l.b16 %v4817
        %v5142 = vunpack.c.h.b16 %v4817
        %v5143 = vunpack.c.l.b16 %v4818
        %v5144 = vunpack.c.h.b16 %v4818
        %v5145 = vunpack.c.l.b16 %v4819
        %v5146 = vunpack.c.h.b16 %v4819
        %v5147 = vunpack.c.l.b16 %v4820
        %v5148 = vunpack.c.h.b16 %v4820
        %v5149 = vunpack.c.l.b16 %v4821
        %v5150 = vunpack.c.h.b16 %v4821
        %v5151 = vunpack.c.l.b16 %v4822
        %v5152 = vunpack.c.h.b16 %v4822
        %v5153 = vunpack.c.l.b16 %v4823
        %v5154 = vunpack.c.h.b16 %v4823
        %v5155 = vunpack.c.l.b16 %v4824
        %v5156 = vunpack.c.h.b16 %v4824
        %v5157 = vunpack.c.l.b16 %v4825
        %v5158 = vunpack.c.h.b16 %v4825
        %v5159 = vunpack.c.l.b16 %v4826
        %v5160 = vunpack.c.h.b16 %v4826
        %v5161 = vunpack.c.l.b16 %v4827
        %v5162 = vunpack.c.h.b16 %v4827
        %v5163 = vunpack.c.l.b16 %v4828
        %v5164 = vunpack.c.h.b16 %v4828
        %v5165 = vunpack.c.l.b16 %v4829
        %v5166 = vunpack.c.h.b16 %v4829
        %v5167 = vunpack.c.l.b16 %v4830
        %v5168 = vunpack.c.h.b16 %v4830
        %v5169 = vunpack.c.l.b16 %v4831
        %v5170 = vunpack.c.h.b16 %v4831
        %v5171 = vunpack.c.l.b16 %v4832
        %v5172 = vunpack.c.h.b16 %v4832
        %v5173 = vunpack.c.l.b16 %v4833
        %v5174 = vunpack.c.h.b16 %v4833
        %v5175 = vunpack.c.l.b16 %v4834
        %v5176 = vunpack.c.h.b16 %v4834
        %v5177 = vunpack.c.l.b16 %v4835
        %v5178 = vunpack.c.h.b16 %v4835
        %v5179 = vunpack.c.l.b16 %v4836
        %v5180 = vunpack.c.h.b16 %v4836
        %v5181 = vunpack.c.l.b16 %v4837
        %v5182 = vunpack.c.h.b16 %v4837
        %v5183 = vunpack.c.l.b16 %v4838
        %v5184 = vunpack.c.h.b16 %v4838
        %v5185 = vunpack.c.l.b16 %v4839
        %v5186 = vunpack.c.h.b16 %v4839
        %v5187 = vunpack.c.l.b16 %v4840
        %v5188 = vunpack.c.h.b16 %v4840
        %v5189 = vunpack.c.l.b16 %v4841
        %v5190 = vunpack.c.h.b16 %v4841
        %v5191 = vunpack.c.l.b16 %v4842
        %v5192 = vunpack.c.h.b16 %v4842
        %v5193 = vunpack.c.l.b16 %v4843
        %v5194 = vunpack.c.h.b16 %v4843
        %v5195 = vunpack.c.l.b16 %v4844
        %v5196 = vunpack.c.h.b16 %v4844
        %v5197 = vunpack.c.l.b16 %v4845
        %v5198 = vunpack.c.h.b16 %v4845
        %v5199 = vunpack.c.l.b16 %v4846
        %v5200 = vunpack.c.h.b16 %v4846
        %v5201 = vunpack.c.l.b16 %v4847
        %v5202 = vunpack.c.h.b16 %v4847
        %v5203 = vunpack.c.l.b16 %v4848
        %v5204 = vunpack.c.h.b16 %v4848
        %v5205 = vunpack.c.l.b16 %v4849
        %v5206 = vunpack.c.h.b16 %v4849
        %v5207 = vunpack.c.l.b16 %v4850
        %v5208 = vunpack.c.h.b16 %v4850
        %v5209 = vunpack.c.l.b16 %v4851
        %v5210 = vunpack.c.h.b16 %v4851
        %v5211 = vunpack.c.l.b16 %v4852
        %v5212 = vunpack.c.h.b16 %v4852
        %v5213 = vunpack.c.l.b16 %v4853
        %v5214 = vunpack.c.h.b16 %v4853
        %v5215 = vunpack.c.l.b16 %v4854
        %v5216 = vunpack.c.h.b16 %v4854
        %v5217 = vunpack.c.l.b16 %v4855
        %v5218 = vunpack.c.h.b16 %v4855
        %v5219 = vunpack.c.l.b16 %v4856
        %v5220 = vunpack.c.h.b16 %v4856
        %v5221 = vunpack.c.l.b16 %v4857
        %v5222 = vunpack.c.h.b16 %v4857
        %v5223 = vunpack.c.l.b16 %v4858
        %v5224 = vunpack.c.h.b16 %v4858
        %v5225 = vunpack.c.l.b16 %v4859
        %v5226 = vunpack.c.h.b16 %v4859
        %v5227 = vunpack.c.l.b16 %v4860
        %v5228 = vunpack.c.h.b16 %v4860
        %v5229 = vunpack.c.l.b16 %v4861
        %v5230 = vunpack.c.h.b16 %v4861
        %v5231 = vunpack.c.l.b16 %v4862
        %v5232 = vunpack.c.h.b16 %v4862
        %v5233 = vunpack.c.l.b16 %v4863
        %v5234 = vunpack.c.h.b16 %v4863
        %v5235 = vunpack.c.l.b16 %v4864
        %v5236 = vunpack.c.h.b16 %v4864
        %v5237 = vunpack.c.l.b16 %v4865
        %v5238 = vunpack.c.h.b16 %v4865
        %v5239 = vunpack.c.l.b16 %v4866
        %v5240 = vunpack.c.h.b16 %v4866
        %v5241 = vunpack.c.l.b16 %v4867
        %v5242 = vunpack.c.h.b16 %v4867
        %v5243 = vunpack.c.l.b16 %v4868
        %v5244 = vunpack.c.h.b16 %v4868
        %v5245 = vunpack.c.l.b16 %v4869
        %v5246 = vunpack.c.h.b16 %v4869
        %v5247 = vunpack.c.l.b16 %v4870
        %v5248 = vunpack.c.h.b16 %v4870
        %v5249 = vunpack.c.l.b16 %v4871
        %v5250 = vunpack.c.h.b16 %v4871
        %v5251 = vunpack.c.l.b16 %v4872
        %v5252 = vunpack.c.h.b16 %v4872
        %v5253 = vunpack.c.l.b16 %v4873
        %v5254 = vunpack.c.h.b16 %v4873
        %v5255 = vunpack.c.l.b16 %v4874
        %v5256 = vunpack.c.h.b16 %v4874
        %v5257 = vunpack.c.l.b16 %v4875
        %v5258 = vunpack.c.h.b16 %v4875
        %v5259 = vunpack.c.l.b16 %v4876
        %v5260 = vunpack.c.h.b16 %v4876
        %v5261 = vpack.c.b16 %v5013, %v5005
        %v5262 = vpack.c.b16 %v5014, %v5006
        %v5263 = vpack.c.b16 %v5015, %v5007
        %v5264 = vpack.c.b16 %v5016, %v5008
        %v5265 = vpack.c.b16 %v5017, %v5009
        %v5266 = vpack.c.b16 %v5018, %v5010
        %v5267 = vpack.c.b16 %v5019, %v5011
        %v5268 = vpack.c.b16 %v5020, %v5012
        %v5269 = vpack.c.b16 %v5029, %v5021
        %v5270 = vpack.c.b16 %v5030, %v5022
        %v5271 = vpack.c.b16 %v5031, %v5023
        %v5272 = vpack.c.b16 %v5032, %v5024
        %v5273 = vpack.c.b16 %v5033, %v5025
        %v5274 = vpack.c.b16 %v5034, %v5026
        %v5275 = vpack.c.b16 %v5035, %v5027
        %v5276 = vpack.c.b16 %v5036, %v5028
        %v5277 = vpack.c.b16 %v5045, %v5037
        %v5278 = vpack.c.b16 %v5046, %v5038
        %v5279 = vpack.c.b16 %v5047, %v5039
        %v5280 = vpack.c.b16 %v5048, %v5040
        %v5281 = vpack.c.b16 %v5049, %v5041
        %v5282 = vpack.c.b16 %v5050, %v5042
        %v5283 = vpack.c.b16 %v5051, %v5043
        %v5284 = vpack.c.b16 %v5052, %v5044
        %v5285 = vpack.c.b16 %v5061, %v5053
        %v5286 = vpack.c.b16 %v5062, %v5054
        %v5287 = vpack.c.b16 %v5063, %v5055
        %v5288 = vpack.c.b16 %v5064, %v5056
        %v5289 = vpack.c.b16 %v5065, %v5057
        %v5290 = vpack.c.b16 %v5066, %v5058
        %v5291 = vpack.c.b16 %v5067, %v5059
        %v5292 = vpack.c.b16 %v5068, %v5060
        %v5293 = vpack.c.b16 %v5077, %v5069
        %v5294 = vpack.c.b16 %v5078, %v5070
        %v5295 = vpack.c.b16 %v5079, %v5071
        %v5296 = vpack.c.b16 %v5080, %v5072
        %v5297 = vpack.c.b16 %v5081, %v5073
        %v5298 = vpack.c.b16 %v5082, %v5074
        %v5299 = vpack.c.b16 %v5083, %v5075
        %v5300 = vpack.c.b16 %v5084, %v5076
        %v5301 = vpack.c.b16 %v5093, %v5085
        %v5302 = vpack.c.b16 %v5094, %v5086
        %v5303 = vpack.c.b16 %v5095, %v5087
        %v5304 = vpack.c.b16 %v5096, %v5088
        %v5305 = vpack.c.b16 %v5097, %v5089
        %v5306 = vpack.c.b16 %v5098, %v5090
        %v5307 = vpack.c.b16 %v5099, %v5091
        %v5308 = vpack.c.b16 %v5100, %v5092
        %v5309 = vpack.c.b16 %v5109, %v5101
        %v5310 = vpack.c.b16 %v5110, %v5102
        %v5311 = vpack.c.b16 %v5111, %v5103
        %v5312 = vpack.c.b16 %v5112, %v5104
        %v5313 = vpack.c.b16 %v5113, %v5105
        %v5314 = vpack.c.b16 %v5114, %v5106
        %v5315 = vpack.c.b16 %v5115, %v5107
        %v5316 = vpack.c.b16 %v5116, %v5108
        %v5317 = vpack.c.b16 %v5125, %v5117
        %v5318 = vpack.c.b16 %v5126, %v5118
        %v5319 = vpack.c.b16 %v5127, %v5119
        %v5320 = vpack.c.b16 %v5128, %v5120
        %v5321 = vpack.c.b16 %v5129, %v5121
        %v5322 = vpack.c.b16 %v5130, %v5122
        %v5323 = vpack.c.b16 %v5131, %v5123
        %v5324 = vpack.c.b16 %v5132, %v5124
        %v5325 = vpack.c.b16 %v5141, %v5133
        %v5326 = vpack.c.b16 %v5142, %v5134
        %v5327 = vpack.c.b16 %v5143, %v5135
        %v5328 = vpack.c.b16 %v5144, %v5136
        %v5329 = vpack.c.b16 %v5145, %v5137
        %v5330 = vpack.c.b16 %v5146, %v5138
        %v5331 = vpack.c.b16 %v5147, %v5139
        %v5332 = vpack.c.b16 %v5148, %v5140
        %v5333 = vpack.c.b16 %v5157, %v5149
        %v5334 = vpack.c.b16 %v5158, %v5150
        %v5335 = vpack.c.b16 %v5159, %v5151
        %v5336 = vpack.c.b16 %v5160, %v5152
        %v5337 = vpack.c.b16 %v5161, %v5153
        %v5338 = vpack.c.b16 %v5162, %v5154
        %v5339 = vpack.c.b16 %v5163, %v5155
        %v5340 = vpack.c.b16 %v5164, %v5156
        %v5341 = vpack.c.b16 %v5173, %v5165
        %v5342 = vpack.c.b16 %v5174, %v5166
        %v5343 = vpack.c.b16 %v5175, %v5167
        %v5344 = vpack.c.b16 %v5176, %v5168
        %v5345 = vpack.c.b16 %v5177, %v5169
        %v5346 = vpack.c.b16 %v5178, %v5170
        %v5347 = vpack.c.b16 %v5179, %v5171
        %v5348 = vpack.c.b16 %v5180, %v5172
        %v5349 = vpack.c.b16 %v5189, %v5181
        %v5350 = vpack.c.b16 %v5190, %v5182
        %v5351 = vpack.c.b16 %v5191, %v5183
        %v5352 = vpack.c.b16 %v5192, %v5184
        %v5353 = vpack.c.b16 %v5193, %v5185
        %v5354 = vpack.c.b16 %v5194, %v5186
        %v5355 = vpack.c.b16 %v5195, %v5187
        %v5356 = vpack.c.b16 %v5196, %v5188
        %v5357 = vpack.c.b16 %v5205, %v5197
        %v5358 = vpack.c.b16 %v5206, %v5198
        %v5359 = vpack.c.b16 %v5207, %v5199
        %v5360 = vpack.c.b16 %v5208, %v5200
        %v5361 = vpack.c.b16 %v5209, %v5201
        %v5362 = vpack.c.b16 %v5210, %v5202
        %v5363 = vpack.c.b16 %v5211, %v5203
        %v5364 = vpack.c.b16 %v5212, %v5204
        %v5365 = vpack.c.b16 %v5221, %v5213
        %v5366 = vpack.c.b16 %v5222, %v5214
        %v5367 = vpack.c.b16 %v5223, %v5215
        %v5368 = vpack.c.b16 %v5224, %v5216
        %v5369 = vpack.c.b16 %v5225, %v5217
        %v5370 = vpack.c.b16 %v5226, %v5218
        %v5371 = vpack.c.b16 %v5227, %v5219
        %v5372 = vpack.c.b16 %v5228, %v5220
        %v5373 = vpack.c.b16 %v5237, %v5229
        %v5374 = vpack.c.b16 %v5238, %v5230
        %v5375 = vpack.c.b16 %v5239, %v5231
        %v5376 = vpack.c.b16 %v5240, %v5232
        %v5377 = vpack.c.b16 %v5241, %v5233
        %v5378 = vpack.c.b16 %v5242, %v5234
        %v5379 = vpack.c.b16 %v5243, %v5235
        %v5380 = vpack.c.b16 %v5244, %v5236
        %v5381 = vpack.c.b16 %v5253, %v5245
        %v5382 = vpack.c.b16 %v5254, %v5246
        %v5383 = vpack.c.b16 %v5255, %v5247
        %v5384 = vpack.c.b16 %v5256, %v5248
        %v5385 = vpack.c.b16 %v5257, %v5249
        %v5386 = vpack.c.b16 %v5258, %v5250
        %v5387 = vpack.c.b16 %v5259, %v5251
        %v5388 = vpack.c.b16 %v5260, %v5252
        %5517 = vmatprep.subr.bf16.mxu0 %v5318
        %5518 = vmatpush1.bf16.msra.mxu0 %v5317
        %5519 = vmatprep.subr.bf16.mxu0 %v5310
        %5520 = vmatpush1.bf16.msra.mxu0 %v5309
        %5521 = vmatprep.subr.bf16.mxu0 %v5302
        %5522 = vmatpush1.bf16.msra.mxu0 %v5301
        %5523 = vmatprep.subr.bf16.mxu0 %v5294
        %5524 = vmatpush1.bf16.msra.mxu0 %v5293
        %5525 = vmatprep.subr.bf16.mxu0 %v5286
        %5526 = vmatpush1.bf16.msra.mxu0 %v5285
        %5527 = vmatprep.subr.bf16.mxu0 %v5278
        %5528 = vmatpush1.bf16.msra.mxu0 %v5277
        %5529 = vmatprep.subr.bf16.mxu0 %v5270
        %5530 = vmatpush1.bf16.msra.mxu0 %v5269
        %5531 = vmatprep.subr.bf16.mxu0 %v5262
        %5532 = vmatpush1.bf16.msra.mxu0 %v5261
        %5533 = vmatprep.subr.bf16.mxu0 %v5382
        %5534 = vmatpush2.bf16.msra.mxu0 %v5381
        %5535 = vmatprep.subr.bf16.mxu0 %v5374
        %5536 = vmatpush2.bf16.msra.mxu0 %v5373
        %5537 = vmatprep.subr.bf16.mxu0 %v5366
        %5538 = vmatpush2.bf16.msra.mxu0 %v5365
        %5539 = vmatprep.subr.bf16.mxu0 %v5358
        %5540 = vmatpush2.bf16.msra.mxu0 %v5357
        %5541 = vmatprep.subr.bf16.mxu0 %v5350
        %5542 = vmatpush2.bf16.msra.mxu0 %v5349
        %5543 = vmatprep.subr.bf16.mxu0 %v5342
        %5544 = vmatpush2.bf16.msra.mxu0 %v5341
        %5545 = vmatprep.subr.bf16.mxu0 %v5334
        %5546 = vmatpush2.bf16.msra.mxu0 %v5333
        %5547 = vmatprep.subr.bf16.mxu0 %v5326
        %5548 = vmatpush2.bf16.msra.mxu0 %v5325
        %5549 = vmatprep.mubr.bf16.mxu0 %v4748
        %5550 = vmatmul.mubr.bf16.gmra.mxu0 %v4747
        %v5551 = vpop.f32.mrf.mxu0
        %v5552 = vadd.f32 0.0, %v5551
        %v5553 = vpop.f32.mrf.mxu0
        %v5554 = vadd.f32 0.0, %v5553
        %v5555 = vpop.f32.mrf.mxu0
        %v5556 = vpop.f32.mrf.mxu0
        %5557 = vdwg.mxu0
        %5558 = vmatprep.subr.bf16.mxu0 %v5320
        %5559 = vmatpush1.bf16.msra.mxu0 %v5319
        %5560 = vmatprep.subr.bf16.mxu0 %v5312
        %5561 = vmatpush1.bf16.msra.mxu0 %v5311
        %5562 = vmatprep.subr.bf16.mxu0 %v5304
        %5563 = vmatpush1.bf16.msra.mxu0 %v5303
        %5564 = vmatprep.subr.bf16.mxu0 %v5296
        %5565 = vmatpush1.bf16.msra.mxu0 %v5295
        %5566 = vmatprep.subr.bf16.mxu0 %v5288
        %5567 = vmatpush1.bf16.msra.mxu0 %v5287
        %5568 = vmatprep.subr.bf16.mxu0 %v5280
        %5569 = vmatpush1.bf16.msra.mxu0 %v5279
        %5570 = vmatprep.subr.bf16.mxu0 %v5272
        %5571 = vmatpush1.bf16.msra.mxu0 %v5271
        %5572 = vmatprep.subr.bf16.mxu0 %v5264
        %5573 = vmatpush1.bf16.msra.mxu0 %v5263
        %5574 = vmatprep.subr.bf16.mxu0 %v5384
        %5575 = vmatpush2.bf16.msra.mxu0 %v5383
        %5576 = vmatprep.subr.bf16.mxu0 %v5376
        %5577 = vmatpush2.bf16.msra.mxu0 %v5375
        %5578 = vmatprep.subr.bf16.mxu0 %v5368
        %5579 = vmatpush2.bf16.msra.mxu0 %v5367
        %5580 = vmatprep.subr.bf16.mxu0 %v5360
        %5581 = vmatpush2.bf16.msra.mxu0 %v5359
        %5582 = vmatprep.subr.bf16.mxu0 %v5352
        %5583 = vmatpush2.bf16.msra.mxu0 %v5351
        %5584 = vmatprep.subr.bf16.mxu0 %v5344
        %5585 = vmatpush2.bf16.msra.mxu0 %v5343
        %5586 = vmatprep.subr.bf16.mxu0 %v5336
        %5587 = vmatpush2.bf16.msra.mxu0 %v5335
        %5588 = vmatprep.subr.bf16.mxu0 %v5328
        %5589 = vmatpush2.bf16.msra.mxu0 %v5327
        %5590 = vmatprep.mubr.bf16.mxu0 %v4748
        %5591 = vmatmul.mubr.bf16.gmra.mxu0 %v4747
        %v5592 = vpop.f32.mrf.mxu0
        %v5593 = vadd.f32 0.0, %v5592
        %v5594 = vpop.f32.mrf.mxu0
        %v5595 = vadd.f32 0.0, %v5594
        %v5596 = vpop.f32.mrf.mxu0
        %v5597 = vpop.f32.mrf.mxu0
        %5598 = vdwg.mxu0
        %5599 = vmatprep.subr.bf16.mxu0 %v5322
        %5600 = vmatpush1.bf16.msra.mxu0 %v5321
        %5601 = vmatprep.subr.bf16.mxu0 %v5314
        %5602 = vmatpush1.bf16.msra.mxu0 %v5313
        %5603 = vmatprep.subr.bf16.mxu0 %v5306
        %5604 = vmatpush1.bf16.msra.mxu0 %v5305
        %5605 = vmatprep.subr.bf16.mxu0 %v5298
        %5606 = vmatpush1.bf16.msra.mxu0 %v5297
        %5607 = vmatprep.subr.bf16.mxu0 %v5290
        %5608 = vmatpush1.bf16.msra.mxu0 %v5289
        %5609 = vmatprep.subr.bf16.mxu0 %v5282
        %5610 = vmatpush1.bf16.msra.mxu0 %v5281
        %5611 = vmatprep.subr.bf16.mxu0 %v5274
        %5612 = vmatpush1.bf16.msra.mxu0 %v5273
        %5613 = vmatprep.subr.bf16.mxu0 %v5266
        %5614 = vmatpush1.bf16.msra.mxu0 %v5265
        %5615 = vmatprep.subr.bf16.mxu0 %v5386
        %5616 = vmatpush2.bf16.msra.mxu0 %v5385
        %5617 = vmatprep.subr.bf16.mxu0 %v5378
        %5618 = vmatpush2.bf16.msra.mxu0 %v5377
        %5619 = vmatprep.subr.bf16.mxu0 %v5370
        %5620 = vmatpush2.bf16.msra.mxu0 %v5369
        %5621 = vmatprep.subr.bf16.mxu0 %v5362
        %5622 = vmatpush2.bf16.msra.mxu0 %v5361
        %5623 = vmatprep.subr.bf16.mxu0 %v5354
        %5624 = vmatpush2.bf16.msra.mxu0 %v5353
        %5625 = vmatprep.subr.bf16.mxu0 %v5346
        %5626 = vmatpush2.bf16.msra.mxu0 %v5345
        %5627 = vmatprep.subr.bf16.mxu0 %v5338
        %5628 = vmatpush2.bf16.msra.mxu0 %v5337
        %5629 = vmatprep.subr.bf16.mxu0 %v5330
        %5630 = vmatpush2.bf16.msra.mxu0 %v5329
        %5631 = vmatprep.mubr.bf16.mxu0 %v4748
        %5632 = vmatmul.mubr.bf16.gmra.mxu0 %v4747
        %v5633 = vpop.f32.mrf.mxu0
        %v5634 = vadd.f32 0.0, %v5633
        %v5635 = vpop.f32.mrf.mxu0
        %v5636 = vadd.f32 0.0, %v5635
        %v5637 = vpop.f32.mrf.mxu0
        %v5638 = vpop.f32.mrf.mxu0
        %5639 = vdwg.mxu0
        %5640 = vmatprep.subr.bf16.mxu0 %v5324
        %5641 = vmatpush1.bf16.msra.mxu0 %v5323
        %5642 = vmatprep.subr.bf16.mxu0 %v5316
        %5643 = vmatpush1.bf16.msra.mxu0 %v5315
        %5644 = vmatprep.subr.bf16.mxu0 %v5308
        %5645 = vmatpush1.bf16.msra.mxu0 %v5307
        %5646 = vmatprep.subr.bf16.mxu0 %v5300
        %5647 = vmatpush1.bf16.msra.mxu0 %v5299
        %5648 = vmatprep.subr.bf16.mxu0 %v5292
        %5649 = vmatpush1.bf16.msra.mxu0 %v5291
        %5650 = vmatprep.subr.bf16.mxu0 %v5284
        %5651 = vmatpush1.bf16.msra.mxu0 %v5283
        %5652 = vmatprep.subr.bf16.mxu0 %v5276
        %5653 = vmatpush1.bf16.msra.mxu0 %v5275
        %5654 = vmatprep.subr.bf16.mxu0 %v5268
        %5655 = vmatpush1.bf16.msra.mxu0 %v5267
        %5656 = vmatprep.subr.bf16.mxu0 %v5388
        %5657 = vmatpush2.bf16.msra.mxu0 %v5387
        %5658 = vmatprep.subr.bf16.mxu0 %v5380
        %5659 = vmatpush2.bf16.msra.mxu0 %v5379
        %5660 = vmatprep.subr.bf16.mxu0 %v5372
        %5661 = vmatpush2.bf16.msra.mxu0 %v5371
        %5662 = vmatprep.subr.bf16.mxu0 %v5364
        %5663 = vmatpush2.bf16.msra.mxu0 %v5363
        %5664 = vmatprep.subr.bf16.mxu0 %v5356
        %5665 = vmatpush2.bf16.msra.mxu0 %v5355
        %5666 = vmatprep.subr.bf16.mxu0 %v5348
        %5667 = vmatpush2.bf16.msra.mxu0 %v5347
        %5668 = vmatprep.subr.bf16.mxu0 %v5340
        %5669 = vmatpush2.bf16.msra.mxu0 %v5339
        %5670 = vmatprep.subr.bf16.mxu0 %v5332
        %5671 = vmatpush2.bf16.msra.mxu0 %v5331
        %5672 = vmatprep.mubr.bf16.mxu0 %v4748
        %5673 = vmatmul.mubr.bf16.gmra.mxu0 %v4747
        %v5674 = vpop.f32.mrf.mxu0
        %v5675 = vadd.f32 0.0, %v5674
        %v5676 = vpop.f32.mrf.mxu0
        %v5677 = vadd.f32 0.0, %v5676
        %v5678 = vpop.f32.mrf.mxu0
        %v5679 = vpop.f32.mrf.mxu0
        %5680 = vdwg.mxu0
        %v5689 = vcombine.low %v5552, %v5554
        %v5690 = vcombine.low %v5593, %v5595
        %v5691 = vcombine.low %v5634, %v5636
        %v5692 = vcombine.low %v5675, %v5677
        %v5694 = vunpack.c.l.s4 1966171168
        %v5695 = vunpack.c.0.s8 %v5694
        %v5696 = vlaneseq
        %v5697 = vshrl.u32 %v5696, 7
        %v5698 = vsub.s32 %v5695, %v5697
        %v5699 = vrot.slane %v5689, %v5698
        %v5701 = vunpack.c.l.s4 1966171168
        %v5702 = vunpack.c.0.s8 %v5701
        %v5703 = vlaneseq
        %v5704 = vshrl.u32 %v5703, 7
        %v5705 = vsub.s32 %v5702, %v5704
        %v5706 = vrot.slane %v5690, %v5705
        %v5708 = vunpack.c.l.s4 1966171168
        %v5709 = vunpack.c.0.s8 %v5708
        %v5710 = vlaneseq
        %v5711 = vshrl.u32 %v5710, 7
        %v5712 = vsub.s32 %v5709, %v5711
        %v5713 = vrot.slane %v5691, %v5712
        %v5715 = vunpack.c.l.s4 1966171168
        %v5716 = vunpack.c.0.s8 %v5715
        %v5717 = vlaneseq
        %v5718 = vshrl.u32 %v5717, 7
        %v5719 = vsub.s32 %v5716, %v5718
        %v5720 = vrot.slane %v5692, %v5719
        %v5721 = vcombine.low %v5699, %v5706
        %v5722 = vcombine.low %v5713, %v5720
        %v5724 = vunpack.c.l.s4 1966171168
        %v5725 = vunpack.c.0.s8 %v5724
        %v5726 = vlaneseq
        %v5727 = vshrl.u32 %v5726, 7
        %v5728 = vsub.s32 %v5725, %v5727
        %v5729 = vrot.slane %v5721, %v5728
        %v5731 = vunpack.c.l.s4 1966171168
        %v5732 = vunpack.c.0.s8 %v5731
        %v5733 = vlaneseq
        %v5734 = vshrl.u32 %v5733, 7
        %v5735 = vsub.s32 %v5732, %v5734
        %v5736 = vrot.slane %v5722, %v5735
        %v5737 = vcombine.low %v5729, %v5736
        %v5739 = vadd.f32 %v4735, %v5737
        %v5740 = vxor.u32 %v5739, 2147483648
        %v5741 = vmul.f32 %v5740, 1.442695
        %v5742 = vpow.pop %v5741
        %v5743 = vadd.f32 %v5742, 1.0
        %v5744 = vrcp.pop %v5743
        %v5745 = vmul.f32 1.0, %v5744
        %v5747 = vrot.slane %v5739, 6
        %v5749 = vtanh.pop %v5747
        %v5751 = vrot.slane %v5745, 2
        %v5753 = vmul.f32 %v5751, %v4724
        %v5754 = vmul.f32 %v5745, %v5749
        %v5755 = vadd.f32 %v5753, %v5754
        %v5756 = vtanh.pop %v5755
        %v5757 = vrot.slane %v5745, 4
        %v5759 = vmul.f32 %v5757, %v5756
        %s5760 = scalar_lea.vmem [#allocation3], 3
        %5761 = vst.msk [vmem:[%s5760] ss:$8 sm:$0x3] %vm2667, %v5759
        %5762 = vst.msk [vmem:[%s5760] ss:$8 sm:$0x0] %vm2667, %v5759
        %s5763 = scalar_lea.vmem [#allocation2], 4
        %v5764 = vld [vmem:[%s5763] ss:$8 sm:$0xf]
        %v5765 = vld [vmem:[%s5763] ss:$8 sm:$0xf0]
        %v5766 = vor.u32 %v5764, %v5765
        %v5768 = vlaneseq
        %v5769 = vshrl.u32 %v5768, 7
        %v5770 = vsub.s32 0, %v5769
        %v5771 = vrot.slane %v5759, %v5770
        %v5772 = vlaneseq
        %v5773 = vshrl.u32 %v5772, 7
        %v5774 = vsub.s32 1, %v5773
        %v5775 = vrot.slane %v5759, %v5774
        %v5778 = vpack.c.bf16 %v5771, %v5771
        %v5779 = vpack.c.bf16 %v5775, %v5775
        %v5780 = vld [vmem:[%s562] sm:$0xff]
        %v5781 = vld [vmem:[%s562 + $0x8] sm:$0xff]
        %v5782 = vld [vmem:[%s562 + $0x10] sm:$0xff]
        %v5783 = vld [vmem:[%s562 + $0x18] sm:$0xff]
        %v5784 = vld [vmem:[%s562 + $0x20] sm:$0xff]
        %v5785 = vld [vmem:[%s562 + $0x28] sm:$0xff]
        %v5786 = vld [vmem:[%s562 + $0x30] sm:$0xff]
        %v5787 = vld [vmem:[%s562 + $0x38] sm:$0xff]
        %v5788 = vld [vmem:[%s562 + $0x40] sm:$0xff]
        %v5789 = vld [vmem:[%s562 + $0x48] sm:$0xff]
        %v5790 = vld [vmem:[%s562 + $0x50] sm:$0xff]
        %v5791 = vld [vmem:[%s562 + $0x58] sm:$0xff]
        %v5792 = vld [vmem:[%s562 + $0x60] sm:$0xff]
        %v5793 = vld [vmem:[%s562 + $0x68] sm:$0xff]
        %v5794 = vld [vmem:[%s562 + $0x70] sm:$0xff]
        %v5795 = vld [vmem:[%s562 + $0x78] sm:$0xff]
        %v5796 = vld [vmem:[%s562 + $0x80] sm:$0xff]
        %v5797 = vld [vmem:[%s562 + $0x88] sm:$0xff]
        %v5798 = vld [vmem:[%s562 + $0x90] sm:$0xff]
        %v5799 = vld [vmem:[%s562 + $0x98] sm:$0xff]
        %v5800 = vld [vmem:[%s562 + $0xa0] sm:$0xff]
        %v5801 = vld [vmem:[%s562 + $0xa8] sm:$0xff]
        %v5802 = vld [vmem:[%s562 + $0xb0] sm:$0xff]
        %v5803 = vld [vmem:[%s562 + $0xb8] sm:$0xff]
        %v5804 = vld [vmem:[%s562 + $0xc0] sm:$0xff]
        %v5805 = vld [vmem:[%s562 + $0xc8] sm:$0xff]
        %v5806 = vld [vmem:[%s562 + $0xd0] sm:$0xff]
        %v5807 = vld [vmem:[%s562 + $0xd8] sm:$0xff]
        %v5808 = vld [vmem:[%s562 + $0xe0] sm:$0xff]
        %v5809 = vld [vmem:[%s562 + $0xe8] sm:$0xff]
        %v5810 = vld [vmem:[%s562 + $0xf0] sm:$0xff]
        %v5811 = vld [vmem:[%s562 + $0xf8] sm:$0xff]
        %v5812 = vld [vmem:[%s562 + $0x100] sm:$0xff]
        %v5813 = vld [vmem:[%s562 + $0x108] sm:$0xff]
        %v5814 = vld [vmem:[%s562 + $0x110] sm:$0xff]
        %v5815 = vld [vmem:[%s562 + $0x118] sm:$0xff]
        %v5816 = vld [vmem:[%s562 + $0x120] sm:$0xff]
        %v5817 = vld [vmem:[%s562 + $0x128] sm:$0xff]
        %v5818 = vld [vmem:[%s562 + $0x130] sm:$0xff]
        %v5819 = vld [vmem:[%s562 + $0x138] sm:$0xff]
        %v5820 = vld [vmem:[%s562 + $0x140] sm:$0xff]
        %v5821 = vld [vmem:[%s562 + $0x148] sm:$0xff]
        %v5822 = vld [vmem:[%s562 + $0x150] sm:$0xff]
        %v5823 = vld [vmem:[%s562 + $0x158] sm:$0xff]
        %v5824 = vld [vmem:[%s562 + $0x160] sm:$0xff]
        %v5825 = vld [vmem:[%s562 + $0x168] sm:$0xff]
        %v5826 = vld [vmem:[%s562 + $0x170] sm:$0xff]
        %v5827 = vld [vmem:[%s562 + $0x178] sm:$0xff]
        %v5828 = vld [vmem:[%s562 + $0x180] sm:$0xff]
        %v5829 = vld [vmem:[%s562 + $0x188] sm:$0xff]
        %v5830 = vld [vmem:[%s562 + $0x190] sm:$0xff]
        %v5831 = vld [vmem:[%s562 + $0x198] sm:$0xff]
        %v5832 = vld [vmem:[%s562 + $0x1a0] sm:$0xff]
        %v5833 = vld [vmem:[%s562 + $0x1a8] sm:$0xff]
        %v5834 = vld [vmem:[%s562 + $0x1b0] sm:$0xff]
        %v5835 = vld [vmem:[%s562 + $0x1b8] sm:$0xff]
        %v5836 = vld [vmem:[%s562 + $0x1c0] sm:$0xff]
        %v5837 = vld [vmem:[%s562 + $0x1c8] sm:$0xff]
        %v5838 = vld [vmem:[%s562 + $0x1d0] sm:$0xff]
        %v5839 = vld [vmem:[%s562 + $0x1d8] sm:$0xff]
        %v5840 = vld [vmem:[%s562 + $0x1e0] sm:$0xff]
        %v5841 = vld [vmem:[%s562 + $0x1e8] sm:$0xff]
        %v5842 = vld [vmem:[%s562 + $0x1f0] sm:$0xff]
        %v5843 = vld [vmem:[%s562 + $0x1f8] sm:$0xff]
        %v5844 = vld [vmem:[%s562 + $0x200] sm:$0xff]
        %v5845 = vld [vmem:[%s562 + $0x208] sm:$0xff]
        %v5846 = vld [vmem:[%s562 + $0x210] sm:$0xff]
        %v5847 = vld [vmem:[%s562 + $0x218] sm:$0xff]
        %v5848 = vld [vmem:[%s562 + $0x220] sm:$0xff]
        %v5849 = vld [vmem:[%s562 + $0x228] sm:$0xff]
        %v5850 = vld [vmem:[%s562 + $0x230] sm:$0xff]
        %v5851 = vld [vmem:[%s562 + $0x238] sm:$0xff]
        %v5852 = vld [vmem:[%s562 + $0x240] sm:$0xff]
        %v5853 = vld [vmem:[%s562 + $0x248] sm:$0xff]
        %v5854 = vld [vmem:[%s562 + $0x250] sm:$0xff]
        %v5855 = vld [vmem:[%s562 + $0x258] sm:$0xff]
        %v5856 = vld [vmem:[%s562 + $0x260] sm:$0xff]
        %v5857 = vld [vmem:[%s562 + $0x268] sm:$0xff]
        %v5858 = vld [vmem:[%s562 + $0x270] sm:$0xff]
        %v5859 = vld [vmem:[%s562 + $0x278] sm:$0xff]
        %v5860 = vld [vmem:[%s562 + $0x280] sm:$0xff]
        %v5861 = vld [vmem:[%s562 + $0x288] sm:$0xff]
        %v5862 = vld [vmem:[%s562 + $0x290] sm:$0xff]
        %v5863 = vld [vmem:[%s562 + $0x298] sm:$0xff]
        %v5864 = vld [vmem:[%s562 + $0x2a0] sm:$0xff]
        %v5865 = vld [vmem:[%s562 + $0x2a8] sm:$0xff]
        %v5866 = vld [vmem:[%s562 + $0x2b0] sm:$0xff]
        %v5867 = vld [vmem:[%s562 + $0x2b8] sm:$0xff]
        %v5868 = vld [vmem:[%s562 + $0x2c0] sm:$0xff]
        %v5869 = vld [vmem:[%s562 + $0x2c8] sm:$0xff]
        %v5870 = vld [vmem:[%s562 + $0x2d0] sm:$0xff]
        %v5871 = vld [vmem:[%s562 + $0x2d8] sm:$0xff]
        %v5872 = vld [vmem:[%s562 + $0x2e0] sm:$0xff]
        %v5873 = vld [vmem:[%s562 + $0x2e8] sm:$0xff]
        %v5874 = vld [vmem:[%s562 + $0x2f0] sm:$0xff]
        %v5875 = vld [vmem:[%s562 + $0x2f8] sm:$0xff]
        %v5876 = vld [vmem:[%s562 + $0x300] sm:$0xff]
        %v5877 = vld [vmem:[%s562 + $0x308] sm:$0xff]
        %v5878 = vld [vmem:[%s562 + $0x310] sm:$0xff]
        %v5879 = vld [vmem:[%s562 + $0x318] sm:$0xff]
        %v5880 = vld [vmem:[%s562 + $0x320] sm:$0xff]
        %v5881 = vld [vmem:[%s562 + $0x328] sm:$0xff]
        %v5882 = vld [vmem:[%s562 + $0x330] sm:$0xff]
        %v5883 = vld [vmem:[%s562 + $0x338] sm:$0xff]
        %v5884 = vld [vmem:[%s562 + $0x340] sm:$0xff]
        %v5885 = vld [vmem:[%s562 + $0x348] sm:$0xff]
        %v5886 = vld [vmem:[%s562 + $0x350] sm:$0xff]
        %v5887 = vld [vmem:[%s562 + $0x358] sm:$0xff]
        %v5888 = vld [vmem:[%s562 + $0x360] sm:$0xff]
        %v5889 = vld [vmem:[%s562 + $0x368] sm:$0xff]
        %v5890 = vld [vmem:[%s562 + $0x370] sm:$0xff]
        %v5891 = vld [vmem:[%s562 + $0x378] sm:$0xff]
        %v5892 = vld [vmem:[%s562 + $0x380] sm:$0xff]
        %v5893 = vld [vmem:[%s562 + $0x388] sm:$0xff]
        %v5894 = vld [vmem:[%s562 + $0x390] sm:$0xff]
        %v5895 = vld [vmem:[%s562 + $0x398] sm:$0xff]
        %v5896 = vld [vmem:[%s562 + $0x3a0] sm:$0xff]
        %v5897 = vld [vmem:[%s562 + $0x3a8] sm:$0xff]
        %v5898 = vld [vmem:[%s562 + $0x3b0] sm:$0xff]
        %v5899 = vld [vmem:[%s562 + $0x3b8] sm:$0xff]
        %v5900 = vld [vmem:[%s562 + $0x3c0] sm:$0xff]
        %v5901 = vld [vmem:[%s562 + $0x3c8] sm:$0xff]
        %v5902 = vld [vmem:[%s562 + $0x3d0] sm:$0xff]
        %v5903 = vld [vmem:[%s562 + $0x3d8] sm:$0xff]
        %v5904 = vld [vmem:[%s562 + $0x3e0] sm:$0xff]
        %v5905 = vld [vmem:[%s562 + $0x3e8] sm:$0xff]
        %v5906 = vld [vmem:[%s562 + $0x3f0] sm:$0xff]
        %v5907 = vld [vmem:[%s562 + $0x3f8] sm:$0xff]
        %v6036 = vunpack.c.l.b16 %v5780
        %v6037 = vunpack.c.h.b16 %v5780
        %v6038 = vunpack.c.l.b16 %v5781
        %v6039 = vunpack.c.h.b16 %v5781
        %v6040 = vunpack.c.l.b16 %v5782
        %v6041 = vunpack.c.h.b16 %v5782
        %v6042 = vunpack.c.l.b16 %v5783
        %v6043 = vunpack.c.h.b16 %v5783
        %v6044 = vunpack.c.l.b16 %v5784
        %v6045 = vunpack.c.h.b16 %v5784
        %v6046 = vunpack.c.l.b16 %v5785
        %v6047 = vunpack.c.h.b16 %v5785
        %v6048 = vunpack.c.l.b16 %v5786
        %v6049 = vunpack.c.h.b16 %v5786
        %v6050 = vunpack.c.l.b16 %v5787
        %v6051 = vunpack.c.h.b16 %v5787
        %v6052 = vunpack.c.l.b16 %v5788
        %v6053 = vunpack.c.h.b16 %v5788
        %v6054 = vunpack.c.l.b16 %v5789
        %v6055 = vunpack.c.h.b16 %v5789
        %v6056 = vunpack.c.l.b16 %v5790
        %v6057 = vunpack.c.h.b16 %v5790
        %v6058 = vunpack.c.l.b16 %v5791
        %v6059 = vunpack.c.h.b16 %v5791
        %v6060 = vunpack.c.l.b16 %v5792
        %v6061 = vunpack.c.h.b16 %v5792
        %v6062 = vunpack.c.l.b16 %v5793
        %v6063 = vunpack.c.h.b16 %v5793
        %v6064 = vunpack.c.l.b16 %v5794
        %v6065 = vunpack.c.h.b16 %v5794
        %v6066 = vunpack.c.l.b16 %v5795
        %v6067 = vunpack.c.h.b16 %v5795
        %v6068 = vunpack.c.l.b16 %v5796
        %v6069 = vunpack.c.h.b16 %v5796
        %v6070 = vunpack.c.l.b16 %v5797
        %v6071 = vunpack.c.h.b16 %v5797
        %v6072 = vunpack.c.l.b16 %v5798
        %v6073 = vunpack.c.h.b16 %v5798
        %v6074 = vunpack.c.l.b16 %v5799
        %v6075 = vunpack.c.h.b16 %v5799
        %v6076 = vunpack.c.l.b16 %v5800
        %v6077 = vunpack.c.h.b16 %v5800
        %v6078 = vunpack.c.l.b16 %v5801
        %v6079 = vunpack.c.h.b16 %v5801
        %v6080 = vunpack.c.l.b16 %v5802
        %v6081 = vunpack.c.h.b16 %v5802
        %v6082 = vunpack.c.l.b16 %v5803
        %v6083 = vunpack.c.h.b16 %v5803
        %v6084 = vunpack.c.l.b16 %v5804
        %v6085 = vunpack.c.h.b16 %v5804
        %v6086 = vunpack.c.l.b16 %v5805
        %v6087 = vunpack.c.h.b16 %v5805
        %v6088 = vunpack.c.l.b16 %v5806
        %v6089 = vunpack.c.h.b16 %v5806
        %v6090 = vunpack.c.l.b16 %v5807
        %v6091 = vunpack.c.h.b16 %v5807
        %v6092 = vunpack.c.l.b16 %v5808
        %v6093 = vunpack.c.h.b16 %v5808
        %v6094 = vunpack.c.l.b16 %v5809
        %v6095 = vunpack.c.h.b16 %v5809
        %v6096 = vunpack.c.l.b16 %v5810
        %v6097 = vunpack.c.h.b16 %v5810
        %v6098 = vunpack.c.l.b16 %v5811
        %v6099 = vunpack.c.h.b16 %v5811
        %v6100 = vunpack.c.l.b16 %v5812
        %v6101 = vunpack.c.h.b16 %v5812
        %v6102 = vunpack.c.l.b16 %v5813
        %v6103 = vunpack.c.h.b16 %v5813
        %v6104 = vunpack.c.l.b16 %v5814
        %v6105 = vunpack.c.h.b16 %v5814
        %v6106 = vunpack.c.l.b16 %v5815
        %v6107 = vunpack.c.h.b16 %v5815
        %v6108 = vunpack.c.l.b16 %v5816
        %v6109 = vunpack.c.h.b16 %v5816
        %v6110 = vunpack.c.l.b16 %v5817
        %v6111 = vunpack.c.h.b16 %v5817
        %v6112 = vunpack.c.l.b16 %v5818
        %v6113 = vunpack.c.h.b16 %v5818
        %v6114 = vunpack.c.l.b16 %v5819
        %v6115 = vunpack.c.h.b16 %v5819
        %v6116 = vunpack.c.l.b16 %v5820
        %v6117 = vunpack.c.h.b16 %v5820
        %v6118 = vunpack.c.l.b16 %v5821
        %v6119 = vunpack.c.h.b16 %v5821
        %v6120 = vunpack.c.l.b16 %v5822
        %v6121 = vunpack.c.h.b16 %v5822
        %v6122 = vunpack.c.l.b16 %v5823
        %v6123 = vunpack.c.h.b16 %v5823
        %v6124 = vunpack.c.l.b16 %v5824
        %v6125 = vunpack.c.h.b16 %v5824
        %v6126 = vunpack.c.l.b16 %v5825
        %v6127 = vunpack.c.h.b16 %v5825
        %v6128 = vunpack.c.l.b16 %v5826
        %v6129 = vunpack.c.h.b16 %v5826
        %v6130 = vunpack.c.l.b16 %v5827
        %v6131 = vunpack.c.h.b16 %v5827
        %v6132 = vunpack.c.l.b16 %v5828
        %v6133 = vunpack.c.h.b16 %v5828
        %v6134 = vunpack.c.l.b16 %v5829
        %v6135 = vunpack.c.h.b16 %v5829
        %v6136 = vunpack.c.l.b16 %v5830
        %v6137 = vunpack.c.h.b16 %v5830
        %v6138 = vunpack.c.l.b16 %v5831
        %v6139 = vunpack.c.h.b16 %v5831
        %v6140 = vunpack.c.l.b16 %v5832
        %v6141 = vunpack.c.h.b16 %v5832
        %v6142 = vunpack.c.l.b16 %v5833
        %v6143 = vunpack.c.h.b16 %v5833
        %v6144 = vunpack.c.l.b16 %v5834
        %v6145 = vunpack.c.h.b16 %v5834
        %v6146 = vunpack.c.l.b16 %v5835
        %v6147 = vunpack.c.h.b16 %v5835
        %v6148 = vunpack.c.l.b16 %v5836
        %v6149 = vunpack.c.h.b16 %v5836
        %v6150 = vunpack.c.l.b16 %v5837
        %v6151 = vunpack.c.h.b16 %v5837
        %v6152 = vunpack.c.l.b16 %v5838
        %v6153 = vunpack.c.h.b16 %v5838
        %v6154 = vunpack.c.l.b16 %v5839
        %v6155 = vunpack.c.h.b16 %v5839
        %v6156 = vunpack.c.l.b16 %v5840
        %v6157 = vunpack.c.h.b16 %v5840
        %v6158 = vunpack.c.l.b16 %v5841
        %v6159 = vunpack.c.h.b16 %v5841
        %v6160 = vunpack.c.l.b16 %v5842
        %v6161 = vunpack.c.h.b16 %v5842
        %v6162 = vunpack.c.l.b16 %v5843
        %v6163 = vunpack.c.h.b16 %v5843
        %v6164 = vunpack.c.l.b16 %v5844
        %v6165 = vunpack.c.h.b16 %v5844
        %v6166 = vunpack.c.l.b16 %v5845
        %v6167 = vunpack.c.h.b16 %v5845
        %v6168 = vunpack.c.l.b16 %v5846
        %v6169 = vunpack.c.h.b16 %v5846
        %v6170 = vunpack.c.l.b16 %v5847
        %v6171 = vunpack.c.h.b16 %v5847
        %v6172 = vunpack.c.l.b16 %v5848
        %v6173 = vunpack.c.h.b16 %v5848
        %v6174 = vunpack.c.l.b16 %v5849
        %v6175 = vunpack.c.h.b16 %v5849
        %v6176 = vunpack.c.l.b16 %v5850
        %v6177 = vunpack.c.h.b16 %v5850
        %v6178 = vunpack.c.l.b16 %v5851
        %v6179 = vunpack.c.h.b16 %v5851
        %v6180 = vunpack.c.l.b16 %v5852
        %v6181 = vunpack.c.h.b16 %v5852
        %v6182 = vunpack.c.l.b16 %v5853
        %v6183 = vunpack.c.h.b16 %v5853
        %v6184 = vunpack.c.l.b16 %v5854
        %v6185 = vunpack.c.h.b16 %v5854
        %v6186 = vunpack.c.l.b16 %v5855
        %v6187 = vunpack.c.h.b16 %v5855
        %v6188 = vunpack.c.l.b16 %v5856
        %v6189 = vunpack.c.h.b16 %v5856
        %v6190 = vunpack.c.l.b16 %v5857
        %v6191 = vunpack.c.h.b16 %v5857
        %v6192 = vunpack.c.l.b16 %v5858
        %v6193 = vunpack.c.h.b16 %v5858
        %v6194 = vunpack.c.l.b16 %v5859
        %v6195 = vunpack.c.h.b16 %v5859
        %v6196 = vunpack.c.l.b16 %v5860
        %v6197 = vunpack.c.h.b16 %v5860
        %v6198 = vunpack.c.l.b16 %v5861
        %v6199 = vunpack.c.h.b16 %v5861
        %v6200 = vunpack.c.l.b16 %v5862
        %v6201 = vunpack.c.h.b16 %v5862
        %v6202 = vunpack.c.l.b16 %v5863
        %v6203 = vunpack.c.h.b16 %v5863
        %v6204 = vunpack.c.l.b16 %v5864
        %v6205 = vunpack.c.h.b16 %v5864
        %v6206 = vunpack.c.l.b16 %v5865
        %v6207 = vunpack.c.h.b16 %v5865
        %v6208 = vunpack.c.l.b16 %v5866
        %v6209 = vunpack.c.h.b16 %v5866
        %v6210 = vunpack.c.l.b16 %v5867
        %v6211 = vunpack.c.h.b16 %v5867
        %v6212 = vunpack.c.l.b16 %v5868
        %v6213 = vunpack.c.h.b16 %v5868
        %v6214 = vunpack.c.l.b16 %v5869
        %v6215 = vunpack.c.h.b16 %v5869
        %v6216 = vunpack.c.l.b16 %v5870
        %v6217 = vunpack.c.h.b16 %v5870
        %v6218 = vunpack.c.l.b16 %v5871
        %v6219 = vunpack.c.h.b16 %v5871
        %v6220 = vunpack.c.l.b16 %v5872
        %v6221 = vunpack.c.h.b16 %v5872
        %v6222 = vunpack.c.l.b16 %v5873
        %v6223 = vunpack.c.h.b16 %v5873
        %v6224 = vunpack.c.l.b16 %v5874
        %v6225 = vunpack.c.h.b16 %v5874
        %v6226 = vunpack.c.l.b16 %v5875
        %v6227 = vunpack.c.h.b16 %v5875
        %v6228 = vunpack.c.l.b16 %v5876
        %v6229 = vunpack.c.h.b16 %v5876
        %v6230 = vunpack.c.l.b16 %v5877
        %v6231 = vunpack.c.h.b16 %v5877
        %v6232 = vunpack.c.l.b16 %v5878
        %v6233 = vunpack.c.h.b16 %v5878
        %v6234 = vunpack.c.l.b16 %v5879
        %v6235 = vunpack.c.h.b16 %v5879
        %v6236 = vunpack.c.l.b16 %v5880
        %v6237 = vunpack.c.h.b16 %v5880
        %v6238 = vunpack.c.l.b16 %v5881
        %v6239 = vunpack.c.h.b16 %v5881
        %v6240 = vunpack.c.l.b16 %v5882
        %v6241 = vunpack.c.h.b16 %v5882
        %v6242 = vunpack.c.l.b16 %v5883
        %v6243 = vunpack.c.h.b16 %v5883
        %v6244 = vunpack.c.l.b16 %v5884
        %v6245 = vunpack.c.h.b16 %v5884
        %v6246 = vunpack.c.l.b16 %v5885
        %v6247 = vunpack.c.h.b16 %v5885
        %v6248 = vunpack.c.l.b16 %v5886
        %v6249 = vunpack.c.h.b16 %v5886
        %v6250 = vunpack.c.l.b16 %v5887
        %v6251 = vunpack.c.h.b16 %v5887
        %v6252 = vunpack.c.l.b16 %v5888
        %v6253 = vunpack.c.h.b16 %v5888
        %v6254 = vunpack.c.l.b16 %v5889
        %v6255 = vunpack.c.h.b16 %v5889
        %v6256 = vunpack.c.l.b16 %v5890
        %v6257 = vunpack.c.h.b16 %v5890
        %v6258 = vunpack.c.l.b16 %v5891
        %v6259 = vunpack.c.h.b16 %v5891
        %v6260 = vunpack.c.l.b16 %v5892
        %v6261 = vunpack.c.h.b16 %v5892
        %v6262 = vunpack.c.l.b16 %v5893
        %v6263 = vunpack.c.h.b16 %v5893
        %v6264 = vunpack.c.l.b16 %v5894
        %v6265 = vunpack.c.h.b16 %v5894
        %v6266 = vunpack.c.l.b16 %v5895
        %v6267 = vunpack.c.h.b16 %v5895
        %v6268 = vunpack.c.l.b16 %v5896
        %v6269 = vunpack.c.h.b16 %v5896
        %v6270 = vunpack.c.l.b16 %v5897
        %v6271 = vunpack.c.h.b16 %v5897
        %v6272 = vunpack.c.l.b16 %v5898
        %v6273 = vunpack.c.h.b16 %v5898
        %v6274 = vunpack.c.l.b16 %v5899
        %v6275 = vunpack.c.h.b16 %v5899
        %v6276 = vunpack.c.l.b16 %v5900
        %v6277 = vunpack.c.h.b16 %v5900
        %v6278 = vunpack.c.l.b16 %v5901
        %v6279 = vunpack.c.h.b16 %v5901
        %v6280 = vunpack.c.l.b16 %v5902
        %v6281 = vunpack.c.h.b16 %v5902
        %v6282 = vunpack.c.l.b16 %v5903
        %v6283 = vunpack.c.h.b16 %v5903
        %v6284 = vunpack.c.l.b16 %v5904
        %v6285 = vunpack.c.h.b16 %v5904
        %v6286 = vunpack.c.l.b16 %v5905
        %v6287 = vunpack.c.h.b16 %v5905
        %v6288 = vunpack.c.l.b16 %v5906
        %v6289 = vunpack.c.h.b16 %v5906
        %v6290 = vunpack.c.l.b16 %v5907
        %v6291 = vunpack.c.h.b16 %v5907
        %v6292 = vpack.c.b16 %v6044, %v6036
        %v6293 = vpack.c.b16 %v6045, %v6037
        %v6294 = vpack.c.b16 %v6046, %v6038
        %v6295 = vpack.c.b16 %v6047, %v6039
        %v6296 = vpack.c.b16 %v6048, %v6040
        %v6297 = vpack.c.b16 %v6049, %v6041
        %v6298 = vpack.c.b16 %v6050, %v6042
        %v6299 = vpack.c.b16 %v6051, %v6043
        %v6300 = vpack.c.b16 %v6060, %v6052
        %v6301 = vpack.c.b16 %v6061, %v6053
        %v6302 = vpack.c.b16 %v6062, %v6054
        %v6303 = vpack.c.b16 %v6063, %v6055
        %v6304 = vpack.c.b16 %v6064, %v6056
        %v6305 = vpack.c.b16 %v6065, %v6057
        %v6306 = vpack.c.b16 %v6066, %v6058
        %v6307 = vpack.c.b16 %v6067, %v6059
        %v6308 = vpack.c.b16 %v6076, %v6068
        %v6309 = vpack.c.b16 %v6077, %v6069
        %v6310 = vpack.c.b16 %v6078, %v6070
        %v6311 = vpack.c.b16 %v6079, %v6071
        %v6312 = vpack.c.b16 %v6080, %v6072
        %v6313 = vpack.c.b16 %v6081, %v6073
        %v6314 = vpack.c.b16 %v6082, %v6074
        %v6315 = vpack.c.b16 %v6083, %v6075
        %v6316 = vpack.c.b16 %v6092, %v6084
        %v6317 = vpack.c.b16 %v6093, %v6085
        %v6318 = vpack.c.b16 %v6094, %v6086
        %v6319 = vpack.c.b16 %v6095, %v6087
        %v6320 = vpack.c.b16 %v6096, %v6088
        %v6321 = vpack.c.b16 %v6097, %v6089
        %v6322 = vpack.c.b16 %v6098, %v6090
        %v6323 = vpack.c.b16 %v6099, %v6091
        %v6324 = vpack.c.b16 %v6108, %v6100
        %v6325 = vpack.c.b16 %v6109, %v6101
        %v6326 = vpack.c.b16 %v6110, %v6102
        %v6327 = vpack.c.b16 %v6111, %v6103
        %v6328 = vpack.c.b16 %v6112, %v6104
        %v6329 = vpack.c.b16 %v6113, %v6105
        %v6330 = vpack.c.b16 %v6114, %v6106
        %v6331 = vpack.c.b16 %v6115, %v6107
        %v6332 = vpack.c.b16 %v6124, %v6116
        %v6333 = vpack.c.b16 %v6125, %v6117
        %v6334 = vpack.c.b16 %v6126, %v6118
        %v6335 = vpack.c.b16 %v6127, %v6119
        %v6336 = vpack.c.b16 %v6128, %v6120
        %v6337 = vpack.c.b16 %v6129, %v6121
        %v6338 = vpack.c.b16 %v6130, %v6122
        %v6339 = vpack.c.b16 %v6131, %v6123
        %v6340 = vpack.c.b16 %v6140, %v6132
        %v6341 = vpack.c.b16 %v6141, %v6133
        %v6342 = vpack.c.b16 %v6142, %v6134
        %v6343 = vpack.c.b16 %v6143, %v6135
        %v6344 = vpack.c.b16 %v6144, %v6136
        %v6345 = vpack.c.b16 %v6145, %v6137
        %v6346 = vpack.c.b16 %v6146, %v6138
        %v6347 = vpack.c.b16 %v6147, %v6139
        %v6348 = vpack.c.b16 %v6156, %v6148
        %v6349 = vpack.c.b16 %v6157, %v6149
        %v6350 = vpack.c.b16 %v6158, %v6150
        %v6351 = vpack.c.b16 %v6159, %v6151
        %v6352 = vpack.c.b16 %v6160, %v6152
        %v6353 = vpack.c.b16 %v6161, %v6153
        %v6354 = vpack.c.b16 %v6162, %v6154
        %v6355 = vpack.c.b16 %v6163, %v6155
        %v6356 = vpack.c.b16 %v6172, %v6164
        %v6357 = vpack.c.b16 %v6173, %v6165
        %v6358 = vpack.c.b16 %v6174, %v6166
        %v6359 = vpack.c.b16 %v6175, %v6167
        %v6360 = vpack.c.b16 %v6176, %v6168
        %v6361 = vpack.c.b16 %v6177, %v6169
        %v6362 = vpack.c.b16 %v6178, %v6170
        %v6363 = vpack.c.b16 %v6179, %v6171
        %v6364 = vpack.c.b16 %v6188, %v6180
        %v6365 = vpack.c.b16 %v6189, %v6181
        %v6366 = vpack.c.b16 %v6190, %v6182
        %v6367 = vpack.c.b16 %v6191, %v6183
        %v6368 = vpack.c.b16 %v6192, %v6184
        %v6369 = vpack.c.b16 %v6193, %v6185
        %v6370 = vpack.c.b16 %v6194, %v6186
        %v6371 = vpack.c.b16 %v6195, %v6187
        %v6372 = vpack.c.b16 %v6204, %v6196
        %v6373 = vpack.c.b16 %v6205, %v6197
        %v6374 = vpack.c.b16 %v6206, %v6198
        %v6375 = vpack.c.b16 %v6207, %v6199
        %v6376 = vpack.c.b16 %v6208, %v6200
        %v6377 = vpack.c.b16 %v6209, %v6201
        %v6378 = vpack.c.b16 %v6210, %v6202
        %v6379 = vpack.c.b16 %v6211, %v6203
        %v6380 = vpack.c.b16 %v6220, %v6212
        %v6381 = vpack.c.b16 %v6221, %v6213
        %v6382 = vpack.c.b16 %v6222, %v6214
        %v6383 = vpack.c.b16 %v6223, %v6215
        %v6384 = vpack.c.b16 %v6224, %v6216
        %v6385 = vpack.c.b16 %v6225, %v6217
        %v6386 = vpack.c.b16 %v6226, %v6218
        %v6387 = vpack.c.b16 %v6227, %v6219
        %v6388 = vpack.c.b16 %v6236, %v6228
        %v6389 = vpack.c.b16 %v6237, %v6229
        %v6390 = vpack.c.b16 %v6238, %v6230
        %v6391 = vpack.c.b16 %v6239, %v6231
        %v6392 = vpack.c.b16 %v6240, %v6232
        %v6393 = vpack.c.b16 %v6241, %v6233
        %v6394 = vpack.c.b16 %v6242, %v6234
        %v6395 = vpack.c.b16 %v6243, %v6235
        %v6396 = vpack.c.b16 %v6252, %v6244
        %v6397 = vpack.c.b16 %v6253, %v6245
        %v6398 = vpack.c.b16 %v6254, %v6246
        %v6399 = vpack.c.b16 %v6255, %v6247
        %v6400 = vpack.c.b16 %v6256, %v6248
        %v6401 = vpack.c.b16 %v6257, %v6249
        %v6402 = vpack.c.b16 %v6258, %v6250
        %v6403 = vpack.c.b16 %v6259, %v6251
        %v6404 = vpack.c.b16 %v6268, %v6260
        %v6405 = vpack.c.b16 %v6269, %v6261
        %v6406 = vpack.c.b16 %v6270, %v6262
        %v6407 = vpack.c.b16 %v6271, %v6263
        %v6408 = vpack.c.b16 %v6272, %v6264
        %v6409 = vpack.c.b16 %v6273, %v6265
        %v6410 = vpack.c.b16 %v6274, %v6266
        %v6411 = vpack.c.b16 %v6275, %v6267
        %v6412 = vpack.c.b16 %v6284, %v6276
        %v6413 = vpack.c.b16 %v6285, %v6277
        %v6414 = vpack.c.b16 %v6286, %v6278
        %v6415 = vpack.c.b16 %v6287, %v6279
        %v6416 = vpack.c.b16 %v6288, %v6280
        %v6417 = vpack.c.b16 %v6289, %v6281
        %v6418 = vpack.c.b16 %v6290, %v6282
        %v6419 = vpack.c.b16 %v6291, %v6283
        %6548 = vmatprep.subr.bf16.mxu0 %v6349
        %6549 = vmatpush1.bf16.msra.mxu0 %v6348
        %6550 = vmatprep.subr.bf16.mxu0 %v6341
        %6551 = vmatpush1.bf16.msra.mxu0 %v6340
        %6552 = vmatprep.subr.bf16.mxu0 %v6333
        %6553 = vmatpush1.bf16.msra.mxu0 %v6332
        %6554 = vmatprep.subr.bf16.mxu0 %v6325
        %6555 = vmatpush1.bf16.msra.mxu0 %v6324
        %6556 = vmatprep.subr.bf16.mxu0 %v6317
        %6557 = vmatpush1.bf16.msra.mxu0 %v6316
        %6558 = vmatprep.subr.bf16.mxu0 %v6309
        %6559 = vmatpush1.bf16.msra.mxu0 %v6308
        %6560 = vmatprep.subr.bf16.mxu0 %v6301
        %6561 = vmatpush1.bf16.msra.mxu0 %v6300
        %6562 = vmatprep.subr.bf16.mxu0 %v6293
        %6563 = vmatpush1.bf16.msra.mxu0 %v6292
        %6564 = vmatprep.subr.bf16.mxu0 %v6413
        %6565 = vmatpush2.bf16.msra.mxu0 %v6412
        %6566 = vmatprep.subr.bf16.mxu0 %v6405
        %6567 = vmatpush2.bf16.msra.mxu0 %v6404
        %6568 = vmatprep.subr.bf16.mxu0 %v6397
        %6569 = vmatpush2.bf16.msra.mxu0 %v6396
        %6570 = vmatprep.subr.bf16.mxu0 %v6389
        %6571 = vmatpush2.bf16.msra.mxu0 %v6388
        %6572 = vmatprep.subr.bf16.mxu0 %v6381
        %6573 = vmatpush2.bf16.msra.mxu0 %v6380
        %6574 = vmatprep.subr.bf16.mxu0 %v6373
        %6575 = vmatpush2.bf16.msra.mxu0 %v6372
        %6576 = vmatprep.subr.bf16.mxu0 %v6365
        %6577 = vmatpush2.bf16.msra.mxu0 %v6364
        %6578 = vmatprep.subr.bf16.mxu0 %v6357
        %6579 = vmatpush2.bf16.msra.mxu0 %v6356
        %6580 = vmatprep.mubr.bf16.mxu0 %v5779
        %6581 = vmatmul.mubr.bf16.gmra.mxu0 %v5778
        %v6582 = vpop.f32.mrf.mxu0
        %v6583 = vadd.f32 0.0, %v6582
        %v6584 = vpop.f32.mrf.mxu0
        %v6585 = vadd.f32 0.0, %v6584
        %v6586 = vpop.f32.mrf.mxu0
        %v6587 = vpop.f32.mrf.mxu0
        %6588 = vdwg.mxu0
        %6589 = vmatprep.subr.bf16.mxu0 %v6351
        %6590 = vmatpush1.bf16.msra.mxu0 %v6350
        %6591 = vmatprep.subr.bf16.mxu0 %v6343
        %6592 = vmatpush1.bf16.msra.mxu0 %v6342
        %6593 = vmatprep.subr.bf16.mxu0 %v6335
        %6594 = vmatpush1.bf16.msra.mxu0 %v6334
        %6595 = vmatprep.subr.bf16.mxu0 %v6327
        %6596 = vmatpush1.bf16.msra.mxu0 %v6326
        %6597 = vmatprep.subr.bf16.mxu0 %v6319
        %6598 = vmatpush1.bf16.msra.mxu0 %v6318
        %6599 = vmatprep.subr.bf16.mxu0 %v6311
        %6600 = vmatpush1.bf16.msra.mxu0 %v6310
        %6601 = vmatprep.subr.bf16.mxu0 %v6303
        %6602 = vmatpush1.bf16.msra.mxu0 %v6302
        %6603 = vmatprep.subr.bf16.mxu0 %v6295
        %6604 = vmatpush1.bf16.msra.mxu0 %v6294
        %6605 = vmatprep.subr.bf16.mxu0 %v6415
        %6606 = vmatpush2.bf16.msra.mxu0 %v6414
        %6607 = vmatprep.subr.bf16.mxu0 %v6407
        %6608 = vmatpush2.bf16.msra.mxu0 %v6406
        %6609 = vmatprep.subr.bf16.mxu0 %v6399
        %6610 = vmatpush2.bf16.msra.mxu0 %v6398
        %6611 = vmatprep.subr.bf16.mxu0 %v6391
        %6612 = vmatpush2.bf16.msra.mxu0 %v6390
        %6613 = vmatprep.subr.bf16.mxu0 %v6383
        %6614 = vmatpush2.bf16.msra.mxu0 %v6382
        %6615 = vmatprep.subr.bf16.mxu0 %v6375
        %6616 = vmatpush2.bf16.msra.mxu0 %v6374
        %6617 = vmatprep.subr.bf16.mxu0 %v6367
        %6618 = vmatpush2.bf16.msra.mxu0 %v6366
        %6619 = vmatprep.subr.bf16.mxu0 %v6359
        %6620 = vmatpush2.bf16.msra.mxu0 %v6358
        %6621 = vmatprep.mubr.bf16.mxu0 %v5779
        %6622 = vmatmul.mubr.bf16.gmra.mxu0 %v5778
        %v6623 = vpop.f32.mrf.mxu0
        %v6624 = vadd.f32 0.0, %v6623
        %v6625 = vpop.f32.mrf.mxu0
        %v6626 = vadd.f32 0.0, %v6625
        %v6627 = vpop.f32.mrf.mxu0
        %v6628 = vpop.f32.mrf.mxu0
        %6629 = vdwg.mxu0
        %6630 = vmatprep.subr.bf16.mxu0 %v6353
        %6631 = vmatpush1.bf16.msra.mxu0 %v6352
        %6632 = vmatprep.subr.bf16.mxu0 %v6345
        %6633 = vmatpush1.bf16.msra.mxu0 %v6344
        %6634 = vmatprep.subr.bf16.mxu0 %v6337
        %6635 = vmatpush1.bf16.msra.mxu0 %v6336
        %6636 = vmatprep.subr.bf16.mxu0 %v6329
        %6637 = vmatpush1.bf16.msra.mxu0 %v6328
        %6638 = vmatprep.subr.bf16.mxu0 %v6321
        %6639 = vmatpush1.bf16.msra.mxu0 %v6320
        %6640 = vmatprep.subr.bf16.mxu0 %v6313
        %6641 = vmatpush1.bf16.msra.mxu0 %v6312
        %6642 = vmatprep.subr.bf16.mxu0 %v6305
        %6643 = vmatpush1.bf16.msra.mxu0 %v6304
        %6644 = vmatprep.subr.bf16.mxu0 %v6297
        %6645 = vmatpush1.bf16.msra.mxu0 %v6296
        %6646 = vmatprep.subr.bf16.mxu0 %v6417
        %6647 = vmatpush2.bf16.msra.mxu0 %v6416
        %6648 = vmatprep.subr.bf16.mxu0 %v6409
        %6649 = vmatpush2.bf16.msra.mxu0 %v6408
        %6650 = vmatprep.subr.bf16.mxu0 %v6401
        %6651 = vmatpush2.bf16.msra.mxu0 %v6400
        %6652 = vmatprep.subr.bf16.mxu0 %v6393
        %6653 = vmatpush2.bf16.msra.mxu0 %v6392
        %6654 = vmatprep.subr.bf16.mxu0 %v6385
        %6655 = vmatpush2.bf16.msra.mxu0 %v6384
        %6656 = vmatprep.subr.bf16.mxu0 %v6377
        %6657 = vmatpush2.bf16.msra.mxu0 %v6376
        %6658 = vmatprep.subr.bf16.mxu0 %v6369
        %6659 = vmatpush2.bf16.msra.mxu0 %v6368
        %6660 = vmatprep.subr.bf16.mxu0 %v6361
        %6661 = vmatpush2.bf16.msra.mxu0 %v6360
        %6662 = vmatprep.mubr.bf16.mxu0 %v5779
        %6663 = vmatmul.mubr.bf16.gmra.mxu0 %v5778
        %v6664 = vpop.f32.mrf.mxu0
        %v6665 = vadd.f32 0.0, %v6664
        %v6666 = vpop.f32.mrf.mxu0
        %v6667 = vadd.f32 0.0, %v6666
        %v6668 = vpop.f32.mrf.mxu0
        %v6669 = vpop.f32.mrf.mxu0
        %6670 = vdwg.mxu0
        %6671 = vmatprep.subr.bf16.mxu0 %v6355
        %6672 = vmatpush1.bf16.msra.mxu0 %v6354
        %6673 = vmatprep.subr.bf16.mxu0 %v6347
        %6674 = vmatpush1.bf16.msra.mxu0 %v6346
        %6675 = vmatprep.subr.bf16.mxu0 %v6339
        %6676 = vmatpush1.bf16.msra.mxu0 %v6338
        %6677 = vmatprep.subr.bf16.mxu0 %v6331
        %6678 = vmatpush1.bf16.msra.mxu0 %v6330
        %6679 = vmatprep.subr.bf16.mxu0 %v6323
        %6680 = vmatpush1.bf16.msra.mxu0 %v6322
        %6681 = vmatprep.subr.bf16.mxu0 %v6315
        %6682 = vmatpush1.bf16.msra.mxu0 %v6314
        %6683 = vmatprep.subr.bf16.mxu0 %v6307
        %6684 = vmatpush1.bf16.msra.mxu0 %v6306
        %6685 = vmatprep.subr.bf16.mxu0 %v6299
        %6686 = vmatpush1.bf16.msra.mxu0 %v6298
        %6687 = vmatprep.subr.bf16.mxu0 %v6419
        %6688 = vmatpush2.bf16.msra.mxu0 %v6418
        %6689 = vmatprep.subr.bf16.mxu0 %v6411
        %6690 = vmatpush2.bf16.msra.mxu0 %v6410
        %6691 = vmatprep.subr.bf16.mxu0 %v6403
        %6692 = vmatpush2.bf16.msra.mxu0 %v6402
        %6693 = vmatprep.subr.bf16.mxu0 %v6395
        %6694 = vmatpush2.bf16.msra.mxu0 %v6394
        %6695 = vmatprep.subr.bf16.mxu0 %v6387
        %6696 = vmatpush2.bf16.msra.mxu0 %v6386
        %6697 = vmatprep.subr.bf16.mxu0 %v6379
        %6698 = vmatpush2.bf16.msra.mxu0 %v6378
        %6699 = vmatprep.subr.bf16.mxu0 %v6371
        %6700 = vmatpush2.bf16.msra.mxu0 %v6370
        %6701 = vmatprep.subr.bf16.mxu0 %v6363
        %6702 = vmatpush2.bf16.msra.mxu0 %v6362
        %6703 = vmatprep.mubr.bf16.mxu0 %v5779
        %6704 = vmatmul.mubr.bf16.gmra.mxu0 %v5778
        %v6705 = vpop.f32.mrf.mxu0
        %v6706 = vadd.f32 0.0, %v6705
        %v6707 = vpop.f32.mrf.mxu0
        %v6708 = vadd.f32 0.0, %v6707
        %v6709 = vpop.f32.mrf.mxu0
        %v6710 = vpop.f32.mrf.mxu0
        %6711 = vdwg.mxu0
        %v6720 = vcombine.low %v6583, %v6585
        %v6721 = vcombine.low %v6624, %v6626
        %v6722 = vcombine.low %v6665, %v6667
        %v6723 = vcombine.low %v6706, %v6708
        %v6725 = vunpack.c.l.s4 1966171168
        %v6726 = vunpack.c.0.s8 %v6725
        %v6727 = vlaneseq
        %v6728 = vshrl.u32 %v6727, 7
        %v6729 = vsub.s32 %v6726, %v6728
        %v6730 = vrot.slane %v6720, %v6729
        %v6732 = vunpack.c.l.s4 1966171168
        %v6733 = vunpack.c.0.s8 %v6732
        %v6734 = vlaneseq
        %v6735 = vshrl.u32 %v6734, 7
        %v6736 = vsub.s32 %v6733, %v6735
        %v6737 = vrot.slane %v6721, %v6736
        %v6739 = vunpack.c.l.s4 1966171168
        %v6740 = vunpack.c.0.s8 %v6739
        %v6741 = vlaneseq
        %v6742 = vshrl.u32 %v6741, 7
        %v6743 = vsub.s32 %v6740, %v6742
        %v6744 = vrot.slane %v6722, %v6743
        %v6746 = vunpack.c.l.s4 1966171168
        %v6747 = vunpack.c.0.s8 %v6746
        %v6748 = vlaneseq
        %v6749 = vshrl.u32 %v6748, 7
        %v6750 = vsub.s32 %v6747, %v6749
        %v6751 = vrot.slane %v6723, %v6750
        %v6752 = vcombine.low %v6730, %v6737
        %v6753 = vcombine.low %v6744, %v6751
        %v6755 = vunpack.c.l.s4 1966171168
        %v6756 = vunpack.c.0.s8 %v6755
        %v6757 = vlaneseq
        %v6758 = vshrl.u32 %v6757, 7
        %v6759 = vsub.s32 %v6756, %v6758
        %v6760 = vrot.slane %v6752, %v6759
        %v6762 = vunpack.c.l.s4 1966171168
        %v6763 = vunpack.c.0.s8 %v6762
        %v6764 = vlaneseq
        %v6765 = vshrl.u32 %v6764, 7
        %v6766 = vsub.s32 %v6763, %v6765
        %v6767 = vrot.slane %v6753, %v6766
        %v6768 = vcombine.low %v6760, %v6767
        %v6770 = vadd.f32 %v5766, %v6768
        %v6771 = vxor.u32 %v6770, 2147483648
        %v6772 = vmul.f32 %v6771, 1.442695
        %v6773 = vpow.pop %v6772
        %v6774 = vadd.f32 %v6773, 1.0
        %v6775 = vrcp.pop %v6774
        %v6776 = vmul.f32 1.0, %v6775
        %v6778 = vrot.slane %v6770, 6
        %v6780 = vtanh.pop %v6778
        %v6782 = vrot.slane %v6776, 2
        %v6784 = vmul.f32 %v6782, %v5755
        %v6785 = vmul.f32 %v6776, %v6780
        %v6786 = vadd.f32 %v6784, %v6785
        %v6787 = vtanh.pop %v6786
        %v6788 = vrot.slane %v6776, 4
        %v6790 = vmul.f32 %v6788, %v6787
        %s6791 = scalar_lea.vmem [#allocation3], 4
        %6792 = vst.msk [vmem:[%s6791] ss:$8 sm:$0x3] %vm2667, %v6790
        %6793 = vst.msk [vmem:[%s6791] ss:$8 sm:$0x0] %vm2667, %v6790
        %s6794 = scalar_lea.vmem [#allocation2], 5
        %v6795 = vld [vmem:[%s6794] ss:$8 sm:$0xf]
        %v6796 = vld [vmem:[%s6794] ss:$8 sm:$0xf0]
        %v6797 = vor.u32 %v6795, %v6796
        %v6799 = vlaneseq
        %v6800 = vshrl.u32 %v6799, 7
        %v6801 = vsub.s32 0, %v6800
        %v6802 = vrot.slane %v6790, %v6801
        %v6803 = vlaneseq
        %v6804 = vshrl.u32 %v6803, 7
        %v6805 = vsub.s32 1, %v6804
        %v6806 = vrot.slane %v6790, %v6805
        %v6809 = vpack.c.bf16 %v6802, %v6802
        %v6810 = vpack.c.bf16 %v6806, %v6806
        %v6811 = vld [vmem:[%s562] sm:$0xff]
        %v6812 = vld [vmem:[%s562 + $0x8] sm:$0xff]
        %v6813 = vld [vmem:[%s562 + $0x10] sm:$0xff]
        %v6814 = vld [vmem:[%s562 + $0x18] sm:$0xff]
        %v6815 = vld [vmem:[%s562 + $0x20] sm:$0xff]
        %v6816 = vld [vmem:[%s562 + $0x28] sm:$0xff]
        %v6817 = vld [vmem:[%s562 + $0x30] sm:$0xff]
        %v6818 = vld [vmem:[%s562 + $0x38] sm:$0xff]
        %v6819 = vld [vmem:[%s562 + $0x40] sm:$0xff]
        %v6820 = vld [vmem:[%s562 + $0x48] sm:$0xff]
        %v6821 = vld [vmem:[%s562 + $0x50] sm:$0xff]
        %v6822 = vld [vmem:[%s562 + $0x58] sm:$0xff]
        %v6823 = vld [vmem:[%s562 + $0x60] sm:$0xff]
        %v6824 = vld [vmem:[%s562 + $0x68] sm:$0xff]
        %v6825 = vld [vmem:[%s562 + $0x70] sm:$0xff]
        %v6826 = vld [vmem:[%s562 + $0x78] sm:$0xff]
        %v6827 = vld [vmem:[%s562 + $0x80] sm:$0xff]
        %v6828 = vld [vmem:[%s562 + $0x88] sm:$0xff]
        %v6829 = vld [vmem:[%s562 + $0x90] sm:$0xff]
        %v6830 = vld [vmem:[%s562 + $0x98] sm:$0xff]
        %v6831 = vld [vmem:[%s562 + $0xa0] sm:$0xff]
        %v6832 = vld [vmem:[%s562 + $0xa8] sm:$0xff]
        %v6833 = vld [vmem:[%s562 + $0xb0] sm:$0xff]
        %v6834 = vld [vmem:[%s562 + $0xb8] sm:$0xff]
        %v6835 = vld [vmem:[%s562 + $0xc0] sm:$0xff]
        %v6836 = vld [vmem:[%s562 + $0xc8] sm:$0xff]
        %v6837 = vld [vmem:[%s562 + $0xd0] sm:$0xff]
        %v6838 = vld [vmem:[%s562 + $0xd8] sm:$0xff]
        %v6839 = vld [vmem:[%s562 + $0xe0] sm:$0xff]
        %v6840 = vld [vmem:[%s562 + $0xe8] sm:$0xff]
        %v6841 = vld [vmem:[%s562 + $0xf0] sm:$0xff]
        %v6842 = vld [vmem:[%s562 + $0xf8] sm:$0xff]
        %v6843 = vld [vmem:[%s562 + $0x100] sm:$0xff]
        %v6844 = vld [vmem:[%s562 + $0x108] sm:$0xff]
        %v6845 = vld [vmem:[%s562 + $0x110] sm:$0xff]
        %v6846 = vld [vmem:[%s562 + $0x118] sm:$0xff]
        %v6847 = vld [vmem:[%s562 + $0x120] sm:$0xff]
        %v6848 = vld [vmem:[%s562 + $0x128] sm:$0xff]
        %v6849 = vld [vmem:[%s562 + $0x130] sm:$0xff]
        %v6850 = vld [vmem:[%s562 + $0x138] sm:$0xff]
        %v6851 = vld [vmem:[%s562 + $0x140] sm:$0xff]
        %v6852 = vld [vmem:[%s562 + $0x148] sm:$0xff]
        %v6853 = vld [vmem:[%s562 + $0x150] sm:$0xff]
        %v6854 = vld [vmem:[%s562 + $0x158] sm:$0xff]
        %v6855 = vld [vmem:[%s562 + $0x160] sm:$0xff]
        %v6856 = vld [vmem:[%s562 + $0x168] sm:$0xff]
        %v6857 = vld [vmem:[%s562 + $0x170] sm:$0xff]
        %v6858 = vld [vmem:[%s562 + $0x178] sm:$0xff]
        %v6859 = vld [vmem:[%s562 + $0x180] sm:$0xff]
        %v6860 = vld [vmem:[%s562 + $0x188] sm:$0xff]
        %v6861 = vld [vmem:[%s562 + $0x190] sm:$0xff]
        %v6862 = vld [vmem:[%s562 + $0x198] sm:$0xff]
        %v6863 = vld [vmem:[%s562 + $0x1a0] sm:$0xff]
        %v6864 = vld [vmem:[%s562 + $0x1a8] sm:$0xff]
        %v6865 = vld [vmem:[%s562 + $0x1b0] sm:$0xff]
        %v6866 = vld [vmem:[%s562 + $0x1b8] sm:$0xff]
        %v6867 = vld [vmem:[%s562 + $0x1c0] sm:$0xff]
        %v6868 = vld [vmem:[%s562 + $0x1c8] sm:$0xff]
        %v6869 = vld [vmem:[%s562 + $0x1d0] sm:$0xff]
        %v6870 = vld [vmem:[%s562 + $0x1d8] sm:$0xff]
        %v6871 = vld [vmem:[%s562 + $0x1e0] sm:$0xff]
        %v6872 = vld [vmem:[%s562 + $0x1e8] sm:$0xff]
        %v6873 = vld [vmem:[%s562 + $0x1f0] sm:$0xff]
        %v6874 = vld [vmem:[%s562 + $0x1f8] sm:$0xff]
        %v6875 = vld [vmem:[%s562 + $0x200] sm:$0xff]
        %v6876 = vld [vmem:[%s562 + $0x208] sm:$0xff]
        %v6877 = vld [vmem:[%s562 + $0x210] sm:$0xff]
        %v6878 = vld [vmem:[%s562 + $0x218] sm:$0xff]
        %v6879 = vld [vmem:[%s562 + $0x220] sm:$0xff]
        %v6880 = vld [vmem:[%s562 + $0x228] sm:$0xff]
        %v6881 = vld [vmem:[%s562 + $0x230] sm:$0xff]
        %v6882 = vld [vmem:[%s562 + $0x238] sm:$0xff]
        %v6883 = vld [vmem:[%s562 + $0x240] sm:$0xff]
        %v6884 = vld [vmem:[%s562 + $0x248] sm:$0xff]
        %v6885 = vld [vmem:[%s562 + $0x250] sm:$0xff]
        %v6886 = vld [vmem:[%s562 + $0x258] sm:$0xff]
        %v6887 = vld [vmem:[%s562 + $0x260] sm:$0xff]
        %v6888 = vld [vmem:[%s562 + $0x268] sm:$0xff]
        %v6889 = vld [vmem:[%s562 + $0x270] sm:$0xff]
        %v6890 = vld [vmem:[%s562 + $0x278] sm:$0xff]
        %v6891 = vld [vmem:[%s562 + $0x280] sm:$0xff]
        %v6892 = vld [vmem:[%s562 + $0x288] sm:$0xff]
        %v6893 = vld [vmem:[%s562 + $0x290] sm:$0xff]
        %v6894 = vld [vmem:[%s562 + $0x298] sm:$0xff]
        %v6895 = vld [vmem:[%s562 + $0x2a0] sm:$0xff]
        %v6896 = vld [vmem:[%s562 + $0x2a8] sm:$0xff]
        %v6897 = vld [vmem:[%s562 + $0x2b0] sm:$0xff]
        %v6898 = vld [vmem:[%s562 + $0x2b8] sm:$0xff]
        %v6899 = vld [vmem:[%s562 + $0x2c0] sm:$0xff]
        %v6900 = vld [vmem:[%s562 + $0x2c8] sm:$0xff]
        %v6901 = vld [vmem:[%s562 + $0x2d0] sm:$0xff]
        %v6902 = vld [vmem:[%s562 + $0x2d8] sm:$0xff]
        %v6903 = vld [vmem:[%s562 + $0x2e0] sm:$0xff]
        %v6904 = vld [vmem:[%s562 + $0x2e8] sm:$0xff]
        %v6905 = vld [vmem:[%s562 + $0x2f0] sm:$0xff]
        %v6906 = vld [vmem:[%s562 + $0x2f8] sm:$0xff]
        %v6907 = vld [vmem:[%s562 + $0x300] sm:$0xff]
        %v6908 = vld [vmem:[%s562 + $0x308] sm:$0xff]
        %v6909 = vld [vmem:[%s562 + $0x310] sm:$0xff]
        %v6910 = vld [vmem:[%s562 + $0x318] sm:$0xff]
        %v6911 = vld [vmem:[%s562 + $0x320] sm:$0xff]
        %v6912 = vld [vmem:[%s562 + $0x328] sm:$0xff]
        %v6913 = vld [vmem:[%s562 + $0x330] sm:$0xff]
        %v6914 = vld [vmem:[%s562 + $0x338] sm:$0xff]
        %v6915 = vld [vmem:[%s562 + $0x340] sm:$0xff]
        %v6916 = vld [vmem:[%s562 + $0x348] sm:$0xff]
        %v6917 = vld [vmem:[%s562 + $0x350] sm:$0xff]
        %v6918 = vld [vmem:[%s562 + $0x358] sm:$0xff]
        %v6919 = vld [vmem:[%s562 + $0x360] sm:$0xff]
        %v6920 = vld [vmem:[%s562 + $0x368] sm:$0xff]
        %v6921 = vld [vmem:[%s562 + $0x370] sm:$0xff]
        %v6922 = vld [vmem:[%s562 + $0x378] sm:$0xff]
        %v6923 = vld [vmem:[%s562 + $0x380] sm:$0xff]
        %v6924 = vld [vmem:[%s562 + $0x388] sm:$0xff]
        %v6925 = vld [vmem:[%s562 + $0x390] sm:$0xff]
        %v6926 = vld [vmem:[%s562 + $0x398] sm:$0xff]
        %v6927 = vld [vmem:[%s562 + $0x3a0] sm:$0xff]
        %v6928 = vld [vmem:[%s562 + $0x3a8] sm:$0xff]
        %v6929 = vld [vmem:[%s562 + $0x3b0] sm:$0xff]
        %v6930 = vld [vmem:[%s562 + $0x3b8] sm:$0xff]
        %v6931 = vld [vmem:[%s562 + $0x3c0] sm:$0xff]
        %v6932 = vld [vmem:[%s562 + $0x3c8] sm:$0xff]
        %v6933 = vld [vmem:[%s562 + $0x3d0] sm:$0xff]
        %v6934 = vld [vmem:[%s562 + $0x3d8] sm:$0xff]
        %v6935 = vld [vmem:[%s562 + $0x3e0] sm:$0xff]
        %v6936 = vld [vmem:[%s562 + $0x3e8] sm:$0xff]
        %v6937 = vld [vmem:[%s562 + $0x3f0] sm:$0xff]
        %v6938 = vld [vmem:[%s562 + $0x3f8] sm:$0xff]
        %v7067 = vunpack.c.l.b16 %v6811
        %v7068 = vunpack.c.h.b16 %v6811
        %v7069 = vunpack.c.l.b16 %v6812
        %v7070 = vunpack.c.h.b16 %v6812
        %v7071 = vunpack.c.l.b16 %v6813
        %v7072 = vunpack.c.h.b16 %v6813
        %v7073 = vunpack.c.l.b16 %v6814
        %v7074 = vunpack.c.h.b16 %v6814
        %v7075 = vunpack.c.l.b16 %v6815
        %v7076 = vunpack.c.h.b16 %v6815
        %v7077 = vunpack.c.l.b16 %v6816
        %v7078 = vunpack.c.h.b16 %v6816
        %v7079 = vunpack.c.l.b16 %v6817
        %v7080 = vunpack.c.h.b16 %v6817
        %v7081 = vunpack.c.l.b16 %v6818
        %v7082 = vunpack.c.h.b16 %v6818
        %v7083 = vunpack.c.l.b16 %v6819
        %v7084 = vunpack.c.h.b16 %v6819
        %v7085 = vunpack.c.l.b16 %v6820
        %v7086 = vunpack.c.h.b16 %v6820
        %v7087 = vunpack.c.l.b16 %v6821
        %v7088 = vunpack.c.h.b16 %v6821
        %v7089 = vunpack.c.l.b16 %v6822
        %v7090 = vunpack.c.h.b16 %v6822
        %v7091 = vunpack.c.l.b16 %v6823
        %v7092 = vunpack.c.h.b16 %v6823
        %v7093 = vunpack.c.l.b16 %v6824
        %v7094 = vunpack.c.h.b16 %v6824
        %v7095 = vunpack.c.l.b16 %v6825
        %v7096 = vunpack.c.h.b16 %v6825
        %v7097 = vunpack.c.l.b16 %v6826
        %v7098 = vunpack.c.h.b16 %v6826
        %v7099 = vunpack.c.l.b16 %v6827
        %v7100 = vunpack.c.h.b16 %v6827
        %v7101 = vunpack.c.l.b16 %v6828
        %v7102 = vunpack.c.h.b16 %v6828
        %v7103 = vunpack.c.l.b16 %v6829
        %v7104 = vunpack.c.h.b16 %v6829
        %v7105 = vunpack.c.l.b16 %v6830
        %v7106 = vunpack.c.h.b16 %v6830
        %v7107 = vunpack.c.l.b16 %v6831
        %v7108 = vunpack.c.h.b16 %v6831
        %v7109 = vunpack.c.l.b16 %v6832
        %v7110 = vunpack.c.h.b16 %v6832
        %v7111 = vunpack.c.l.b16 %v6833
        %v7112 = vunpack.c.h.b16 %v6833
        %v7113 = vunpack.c.l.b16 %v6834
        %v7114 = vunpack.c.h.b16 %v6834
        %v7115 = vunpack.c.l.b16 %v6835
        %v7116 = vunpack.c.h.b16 %v6835
        %v7117 = vunpack.c.l.b16 %v6836
        %v7118 = vunpack.c.h.b16 %v6836
        %v7119 = vunpack.c.l.b16 %v6837
        %v7120 = vunpack.c.h.b16 %v6837
        %v7121 = vunpack.c.l.b16 %v6838
        %v7122 = vunpack.c.h.b16 %v6838
        %v7123 = vunpack.c.l.b16 %v6839
        %v7124 = vunpack.c.h.b16 %v6839
        %v7125 = vunpack.c.l.b16 %v6840
        %v7126 = vunpack.c.h.b16 %v6840
        %v7127 = vunpack.c.l.b16 %v6841
        %v7128 = vunpack.c.h.b16 %v6841
        %v7129 = vunpack.c.l.b16 %v6842
        %v7130 = vunpack.c.h.b16 %v6842
        %v7131 = vunpack.c.l.b16 %v6843
        %v7132 = vunpack.c.h.b16 %v6843
        %v7133 = vunpack.c.l.b16 %v6844
        %v7134 = vunpack.c.h.b16 %v6844
        %v7135 = vunpack.c.l.b16 %v6845
        %v7136 = vunpack.c.h.b16 %v6845
        %v7137 = vunpack.c.l.b16 %v6846
        %v7138 = vunpack.c.h.b16 %v6846
        %v7139 = vunpack.c.l.b16 %v6847
        %v7140 = vunpack.c.h.b16 %v6847
        %v7141 = vunpack.c.l.b16 %v6848
        %v7142 = vunpack.c.h.b16 %v6848
        %v7143 = vunpack.c.l.b16 %v6849
        %v7144 = vunpack.c.h.b16 %v6849
        %v7145 = vunpack.c.l.b16 %v6850
        %v7146 = vunpack.c.h.b16 %v6850
        %v7147 = vunpack.c.l.b16 %v6851
        %v7148 = vunpack.c.h.b16 %v6851
        %v7149 = vunpack.c.l.b16 %v6852
        %v7150 = vunpack.c.h.b16 %v6852
        %v7151 = vunpack.c.l.b16 %v6853
        %v7152 = vunpack.c.h.b16 %v6853
        %v7153 = vunpack.c.l.b16 %v6854
        %v7154 = vunpack.c.h.b16 %v6854
        %v7155 = vunpack.c.l.b16 %v6855
        %v7156 = vunpack.c.h.b16 %v6855
        %v7157 = vunpack.c.l.b16 %v6856
        %v7158 = vunpack.c.h.b16 %v6856
        %v7159 = vunpack.c.l.b16 %v6857
        %v7160 = vunpack.c.h.b16 %v6857
        %v7161 = vunpack.c.l.b16 %v6858
        %v7162 = vunpack.c.h.b16 %v6858
        %v7163 = vunpack.c.l.b16 %v6859
        %v7164 = vunpack.c.h.b16 %v6859
        %v7165 = vunpack.c.l.b16 %v6860
        %v7166 = vunpack.c.h.b16 %v6860
        %v7167 = vunpack.c.l.b16 %v6861
        %v7168 = vunpack.c.h.b16 %v6861
        %v7169 = vunpack.c.l.b16 %v6862
        %v7170 = vunpack.c.h.b16 %v6862
        %v7171 = vunpack.c.l.b16 %v6863
        %v7172 = vunpack.c.h.b16 %v6863
        %v7173 = vunpack.c.l.b16 %v6864
        %v7174 = vunpack.c.h.b16 %v6864
        %v7175 = vunpack.c.l.b16 %v6865
        %v7176 = vunpack.c.h.b16 %v6865
        %v7177 = vunpack.c.l.b16 %v6866
        %v7178 = vunpack.c.h.b16 %v6866
        %v7179 = vunpack.c.l.b16 %v6867
        %v7180 = vunpack.c.h.b16 %v6867
        %v7181 = vunpack.c.l.b16 %v6868
        %v7182 = vunpack.c.h.b16 %v6868
        %v7183 = vunpack.c.l.b16 %v6869
        %v7184 = vunpack.c.h.b16 %v6869
        %v7185 = vunpack.c.l.b16 %v6870
        %v7186 = vunpack.c.h.b16 %v6870
        %v7187 = vunpack.c.l.b16 %v6871
        %v7188 = vunpack.c.h.b16 %v6871
        %v7189 = vunpack.c.l.b16 %v6872
        %v7190 = vunpack.c.h.b16 %v6872
        %v7191 = vunpack.c.l.b16 %v6873
        %v7192 = vunpack.c.h.b16 %v6873
        %v7193 = vunpack.c.l.b16 %v6874
        %v7194 = vunpack.c.h.b16 %v6874
        %v7195 = vunpack.c.l.b16 %v6875
        %v7196 = vunpack.c.h.b16 %v6875
        %v7197 = vunpack.c.l.b16 %v6876
        %v7198 = vunpack.c.h.b16 %v6876
        %v7199 = vunpack.c.l.b16 %v6877
        %v7200 = vunpack.c.h.b16 %v6877
        %v7201 = vunpack.c.l.b16 %v6878
        %v7202 = vunpack.c.h.b16 %v6878
        %v7203 = vunpack.c.l.b16 %v6879
        %v7204 = vunpack.c.h.b16 %v6879
        %v7205 = vunpack.c.l.b16 %v6880
        %v7206 = vunpack.c.h.b16 %v6880
        %v7207 = vunpack.c.l.b16 %v6881
        %v7208 = vunpack.c.h.b16 %v6881
        %v7209 = vunpack.c.l.b16 %v6882
        %v7210 = vunpack.c.h.b16 %v6882
        %v7211 = vunpack.c.l.b16 %v6883
        %v7212 = vunpack.c.h.b16 %v6883
        %v7213 = vunpack.c.l.b16 %v6884
        %v7214 = vunpack.c.h.b16 %v6884
        %v7215 = vunpack.c.l.b16 %v6885
        %v7216 = vunpack.c.h.b16 %v6885
        %v7217 = vunpack.c.l.b16 %v6886
        %v7218 = vunpack.c.h.b16 %v6886
        %v7219 = vunpack.c.l.b16 %v6887
        %v7220 = vunpack.c.h.b16 %v6887
        %v7221 = vunpack.c.l.b16 %v6888
        %v7222 = vunpack.c.h.b16 %v6888
        %v7223 = vunpack.c.l.b16 %v6889
        %v7224 = vunpack.c.h.b16 %v6889
        %v7225 = vunpack.c.l.b16 %v6890
        %v7226 = vunpack.c.h.b16 %v6890
        %v7227 = vunpack.c.l.b16 %v6891
        %v7228 = vunpack.c.h.b16 %v6891
        %v7229 = vunpack.c.l.b16 %v6892
        %v7230 = vunpack.c.h.b16 %v6892
        %v7231 = vunpack.c.l.b16 %v6893
        %v7232 = vunpack.c.h.b16 %v6893
        %v7233 = vunpack.c.l.b16 %v6894
        %v7234 = vunpack.c.h.b16 %v6894
        %v7235 = vunpack.c.l.b16 %v6895
        %v7236 = vunpack.c.h.b16 %v6895
        %v7237 = vunpack.c.l.b16 %v6896
        %v7238 = vunpack.c.h.b16 %v6896
        %v7239 = vunpack.c.l.b16 %v6897
        %v7240 = vunpack.c.h.b16 %v6897
        %v7241 = vunpack.c.l.b16 %v6898
        %v7242 = vunpack.c.h.b16 %v6898
        %v7243 = vunpack.c.l.b16 %v6899
        %v7244 = vunpack.c.h.b16 %v6899
        %v7245 = vunpack.c.l.b16 %v6900
        %v7246 = vunpack.c.h.b16 %v6900
        %v7247 = vunpack.c.l.b16 %v6901
        %v7248 = vunpack.c.h.b16 %v6901
        %v7249 = vunpack.c.l.b16 %v6902
        %v7250 = vunpack.c.h.b16 %v6902
        %v7251 = vunpack.c.l.b16 %v6903
        %v7252 = vunpack.c.h.b16 %v6903
        %v7253 = vunpack.c.l.b16 %v6904
        %v7254 = vunpack.c.h.b16 %v6904
        %v7255 = vunpack.c.l.b16 %v6905
        %v7256 = vunpack.c.h.b16 %v6905
        %v7257 = vunpack.c.l.b16 %v6906
        %v7258 = vunpack.c.h.b16 %v6906
        %v7259 = vunpack.c.l.b16 %v6907
        %v7260 = vunpack.c.h.b16 %v6907
        %v7261 = vunpack.c.l.b16 %v6908
        %v7262 = vunpack.c.h.b16 %v6908
        %v7263 = vunpack.c.l.b16 %v6909
        %v7264 = vunpack.c.h.b16 %v6909
        %v7265 = vunpack.c.l.b16 %v6910
        %v7266 = vunpack.c.h.b16 %v6910
        %v7267 = vunpack.c.l.b16 %v6911
        %v7268 = vunpack.c.h.b16 %v6911
        %v7269 = vunpack.c.l.b16 %v6912
        %v7270 = vunpack.c.h.b16 %v6912
        %v7271 = vunpack.c.l.b16 %v6913
        %v7272 = vunpack.c.h.b16 %v6913
        %v7273 = vunpack.c.l.b16 %v6914
        %v7274 = vunpack.c.h.b16 %v6914
        %v7275 = vunpack.c.l.b16 %v6915
        %v7276 = vunpack.c.h.b16 %v6915
        %v7277 = vunpack.c.l.b16 %v6916
        %v7278 = vunpack.c.h.b16 %v6916
        %v7279 = vunpack.c.l.b16 %v6917
        %v7280 = vunpack.c.h.b16 %v6917
        %v7281 = vunpack.c.l.b16 %v6918
        %v7282 = vunpack.c.h.b16 %v6918
        %v7283 = vunpack.c.l.b16 %v6919
        %v7284 = vunpack.c.h.b16 %v6919
        %v7285 = vunpack.c.l.b16 %v6920
        %v7286 = vunpack.c.h.b16 %v6920
        %v7287 = vunpack.c.l.b16 %v6921
        %v7288 = vunpack.c.h.b16 %v6921
        %v7289 = vunpack.c.l.b16 %v6922
        %v7290 = vunpack.c.h.b16 %v6922
        %v7291 = vunpack.c.l.b16 %v6923
        %v7292 = vunpack.c.h.b16 %v6923
        %v7293 = vunpack.c.l.b16 %v6924
        %v7294 = vunpack.c.h.b16 %v6924
        %v7295 = vunpack.c.l.b16 %v6925
        %v7296 = vunpack.c.h.b16 %v6925
        %v7297 = vunpack.c.l.b16 %v6926
        %v7298 = vunpack.c.h.b16 %v6926
        %v7299 = vunpack.c.l.b16 %v6927
        %v7300 = vunpack.c.h.b16 %v6927
        %v7301 = vunpack.c.l.b16 %v6928
        %v7302 = vunpack.c.h.b16 %v6928
        %v7303 = vunpack.c.l.b16 %v6929
        %v7304 = vunpack.c.h.b16 %v6929
        %v7305 = vunpack.c.l.b16 %v6930
        %v7306 = vunpack.c.h.b16 %v6930
        %v7307 = vunpack.c.l.b16 %v6931
        %v7308 = vunpack.c.h.b16 %v6931
        %v7309 = vunpack.c.l.b16 %v6932
        %v7310 = vunpack.c.h.b16 %v6932
        %v7311 = vunpack.c.l.b16 %v6933
        %v7312 = vunpack.c.h.b16 %v6933
        %v7313 = vunpack.c.l.b16 %v6934
        %v7314 = vunpack.c.h.b16 %v6934
        %v7315 = vunpack.c.l.b16 %v6935
        %v7316 = vunpack.c.h.b16 %v6935
        %v7317 = vunpack.c.l.b16 %v6936
        %v7318 = vunpack.c.h.b16 %v6936
        %v7319 = vunpack.c.l.b16 %v6937
        %v7320 = vunpack.c.h.b16 %v6937
        %v7321 = vunpack.c.l.b16 %v6938
        %v7322 = vunpack.c.h.b16 %v6938
        %v7323 = vpack.c.b16 %v7075, %v7067
        %v7324 = vpack.c.b16 %v7076, %v7068
        %v7325 = vpack.c.b16 %v7077, %v7069
        %v7326 = vpack.c.b16 %v7078, %v7070
        %v7327 = vpack.c.b16 %v7079, %v7071
        %v7328 = vpack.c.b16 %v7080, %v7072
        %v7329 = vpack.c.b16 %v7081, %v7073
        %v7330 = vpack.c.b16 %v7082, %v7074
        %v7331 = vpack.c.b16 %v7091, %v7083
        %v7332 = vpack.c.b16 %v7092, %v7084
        %v7333 = vpack.c.b16 %v7093, %v7085
        %v7334 = vpack.c.b16 %v7094, %v7086
        %v7335 = vpack.c.b16 %v7095, %v7087
        %v7336 = vpack.c.b16 %v7096, %v7088
        %v7337 = vpack.c.b16 %v7097, %v7089
        %v7338 = vpack.c.b16 %v7098, %v7090
        %v7339 = vpack.c.b16 %v7107, %v7099
        %v7340 = vpack.c.b16 %v7108, %v7100
        %v7341 = vpack.c.b16 %v7109, %v7101
        %v7342 = vpack.c.b16 %v7110, %v7102
        %v7343 = vpack.c.b16 %v7111, %v7103
        %v7344 = vpack.c.b16 %v7112, %v7104
        %v7345 = vpack.c.b16 %v7113, %v7105
        %v7346 = vpack.c.b16 %v7114, %v7106
        %v7347 = vpack.c.b16 %v7123, %v7115
        %v7348 = vpack.c.b16 %v7124, %v7116
        %v7349 = vpack.c.b16 %v7125, %v7117
        %v7350 = vpack.c.b16 %v7126, %v7118
        %v7351 = vpack.c.b16 %v7127, %v7119
        %v7352 = vpack.c.b16 %v7128, %v7120
        %v7353 = vpack.c.b16 %v7129, %v7121
        %v7354 = vpack.c.b16 %v7130, %v7122
        %v7355 = vpack.c.b16 %v7139, %v7131
        %v7356 = vpack.c.b16 %v7140, %v7132
        %v7357 = vpack.c.b16 %v7141, %v7133
        %v7358 = vpack.c.b16 %v7142, %v7134
        %v7359 = vpack.c.b16 %v7143, %v7135
        %v7360 = vpack.c.b16 %v7144, %v7136
        %v7361 = vpack.c.b16 %v7145, %v7137
        %v7362 = vpack.c.b16 %v7146, %v7138
        %v7363 = vpack.c.b16 %v7155, %v7147
        %v7364 = vpack.c.b16 %v7156, %v7148
        %v7365 = vpack.c.b16 %v7157, %v7149
        %v7366 = vpack.c.b16 %v7158, %v7150
        %v7367 = vpack.c.b16 %v7159, %v7151
        %v7368 = vpack.c.b16 %v7160, %v7152
        %v7369 = vpack.c.b16 %v7161, %v7153
        %v7370 = vpack.c.b16 %v7162, %v7154
        %v7371 = vpack.c.b16 %v7171, %v7163
        %v7372 = vpack.c.b16 %v7172, %v7164
        %v7373 = vpack.c.b16 %v7173, %v7165
        %v7374 = vpack.c.b16 %v7174, %v7166
        %v7375 = vpack.c.b16 %v7175, %v7167
        %v7376 = vpack.c.b16 %v7176, %v7168
        %v7377 = vpack.c.b16 %v7177, %v7169
        %v7378 = vpack.c.b16 %v7178, %v7170
        %v7379 = vpack.c.b16 %v7187, %v7179
        %v7380 = vpack.c.b16 %v7188, %v7180
        %v7381 = vpack.c.b16 %v7189, %v7181
        %v7382 = vpack.c.b16 %v7190, %v7182
        %v7383 = vpack.c.b16 %v7191, %v7183
        %v7384 = vpack.c.b16 %v7192, %v7184
        %v7385 = vpack.c.b16 %v7193, %v7185
        %v7386 = vpack.c.b16 %v7194, %v7186
        %v7387 = vpack.c.b16 %v7203, %v7195
        %v7388 = vpack.c.b16 %v7204, %v7196
        %v7389 = vpack.c.b16 %v7205, %v7197
        %v7390 = vpack.c.b16 %v7206, %v7198
        %v7391 = vpack.c.b16 %v7207, %v7199
        %v7392 = vpack.c.b16 %v7208, %v7200
        %v7393 = vpack.c.b16 %v7209, %v7201
        %v7394 = vpack.c.b16 %v7210, %v7202
        %v7395 = vpack.c.b16 %v7219, %v7211
        %v7396 = vpack.c.b16 %v7220, %v7212
        %v7397 = vpack.c.b16 %v7221, %v7213
        %v7398 = vpack.c.b16 %v7222, %v7214
        %v7399 = vpack.c.b16 %v7223, %v7215
        %v7400 = vpack.c.b16 %v7224, %v7216
        %v7401 = vpack.c.b16 %v7225, %v7217
        %v7402 = vpack.c.b16 %v7226, %v7218
        %v7403 = vpack.c.b16 %v7235, %v7227
        %v7404 = vpack.c.b16 %v7236, %v7228
        %v7405 = vpack.c.b16 %v7237, %v7229
        %v7406 = vpack.c.b16 %v7238, %v7230
        %v7407 = vpack.c.b16 %v7239, %v7231
        %v7408 = vpack.c.b16 %v7240, %v7232
        %v7409 = vpack.c.b16 %v7241, %v7233
        %v7410 = vpack.c.b16 %v7242, %v7234
        %v7411 = vpack.c.b16 %v7251, %v7243
        %v7412 = vpack.c.b16 %v7252, %v7244
        %v7413 = vpack.c.b16 %v7253, %v7245
        %v7414 = vpack.c.b16 %v7254, %v7246
        %v7415 = vpack.c.b16 %v7255, %v7247
        %v7416 = vpack.c.b16 %v7256, %v7248
        %v7417 = vpack.c.b16 %v7257, %v7249
        %v7418 = vpack.c.b16 %v7258, %v7250
        %v7419 = vpack.c.b16 %v7267, %v7259
        %v7420 = vpack.c.b16 %v7268, %v7260
        %v7421 = vpack.c.b16 %v7269, %v7261
        %v7422 = vpack.c.b16 %v7270, %v7262
        %v7423 = vpack.c.b16 %v7271, %v7263
        %v7424 = vpack.c.b16 %v7272, %v7264
        %v7425 = vpack.c.b16 %v7273, %v7265
        %v7426 = vpack.c.b16 %v7274, %v7266
        %v7427 = vpack.c.b16 %v7283, %v7275
        %v7428 = vpack.c.b16 %v7284, %v7276
        %v7429 = vpack.c.b16 %v7285, %v7277
        %v7430 = vpack.c.b16 %v7286, %v7278
        %v7431 = vpack.c.b16 %v7287, %v7279
        %v7432 = vpack.c.b16 %v7288, %v7280
        %v7433 = vpack.c.b16 %v7289, %v7281
        %v7434 = vpack.c.b16 %v7290, %v7282
        %v7435 = vpack.c.b16 %v7299, %v7291
        %v7436 = vpack.c.b16 %v7300, %v7292
        %v7437 = vpack.c.b16 %v7301, %v7293
        %v7438 = vpack.c.b16 %v7302, %v7294
        %v7439 = vpack.c.b16 %v7303, %v7295
        %v7440 = vpack.c.b16 %v7304, %v7296
        %v7441 = vpack.c.b16 %v7305, %v7297
        %v7442 = vpack.c.b16 %v7306, %v7298
        %v7443 = vpack.c.b16 %v7315, %v7307
        %v7444 = vpack.c.b16 %v7316, %v7308
        %v7445 = vpack.c.b16 %v7317, %v7309
        %v7446 = vpack.c.b16 %v7318, %v7310
        %v7447 = vpack.c.b16 %v7319, %v7311
        %v7448 = vpack.c.b16 %v7320, %v7312
        %v7449 = vpack.c.b16 %v7321, %v7313
        %v7450 = vpack.c.b16 %v7322, %v7314
        %7579 = vmatprep.subr.bf16.mxu0 %v7380
        %7580 = vmatpush1.bf16.msra.mxu0 %v7379
        %7581 = vmatprep.subr.bf16.mxu0 %v7372
        %7582 = vmatpush1.bf16.msra.mxu0 %v7371
        %7583 = vmatprep.subr.bf16.mxu0 %v7364
        %7584 = vmatpush1.bf16.msra.mxu0 %v7363
        %7585 = vmatprep.subr.bf16.mxu0 %v7356
        %7586 = vmatpush1.bf16.msra.mxu0 %v7355
        %7587 = vmatprep.subr.bf16.mxu0 %v7348
        %7588 = vmatpush1.bf16.msra.mxu0 %v7347
        %7589 = vmatprep.subr.bf16.mxu0 %v7340
        %7590 = vmatpush1.bf16.msra.mxu0 %v7339
        %7591 = vmatprep.subr.bf16.mxu0 %v7332
        %7592 = vmatpush1.bf16.msra.mxu0 %v7331
        %7593 = vmatprep.subr.bf16.mxu0 %v7324
        %7594 = vmatpush1.bf16.msra.mxu0 %v7323
        %7595 = vmatprep.subr.bf16.mxu0 %v7444
        %7596 = vmatpush2.bf16.msra.mxu0 %v7443
        %7597 = vmatprep.subr.bf16.mxu0 %v7436
        %7598 = vmatpush2.bf16.msra.mxu0 %v7435
        %7599 = vmatprep.subr.bf16.mxu0 %v7428
        %7600 = vmatpush2.bf16.msra.mxu0 %v7427
        %7601 = vmatprep.subr.bf16.mxu0 %v7420
        %7602 = vmatpush2.bf16.msra.mxu0 %v7419
        %7603 = vmatprep.subr.bf16.mxu0 %v7412
        %7604 = vmatpush2.bf16.msra.mxu0 %v7411
        %7605 = vmatprep.subr.bf16.mxu0 %v7404
        %7606 = vmatpush2.bf16.msra.mxu0 %v7403
        %7607 = vmatprep.subr.bf16.mxu0 %v7396
        %7608 = vmatpush2.bf16.msra.mxu0 %v7395
        %7609 = vmatprep.subr.bf16.mxu0 %v7388
        %7610 = vmatpush2.bf16.msra.mxu0 %v7387
        %7611 = vmatprep.mubr.bf16.mxu0 %v6810
        %7612 = vmatmul.mubr.bf16.gmra.mxu0 %v6809
        %v7613 = vpop.f32.mrf.mxu0
        %v7614 = vadd.f32 0.0, %v7613
        %v7615 = vpop.f32.mrf.mxu0
        %v7616 = vadd.f32 0.0, %v7615
        %v7617 = vpop.f32.mrf.mxu0
        %v7618 = vpop.f32.mrf.mxu0
        %7619 = vdwg.mxu0
        %7620 = vmatprep.subr.bf16.mxu0 %v7382
        %7621 = vmatpush1.bf16.msra.mxu0 %v7381
        %7622 = vmatprep.subr.bf16.mxu0 %v7374
        %7623 = vmatpush1.bf16.msra.mxu0 %v7373
        %7624 = vmatprep.subr.bf16.mxu0 %v7366
        %7625 = vmatpush1.bf16.msra.mxu0 %v7365
        %7626 = vmatprep.subr.bf16.mxu0 %v7358
        %7627 = vmatpush1.bf16.msra.mxu0 %v7357
        %7628 = vmatprep.subr.bf16.mxu0 %v7350
        %7629 = vmatpush1.bf16.msra.mxu0 %v7349
        %7630 = vmatprep.subr.bf16.mxu0 %v7342
        %7631 = vmatpush1.bf16.msra.mxu0 %v7341
        %7632 = vmatprep.subr.bf16.mxu0 %v7334
        %7633 = vmatpush1.bf16.msra.mxu0 %v7333
        %7634 = vmatprep.subr.bf16.mxu0 %v7326
        %7635 = vmatpush1.bf16.msra.mxu0 %v7325
        %7636 = vmatprep.subr.bf16.mxu0 %v7446
        %7637 = vmatpush2.bf16.msra.mxu0 %v7445
        %7638 = vmatprep.subr.bf16.mxu0 %v7438
        %7639 = vmatpush2.bf16.msra.mxu0 %v7437
        %7640 = vmatprep.subr.bf16.mxu0 %v7430
        %7641 = vmatpush2.bf16.msra.mxu0 %v7429
        %7642 = vmatprep.subr.bf16.mxu0 %v7422
        %7643 = vmatpush2.bf16.msra.mxu0 %v7421
        %7644 = vmatprep.subr.bf16.mxu0 %v7414
        %7645 = vmatpush2.bf16.msra.mxu0 %v7413
        %7646 = vmatprep.subr.bf16.mxu0 %v7406
        %7647 = vmatpush2.bf16.msra.mxu0 %v7405
        %7648 = vmatprep.subr.bf16.mxu0 %v7398
        %7649 = vmatpush2.bf16.msra.mxu0 %v7397
        %7650 = vmatprep.subr.bf16.mxu0 %v7390
        %7651 = vmatpush2.bf16.msra.mxu0 %v7389
        %7652 = vmatprep.mubr.bf16.mxu0 %v6810
        %7653 = vmatmul.mubr.bf16.gmra.mxu0 %v6809
        %v7654 = vpop.f32.mrf.mxu0
        %v7655 = vadd.f32 0.0, %v7654
        %v7656 = vpop.f32.mrf.mxu0
        %v7657 = vadd.f32 0.0, %v7656
        %v7658 = vpop.f32.mrf.mxu0
        %v7659 = vpop.f32.mrf.mxu0
        %7660 = vdwg.mxu0
        %7661 = vmatprep.subr.bf16.mxu0 %v7384
        %7662 = vmatpush1.bf16.msra.mxu0 %v7383
        %7663 = vmatprep.subr.bf16.mxu0 %v7376
        %7664 = vmatpush1.bf16.msra.mxu0 %v7375
        %7665 = vmatprep.subr.bf16.mxu0 %v7368
        %7666 = vmatpush1.bf16.msra.mxu0 %v7367
        %7667 = vmatprep.subr.bf16.mxu0 %v7360
        %7668 = vmatpush1.bf16.msra.mxu0 %v7359
        %7669 = vmatprep.subr.bf16.mxu0 %v7352
        %7670 = vmatpush1.bf16.msra.mxu0 %v7351
        %7671 = vmatprep.subr.bf16.mxu0 %v7344
        %7672 = vmatpush1.bf16.msra.mxu0 %v7343
        %7673 = vmatprep.subr.bf16.mxu0 %v7336
        %7674 = vmatpush1.bf16.msra.mxu0 %v7335
        %7675 = vmatprep.subr.bf16.mxu0 %v7328
        %7676 = vmatpush1.bf16.msra.mxu0 %v7327
        %7677 = vmatprep.subr.bf16.mxu0 %v7448
        %7678 = vmatpush2.bf16.msra.mxu0 %v7447
        %7679 = vmatprep.subr.bf16.mxu0 %v7440
        %7680 = vmatpush2.bf16.msra.mxu0 %v7439
        %7681 = vmatprep.subr.bf16.mxu0 %v7432
        %7682 = vmatpush2.bf16.msra.mxu0 %v7431
        %7683 = vmatprep.subr.bf16.mxu0 %v7424
        %7684 = vmatpush2.bf16.msra.mxu0 %v7423
        %7685 = vmatprep.subr.bf16.mxu0 %v7416
        %7686 = vmatpush2.bf16.msra.mxu0 %v7415
        %7687 = vmatprep.subr.bf16.mxu0 %v7408
        %7688 = vmatpush2.bf16.msra.mxu0 %v7407
        %7689 = vmatprep.subr.bf16.mxu0 %v7400
        %7690 = vmatpush2.bf16.msra.mxu0 %v7399
        %7691 = vmatprep.subr.bf16.mxu0 %v7392
        %7692 = vmatpush2.bf16.msra.mxu0 %v7391
        %7693 = vmatprep.mubr.bf16.mxu0 %v6810
        %7694 = vmatmul.mubr.bf16.gmra.mxu0 %v6809
        %v7695 = vpop.f32.mrf.mxu0
        %v7696 = vadd.f32 0.0, %v7695
        %v7697 = vpop.f32.mrf.mxu0
        %v7698 = vadd.f32 0.0, %v7697
        %v7699 = vpop.f32.mrf.mxu0
        %v7700 = vpop.f32.mrf.mxu0
        %7701 = vdwg.mxu0
        %7702 = vmatprep.subr.bf16.mxu0 %v7386
        %7703 = vmatpush1.bf16.msra.mxu0 %v7385
        %7704 = vmatprep.subr.bf16.mxu0 %v7378
        %7705 = vmatpush1.bf16.msra.mxu0 %v7377
        %7706 = vmatprep.subr.bf16.mxu0 %v7370
        %7707 = vmatpush1.bf16.msra.mxu0 %v7369
        %7708 = vmatprep.subr.bf16.mxu0 %v7362
        %7709 = vmatpush1.bf16.msra.mxu0 %v7361
        %7710 = vmatprep.subr.bf16.mxu0 %v7354
        %7711 = vmatpush1.bf16.msra.mxu0 %v7353
        %7712 = vmatprep.subr.bf16.mxu0 %v7346
        %7713 = vmatpush1.bf16.msra.mxu0 %v7345
        %7714 = vmatprep.subr.bf16.mxu0 %v7338
        %7715 = vmatpush1.bf16.msra.mxu0 %v7337
        %7716 = vmatprep.subr.bf16.mxu0 %v7330
        %7717 = vmatpush1.bf16.msra.mxu0 %v7329
        %7718 = vmatprep.subr.bf16.mxu0 %v7450
        %7719 = vmatpush2.bf16.msra.mxu0 %v7449
        %7720 = vmatprep.subr.bf16.mxu0 %v7442
        %7721 = vmatpush2.bf16.msra.mxu0 %v7441
        %7722 = vmatprep.subr.bf16.mxu0 %v7434
        %7723 = vmatpush2.bf16.msra.mxu0 %v7433
        %7724 = vmatprep.subr.bf16.mxu0 %v7426
        %7725 = vmatpush2.bf16.msra.mxu0 %v7425
        %7726 = vmatprep.subr.bf16.mxu0 %v7418
        %7727 = vmatpush2.bf16.msra.mxu0 %v7417
        %7728 = vmatprep.subr.bf16.mxu0 %v7410
        %7729 = vmatpush2.bf16.msra.mxu0 %v7409
        %7730 = vmatprep.subr.bf16.mxu0 %v7402
        %7731 = vmatpush2.bf16.msra.mxu0 %v7401
        %7732 = vmatprep.subr.bf16.mxu0 %v7394
        %7733 = vmatpush2.bf16.msra.mxu0 %v7393
        %7734 = vmatprep.mubr.bf16.mxu0 %v6810
        %7735 = vmatmul.mubr.bf16.gmra.mxu0 %v6809
        %v7736 = vpop.f32.mrf.mxu0
        %v7737 = vadd.f32 0.0, %v7736
        %v7738 = vpop.f32.mrf.mxu0
        %v7739 = vadd.f32 0.0, %v7738
        %v7740 = vpop.f32.mrf.mxu0
        %v7741 = vpop.f32.mrf.mxu0
        %7742 = vdwg.mxu0
        %v7751 = vcombine.low %v7614, %v7616
        %v7752 = vcombine.low %v7655, %v7657
        %v7753 = vcombine.low %v7696, %v7698
        %v7754 = vcombine.low %v7737, %v7739
        %v7756 = vunpack.c.l.s4 1966171168
        %v7757 = vunpack.c.0.s8 %v7756
        %v7758 = vlaneseq
        %v7759 = vshrl.u32 %v7758, 7
        %v7760 = vsub.s32 %v7757, %v7759
        %v7761 = vrot.slane %v7751, %v7760
        %v7763 = vunpack.c.l.s4 1966171168
        %v7764 = vunpack.c.0.s8 %v7763
        %v7765 = vlaneseq
        %v7766 = vshrl.u32 %v7765, 7
        %v7767 = vsub.s32 %v7764, %v7766
        %v7768 = vrot.slane %v7752, %v7767
        %v7770 = vunpack.c.l.s4 1966171168
        %v7771 = vunpack.c.0.s8 %v7770
        %v7772 = vlaneseq
        %v7773 = vshrl.u32 %v7772, 7
        %v7774 = vsub.s32 %v7771, %v7773
        %v7775 = vrot.slane %v7753, %v7774
        %v7777 = vunpack.c.l.s4 1966171168
        %v7778 = vunpack.c.0.s8 %v7777
        %v7779 = vlaneseq
        %v7780 = vshrl.u32 %v7779, 7
        %v7781 = vsub.s32 %v7778, %v7780
        %v7782 = vrot.slane %v7754, %v7781
        %v7783 = vcombine.low %v7761, %v7768
        %v7784 = vcombine.low %v7775, %v7782
        %v7786 = vunpack.c.l.s4 1966171168
        %v7787 = vunpack.c.0.s8 %v7786
        %v7788 = vlaneseq
        %v7789 = vshrl.u32 %v7788, 7
        %v7790 = vsub.s32 %v7787, %v7789
        %v7791 = vrot.slane %v7783, %v7790
        %v7793 = vunpack.c.l.s4 1966171168
        %v7794 = vunpack.c.0.s8 %v7793
        %v7795 = vlaneseq
        %v7796 = vshrl.u32 %v7795, 7
        %v7797 = vsub.s32 %v7794, %v7796
        %v7798 = vrot.slane %v7784, %v7797
        %v7799 = vcombine.low %v7791, %v7798
        %v7801 = vadd.f32 %v6797, %v7799
        %v7802 = vxor.u32 %v7801, 2147483648
        %v7803 = vmul.f32 %v7802, 1.442695
        %v7804 = vpow.pop %v7803
        %v7805 = vadd.f32 %v7804, 1.0
        %v7806 = vrcp.pop %v7805
        %v7807 = vmul.f32 1.0, %v7806
        %v7809 = vrot.slane %v7801, 6
        %v7811 = vtanh.pop %v7809
        %v7813 = vrot.slane %v7807, 2
        %v7815 = vmul.f32 %v7813, %v6786
        %v7816 = vmul.f32 %v7807, %v7811
        %v7817 = vadd.f32 %v7815, %v7816
        %v7818 = vtanh.pop %v7817
        %v7819 = vrot.slane %v7807, 4
        %v7821 = vmul.f32 %v7819, %v7818
        %s7822 = scalar_lea.vmem [#allocation3], 5
        %7823 = vst.msk [vmem:[%s7822] ss:$8 sm:$0x3] %vm2667, %v7821
        %7824 = vst.msk [vmem:[%s7822] ss:$8 sm:$0x0] %vm2667, %v7821
        %s7825 = scalar_lea.vmem [#allocation2], 6
        %v7826 = vld [vmem:[%s7825] ss:$8 sm:$0xf]
        %v7827 = vld [vmem:[%s7825] ss:$8 sm:$0xf0]
        %v7828 = vor.u32 %v7826, %v7827
        %v7830 = vlaneseq
        %v7831 = vshrl.u32 %v7830, 7
        %v7832 = vsub.s32 0, %v7831
        %v7833 = vrot.slane %v7821, %v7832
        %v7834 = vlaneseq
        %v7835 = vshrl.u32 %v7834, 7
        %v7836 = vsub.s32 1, %v7835
        %v7837 = vrot.slane %v7821, %v7836
        %v7840 = vpack.c.bf16 %v7833, %v7833
        %v7841 = vpack.c.bf16 %v7837, %v7837
        %v7842 = vld [vmem:[%s562] sm:$0xff]
        %v7843 = vld [vmem:[%s562 + $0x8] sm:$0xff]
        %v7844 = vld [vmem:[%s562 + $0x10] sm:$0xff]
        %v7845 = vld [vmem:[%s562 + $0x18] sm:$0xff]
        %v7846 = vld [vmem:[%s562 + $0x20] sm:$0xff]
        %v7847 = vld [vmem:[%s562 + $0x28] sm:$0xff]
        %v7848 = vld [vmem:[%s562 + $0x30] sm:$0xff]
        %v7849 = vld [vmem:[%s562 + $0x38] sm:$0xff]
        %v7850 = vld [vmem:[%s562 + $0x40] sm:$0xff]
        %v7851 = vld [vmem:[%s562 + $0x48] sm:$0xff]
        %v7852 = vld [vmem:[%s562 + $0x50] sm:$0xff]
        %v7853 = vld [vmem:[%s562 + $0x58] sm:$0xff]
        %v7854 = vld [vmem:[%s562 + $0x60] sm:$0xff]
        %v7855 = vld [vmem:[%s562 + $0x68] sm:$0xff]
        %v7856 = vld [vmem:[%s562 + $0x70] sm:$0xff]
        %v7857 = vld [vmem:[%s562 + $0x78] sm:$0xff]
        %v7858 = vld [vmem:[%s562 + $0x80] sm:$0xff]
        %v7859 = vld [vmem:[%s562 + $0x88] sm:$0xff]
        %v7860 = vld [vmem:[%s562 + $0x90] sm:$0xff]
        %v7861 = vld [vmem:[%s562 + $0x98] sm:$0xff]
        %v7862 = vld [vmem:[%s562 + $0xa0] sm:$0xff]
        %v7863 = vld [vmem:[%s562 + $0xa8] sm:$0xff]
        %v7864 = vld [vmem:[%s562 + $0xb0] sm:$0xff]
        %v7865 = vld [vmem:[%s562 + $0xb8] sm:$0xff]
        %v7866 = vld [vmem:[%s562 + $0xc0] sm:$0xff]
        %v7867 = vld [vmem:[%s562 + $0xc8] sm:$0xff]
        %v7868 = vld [vmem:[%s562 + $0xd0] sm:$0xff]
        %v7869 = vld [vmem:[%s562 + $0xd8] sm:$0xff]
        %v7870 = vld [vmem:[%s562 + $0xe0] sm:$0xff]
        %v7871 = vld [vmem:[%s562 + $0xe8] sm:$0xff]
        %v7872 = vld [vmem:[%s562 + $0xf0] sm:$0xff]
        %v7873 = vld [vmem:[%s562 + $0xf8] sm:$0xff]
        %v7874 = vld [vmem:[%s562 + $0x100] sm:$0xff]
        %v7875 = vld [vmem:[%s562 + $0x108] sm:$0xff]
        %v7876 = vld [vmem:[%s562 + $0x110] sm:$0xff]
        %v7877 = vld [vmem:[%s562 + $0x118] sm:$0xff]
        %v7878 = vld [vmem:[%s562 + $0x120] sm:$0xff]
        %v7879 = vld [vmem:[%s562 + $0x128] sm:$0xff]
        %v7880 = vld [vmem:[%s562 + $0x130] sm:$0xff]
        %v7881 = vld [vmem:[%s562 + $0x138] sm:$0xff]
        %v7882 = vld [vmem:[%s562 + $0x140] sm:$0xff]
        %v7883 = vld [vmem:[%s562 + $0x148] sm:$0xff]
        %v7884 = vld [vmem:[%s562 + $0x150] sm:$0xff]
        %v7885 = vld [vmem:[%s562 + $0x158] sm:$0xff]
        %v7886 = vld [vmem:[%s562 + $0x160] sm:$0xff]
        %v7887 = vld [vmem:[%s562 + $0x168] sm:$0xff]
        %v7888 = vld [vmem:[%s562 + $0x170] sm:$0xff]
        %v7889 = vld [vmem:[%s562 + $0x178] sm:$0xff]
        %v7890 = vld [vmem:[%s562 + $0x180] sm:$0xff]
        %v7891 = vld [vmem:[%s562 + $0x188] sm:$0xff]
        %v7892 = vld [vmem:[%s562 + $0x190] sm:$0xff]
        %v7893 = vld [vmem:[%s562 + $0x198] sm:$0xff]
        %v7894 = vld [vmem:[%s562 + $0x1a0] sm:$0xff]
        %v7895 = vld [vmem:[%s562 + $0x1a8] sm:$0xff]
        %v7896 = vld [vmem:[%s562 + $0x1b0] sm:$0xff]
        %v7897 = vld [vmem:[%s562 + $0x1b8] sm:$0xff]
        %v7898 = vld [vmem:[%s562 + $0x1c0] sm:$0xff]
        %v7899 = vld [vmem:[%s562 + $0x1c8] sm:$0xff]
        %v7900 = vld [vmem:[%s562 + $0x1d0] sm:$0xff]
        %v7901 = vld [vmem:[%s562 + $0x1d8] sm:$0xff]
        %v7902 = vld [vmem:[%s562 + $0x1e0] sm:$0xff]
        %v7903 = vld [vmem:[%s562 + $0x1e8] sm:$0xff]
        %v7904 = vld [vmem:[%s562 + $0x1f0] sm:$0xff]
        %v7905 = vld [vmem:[%s562 + $0x1f8] sm:$0xff]
        %v7906 = vld [vmem:[%s562 + $0x200] sm:$0xff]
        %v7907 = vld [vmem:[%s562 + $0x208] sm:$0xff]
        %v7908 = vld [vmem:[%s562 + $0x210] sm:$0xff]
        %v7909 = vld [vmem:[%s562 + $0x218] sm:$0xff]
        %v7910 = vld [vmem:[%s562 + $0x220] sm:$0xff]
        %v7911 = vld [vmem:[%s562 + $0x228] sm:$0xff]
        %v7912 = vld [vmem:[%s562 + $0x230] sm:$0xff]
        %v7913 = vld [vmem:[%s562 + $0x238] sm:$0xff]
        %v7914 = vld [vmem:[%s562 + $0x240] sm:$0xff]
        %v7915 = vld [vmem:[%s562 + $0x248] sm:$0xff]
        %v7916 = vld [vmem:[%s562 + $0x250] sm:$0xff]
        %v7917 = vld [vmem:[%s562 + $0x258] sm:$0xff]
        %v7918 = vld [vmem:[%s562 + $0x260] sm:$0xff]
        %v7919 = vld [vmem:[%s562 + $0x268] sm:$0xff]
        %v7920 = vld [vmem:[%s562 + $0x270] sm:$0xff]
        %v7921 = vld [vmem:[%s562 + $0x278] sm:$0xff]
        %v7922 = vld [vmem:[%s562 + $0x280] sm:$0xff]
        %v7923 = vld [vmem:[%s562 + $0x288] sm:$0xff]
        %v7924 = vld [vmem:[%s562 + $0x290] sm:$0xff]
        %v7925 = vld [vmem:[%s562 + $0x298] sm:$0xff]
        %v7926 = vld [vmem:[%s562 + $0x2a0] sm:$0xff]
        %v7927 = vld [vmem:[%s562 + $0x2a8] sm:$0xff]
        %v7928 = vld [vmem:[%s562 + $0x2b0] sm:$0xff]
        %v7929 = vld [vmem:[%s562 + $0x2b8] sm:$0xff]
        %v7930 = vld [vmem:[%s562 + $0x2c0] sm:$0xff]
        %v7931 = vld [vmem:[%s562 + $0x2c8] sm:$0xff]
        %v7932 = vld [vmem:[%s562 + $0x2d0] sm:$0xff]
        %v7933 = vld [vmem:[%s562 + $0x2d8] sm:$0xff]
        %v7934 = vld [vmem:[%s562 + $0x2e0] sm:$0xff]
        %v7935 = vld [vmem:[%s562 + $0x2e8] sm:$0xff]
        %v7936 = vld [vmem:[%s562 + $0x2f0] sm:$0xff]
        %v7937 = vld [vmem:[%s562 + $0x2f8] sm:$0xff]
        %v7938 = vld [vmem:[%s562 + $0x300] sm:$0xff]
        %v7939 = vld [vmem:[%s562 + $0x308] sm:$0xff]
        %v7940 = vld [vmem:[%s562 + $0x310] sm:$0xff]
        %v7941 = vld [vmem:[%s562 + $0x318] sm:$0xff]
        %v7942 = vld [vmem:[%s562 + $0x320] sm:$0xff]
        %v7943 = vld [vmem:[%s562 + $0x328] sm:$0xff]
        %v7944 = vld [vmem:[%s562 + $0x330] sm:$0xff]
        %v7945 = vld [vmem:[%s562 + $0x338] sm:$0xff]
        %v7946 = vld [vmem:[%s562 + $0x340] sm:$0xff]
        %v7947 = vld [vmem:[%s562 + $0x348] sm:$0xff]
        %v7948 = vld [vmem:[%s562 + $0x350] sm:$0xff]
        %v7949 = vld [vmem:[%s562 + $0x358] sm:$0xff]
        %v7950 = vld [vmem:[%s562 + $0x360] sm:$0xff]
        %v7951 = vld [vmem:[%s562 + $0x368] sm:$0xff]
        %v7952 = vld [vmem:[%s562 + $0x370] sm:$0xff]
        %v7953 = vld [vmem:[%s562 + $0x378] sm:$0xff]
        %v7954 = vld [vmem:[%s562 + $0x380] sm:$0xff]
        %v7955 = vld [vmem:[%s562 + $0x388] sm:$0xff]
        %v7956 = vld [vmem:[%s562 + $0x390] sm:$0xff]
        %v7957 = vld [vmem:[%s562 + $0x398] sm:$0xff]
        %v7958 = vld [vmem:[%s562 + $0x3a0] sm:$0xff]
        %v7959 = vld [vmem:[%s562 + $0x3a8] sm:$0xff]
        %v7960 = vld [vmem:[%s562 + $0x3b0] sm:$0xff]
        %v7961 = vld [vmem:[%s562 + $0x3b8] sm:$0xff]
        %v7962 = vld [vmem:[%s562 + $0x3c0] sm:$0xff]
        %v7963 = vld [vmem:[%s562 + $0x3c8] sm:$0xff]
        %v7964 = vld [vmem:[%s562 + $0x3d0] sm:$0xff]
        %v7965 = vld [vmem:[%s562 + $0x3d8] sm:$0xff]
        %v7966 = vld [vmem:[%s562 + $0x3e0] sm:$0xff]
        %v7967 = vld [vmem:[%s562 + $0x3e8] sm:$0xff]
        %v7968 = vld [vmem:[%s562 + $0x3f0] sm:$0xff]
        %v7969 = vld [vmem:[%s562 + $0x3f8] sm:$0xff]
        %v8098 = vunpack.c.l.b16 %v7842
        %v8099 = vunpack.c.h.b16 %v7842
        %v8100 = vunpack.c.l.b16 %v7843
        %v8101 = vunpack.c.h.b16 %v7843
        %v8102 = vunpack.c.l.b16 %v7844
        %v8103 = vunpack.c.h.b16 %v7844
        %v8104 = vunpack.c.l.b16 %v7845
        %v8105 = vunpack.c.h.b16 %v7845
        %v8106 = vunpack.c.l.b16 %v7846
        %v8107 = vunpack.c.h.b16 %v7846
        %v8108 = vunpack.c.l.b16 %v7847
        %v8109 = vunpack.c.h.b16 %v7847
        %v8110 = vunpack.c.l.b16 %v7848
        %v8111 = vunpack.c.h.b16 %v7848
        %v8112 = vunpack.c.l.b16 %v7849
        %v8113 = vunpack.c.h.b16 %v7849
        %v8114 = vunpack.c.l.b16 %v7850
        %v8115 = vunpack.c.h.b16 %v7850
        %v8116 = vunpack.c.l.b16 %v7851
        %v8117 = vunpack.c.h.b16 %v7851
        %v8118 = vunpack.c.l.b16 %v7852
        %v8119 = vunpack.c.h.b16 %v7852
        %v8120 = vunpack.c.l.b16 %v7853
        %v8121 = vunpack.c.h.b16 %v7853
        %v8122 = vunpack.c.l.b16 %v7854
        %v8123 = vunpack.c.h.b16 %v7854
        %v8124 = vunpack.c.l.b16 %v7855
        %v8125 = vunpack.c.h.b16 %v7855
        %v8126 = vunpack.c.l.b16 %v7856
        %v8127 = vunpack.c.h.b16 %v7856
        %v8128 = vunpack.c.l.b16 %v7857
        %v8129 = vunpack.c.h.b16 %v7857
        %v8130 = vunpack.c.l.b16 %v7858
        %v8131 = vunpack.c.h.b16 %v7858
        %v8132 = vunpack.c.l.b16 %v7859
        %v8133 = vunpack.c.h.b16 %v7859
        %v8134 = vunpack.c.l.b16 %v7860
        %v8135 = vunpack.c.h.b16 %v7860
        %v8136 = vunpack.c.l.b16 %v7861
        %v8137 = vunpack.c.h.b16 %v7861
        %v8138 = vunpack.c.l.b16 %v7862
        %v8139 = vunpack.c.h.b16 %v7862
        %v8140 = vunpack.c.l.b16 %v7863
        %v8141 = vunpack.c.h.b16 %v7863
        %v8142 = vunpack.c.l.b16 %v7864
        %v8143 = vunpack.c.h.b16 %v7864
        %v8144 = vunpack.c.l.b16 %v7865
        %v8145 = vunpack.c.h.b16 %v7865
        %v8146 = vunpack.c.l.b16 %v7866
        %v8147 = vunpack.c.h.b16 %v7866
        %v8148 = vunpack.c.l.b16 %v7867
        %v8149 = vunpack.c.h.b16 %v7867
        %v8150 = vunpack.c.l.b16 %v7868
        %v8151 = vunpack.c.h.b16 %v7868
        %v8152 = vunpack.c.l.b16 %v7869
        %v8153 = vunpack.c.h.b16 %v7869
        %v8154 = vunpack.c.l.b16 %v7870
        %v8155 = vunpack.c.h.b16 %v7870
        %v8156 = vunpack.c.l.b16 %v7871
        %v8157 = vunpack.c.h.b16 %v7871
        %v8158 = vunpack.c.l.b16 %v7872
        %v8159 = vunpack.c.h.b16 %v7872
        %v8160 = vunpack.c.l.b16 %v7873
        %v8161 = vunpack.c.h.b16 %v7873
        %v8162 = vunpack.c.l.b16 %v7874
        %v8163 = vunpack.c.h.b16 %v7874
        %v8164 = vunpack.c.l.b16 %v7875
        %v8165 = vunpack.c.h.b16 %v7875
        %v8166 = vunpack.c.l.b16 %v7876
        %v8167 = vunpack.c.h.b16 %v7876
        %v8168 = vunpack.c.l.b16 %v7877
        %v8169 = vunpack.c.h.b16 %v7877
        %v8170 = vunpack.c.l.b16 %v7878
        %v8171 = vunpack.c.h.b16 %v7878
        %v8172 = vunpack.c.l.b16 %v7879
        %v8173 = vunpack.c.h.b16 %v7879
        %v8174 = vunpack.c.l.b16 %v7880
        %v8175 = vunpack.c.h.b16 %v7880
        %v8176 = vunpack.c.l.b16 %v7881
        %v8177 = vunpack.c.h.b16 %v7881
        %v8178 = vunpack.c.l.b16 %v7882
        %v8179 = vunpack.c.h.b16 %v7882
        %v8180 = vunpack.c.l.b16 %v7883
        %v8181 = vunpack.c.h.b16 %v7883
        %v8182 = vunpack.c.l.b16 %v7884
        %v8183 = vunpack.c.h.b16 %v7884
        %v8184 = vunpack.c.l.b16 %v7885
        %v8185 = vunpack.c.h.b16 %v7885
        %v8186 = vunpack.c.l.b16 %v7886
        %v8187 = vunpack.c.h.b16 %v7886
        %v8188 = vunpack.c.l.b16 %v7887
        %v8189 = vunpack.c.h.b16 %v7887
        %v8190 = vunpack.c.l.b16 %v7888
        %v8191 = vunpack.c.h.b16 %v7888
        %v8192 = vunpack.c.l.b16 %v7889
        %v8193 = vunpack.c.h.b16 %v7889
        %v8194 = vunpack.c.l.b16 %v7890
        %v8195 = vunpack.c.h.b16 %v7890
        %v8196 = vunpack.c.l.b16 %v7891
        %v8197 = vunpack.c.h.b16 %v7891
        %v8198 = vunpack.c.l.b16 %v7892
        %v8199 = vunpack.c.h.b16 %v7892
        %v8200 = vunpack.c.l.b16 %v7893
        %v8201 = vunpack.c.h.b16 %v7893
        %v8202 = vunpack.c.l.b16 %v7894
        %v8203 = vunpack.c.h.b16 %v7894
        %v8204 = vunpack.c.l.b16 %v7895
        %v8205 = vunpack.c.h.b16 %v7895
        %v8206 = vunpack.c.l.b16 %v7896
        %v8207 = vunpack.c.h.b16 %v7896
        %v8208 = vunpack.c.l.b16 %v7897
        %v8209 = vunpack.c.h.b16 %v7897
        %v8210 = vunpack.c.l.b16 %v7898
        %v8211 = vunpack.c.h.b16 %v7898
        %v8212 = vunpack.c.l.b16 %v7899
        %v8213 = vunpack.c.h.b16 %v7899
        %v8214 = vunpack.c.l.b16 %v7900
        %v8215 = vunpack.c.h.b16 %v7900
        %v8216 = vunpack.c.l.b16 %v7901
        %v8217 = vunpack.c.h.b16 %v7901
        %v8218 = vunpack.c.l.b16 %v7902
        %v8219 = vunpack.c.h.b16 %v7902
        %v8220 = vunpack.c.l.b16 %v7903
        %v8221 = vunpack.c.h.b16 %v7903
        %v8222 = vunpack.c.l.b16 %v7904
        %v8223 = vunpack.c.h.b16 %v7904
        %v8224 = vunpack.c.l.b16 %v7905
        %v8225 = vunpack.c.h.b16 %v7905
        %v8226 = vunpack.c.l.b16 %v7906
        %v8227 = vunpack.c.h.b16 %v7906
        %v8228 = vunpack.c.l.b16 %v7907
        %v8229 = vunpack.c.h.b16 %v7907
        %v8230 = vunpack.c.l.b16 %v7908
        %v8231 = vunpack.c.h.b16 %v7908
        %v8232 = vunpack.c.l.b16 %v7909
        %v8233 = vunpack.c.h.b16 %v7909
        %v8234 = vunpack.c.l.b16 %v7910
        %v8235 = vunpack.c.h.b16 %v7910
        %v8236 = vunpack.c.l.b16 %v7911
        %v8237 = vunpack.c.h.b16 %v7911
        %v8238 = vunpack.c.l.b16 %v7912
        %v8239 = vunpack.c.h.b16 %v7912
        %v8240 = vunpack.c.l.b16 %v7913
        %v8241 = vunpack.c.h.b16 %v7913
        %v8242 = vunpack.c.l.b16 %v7914
        %v8243 = vunpack.c.h.b16 %v7914
        %v8244 = vunpack.c.l.b16 %v7915
        %v8245 = vunpack.c.h.b16 %v7915
        %v8246 = vunpack.c.l.b16 %v7916
        %v8247 = vunpack.c.h.b16 %v7916
        %v8248 = vunpack.c.l.b16 %v7917
        %v8249 = vunpack.c.h.b16 %v7917
        %v8250 = vunpack.c.l.b16 %v7918
        %v8251 = vunpack.c.h.b16 %v7918
        %v8252 = vunpack.c.l.b16 %v7919
        %v8253 = vunpack.c.h.b16 %v7919
        %v8254 = vunpack.c.l.b16 %v7920
        %v8255 = vunpack.c.h.b16 %v7920
        %v8256 = vunpack.c.l.b16 %v7921
        %v8257 = vunpack.c.h.b16 %v7921
        %v8258 = vunpack.c.l.b16 %v7922
        %v8259 = vunpack.c.h.b16 %v7922
        %v8260 = vunpack.c.l.b16 %v7923
        %v8261 = vunpack.c.h.b16 %v7923
        %v8262 = vunpack.c.l.b16 %v7924
        %v8263 = vunpack.c.h.b16 %v7924
        %v8264 = vunpack.c.l.b16 %v7925
        %v8265 = vunpack.c.h.b16 %v7925
        %v8266 = vunpack.c.l.b16 %v7926
        %v8267 = vunpack.c.h.b16 %v7926
        %v8268 = vunpack.c.l.b16 %v7927
        %v8269 = vunpack.c.h.b16 %v7927
        %v8270 = vunpack.c.l.b16 %v7928
        %v8271 = vunpack.c.h.b16 %v7928
        %v8272 = vunpack.c.l.b16 %v7929
        %v8273 = vunpack.c.h.b16 %v7929
        %v8274 = vunpack.c.l.b16 %v7930
        %v8275 = vunpack.c.h.b16 %v7930
        %v8276 = vunpack.c.l.b16 %v7931
        %v8277 = vunpack.c.h.b16 %v7931
        %v8278 = vunpack.c.l.b16 %v7932
        %v8279 = vunpack.c.h.b16 %v7932
        %v8280 = vunpack.c.l.b16 %v7933
        %v8281 = vunpack.c.h.b16 %v7933
        %v8282 = vunpack.c.l.b16 %v7934
        %v8283 = vunpack.c.h.b16 %v7934
        %v8284 = vunpack.c.l.b16 %v7935
        %v8285 = vunpack.c.h.b16 %v7935
        %v8286 = vunpack.c.l.b16 %v7936
        %v8287 = vunpack.c.h.b16 %v7936
        %v8288 = vunpack.c.l.b16 %v7937
        %v8289 = vunpack.c.h.b16 %v7937
        %v8290 = vunpack.c.l.b16 %v7938
        %v8291 = vunpack.c.h.b16 %v7938
        %v8292 = vunpack.c.l.b16 %v7939
        %v8293 = vunpack.c.h.b16 %v7939
        %v8294 = vunpack.c.l.b16 %v7940
        %v8295 = vunpack.c.h.b16 %v7940
        %v8296 = vunpack.c.l.b16 %v7941
        %v8297 = vunpack.c.h.b16 %v7941
        %v8298 = vunpack.c.l.b16 %v7942
        %v8299 = vunpack.c.h.b16 %v7942
        %v8300 = vunpack.c.l.b16 %v7943
        %v8301 = vunpack.c.h.b16 %v7943
        %v8302 = vunpack.c.l.b16 %v7944
        %v8303 = vunpack.c.h.b16 %v7944
        %v8304 = vunpack.c.l.b16 %v7945
        %v8305 = vunpack.c.h.b16 %v7945
        %v8306 = vunpack.c.l.b16 %v7946
        %v8307 = vunpack.c.h.b16 %v7946
        %v8308 = vunpack.c.l.b16 %v7947
        %v8309 = vunpack.c.h.b16 %v7947
        %v8310 = vunpack.c.l.b16 %v7948
        %v8311 = vunpack.c.h.b16 %v7948
        %v8312 = vunpack.c.l.b16 %v7949
        %v8313 = vunpack.c.h.b16 %v7949
        %v8314 = vunpack.c.l.b16 %v7950
        %v8315 = vunpack.c.h.b16 %v7950
        %v8316 = vunpack.c.l.b16 %v7951
        %v8317 = vunpack.c.h.b16 %v7951
        %v8318 = vunpack.c.l.b16 %v7952
        %v8319 = vunpack.c.h.b16 %v7952
        %v8320 = vunpack.c.l.b16 %v7953
        %v8321 = vunpack.c.h.b16 %v7953
        %v8322 = vunpack.c.l.b16 %v7954
        %v8323 = vunpack.c.h.b16 %v7954
        %v8324 = vunpack.c.l.b16 %v7955
        %v8325 = vunpack.c.h.b16 %v7955
        %v8326 = vunpack.c.l.b16 %v7956
        %v8327 = vunpack.c.h.b16 %v7956
        %v8328 = vunpack.c.l.b16 %v7957
        %v8329 = vunpack.c.h.b16 %v7957
        %v8330 = vunpack.c.l.b16 %v7958
        %v8331 = vunpack.c.h.b16 %v7958
        %v8332 = vunpack.c.l.b16 %v7959
        %v8333 = vunpack.c.h.b16 %v7959
        %v8334 = vunpack.c.l.b16 %v7960
        %v8335 = vunpack.c.h.b16 %v7960
        %v8336 = vunpack.c.l.b16 %v7961
        %v8337 = vunpack.c.h.b16 %v7961
        %v8338 = vunpack.c.l.b16 %v7962
        %v8339 = vunpack.c.h.b16 %v7962
        %v8340 = vunpack.c.l.b16 %v7963
        %v8341 = vunpack.c.h.b16 %v7963
        %v8342 = vunpack.c.l.b16 %v7964
        %v8343 = vunpack.c.h.b16 %v7964
        %v8344 = vunpack.c.l.b16 %v7965
        %v8345 = vunpack.c.h.b16 %v7965
        %v8346 = vunpack.c.l.b16 %v7966
        %v8347 = vunpack.c.h.b16 %v7966
        %v8348 = vunpack.c.l.b16 %v7967
        %v8349 = vunpack.c.h.b16 %v7967
        %v8350 = vunpack.c.l.b16 %v7968
        %v8351 = vunpack.c.h.b16 %v7968
        %v8352 = vunpack.c.l.b16 %v7969
        %v8353 = vunpack.c.h.b16 %v7969
        %v8354 = vpack.c.b16 %v8106, %v8098
        %v8355 = vpack.c.b16 %v8107, %v8099
        %v8356 = vpack.c.b16 %v8108, %v8100
        %v8357 = vpack.c.b16 %v8109, %v8101
        %v8358 = vpack.c.b16 %v8110, %v8102
        %v8359 = vpack.c.b16 %v8111, %v8103
        %v8360 = vpack.c.b16 %v8112, %v8104
        %v8361 = vpack.c.b16 %v8113, %v8105
        %v8362 = vpack.c.b16 %v8122, %v8114
        %v8363 = vpack.c.b16 %v8123, %v8115
        %v8364 = vpack.c.b16 %v8124, %v8116
        %v8365 = vpack.c.b16 %v8125, %v8117
        %v8366 = vpack.c.b16 %v8126, %v8118
        %v8367 = vpack.c.b16 %v8127, %v8119
        %v8368 = vpack.c.b16 %v8128, %v8120
        %v8369 = vpack.c.b16 %v8129, %v8121
        %v8370 = vpack.c.b16 %v8138, %v8130
        %v8371 = vpack.c.b16 %v8139, %v8131
        %v8372 = vpack.c.b16 %v8140, %v8132
        %v8373 = vpack.c.b16 %v8141, %v8133
        %v8374 = vpack.c.b16 %v8142, %v8134
        %v8375 = vpack.c.b16 %v8143, %v8135
        %v8376 = vpack.c.b16 %v8144, %v8136
        %v8377 = vpack.c.b16 %v8145, %v8137
        %v8378 = vpack.c.b16 %v8154, %v8146
        %v8379 = vpack.c.b16 %v8155, %v8147
        %v8380 = vpack.c.b16 %v8156, %v8148
        %v8381 = vpack.c.b16 %v8157, %v8149
        %v8382 = vpack.c.b16 %v8158, %v8150
        %v8383 = vpack.c.b16 %v8159, %v8151
        %v8384 = vpack.c.b16 %v8160, %v8152
        %v8385 = vpack.c.b16 %v8161, %v8153
        %v8386 = vpack.c.b16 %v8170, %v8162
        %v8387 = vpack.c.b16 %v8171, %v8163
        %v8388 = vpack.c.b16 %v8172, %v8164
        %v8389 = vpack.c.b16 %v8173, %v8165
        %v8390 = vpack.c.b16 %v8174, %v8166
        %v8391 = vpack.c.b16 %v8175, %v8167
        %v8392 = vpack.c.b16 %v8176, %v8168
        %v8393 = vpack.c.b16 %v8177, %v8169
        %v8394 = vpack.c.b16 %v8186, %v8178
        %v8395 = vpack.c.b16 %v8187, %v8179
        %v8396 = vpack.c.b16 %v8188, %v8180
        %v8397 = vpack.c.b16 %v8189, %v8181
        %v8398 = vpack.c.b16 %v8190, %v8182
        %v8399 = vpack.c.b16 %v8191, %v8183
        %v8400 = vpack.c.b16 %v8192, %v8184
        %v8401 = vpack.c.b16 %v8193, %v8185
        %v8402 = vpack.c.b16 %v8202, %v8194
        %v8403 = vpack.c.b16 %v8203, %v8195
        %v8404 = vpack.c.b16 %v8204, %v8196
        %v8405 = vpack.c.b16 %v8205, %v8197
        %v8406 = vpack.c.b16 %v8206, %v8198
        %v8407 = vpack.c.b16 %v8207, %v8199
        %v8408 = vpack.c.b16 %v8208, %v8200
        %v8409 = vpack.c.b16 %v8209, %v8201
        %v8410 = vpack.c.b16 %v8218, %v8210
        %v8411 = vpack.c.b16 %v8219, %v8211
        %v8412 = vpack.c.b16 %v8220, %v8212
        %v8413 = vpack.c.b16 %v8221, %v8213
        %v8414 = vpack.c.b16 %v8222, %v8214
        %v8415 = vpack.c.b16 %v8223, %v8215
        %v8416 = vpack.c.b16 %v8224, %v8216
        %v8417 = vpack.c.b16 %v8225, %v8217
        %v8418 = vpack.c.b16 %v8234, %v8226
        %v8419 = vpack.c.b16 %v8235, %v8227
        %v8420 = vpack.c.b16 %v8236, %v8228
        %v8421 = vpack.c.b16 %v8237, %v8229
        %v8422 = vpack.c.b16 %v8238, %v8230
        %v8423 = vpack.c.b16 %v8239, %v8231
        %v8424 = vpack.c.b16 %v8240, %v8232
        %v8425 = vpack.c.b16 %v8241, %v8233
        %v8426 = vpack.c.b16 %v8250, %v8242
        %v8427 = vpack.c.b16 %v8251, %v8243
        %v8428 = vpack.c.b16 %v8252, %v8244
        %v8429 = vpack.c.b16 %v8253, %v8245
        %v8430 = vpack.c.b16 %v8254, %v8246
        %v8431 = vpack.c.b16 %v8255, %v8247
        %v8432 = vpack.c.b16 %v8256, %v8248
        %v8433 = vpack.c.b16 %v8257, %v8249
        %v8434 = vpack.c.b16 %v8266, %v8258
        %v8435 = vpack.c.b16 %v8267, %v8259
        %v8436 = vpack.c.b16 %v8268, %v8260
        %v8437 = vpack.c.b16 %v8269, %v8261
        %v8438 = vpack.c.b16 %v8270, %v8262
        %v8439 = vpack.c.b16 %v8271, %v8263
        %v8440 = vpack.c.b16 %v8272, %v8264
        %v8441 = vpack.c.b16 %v8273, %v8265
        %v8442 = vpack.c.b16 %v8282, %v8274
        %v8443 = vpack.c.b16 %v8283, %v8275
        %v8444 = vpack.c.b16 %v8284, %v8276
        %v8445 = vpack.c.b16 %v8285, %v8277
        %v8446 = vpack.c.b16 %v8286, %v8278
        %v8447 = vpack.c.b16 %v8287, %v8279
        %v8448 = vpack.c.b16 %v8288, %v8280
        %v8449 = vpack.c.b16 %v8289, %v8281
        %v8450 = vpack.c.b16 %v8298, %v8290
        %v8451 = vpack.c.b16 %v8299, %v8291
        %v8452 = vpack.c.b16 %v8300, %v8292
        %v8453 = vpack.c.b16 %v8301, %v8293
        %v8454 = vpack.c.b16 %v8302, %v8294
        %v8455 = vpack.c.b16 %v8303, %v8295
        %v8456 = vpack.c.b16 %v8304, %v8296
        %v8457 = vpack.c.b16 %v8305, %v8297
        %v8458 = vpack.c.b16 %v8314, %v8306
        %v8459 = vpack.c.b16 %v8315, %v8307
        %v8460 = vpack.c.b16 %v8316, %v8308
        %v8461 = vpack.c.b16 %v8317, %v8309
        %v8462 = vpack.c.b16 %v8318, %v8310
        %v8463 = vpack.c.b16 %v8319, %v8311
        %v8464 = vpack.c.b16 %v8320, %v8312
        %v8465 = vpack.c.b16 %v8321, %v8313
        %v8466 = vpack.c.b16 %v8330, %v8322
        %v8467 = vpack.c.b16 %v8331, %v8323
        %v8468 = vpack.c.b16 %v8332, %v8324
        %v8469 = vpack.c.b16 %v8333, %v8325
        %v8470 = vpack.c.b16 %v8334, %v8326
        %v8471 = vpack.c.b16 %v8335, %v8327
        %v8472 = vpack.c.b16 %v8336, %v8328
        %v8473 = vpack.c.b16 %v8337, %v8329
        %v8474 = vpack.c.b16 %v8346, %v8338
        %v8475 = vpack.c.b16 %v8347, %v8339
        %v8476 = vpack.c.b16 %v8348, %v8340
        %v8477 = vpack.c.b16 %v8349, %v8341
        %v8478 = vpack.c.b16 %v8350, %v8342
        %v8479 = vpack.c.b16 %v8351, %v8343
        %v8480 = vpack.c.b16 %v8352, %v8344
        %v8481 = vpack.c.b16 %v8353, %v8345
        %8610 = vmatprep.subr.bf16.mxu0 %v8411
        %8611 = vmatpush1.bf16.msra.mxu0 %v8410
        %8612 = vmatprep.subr.bf16.mxu0 %v8403
        %8613 = vmatpush1.bf16.msra.mxu0 %v8402
        %8614 = vmatprep.subr.bf16.mxu0 %v8395
        %8615 = vmatpush1.bf16.msra.mxu0 %v8394
        %8616 = vmatprep.subr.bf16.mxu0 %v8387
        %8617 = vmatpush1.bf16.msra.mxu0 %v8386
        %8618 = vmatprep.subr.bf16.mxu0 %v8379
        %8619 = vmatpush1.bf16.msra.mxu0 %v8378
        %8620 = vmatprep.subr.bf16.mxu0 %v8371
        %8621 = vmatpush1.bf16.msra.mxu0 %v8370
        %8622 = vmatprep.subr.bf16.mxu0 %v8363
        %8623 = vmatpush1.bf16.msra.mxu0 %v8362
        %8624 = vmatprep.subr.bf16.mxu0 %v8355
        %8625 = vmatpush1.bf16.msra.mxu0 %v8354
        %8626 = vmatprep.subr.bf16.mxu0 %v8475
        %8627 = vmatpush2.bf16.msra.mxu0 %v8474
        %8628 = vmatprep.subr.bf16.mxu0 %v8467
        %8629 = vmatpush2.bf16.msra.mxu0 %v8466
        %8630 = vmatprep.subr.bf16.mxu0 %v8459
        %8631 = vmatpush2.bf16.msra.mxu0 %v8458
        %8632 = vmatprep.subr.bf16.mxu0 %v8451
        %8633 = vmatpush2.bf16.msra.mxu0 %v8450
        %8634 = vmatprep.subr.bf16.mxu0 %v8443
        %8635 = vmatpush2.bf16.msra.mxu0 %v8442
        %8636 = vmatprep.subr.bf16.mxu0 %v8435
        %8637 = vmatpush2.bf16.msra.mxu0 %v8434
        %8638 = vmatprep.subr.bf16.mxu0 %v8427
        %8639 = vmatpush2.bf16.msra.mxu0 %v8426
        %8640 = vmatprep.subr.bf16.mxu0 %v8419
        %8641 = vmatpush2.bf16.msra.mxu0 %v8418
        %8642 = vmatprep.mubr.bf16.mxu0 %v7841
        %8643 = vmatmul.mubr.bf16.gmra.mxu0 %v7840
        %v8644 = vpop.f32.mrf.mxu0
        %v8645 = vadd.f32 0.0, %v8644
        %v8646 = vpop.f32.mrf.mxu0
        %v8647 = vadd.f32 0.0, %v8646
        %v8648 = vpop.f32.mrf.mxu0
        %v8649 = vpop.f32.mrf.mxu0
        %8650 = vdwg.mxu0
        %8651 = vmatprep.subr.bf16.mxu0 %v8413
        %8652 = vmatpush1.bf16.msra.mxu0 %v8412
        %8653 = vmatprep.subr.bf16.mxu0 %v8405
        %8654 = vmatpush1.bf16.msra.mxu0 %v8404
        %8655 = vmatprep.subr.bf16.mxu0 %v8397
        %8656 = vmatpush1.bf16.msra.mxu0 %v8396
        %8657 = vmatprep.subr.bf16.mxu0 %v8389
        %8658 = vmatpush1.bf16.msra.mxu0 %v8388
        %8659 = vmatprep.subr.bf16.mxu0 %v8381
        %8660 = vmatpush1.bf16.msra.mxu0 %v8380
        %8661 = vmatprep.subr.bf16.mxu0 %v8373
        %8662 = vmatpush1.bf16.msra.mxu0 %v8372
        %8663 = vmatprep.subr.bf16.mxu0 %v8365
        %8664 = vmatpush1.bf16.msra.mxu0 %v8364
        %8665 = vmatprep.subr.bf16.mxu0 %v8357
        %8666 = vmatpush1.bf16.msra.mxu0 %v8356
        %8667 = vmatprep.subr.bf16.mxu0 %v8477
        %8668 = vmatpush2.bf16.msra.mxu0 %v8476
        %8669 = vmatprep.subr.bf16.mxu0 %v8469
        %8670 = vmatpush2.bf16.msra.mxu0 %v8468
        %8671 = vmatprep.subr.bf16.mxu0 %v8461
        %8672 = vmatpush2.bf16.msra.mxu0 %v8460
        %8673 = vmatprep.subr.bf16.mxu0 %v8453
        %8674 = vmatpush2.bf16.msra.mxu0 %v8452
        %8675 = vmatprep.subr.bf16.mxu0 %v8445
        %8676 = vmatpush2.bf16.msra.mxu0 %v8444
        %8677 = vmatprep.subr.bf16.mxu0 %v8437
        %8678 = vmatpush2.bf16.msra.mxu0 %v8436
        %8679 = vmatprep.subr.bf16.mxu0 %v8429
        %8680 = vmatpush2.bf16.msra.mxu0 %v8428
        %8681 = vmatprep.subr.bf16.mxu0 %v8421
        %8682 = vmatpush2.bf16.msra.mxu0 %v8420
        %8683 = vmatprep.mubr.bf16.mxu0 %v7841
        %8684 = vmatmul.mubr.bf16.gmra.mxu0 %v7840
        %v8685 = vpop.f32.mrf.mxu0
        %v8686 = vadd.f32 0.0, %v8685
        %v8687 = vpop.f32.mrf.mxu0
        %v8688 = vadd.f32 0.0, %v8687
        %v8689 = vpop.f32.mrf.mxu0
        %v8690 = vpop.f32.mrf.mxu0
        %8691 = vdwg.mxu0
        %8692 = vmatprep.subr.bf16.mxu0 %v8415
        %8693 = vmatpush1.bf16.msra.mxu0 %v8414
        %8694 = vmatprep.subr.bf16.mxu0 %v8407
        %8695 = vmatpush1.bf16.msra.mxu0 %v8406
        %8696 = vmatprep.subr.bf16.mxu0 %v8399
        %8697 = vmatpush1.bf16.msra.mxu0 %v8398
        %8698 = vmatprep.subr.bf16.mxu0 %v8391
        %8699 = vmatpush1.bf16.msra.mxu0 %v8390
        %8700 = vmatprep.subr.bf16.mxu0 %v8383
        %8701 = vmatpush1.bf16.msra.mxu0 %v8382
        %8702 = vmatprep.subr.bf16.mxu0 %v8375
        %8703 = vmatpush1.bf16.msra.mxu0 %v8374
        %8704 = vmatprep.subr.bf16.mxu0 %v8367
        %8705 = vmatpush1.bf16.msra.mxu0 %v8366
        %8706 = vmatprep.subr.bf16.mxu0 %v8359
        %8707 = vmatpush1.bf16.msra.mxu0 %v8358
        %8708 = vmatprep.subr.bf16.mxu0 %v8479
        %8709 = vmatpush2.bf16.msra.mxu0 %v8478
        %8710 = vmatprep.subr.bf16.mxu0 %v8471
        %8711 = vmatpush2.bf16.msra.mxu0 %v8470
        %8712 = vmatprep.subr.bf16.mxu0 %v8463
        %8713 = vmatpush2.bf16.msra.mxu0 %v8462
        %8714 = vmatprep.subr.bf16.mxu0 %v8455
        %8715 = vmatpush2.bf16.msra.mxu0 %v8454
        %8716 = vmatprep.subr.bf16.mxu0 %v8447
        %8717 = vmatpush2.bf16.msra.mxu0 %v8446
        %8718 = vmatprep.subr.bf16.mxu0 %v8439
        %8719 = vmatpush2.bf16.msra.mxu0 %v8438
        %8720 = vmatprep.subr.bf16.mxu0 %v8431
        %8721 = vmatpush2.bf16.msra.mxu0 %v8430
        %8722 = vmatprep.subr.bf16.mxu0 %v8423
        %8723 = vmatpush2.bf16.msra.mxu0 %v8422
        %8724 = vmatprep.mubr.bf16.mxu0 %v7841
        %8725 = vmatmul.mubr.bf16.gmra.mxu0 %v7840
        %v8726 = vpop.f32.mrf.mxu0
        %v8727 = vadd.f32 0.0, %v8726
        %v8728 = vpop.f32.mrf.mxu0
        %v8729 = vadd.f32 0.0, %v8728
        %v8730 = vpop.f32.mrf.mxu0
        %v8731 = vpop.f32.mrf.mxu0
        %8732 = vdwg.mxu0
        %8733 = vmatprep.subr.bf16.mxu0 %v8417
        %8734 = vmatpush1.bf16.msra.mxu0 %v8416
        %8735 = vmatprep.subr.bf16.mxu0 %v8409
        %8736 = vmatpush1.bf16.msra.mxu0 %v8408
        %8737 = vmatprep.subr.bf16.mxu0 %v8401
        %8738 = vmatpush1.bf16.msra.mxu0 %v8400
        %8739 = vmatprep.subr.bf16.mxu0 %v8393
        %8740 = vmatpush1.bf16.msra.mxu0 %v8392
        %8741 = vmatprep.subr.bf16.mxu0 %v8385
        %8742 = vmatpush1.bf16.msra.mxu0 %v8384
        %8743 = vmatprep.subr.bf16.mxu0 %v8377
        %8744 = vmatpush1.bf16.msra.mxu0 %v8376
        %8745 = vmatprep.subr.bf16.mxu0 %v8369
        %8746 = vmatpush1.bf16.msra.mxu0 %v8368
        %8747 = vmatprep.subr.bf16.mxu0 %v8361
        %8748 = vmatpush1.bf16.msra.mxu0 %v8360
        %8749 = vmatprep.subr.bf16.mxu0 %v8481
        %8750 = vmatpush2.bf16.msra.mxu0 %v8480
        %8751 = vmatprep.subr.bf16.mxu0 %v8473
        %8752 = vmatpush2.bf16.msra.mxu0 %v8472
        %8753 = vmatprep.subr.bf16.mxu0 %v8465
        %8754 = vmatpush2.bf16.msra.mxu0 %v8464
        %8755 = vmatprep.subr.bf16.mxu0 %v8457
        %8756 = vmatpush2.bf16.msra.mxu0 %v8456
        %8757 = vmatprep.subr.bf16.mxu0 %v8449
        %8758 = vmatpush2.bf16.msra.mxu0 %v8448
        %8759 = vmatprep.subr.bf16.mxu0 %v8441
        %8760 = vmatpush2.bf16.msra.mxu0 %v8440
        %8761 = vmatprep.subr.bf16.mxu0 %v8433
        %8762 = vmatpush2.bf16.msra.mxu0 %v8432
        %8763 = vmatprep.subr.bf16.mxu0 %v8425
        %8764 = vmatpush2.bf16.msra.mxu0 %v8424
        %8765 = vmatprep.mubr.bf16.mxu0 %v7841
        %8766 = vmatmul.mubr.bf16.gmra.mxu0 %v7840
        %v8767 = vpop.f32.mrf.mxu0
        %v8768 = vadd.f32 0.0, %v8767
        %v8769 = vpop.f32.mrf.mxu0
        %v8770 = vadd.f32 0.0, %v8769
        %v8771 = vpop.f32.mrf.mxu0
        %v8772 = vpop.f32.mrf.mxu0
        %8773 = vdwg.mxu0
        %v8782 = vcombine.low %v8645, %v8647
        %v8783 = vcombine.low %v8686, %v8688
        %v8784 = vcombine.low %v8727, %v8729
        %v8785 = vcombine.low %v8768, %v8770
        %v8787 = vunpack.c.l.s4 1966171168
        %v8788 = vunpack.c.0.s8 %v8787
        %v8789 = vlaneseq
        %v8790 = vshrl.u32 %v8789, 7
        %v8791 = vsub.s32 %v8788, %v8790
        %v8792 = vrot.slane %v8782, %v8791
        %v8794 = vunpack.c.l.s4 1966171168
        %v8795 = vunpack.c.0.s8 %v8794
        %v8796 = vlaneseq
        %v8797 = vshrl.u32 %v8796, 7
        %v8798 = vsub.s32 %v8795, %v8797
        %v8799 = vrot.slane %v8783, %v8798
        %v8801 = vunpack.c.l.s4 1966171168
        %v8802 = vunpack.c.0.s8 %v8801
        %v8803 = vlaneseq
        %v8804 = vshrl.u32 %v8803, 7
        %v8805 = vsub.s32 %v8802, %v8804
        %v8806 = vrot.slane %v8784, %v8805
        %v8808 = vunpack.c.l.s4 1966171168
        %v8809 = vunpack.c.0.s8 %v8808
        %v8810 = vlaneseq
        %v8811 = vshrl.u32 %v8810, 7
        %v8812 = vsub.s32 %v8809, %v8811
        %v8813 = vrot.slane %v8785, %v8812
        %v8814 = vcombine.low %v8792, %v8799
        %v8815 = vcombine.low %v8806, %v8813
        %v8817 = vunpack.c.l.s4 1966171168
        %v8818 = vunpack.c.0.s8 %v8817
        %v8819 = vlaneseq
        %v8820 = vshrl.u32 %v8819, 7
        %v8821 = vsub.s32 %v8818, %v8820
        %v8822 = vrot.slane %v8814, %v8821
        %v8824 = vunpack.c.l.s4 1966171168
        %v8825 = vunpack.c.0.s8 %v8824
        %v8826 = vlaneseq
        %v8827 = vshrl.u32 %v8826, 7
        %v8828 = vsub.s32 %v8825, %v8827
        %v8829 = vrot.slane %v8815, %v8828
        %v8830 = vcombine.low %v8822, %v8829
        %v8832 = vadd.f32 %v7828, %v8830
        %v8833 = vxor.u32 %v8832, 2147483648
        %v8834 = vmul.f32 %v8833, 1.442695
        %v8835 = vpow.pop %v8834
        %v8836 = vadd.f32 %v8835, 1.0
        %v8837 = vrcp.pop %v8836
        %v8838 = vmul.f32 1.0, %v8837
        %v8840 = vrot.slane %v8832, 6
        %v8842 = vtanh.pop %v8840
        %v8844 = vrot.slane %v8838, 2
        %v8846 = vmul.f32 %v8844, %v7817
        %v8847 = vmul.f32 %v8838, %v8842
        %v8848 = vadd.f32 %v8846, %v8847
        %v8849 = vtanh.pop %v8848
        %v8850 = vrot.slane %v8838, 4
        %v8852 = vmul.f32 %v8850, %v8849
        %s8853 = scalar_lea.vmem [#allocation3], 6
        %8854 = vst.msk [vmem:[%s8853] ss:$8 sm:$0x3] %vm2667, %v8852
        %8855 = vst.msk [vmem:[%s8853] ss:$8 sm:$0x0] %vm2667, %v8852
        %s8856 = scalar_lea.vmem [#allocation2], 7
        %v8857 = vld [vmem:[%s8856] ss:$8 sm:$0xf]
        %v8858 = vld [vmem:[%s8856] ss:$8 sm:$0xf0]
        %v8859 = vor.u32 %v8857, %v8858
        %v8861 = vlaneseq
        %v8862 = vshrl.u32 %v8861, 7
        %v8863 = vsub.s32 0, %v8862
        %v8864 = vrot.slane %v8852, %v8863
        %v8865 = vlaneseq
        %v8866 = vshrl.u32 %v8865, 7
        %v8867 = vsub.s32 1, %v8866
        %v8868 = vrot.slane %v8852, %v8867
        %v8871 = vpack.c.bf16 %v8864, %v8864
        %v8872 = vpack.c.bf16 %v8868, %v8868
        %v8873 = vld [vmem:[%s562] sm:$0xff]
        %v8874 = vld [vmem:[%s562 + $0x8] sm:$0xff]
        %v8875 = vld [vmem:[%s562 + $0x10] sm:$0xff]
        %v8876 = vld [vmem:[%s562 + $0x18] sm:$0xff]
        %v8877 = vld [vmem:[%s562 + $0x20] sm:$0xff]
        %v8878 = vld [vmem:[%s562 + $0x28] sm:$0xff]
        %v8879 = vld [vmem:[%s562 + $0x30] sm:$0xff]
        %v8880 = vld [vmem:[%s562 + $0x38] sm:$0xff]
        %v8881 = vld [vmem:[%s562 + $0x40] sm:$0xff]
        %v8882 = vld [vmem:[%s562 + $0x48] sm:$0xff]
        %v8883 = vld [vmem:[%s562 + $0x50] sm:$0xff]
        %v8884 = vld [vmem:[%s562 + $0x58] sm:$0xff]
        %v8885 = vld [vmem:[%s562 + $0x60] sm:$0xff]
        %v8886 = vld [vmem:[%s562 + $0x68] sm:$0xff]
        %v8887 = vld [vmem:[%s562 + $0x70] sm:$0xff]
        %v8888 = vld [vmem:[%s562 + $0x78] sm:$0xff]
        %v8889 = vld [vmem:[%s562 + $0x80] sm:$0xff]
        %v8890 = vld [vmem:[%s562 + $0x88] sm:$0xff]
        %v8891 = vld [vmem:[%s562 + $0x90] sm:$0xff]
        %v8892 = vld [vmem:[%s562 + $0x98] sm:$0xff]
        %v8893 = vld [vmem:[%s562 + $0xa0] sm:$0xff]
        %v8894 = vld [vmem:[%s562 + $0xa8] sm:$0xff]
        %v8895 = vld [vmem:[%s562 + $0xb0] sm:$0xff]
        %v8896 = vld [vmem:[%s562 + $0xb8] sm:$0xff]
        %v8897 = vld [vmem:[%s562 + $0xc0] sm:$0xff]
        %v8898 = vld [vmem:[%s562 + $0xc8] sm:$0xff]
        %v8899 = vld [vmem:[%s562 + $0xd0] sm:$0xff]
        %v8900 = vld [vmem:[%s562 + $0xd8] sm:$0xff]
        %v8901 = vld [vmem:[%s562 + $0xe0] sm:$0xff]
        %v8902 = vld [vmem:[%s562 + $0xe8] sm:$0xff]
        %v8903 = vld [vmem:[%s562 + $0xf0] sm:$0xff]
        %v8904 = vld [vmem:[%s562 + $0xf8] sm:$0xff]
        %v8905 = vld [vmem:[%s562 + $0x100] sm:$0xff]
        %v8906 = vld [vmem:[%s562 + $0x108] sm:$0xff]
        %v8907 = vld [vmem:[%s562 + $0x110] sm:$0xff]
        %v8908 = vld [vmem:[%s562 + $0x118] sm:$0xff]
        %v8909 = vld [vmem:[%s562 + $0x120] sm:$0xff]
        %v8910 = vld [vmem:[%s562 + $0x128] sm:$0xff]
        %v8911 = vld [vmem:[%s562 + $0x130] sm:$0xff]
        %v8912 = vld [vmem:[%s562 + $0x138] sm:$0xff]
        %v8913 = vld [vmem:[%s562 + $0x140] sm:$0xff]
        %v8914 = vld [vmem:[%s562 + $0x148] sm:$0xff]
        %v8915 = vld [vmem:[%s562 + $0x150] sm:$0xff]
        %v8916 = vld [vmem:[%s562 + $0x158] sm:$0xff]
        %v8917 = vld [vmem:[%s562 + $0x160] sm:$0xff]
        %v8918 = vld [vmem:[%s562 + $0x168] sm:$0xff]
        %v8919 = vld [vmem:[%s562 + $0x170] sm:$0xff]
        %v8920 = vld [vmem:[%s562 + $0x178] sm:$0xff]
        %v8921 = vld [vmem:[%s562 + $0x180] sm:$0xff]
        %v8922 = vld [vmem:[%s562 + $0x188] sm:$0xff]
        %v8923 = vld [vmem:[%s562 + $0x190] sm:$0xff]
        %v8924 = vld [vmem:[%s562 + $0x198] sm:$0xff]
        %v8925 = vld [vmem:[%s562 + $0x1a0] sm:$0xff]
        %v8926 = vld [vmem:[%s562 + $0x1a8] sm:$0xff]
        %v8927 = vld [vmem:[%s562 + $0x1b0] sm:$0xff]
        %v8928 = vld [vmem:[%s562 + $0x1b8] sm:$0xff]
        %v8929 = vld [vmem:[%s562 + $0x1c0] sm:$0xff]
        %v8930 = vld [vmem:[%s562 + $0x1c8] sm:$0xff]
        %v8931 = vld [vmem:[%s562 + $0x1d0] sm:$0xff]
        %v8932 = vld [vmem:[%s562 + $0x1d8] sm:$0xff]
        %v8933 = vld [vmem:[%s562 + $0x1e0] sm:$0xff]
        %v8934 = vld [vmem:[%s562 + $0x1e8] sm:$0xff]
        %v8935 = vld [vmem:[%s562 + $0x1f0] sm:$0xff]
        %v8936 = vld [vmem:[%s562 + $0x1f8] sm:$0xff]
        %v8937 = vld [vmem:[%s562 + $0x200] sm:$0xff]
        %v8938 = vld [vmem:[%s562 + $0x208] sm:$0xff]
        %v8939 = vld [vmem:[%s562 + $0x210] sm:$0xff]
        %v8940 = vld [vmem:[%s562 + $0x218] sm:$0xff]
        %v8941 = vld [vmem:[%s562 + $0x220] sm:$0xff]
        %v8942 = vld [vmem:[%s562 + $0x228] sm:$0xff]
        %v8943 = vld [vmem:[%s562 + $0x230] sm:$0xff]
        %v8944 = vld [vmem:[%s562 + $0x238] sm:$0xff]
        %v8945 = vld [vmem:[%s562 + $0x240] sm:$0xff]
        %v8946 = vld [vmem:[%s562 + $0x248] sm:$0xff]
        %v8947 = vld [vmem:[%s562 + $0x250] sm:$0xff]
        %v8948 = vld [vmem:[%s562 + $0x258] sm:$0xff]
        %v8949 = vld [vmem:[%s562 + $0x260] sm:$0xff]
        %v8950 = vld [vmem:[%s562 + $0x268] sm:$0xff]
        %v8951 = vld [vmem:[%s562 + $0x270] sm:$0xff]
        %v8952 = vld [vmem:[%s562 + $0x278] sm:$0xff]
        %v8953 = vld [vmem:[%s562 + $0x280] sm:$0xff]
        %v8954 = vld [vmem:[%s562 + $0x288] sm:$0xff]
        %v8955 = vld [vmem:[%s562 + $0x290] sm:$0xff]
        %v8956 = vld [vmem:[%s562 + $0x298] sm:$0xff]
        %v8957 = vld [vmem:[%s562 + $0x2a0] sm:$0xff]
        %v8958 = vld [vmem:[%s562 + $0x2a8] sm:$0xff]
        %v8959 = vld [vmem:[%s562 + $0x2b0] sm:$0xff]
        %v8960 = vld [vmem:[%s562 + $0x2b8] sm:$0xff]
        %v8961 = vld [vmem:[%s562 + $0x2c0] sm:$0xff]
        %v8962 = vld [vmem:[%s562 + $0x2c8] sm:$0xff]
        %v8963 = vld [vmem:[%s562 + $0x2d0] sm:$0xff]
        %v8964 = vld [vmem:[%s562 + $0x2d8] sm:$0xff]
        %v8965 = vld [vmem:[%s562 + $0x2e0] sm:$0xff]
        %v8966 = vld [vmem:[%s562 + $0x2e8] sm:$0xff]
        %v8967 = vld [vmem:[%s562 + $0x2f0] sm:$0xff]
        %v8968 = vld [vmem:[%s562 + $0x2f8] sm:$0xff]
        %v8969 = vld [vmem:[%s562 + $0x300] sm:$0xff]
        %v8970 = vld [vmem:[%s562 + $0x308] sm:$0xff]
        %v8971 = vld [vmem:[%s562 + $0x310] sm:$0xff]
        %v8972 = vld [vmem:[%s562 + $0x318] sm:$0xff]
        %v8973 = vld [vmem:[%s562 + $0x320] sm:$0xff]
        %v8974 = vld [vmem:[%s562 + $0x328] sm:$0xff]
        %v8975 = vld [vmem:[%s562 + $0x330] sm:$0xff]
        %v8976 = vld [vmem:[%s562 + $0x338] sm:$0xff]
        %v8977 = vld [vmem:[%s562 + $0x340] sm:$0xff]
        %v8978 = vld [vmem:[%s562 + $0x348] sm:$0xff]
        %v8979 = vld [vmem:[%s562 + $0x350] sm:$0xff]
        %v8980 = vld [vmem:[%s562 + $0x358] sm:$0xff]
        %v8981 = vld [vmem:[%s562 + $0x360] sm:$0xff]
        %v8982 = vld [vmem:[%s562 + $0x368] sm:$0xff]
        %v8983 = vld [vmem:[%s562 + $0x370] sm:$0xff]
        %v8984 = vld [vmem:[%s562 + $0x378] sm:$0xff]
        %v8985 = vld [vmem:[%s562 + $0x380] sm:$0xff]
        %v8986 = vld [vmem:[%s562 + $0x388] sm:$0xff]
        %v8987 = vld [vmem:[%s562 + $0x390] sm:$0xff]
        %v8988 = vld [vmem:[%s562 + $0x398] sm:$0xff]
        %v8989 = vld [vmem:[%s562 + $0x3a0] sm:$0xff]
        %v8990 = vld [vmem:[%s562 + $0x3a8] sm:$0xff]
        %v8991 = vld [vmem:[%s562 + $0x3b0] sm:$0xff]
        %v8992 = vld [vmem:[%s562 + $0x3b8] sm:$0xff]
        %v8993 = vld [vmem:[%s562 + $0x3c0] sm:$0xff]
        %v8994 = vld [vmem:[%s562 + $0x3c8] sm:$0xff]
        %v8995 = vld [vmem:[%s562 + $0x3d0] sm:$0xff]
        %v8996 = vld [vmem:[%s562 + $0x3d8] sm:$0xff]
        %v8997 = vld [vmem:[%s562 + $0x3e0] sm:$0xff]
        %v8998 = vld [vmem:[%s562 + $0x3e8] sm:$0xff]
        %v8999 = vld [vmem:[%s562 + $0x3f0] sm:$0xff]
        %v9000 = vld [vmem:[%s562 + $0x3f8] sm:$0xff]
        %v9129 = vunpack.c.l.b16 %v8873
        %v9130 = vunpack.c.h.b16 %v8873
        %v9131 = vunpack.c.l.b16 %v8874
        %v9132 = vunpack.c.h.b16 %v8874
        %v9133 = vunpack.c.l.b16 %v8875
        %v9134 = vunpack.c.h.b16 %v8875
        %v9135 = vunpack.c.l.b16 %v8876
        %v9136 = vunpack.c.h.b16 %v8876
        %v9137 = vunpack.c.l.b16 %v8877
        %v9138 = vunpack.c.h.b16 %v8877
        %v9139 = vunpack.c.l.b16 %v8878
        %v9140 = vunpack.c.h.b16 %v8878
        %v9141 = vunpack.c.l.b16 %v8879
        %v9142 = vunpack.c.h.b16 %v8879
        %v9143 = vunpack.c.l.b16 %v8880
        %v9144 = vunpack.c.h.b16 %v8880
        %v9145 = vunpack.c.l.b16 %v8881
        %v9146 = vunpack.c.h.b16 %v8881
        %v9147 = vunpack.c.l.b16 %v8882
        %v9148 = vunpack.c.h.b16 %v8882
        %v9149 = vunpack.c.l.b16 %v8883
        %v9150 = vunpack.c.h.b16 %v8883
        %v9151 = vunpack.c.l.b16 %v8884
        %v9152 = vunpack.c.h.b16 %v8884
        %v9153 = vunpack.c.l.b16 %v8885
        %v9154 = vunpack.c.h.b16 %v8885
        %v9155 = vunpack.c.l.b16 %v8886
        %v9156 = vunpack.c.h.b16 %v8886
        %v9157 = vunpack.c.l.b16 %v8887
        %v9158 = vunpack.c.h.b16 %v8887
        %v9159 = vunpack.c.l.b16 %v8888
        %v9160 = vunpack.c.h.b16 %v8888
        %v9161 = vunpack.c.l.b16 %v8889
        %v9162 = vunpack.c.h.b16 %v8889
        %v9163 = vunpack.c.l.b16 %v8890
        %v9164 = vunpack.c.h.b16 %v8890
        %v9165 = vunpack.c.l.b16 %v8891
        %v9166 = vunpack.c.h.b16 %v8891
        %v9167 = vunpack.c.l.b16 %v8892
        %v9168 = vunpack.c.h.b16 %v8892
        %v9169 = vunpack.c.l.b16 %v8893
        %v9170 = vunpack.c.h.b16 %v8893
        %v9171 = vunpack.c.l.b16 %v8894
        %v9172 = vunpack.c.h.b16 %v8894
        %v9173 = vunpack.c.l.b16 %v8895
        %v9174 = vunpack.c.h.b16 %v8895
        %v9175 = vunpack.c.l.b16 %v8896
        %v9176 = vunpack.c.h.b16 %v8896
        %v9177 = vunpack.c.l.b16 %v8897
        %v9178 = vunpack.c.h.b16 %v8897
        %v9179 = vunpack.c.l.b16 %v8898
        %v9180 = vunpack.c.h.b16 %v8898
        %v9181 = vunpack.c.l.b16 %v8899
        %v9182 = vunpack.c.h.b16 %v8899
        %v9183 = vunpack.c.l.b16 %v8900
        %v9184 = vunpack.c.h.b16 %v8900
        %v9185 = vunpack.c.l.b16 %v8901
        %v9186 = vunpack.c.h.b16 %v8901
        %v9187 = vunpack.c.l.b16 %v8902
        %v9188 = vunpack.c.h.b16 %v8902
        %v9189 = vunpack.c.l.b16 %v8903
        %v9190 = vunpack.c.h.b16 %v8903
        %v9191 = vunpack.c.l.b16 %v8904
        %v9192 = vunpack.c.h.b16 %v8904
        %v9193 = vunpack.c.l.b16 %v8905
        %v9194 = vunpack.c.h.b16 %v8905
        %v9195 = vunpack.c.l.b16 %v8906
        %v9196 = vunpack.c.h.b16 %v8906
        %v9197 = vunpack.c.l.b16 %v8907
        %v9198 = vunpack.c.h.b16 %v8907
        %v9199 = vunpack.c.l.b16 %v8908
        %v9200 = vunpack.c.h.b16 %v8908
        %v9201 = vunpack.c.l.b16 %v8909
        %v9202 = vunpack.c.h.b16 %v8909
        %v9203 = vunpack.c.l.b16 %v8910
        %v9204 = vunpack.c.h.b16 %v8910
        %v9205 = vunpack.c.l.b16 %v8911
        %v9206 = vunpack.c.h.b16 %v8911
        %v9207 = vunpack.c.l.b16 %v8912
        %v9208 = vunpack.c.h.b16 %v8912
        %v9209 = vunpack.c.l.b16 %v8913
        %v9210 = vunpack.c.h.b16 %v8913
        %v9211 = vunpack.c.l.b16 %v8914
        %v9212 = vunpack.c.h.b16 %v8914
        %v9213 = vunpack.c.l.b16 %v8915
        %v9214 = vunpack.c.h.b16 %v8915
        %v9215 = vunpack.c.l.b16 %v8916
        %v9216 = vunpack.c.h.b16 %v8916
        %v9217 = vunpack.c.l.b16 %v8917
        %v9218 = vunpack.c.h.b16 %v8917
        %v9219 = vunpack.c.l.b16 %v8918
        %v9220 = vunpack.c.h.b16 %v8918
        %v9221 = vunpack.c.l.b16 %v8919
        %v9222 = vunpack.c.h.b16 %v8919
        %v9223 = vunpack.c.l.b16 %v8920
        %v9224 = vunpack.c.h.b16 %v8920
        %v9225 = vunpack.c.l.b16 %v8921
        %v9226 = vunpack.c.h.b16 %v8921
        %v9227 = vunpack.c.l.b16 %v8922
        %v9228 = vunpack.c.h.b16 %v8922
        %v9229 = vunpack.c.l.b16 %v8923
        %v9230 = vunpack.c.h.b16 %v8923
        %v9231 = vunpack.c.l.b16 %v8924
        %v9232 = vunpack.c.h.b16 %v8924
        %v9233 = vunpack.c.l.b16 %v8925
        %v9234 = vunpack.c.h.b16 %v8925
        %v9235 = vunpack.c.l.b16 %v8926
        %v9236 = vunpack.c.h.b16 %v8926
        %v9237 = vunpack.c.l.b16 %v8927
        %v9238 = vunpack.c.h.b16 %v8927
        %v9239 = vunpack.c.l.b16 %v8928
        %v9240 = vunpack.c.h.b16 %v8928
        %v9241 = vunpack.c.l.b16 %v8929
        %v9242 = vunpack.c.h.b16 %v8929
        %v9243 = vunpack.c.l.b16 %v8930
        %v9244 = vunpack.c.h.b16 %v8930
        %v9245 = vunpack.c.l.b16 %v8931
        %v9246 = vunpack.c.h.b16 %v8931
        %v9247 = vunpack.c.l.b16 %v8932
        %v9248 = vunpack.c.h.b16 %v8932
        %v9249 = vunpack.c.l.b16 %v8933
        %v9250 = vunpack.c.h.b16 %v8933
        %v9251 = vunpack.c.l.b16 %v8934
        %v9252 = vunpack.c.h.b16 %v8934
        %v9253 = vunpack.c.l.b16 %v8935
        %v9254 = vunpack.c.h.b16 %v8935
        %v9255 = vunpack.c.l.b16 %v8936
        %v9256 = vunpack.c.h.b16 %v8936
        %v9257 = vunpack.c.l.b16 %v8937
        %v9258 = vunpack.c.h.b16 %v8937
        %v9259 = vunpack.c.l.b16 %v8938
        %v9260 = vunpack.c.h.b16 %v8938
        %v9261 = vunpack.c.l.b16 %v8939
        %v9262 = vunpack.c.h.b16 %v8939
        %v9263 = vunpack.c.l.b16 %v8940
        %v9264 = vunpack.c.h.b16 %v8940
        %v9265 = vunpack.c.l.b16 %v8941
        %v9266 = vunpack.c.h.b16 %v8941
        %v9267 = vunpack.c.l.b16 %v8942
        %v9268 = vunpack.c.h.b16 %v8942
        %v9269 = vunpack.c.l.b16 %v8943
        %v9270 = vunpack.c.h.b16 %v8943
        %v9271 = vunpack.c.l.b16 %v8944
        %v9272 = vunpack.c.h.b16 %v8944
        %v9273 = vunpack.c.l.b16 %v8945
        %v9274 = vunpack.c.h.b16 %v8945
        %v9275 = vunpack.c.l.b16 %v8946
        %v9276 = vunpack.c.h.b16 %v8946
        %v9277 = vunpack.c.l.b16 %v8947
        %v9278 = vunpack.c.h.b16 %v8947
        %v9279 = vunpack.c.l.b16 %v8948
        %v9280 = vunpack.c.h.b16 %v8948
        %v9281 = vunpack.c.l.b16 %v8949
        %v9282 = vunpack.c.h.b16 %v8949
        %v9283 = vunpack.c.l.b16 %v8950
        %v9284 = vunpack.c.h.b16 %v8950
        %v9285 = vunpack.c.l.b16 %v8951
        %v9286 = vunpack.c.h.b16 %v8951
        %v9287 = vunpack.c.l.b16 %v8952
        %v9288 = vunpack.c.h.b16 %v8952
        %v9289 = vunpack.c.l.b16 %v8953
        %v9290 = vunpack.c.h.b16 %v8953
        %v9291 = vunpack.c.l.b16 %v8954
        %v9292 = vunpack.c.h.b16 %v8954
        %v9293 = vunpack.c.l.b16 %v8955
        %v9294 = vunpack.c.h.b16 %v8955
        %v9295 = vunpack.c.l.b16 %v8956
        %v9296 = vunpack.c.h.b16 %v8956
        %v9297 = vunpack.c.l.b16 %v8957
        %v9298 = vunpack.c.h.b16 %v8957
        %v9299 = vunpack.c.l.b16 %v8958
        %v9300 = vunpack.c.h.b16 %v8958
        %v9301 = vunpack.c.l.b16 %v8959
        %v9302 = vunpack.c.h.b16 %v8959
        %v9303 = vunpack.c.l.b16 %v8960
        %v9304 = vunpack.c.h.b16 %v8960
        %v9305 = vunpack.c.l.b16 %v8961
        %v9306 = vunpack.c.h.b16 %v8961
        %v9307 = vunpack.c.l.b16 %v8962
        %v9308 = vunpack.c.h.b16 %v8962
        %v9309 = vunpack.c.l.b16 %v8963
        %v9310 = vunpack.c.h.b16 %v8963
        %v9311 = vunpack.c.l.b16 %v8964
        %v9312 = vunpack.c.h.b16 %v8964
        %v9313 = vunpack.c.l.b16 %v8965
        %v9314 = vunpack.c.h.b16 %v8965
        %v9315 = vunpack.c.l.b16 %v8966
        %v9316 = vunpack.c.h.b16 %v8966
        %v9317 = vunpack.c.l.b16 %v8967
        %v9318 = vunpack.c.h.b16 %v8967
        %v9319 = vunpack.c.l.b16 %v8968
        %v9320 = vunpack.c.h.b16 %v8968
        %v9321 = vunpack.c.l.b16 %v8969
        %v9322 = vunpack.c.h.b16 %v8969
        %v9323 = vunpack.c.l.b16 %v8970
        %v9324 = vunpack.c.h.b16 %v8970
        %v9325 = vunpack.c.l.b16 %v8971
        %v9326 = vunpack.c.h.b16 %v8971
        %v9327 = vunpack.c.l.b16 %v8972
        %v9328 = vunpack.c.h.b16 %v8972
        %v9329 = vunpack.c.l.b16 %v8973
        %v9330 = vunpack.c.h.b16 %v8973
        %v9331 = vunpack.c.l.b16 %v8974
        %v9332 = vunpack.c.h.b16 %v8974
        %v9333 = vunpack.c.l.b16 %v8975
        %v9334 = vunpack.c.h.b16 %v8975
        %v9335 = vunpack.c.l.b16 %v8976
        %v9336 = vunpack.c.h.b16 %v8976
        %v9337 = vunpack.c.l.b16 %v8977
        %v9338 = vunpack.c.h.b16 %v8977
        %v9339 = vunpack.c.l.b16 %v8978
        %v9340 = vunpack.c.h.b16 %v8978
        %v9341 = vunpack.c.l.b16 %v8979
        %v9342 = vunpack.c.h.b16 %v8979
        %v9343 = vunpack.c.l.b16 %v8980
        %v9344 = vunpack.c.h.b16 %v8980
        %v9345 = vunpack.c.l.b16 %v8981
        %v9346 = vunpack.c.h.b16 %v8981
        %v9347 = vunpack.c.l.b16 %v8982
        %v9348 = vunpack.c.h.b16 %v8982
        %v9349 = vunpack.c.l.b16 %v8983
        %v9350 = vunpack.c.h.b16 %v8983
        %v9351 = vunpack.c.l.b16 %v8984
        %v9352 = vunpack.c.h.b16 %v8984
        %v9353 = vunpack.c.l.b16 %v8985
        %v9354 = vunpack.c.h.b16 %v8985
        %v9355 = vunpack.c.l.b16 %v8986
        %v9356 = vunpack.c.h.b16 %v8986
        %v9357 = vunpack.c.l.b16 %v8987
        %v9358 = vunpack.c.h.b16 %v8987
        %v9359 = vunpack.c.l.b16 %v8988
        %v9360 = vunpack.c.h.b16 %v8988
        %v9361 = vunpack.c.l.b16 %v8989
        %v9362 = vunpack.c.h.b16 %v8989
        %v9363 = vunpack.c.l.b16 %v8990
        %v9364 = vunpack.c.h.b16 %v8990
        %v9365 = vunpack.c.l.b16 %v8991
        %v9366 = vunpack.c.h.b16 %v8991
        %v9367 = vunpack.c.l.b16 %v8992
        %v9368 = vunpack.c.h.b16 %v8992
        %v9369 = vunpack.c.l.b16 %v8993
        %v9370 = vunpack.c.h.b16 %v8993
        %v9371 = vunpack.c.l.b16 %v8994
        %v9372 = vunpack.c.h.b16 %v8994
        %v9373 = vunpack.c.l.b16 %v8995
        %v9374 = vunpack.c.h.b16 %v8995
        %v9375 = vunpack.c.l.b16 %v8996
        %v9376 = vunpack.c.h.b16 %v8996
        %v9377 = vunpack.c.l.b16 %v8997
        %v9378 = vunpack.c.h.b16 %v8997
        %v9379 = vunpack.c.l.b16 %v8998
        %v9380 = vunpack.c.h.b16 %v8998
        %v9381 = vunpack.c.l.b16 %v8999
        %v9382 = vunpack.c.h.b16 %v8999
        %v9383 = vunpack.c.l.b16 %v9000
        %v9384 = vunpack.c.h.b16 %v9000
        %v9385 = vpack.c.b16 %v9137, %v9129
        %v9386 = vpack.c.b16 %v9138, %v9130
        %v9387 = vpack.c.b16 %v9139, %v9131
        %v9388 = vpack.c.b16 %v9140, %v9132
        %v9389 = vpack.c.b16 %v9141, %v9133
        %v9390 = vpack.c.b16 %v9142, %v9134
        %v9391 = vpack.c.b16 %v9143, %v9135
        %v9392 = vpack.c.b16 %v9144, %v9136
        %v9393 = vpack.c.b16 %v9153, %v9145
        %v9394 = vpack.c.b16 %v9154, %v9146
        %v9395 = vpack.c.b16 %v9155, %v9147
        %v9396 = vpack.c.b16 %v9156, %v9148
        %v9397 = vpack.c.b16 %v9157, %v9149
        %v9398 = vpack.c.b16 %v9158, %v9150
        %v9399 = vpack.c.b16 %v9159, %v9151
        %v9400 = vpack.c.b16 %v9160, %v9152
        %v9401 = vpack.c.b16 %v9169, %v9161
        %v9402 = vpack.c.b16 %v9170, %v9162
        %v9403 = vpack.c.b16 %v9171, %v9163
        %v9404 = vpack.c.b16 %v9172, %v9164
        %v9405 = vpack.c.b16 %v9173, %v9165
        %v9406 = vpack.c.b16 %v9174, %v9166
        %v9407 = vpack.c.b16 %v9175, %v9167
        %v9408 = vpack.c.b16 %v9176, %v9168
        %v9409 = vpack.c.b16 %v9185, %v9177
        %v9410 = vpack.c.b16 %v9186, %v9178
        %v9411 = vpack.c.b16 %v9187, %v9179
        %v9412 = vpack.c.b16 %v9188, %v9180
        %v9413 = vpack.c.b16 %v9189, %v9181
        %v9414 = vpack.c.b16 %v9190, %v9182
        %v9415 = vpack.c.b16 %v9191, %v9183
        %v9416 = vpack.c.b16 %v9192, %v9184
        %v9417 = vpack.c.b16 %v9201, %v9193
        %v9418 = vpack.c.b16 %v9202, %v9194
        %v9419 = vpack.c.b16 %v9203, %v9195
        %v9420 = vpack.c.b16 %v9204, %v9196
        %v9421 = vpack.c.b16 %v9205, %v9197
        %v9422 = vpack.c.b16 %v9206, %v9198
        %v9423 = vpack.c.b16 %v9207, %v9199
        %v9424 = vpack.c.b16 %v9208, %v9200
        %v9425 = vpack.c.b16 %v9217, %v9209
        %v9426 = vpack.c.b16 %v9218, %v9210
        %v9427 = vpack.c.b16 %v9219, %v9211
        %v9428 = vpack.c.b16 %v9220, %v9212
        %v9429 = vpack.c.b16 %v9221, %v9213
        %v9430 = vpack.c.b16 %v9222, %v9214
        %v9431 = vpack.c.b16 %v9223, %v9215
        %v9432 = vpack.c.b16 %v9224, %v9216
        %v9433 = vpack.c.b16 %v9233, %v9225
        %v9434 = vpack.c.b16 %v9234, %v9226
        %v9435 = vpack.c.b16 %v9235, %v9227
        %v9436 = vpack.c.b16 %v9236, %v9228
        %v9437 = vpack.c.b16 %v9237, %v9229
        %v9438 = vpack.c.b16 %v9238, %v9230
        %v9439 = vpack.c.b16 %v9239, %v9231
        %v9440 = vpack.c.b16 %v9240, %v9232
        %v9441 = vpack.c.b16 %v9249, %v9241
        %v9442 = vpack.c.b16 %v9250, %v9242
        %v9443 = vpack.c.b16 %v9251, %v9243
        %v9444 = vpack.c.b16 %v9252, %v9244
        %v9445 = vpack.c.b16 %v9253, %v9245
        %v9446 = vpack.c.b16 %v9254, %v9246
        %v9447 = vpack.c.b16 %v9255, %v9247
        %v9448 = vpack.c.b16 %v9256, %v9248
        %v9449 = vpack.c.b16 %v9265, %v9257
        %v9450 = vpack.c.b16 %v9266, %v9258
        %v9451 = vpack.c.b16 %v9267, %v9259
        %v9452 = vpack.c.b16 %v9268, %v9260
        %v9453 = vpack.c.b16 %v9269, %v9261
        %v9454 = vpack.c.b16 %v9270, %v9262
        %v9455 = vpack.c.b16 %v9271, %v9263
        %v9456 = vpack.c.b16 %v9272, %v9264
        %v9457 = vpack.c.b16 %v9281, %v9273
        %v9458 = vpack.c.b16 %v9282, %v9274
        %v9459 = vpack.c.b16 %v9283, %v9275
        %v9460 = vpack.c.b16 %v9284, %v9276
        %v9461 = vpack.c.b16 %v9285, %v9277
        %v9462 = vpack.c.b16 %v9286, %v9278
        %v9463 = vpack.c.b16 %v9287, %v9279
        %v9464 = vpack.c.b16 %v9288, %v9280
        %v9465 = vpack.c.b16 %v9297, %v9289
        %v9466 = vpack.c.b16 %v9298, %v9290
        %v9467 = vpack.c.b16 %v9299, %v9291
        %v9468 = vpack.c.b16 %v9300, %v9292
        %v9469 = vpack.c.b16 %v9301, %v9293
        %v9470 = vpack.c.b16 %v9302, %v9294
        %v9471 = vpack.c.b16 %v9303, %v9295
        %v9472 = vpack.c.b16 %v9304, %v9296
        %v9473 = vpack.c.b16 %v9313, %v9305
        %v9474 = vpack.c.b16 %v9314, %v9306
        %v9475 = vpack.c.b16 %v9315, %v9307
        %v9476 = vpack.c.b16 %v9316, %v9308
        %v9477 = vpack.c.b16 %v9317, %v9309
        %v9478 = vpack.c.b16 %v9318, %v9310
        %v9479 = vpack.c.b16 %v9319, %v9311
        %v9480 = vpack.c.b16 %v9320, %v9312
        %v9481 = vpack.c.b16 %v9329, %v9321
        %v9482 = vpack.c.b16 %v9330, %v9322
        %v9483 = vpack.c.b16 %v9331, %v9323
        %v9484 = vpack.c.b16 %v9332, %v9324
        %v9485 = vpack.c.b16 %v9333, %v9325
        %v9486 = vpack.c.b16 %v9334, %v9326
        %v9487 = vpack.c.b16 %v9335, %v9327
        %v9488 = vpack.c.b16 %v9336, %v9328
        %v9489 = vpack.c.b16 %v9345, %v9337
        %v9490 = vpack.c.b16 %v9346, %v9338
        %v9491 = vpack.c.b16 %v9347, %v9339
        %v9492 = vpack.c.b16 %v9348, %v9340
        %v9493 = vpack.c.b16 %v9349, %v9341
        %v9494 = vpack.c.b16 %v9350, %v9342
        %v9495 = vpack.c.b16 %v9351, %v9343
        %v9496 = vpack.c.b16 %v9352, %v9344
        %v9497 = vpack.c.b16 %v9361, %v9353
        %v9498 = vpack.c.b16 %v9362, %v9354
        %v9499 = vpack.c.b16 %v9363, %v9355
        %v9500 = vpack.c.b16 %v9364, %v9356
        %v9501 = vpack.c.b16 %v9365, %v9357
        %v9502 = vpack.c.b16 %v9366, %v9358
        %v9503 = vpack.c.b16 %v9367, %v9359
        %v9504 = vpack.c.b16 %v9368, %v9360
        %v9505 = vpack.c.b16 %v9377, %v9369
        %v9506 = vpack.c.b16 %v9378, %v9370
        %v9507 = vpack.c.b16 %v9379, %v9371
        %v9508 = vpack.c.b16 %v9380, %v9372
        %v9509 = vpack.c.b16 %v9381, %v9373
        %v9510 = vpack.c.b16 %v9382, %v9374
        %v9511 = vpack.c.b16 %v9383, %v9375
        %v9512 = vpack.c.b16 %v9384, %v9376
        %9641 = vmatprep.subr.bf16.mxu0 %v9442
        %9642 = vmatpush1.bf16.msra.mxu0 %v9441
        %9643 = vmatprep.subr.bf16.mxu0 %v9434
        %9644 = vmatpush1.bf16.msra.mxu0 %v9433
        %9645 = vmatprep.subr.bf16.mxu0 %v9426
        %9646 = vmatpush1.bf16.msra.mxu0 %v9425
        %9647 = vmatprep.subr.bf16.mxu0 %v9418
        %9648 = vmatpush1.bf16.msra.mxu0 %v9417
        %9649 = vmatprep.subr.bf16.mxu0 %v9410
        %9650 = vmatpush1.bf16.msra.mxu0 %v9409
        %9651 = vmatprep.subr.bf16.mxu0 %v9402
        %9652 = vmatpush1.bf16.msra.mxu0 %v9401
        %9653 = vmatprep.subr.bf16.mxu0 %v9394
        %9654 = vmatpush1.bf16.msra.mxu0 %v9393
        %9655 = vmatprep.subr.bf16.mxu0 %v9386
        %9656 = vmatpush1.bf16.msra.mxu0 %v9385
        %9657 = vmatprep.subr.bf16.mxu0 %v9506
        %9658 = vmatpush2.bf16.msra.mxu0 %v9505
        %9659 = vmatprep.subr.bf16.mxu0 %v9498
        %9660 = vmatpush2.bf16.msra.mxu0 %v9497
        %9661 = vmatprep.subr.bf16.mxu0 %v9490
        %9662 = vmatpush2.bf16.msra.mxu0 %v9489
        %9663 = vmatprep.subr.bf16.mxu0 %v9482
        %9664 = vmatpush2.bf16.msra.mxu0 %v9481
        %9665 = vmatprep.subr.bf16.mxu0 %v9474
        %9666 = vmatpush2.bf16.msra.mxu0 %v9473
        %9667 = vmatprep.subr.bf16.mxu0 %v9466
        %9668 = vmatpush2.bf16.msra.mxu0 %v9465
        %9669 = vmatprep.subr.bf16.mxu0 %v9458
        %9670 = vmatpush2.bf16.msra.mxu0 %v9457
        %9671 = vmatprep.subr.bf16.mxu0 %v9450
        %9672 = vmatpush2.bf16.msra.mxu0 %v9449
        %9673 = vmatprep.mubr.bf16.mxu0 %v8872
        %9674 = vmatmul.mubr.bf16.gmra.mxu0 %v8871
        %v9675 = vpop.f32.mrf.mxu0
        %v9676 = vadd.f32 0.0, %v9675
        %v9677 = vpop.f32.mrf.mxu0
        %v9678 = vadd.f32 0.0, %v9677
        %v9679 = vpop.f32.mrf.mxu0
        %v9680 = vpop.f32.mrf.mxu0
        %9681 = vdwg.mxu0
        %9682 = vmatprep.subr.bf16.mxu0 %v9444
        %9683 = vmatpush1.bf16.msra.mxu0 %v9443
        %9684 = vmatprep.subr.bf16.mxu0 %v9436
        %9685 = vmatpush1.bf16.msra.mxu0 %v9435
        %9686 = vmatprep.subr.bf16.mxu0 %v9428
        %9687 = vmatpush1.bf16.msra.mxu0 %v9427
        %9688 = vmatprep.subr.bf16.mxu0 %v9420
        %9689 = vmatpush1.bf16.msra.mxu0 %v9419
        %9690 = vmatprep.subr.bf16.mxu0 %v9412
        %9691 = vmatpush1.bf16.msra.mxu0 %v9411
        %9692 = vmatprep.subr.bf16.mxu0 %v9404
        %9693 = vmatpush1.bf16.msra.mxu0 %v9403
        %9694 = vmatprep.subr.bf16.mxu0 %v9396
        %9695 = vmatpush1.bf16.msra.mxu0 %v9395
        %9696 = vmatprep.subr.bf16.mxu0 %v9388
        %9697 = vmatpush1.bf16.msra.mxu0 %v9387
        %9698 = vmatprep.subr.bf16.mxu0 %v9508
        %9699 = vmatpush2.bf16.msra.mxu0 %v9507
        %9700 = vmatprep.subr.bf16.mxu0 %v9500
        %9701 = vmatpush2.bf16.msra.mxu0 %v9499
        %9702 = vmatprep.subr.bf16.mxu0 %v9492
        %9703 = vmatpush2.bf16.msra.mxu0 %v9491
        %9704 = vmatprep.subr.bf16.mxu0 %v9484
        %9705 = vmatpush2.bf16.msra.mxu0 %v9483
        %9706 = vmatprep.subr.bf16.mxu0 %v9476
        %9707 = vmatpush2.bf16.msra.mxu0 %v9475
        %9708 = vmatprep.subr.bf16.mxu0 %v9468
        %9709 = vmatpush2.bf16.msra.mxu0 %v9467
        %9710 = vmatprep.subr.bf16.mxu0 %v9460
        %9711 = vmatpush2.bf16.msra.mxu0 %v9459
        %9712 = vmatprep.subr.bf16.mxu0 %v9452
        %9713 = vmatpush2.bf16.msra.mxu0 %v9451
        %9714 = vmatprep.mubr.bf16.mxu0 %v8872
        %9715 = vmatmul.mubr.bf16.gmra.mxu0 %v8871
        %v9716 = vpop.f32.mrf.mxu0
        %v9717 = vadd.f32 0.0, %v9716
        %v9718 = vpop.f32.mrf.mxu0
        %v9719 = vadd.f32 0.0, %v9718
        %v9720 = vpop.f32.mrf.mxu0
        %v9721 = vpop.f32.mrf.mxu0
        %9722 = vdwg.mxu0
        %9723 = vmatprep.subr.bf16.mxu0 %v9446
        %9724 = vmatpush1.bf16.msra.mxu0 %v9445
        %9725 = vmatprep.subr.bf16.mxu0 %v9438
        %9726 = vmatpush1.bf16.msra.mxu0 %v9437
        %9727 = vmatprep.subr.bf16.mxu0 %v9430
        %9728 = vmatpush1.bf16.msra.mxu0 %v9429
        %9729 = vmatprep.subr.bf16.mxu0 %v9422
        %9730 = vmatpush1.bf16.msra.mxu0 %v9421
        %9731 = vmatprep.subr.bf16.mxu0 %v9414
        %9732 = vmatpush1.bf16.msra.mxu0 %v9413
        %9733 = vmatprep.subr.bf16.mxu0 %v9406
        %9734 = vmatpush1.bf16.msra.mxu0 %v9405
        %9735 = vmatprep.subr.bf16.mxu0 %v9398
        %9736 = vmatpush1.bf16.msra.mxu0 %v9397
        %9737 = vmatprep.subr.bf16.mxu0 %v9390
        %9738 = vmatpush1.bf16.msra.mxu0 %v9389
        %9739 = vmatprep.subr.bf16.mxu0 %v9510
        %9740 = vmatpush2.bf16.msra.mxu0 %v9509
        %9741 = vmatprep.subr.bf16.mxu0 %v9502
        %9742 = vmatpush2.bf16.msra.mxu0 %v9501
        %9743 = vmatprep.subr.bf16.mxu0 %v9494
        %9744 = vmatpush2.bf16.msra.mxu0 %v9493
        %9745 = vmatprep.subr.bf16.mxu0 %v9486
        %9746 = vmatpush2.bf16.msra.mxu0 %v9485
        %9747 = vmatprep.subr.bf16.mxu0 %v9478
        %9748 = vmatpush2.bf16.msra.mxu0 %v9477
        %9749 = vmatprep.subr.bf16.mxu0 %v9470
        %9750 = vmatpush2.bf16.msra.mxu0 %v9469
        %9751 = vmatprep.subr.bf16.mxu0 %v9462
        %9752 = vmatpush2.bf16.msra.mxu0 %v9461
        %9753 = vmatprep.subr.bf16.mxu0 %v9454
        %9754 = vmatpush2.bf16.msra.mxu0 %v9453
        %9755 = vmatprep.mubr.bf16.mxu0 %v8872
        %9756 = vmatmul.mubr.bf16.gmra.mxu0 %v8871
        %v9757 = vpop.f32.mrf.mxu0
        %v9758 = vadd.f32 0.0, %v9757
        %v9759 = vpop.f32.mrf.mxu0
        %v9760 = vadd.f32 0.0, %v9759
        %v9761 = vpop.f32.mrf.mxu0
        %v9762 = vpop.f32.mrf.mxu0
        %9763 = vdwg.mxu0
        %9764 = vmatprep.subr.bf16.mxu0 %v9448
        %9765 = vmatpush1.bf16.msra.mxu0 %v9447
        %9766 = vmatprep.subr.bf16.mxu0 %v9440
        %9767 = vmatpush1.bf16.msra.mxu0 %v9439
        %9768 = vmatprep.subr.bf16.mxu0 %v9432
        %9769 = vmatpush1.bf16.msra.mxu0 %v9431
        %9770 = vmatprep.subr.bf16.mxu0 %v9424
        %9771 = vmatpush1.bf16.msra.mxu0 %v9423
        %9772 = vmatprep.subr.bf16.mxu0 %v9416
        %9773 = vmatpush1.bf16.msra.mxu0 %v9415
        %9774 = vmatprep.subr.bf16.mxu0 %v9408
        %9775 = vmatpush1.bf16.msra.mxu0 %v9407
        %9776 = vmatprep.subr.bf16.mxu0 %v9400
        %9777 = vmatpush1.bf16.msra.mxu0 %v9399
        %9778 = vmatprep.subr.bf16.mxu0 %v9392
        %9779 = vmatpush1.bf16.msra.mxu0 %v9391
        %9780 = vmatprep.subr.bf16.mxu0 %v9512
        %9781 = vmatpush2.bf16.msra.mxu0 %v9511
        %9782 = vmatprep.subr.bf16.mxu0 %v9504
        %9783 = vmatpush2.bf16.msra.mxu0 %v9503
        %9784 = vmatprep.subr.bf16.mxu0 %v9496
        %9785 = vmatpush2.bf16.msra.mxu0 %v9495
        %9786 = vmatprep.subr.bf16.mxu0 %v9488
        %9787 = vmatpush2.bf16.msra.mxu0 %v9487
        %9788 = vmatprep.subr.bf16.mxu0 %v9480
        %9789 = vmatpush2.bf16.msra.mxu0 %v9479
        %9790 = vmatprep.subr.bf16.mxu0 %v9472
        %9791 = vmatpush2.bf16.msra.mxu0 %v9471
        %9792 = vmatprep.subr.bf16.mxu0 %v9464
        %9793 = vmatpush2.bf16.msra.mxu0 %v9463
        %9794 = vmatprep.subr.bf16.mxu0 %v9456
        %9795 = vmatpush2.bf16.msra.mxu0 %v9455
        %9796 = vmatprep.mubr.bf16.mxu0 %v8872
        %9797 = vmatmul.mubr.bf16.gmra.mxu0 %v8871
        %v9798 = vpop.f32.mrf.mxu0
        %v9799 = vadd.f32 0.0, %v9798
        %v9800 = vpop.f32.mrf.mxu0
        %v9801 = vadd.f32 0.0, %v9800
        %v9802 = vpop.f32.mrf.mxu0
        %v9803 = vpop.f32.mrf.mxu0
        %9804 = vdwg.mxu0
        %v9813 = vcombine.low %v9676, %v9678
        %v9814 = vcombine.low %v9717, %v9719
        %v9815 = vcombine.low %v9758, %v9760
        %v9816 = vcombine.low %v9799, %v9801
        %v9818 = vunpack.c.l.s4 1966171168
        %v9819 = vunpack.c.0.s8 %v9818
        %v9820 = vlaneseq
        %v9821 = vshrl.u32 %v9820, 7
        %v9822 = vsub.s32 %v9819, %v9821
        %v9823 = vrot.slane %v9813, %v9822
        %v9825 = vunpack.c.l.s4 1966171168
        %v9826 = vunpack.c.0.s8 %v9825
        %v9827 = vlaneseq
        %v9828 = vshrl.u32 %v9827, 7
        %v9829 = vsub.s32 %v9826, %v9828
        %v9830 = vrot.slane %v9814, %v9829
        %v9832 = vunpack.c.l.s4 1966171168
        %v9833 = vunpack.c.0.s8 %v9832
        %v9834 = vlaneseq
        %v9835 = vshrl.u32 %v9834, 7
        %v9836 = vsub.s32 %v9833, %v9835
        %v9837 = vrot.slane %v9815, %v9836
        %v9839 = vunpack.c.l.s4 1966171168
        %v9840 = vunpack.c.0.s8 %v9839
        %v9841 = vlaneseq
        %v9842 = vshrl.u32 %v9841, 7
        %v9843 = vsub.s32 %v9840, %v9842
        %v9844 = vrot.slane %v9816, %v9843
        %v9845 = vcombine.low %v9823, %v9830
        %v9846 = vcombine.low %v9837, %v9844
        %v9848 = vunpack.c.l.s4 1966171168
        %v9849 = vunpack.c.0.s8 %v9848
        %v9850 = vlaneseq
        %v9851 = vshrl.u32 %v9850, 7
        %v9852 = vsub.s32 %v9849, %v9851
        %v9853 = vrot.slane %v9845, %v9852
        %v9855 = vunpack.c.l.s4 1966171168
        %v9856 = vunpack.c.0.s8 %v9855
        %v9857 = vlaneseq
        %v9858 = vshrl.u32 %v9857, 7
        %v9859 = vsub.s32 %v9856, %v9858
        %v9860 = vrot.slane %v9846, %v9859
        %v9861 = vcombine.low %v9853, %v9860
        %v9863 = vadd.f32 %v8859, %v9861
        %v9864 = vxor.u32 %v9863, 2147483648
        %v9865 = vmul.f32 %v9864, 1.442695
        %v9866 = vpow.pop %v9865
        %v9867 = vadd.f32 %v9866, 1.0
        %v9868 = vrcp.pop %v9867
        %v9869 = vmul.f32 1.0, %v9868
        %v9871 = vrot.slane %v9863, 6
        %v9873 = vtanh.pop %v9871
        %v9875 = vrot.slane %v9869, 2
        %v9877 = vmul.f32 %v9875, %v8848
        %v9878 = vmul.f32 %v9869, %v9873
        %v9879 = vadd.f32 %v9877, %v9878
        %v9880 = vtanh.pop %v9879
        %v9881 = vrot.slane %v9869, 4
        %v9883 = vmul.f32 %v9881, %v9880
        %s9884 = scalar_lea.vmem [#allocation3], 7
        %9885 = vst.msk [vmem:[%s9884] ss:$8 sm:$0x3] %vm2667, %v9883
        %9886 = vst.msk [vmem:[%s9884] ss:$8 sm:$0x0] %vm2667, %v9883
        %p9887 = scmp.eq.s32.totalorder %s36, 2
        // Predicated region
        $region129: #{tpu_custom_call.1} parent=71 // pred_check
          %p9888 = pneg %p9887
        $region130: #{tpu_custom_call.1} parent=71 // pred_check_branch
          %9890 = sbr.rel (%p9888) target = $region132
        $region131: #{tpu_custom_call.1} parent=71 // pred_region
          %v9891 = vld [vmem:[#allocation3] sm:$0xff]
          %v9892 = vld [vmem:[#allocation3 + $0x8] sm:$0xff]
          %v9893 = vpack.c.bf16 %v9891, %v9891
          %v9894 = vpack.c.bf16 %v9892, %v9892
          %v9895 = vld [vmem:[#allocation12] sm:$0xf]
          %v9896 = vld [vmem:[#allocation12 + $0x4] sm:$0xf]
          %v9897 = vld [vmem:[#allocation12 + $0x8] sm:$0xf]
          %v9898 = vld [vmem:[#allocation12 + $0xc] sm:$0xf]
          %v9899 = vld [vmem:[#allocation12 + $0x10] sm:$0xf]
          %v9900 = vld [vmem:[#allocation12 + $0x14] sm:$0xf]
          %v9901 = vld [vmem:[#allocation12 + $0x18] sm:$0xf]
          %v9902 = vld [vmem:[#allocation12 + $0x1c] sm:$0xf]
          %v9903 = vld [vmem:[#allocation12 + $0x20] sm:$0xf]
          %v9904 = vld [vmem:[#allocation12 + $0x24] sm:$0xf]
          %v9905 = vld [vmem:[#allocation12 + $0x28] sm:$0xf]
          %v9906 = vld [vmem:[#allocation12 + $0x2c] sm:$0xf]
          %v9907 = vld [vmem:[#allocation12 + $0x30] sm:$0xf]
          %v9908 = vld [vmem:[#allocation12 + $0x34] sm:$0xf]
          %v9909 = vld [vmem:[#allocation12 + $0x38] sm:$0xf]
          %v9910 = vld [vmem:[#allocation12 + $0x3c] sm:$0xf]
          %v9911 = vld [vmem:[#allocation12 + $0x40] sm:$0xf]
          %v9912 = vld [vmem:[#allocation12 + $0x44] sm:$0xf]
          %v9913 = vld [vmem:[#allocation12 + $0x48] sm:$0xf]
          %v9914 = vld [vmem:[#allocation12 + $0x4c] sm:$0xf]
          %v9915 = vld [vmem:[#allocation12 + $0x50] sm:$0xf]
          %v9916 = vld [vmem:[#allocation12 + $0x54] sm:$0xf]
          %v9917 = vld [vmem:[#allocation12 + $0x58] sm:$0xf]
          %v9918 = vld [vmem:[#allocation12 + $0x5c] sm:$0xf]
          %v9919 = vld [vmem:[#allocation12 + $0x60] sm:$0xf]
          %v9920 = vld [vmem:[#allocation12 + $0x64] sm:$0xf]
          %v9921 = vld [vmem:[#allocation12 + $0x68] sm:$0xf]
          %v9922 = vld [vmem:[#allocation12 + $0x6c] sm:$0xf]
          %v9923 = vld [vmem:[#allocation12 + $0x70] sm:$0xf]
          %v9924 = vld [vmem:[#allocation12 + $0x74] sm:$0xf]
          %v9925 = vld [vmem:[#allocation12 + $0x78] sm:$0xf]
          %v9926 = vld [vmem:[#allocation12 + $0x7c] sm:$0xf]
          %v9927 = vld [vmem:[#allocation13] sm:$0x1]
          %v9929 = vlaneseq
          %v9930 = vshrl.u32 %v9929, 7
          %v9931 = vsub.s32 0, %v9930
          %v9932 = vrot.slane %v9927, %v9931
          %v9966 = vunpack.c.l.b16 %v9895
          %v9967 = vunpack.c.l.b16 %v9896
          %v9968 = vunpack.c.l.b16 %v9897
          %v9969 = vunpack.c.l.b16 %v9898
          %v9970 = vunpack.c.l.b16 %v9899
          %v9971 = vunpack.c.l.b16 %v9900
          %v9972 = vunpack.c.l.b16 %v9901
          %v9973 = vunpack.c.l.b16 %v9902
          %v9974 = vunpack.c.l.b16 %v9903
          %v9975 = vunpack.c.l.b16 %v9904
          %v9976 = vunpack.c.l.b16 %v9905
          %v9977 = vunpack.c.l.b16 %v9906
          %v9978 = vunpack.c.l.b16 %v9907
          %v9979 = vunpack.c.l.b16 %v9908
          %v9980 = vunpack.c.l.b16 %v9909
          %v9981 = vunpack.c.l.b16 %v9910
          %v9982 = vunpack.c.l.b16 %v9911
          %v9983 = vunpack.c.l.b16 %v9912
          %v9984 = vunpack.c.l.b16 %v9913
          %v9985 = vunpack.c.l.b16 %v9914
          %v9986 = vunpack.c.l.b16 %v9915
          %v9987 = vunpack.c.l.b16 %v9916
          %v9988 = vunpack.c.l.b16 %v9917
          %v9989 = vunpack.c.l.b16 %v9918
          %v9990 = vunpack.c.l.b16 %v9919
          %v9991 = vunpack.c.l.b16 %v9920
          %v9992 = vunpack.c.l.b16 %v9921
          %v9993 = vunpack.c.l.b16 %v9922
          %v9994 = vunpack.c.l.b16 %v9923
          %v9995 = vunpack.c.l.b16 %v9924
          %v9996 = vunpack.c.l.b16 %v9925
          %v9997 = vunpack.c.l.b16 %v9926
          %v9998 = vpack.c.b16 %v9967, %v9966
          %v9999 = vpack.c.b16 %v9969, %v9968
          %v10000 = vpack.c.b16 %v9971, %v9970
          %v10001 = vpack.c.b16 %v9973, %v9972
          %v10002 = vpack.c.b16 %v9975, %v9974
          %v10003 = vpack.c.b16 %v9977, %v9976
          %v10004 = vpack.c.b16 %v9979, %v9978
          %v10005 = vpack.c.b16 %v9981, %v9980
          %v10006 = vpack.c.b16 %v9983, %v9982
          %v10007 = vpack.c.b16 %v9985, %v9984
          %v10008 = vpack.c.b16 %v9987, %v9986
          %v10009 = vpack.c.b16 %v9989, %v9988
          %v10010 = vpack.c.b16 %v9991, %v9990
          %v10011 = vpack.c.b16 %v9993, %v9992
          %v10012 = vpack.c.b16 %v9995, %v9994
          %v10013 = vpack.c.b16 %v9997, %v9996
          %10030 = vmatprep.subr.bf16.mxu0 0
          %10031 = vmatpush1.bf16.msra.mxu0 %v10005
          %10032 = vmatprep.subr.bf16.mxu0 0
          %10033 = vmatpush1.bf16.msra.mxu0 %v10004
          %10034 = vmatprep.subr.bf16.mxu0 0
          %10035 = vmatpush1.bf16.msra.mxu0 %v10003
          %10036 = vmatprep.subr.bf16.mxu0 0
          %10037 = vmatpush1.bf16.msra.mxu0 %v10002
          %10038 = vmatprep.subr.bf16.mxu0 0
          %10039 = vmatpush1.bf16.msra.mxu0 %v10001
          %10040 = vmatprep.subr.bf16.mxu0 0
          %10041 = vmatpush1.bf16.msra.mxu0 %v10000
          %10042 = vmatprep.subr.bf16.mxu0 0
          %10043 = vmatpush1.bf16.msra.mxu0 %v9999
          %10044 = vmatprep.subr.bf16.mxu0 0
          %10045 = vmatpush1.bf16.msra.mxu0 %v9998
          %10046 = vmatprep.subr.bf16.mxu0 0
          %10047 = vmatpush2.bf16.msra.mxu0 %v10013
          %10048 = vmatprep.subr.bf16.mxu0 0
          %10049 = vmatpush2.bf16.msra.mxu0 %v10012
          %10050 = vmatprep.subr.bf16.mxu0 0
          %10051 = vmatpush2.bf16.msra.mxu0 %v10011
          %10052 = vmatprep.subr.bf16.mxu0 0
          %10053 = vmatpush2.bf16.msra.mxu0 %v10010
          %10054 = vmatprep.subr.bf16.mxu0 0
          %10055 = vmatpush2.bf16.msra.mxu0 %v10009
          %10056 = vmatprep.subr.bf16.mxu0 0
          %10057 = vmatpush2.bf16.msra.mxu0 %v10008
          %10058 = vmatprep.subr.bf16.mxu0 0
          %10059 = vmatpush2.bf16.msra.mxu0 %v10007
          %10060 = vmatprep.subr.bf16.mxu0 0
          %10061 = vmatpush2.bf16.msra.mxu0 %v10006
          %10062 = vmatprep.mubr.bf16.mxu0 %v9894
          %10063 = vmatmul.mubr.bf16.gmra.mxu0 %v9893
          %v10064 = vpop.f32.mrf.mxu0
          %v10065 = vadd.f32 %v9932, %v10064
          %v10066 = vpop.f32.mrf.mxu0
          %v10067 = vpop.f32.mrf.mxu0
          %v10068 = vpop.f32.mrf.mxu0
          %10069 = vdwg.mxu0
          %v10070 = vmax.f32 %v10065, 0.0
          %v10071 = vpack.c.bf16 %v10070, %v10070
          %v10072 = vld [vmem:[#allocation15] sm:$0xf]
          %v10073 = vld [vmem:[#allocation15 + $0x4] sm:$0xf]
          %v10074 = vld [vmem:[#allocation15 + $0x8] sm:$0xf]
          %v10075 = vld [vmem:[#allocation15 + $0xc] sm:$0xf]
          %v10076 = vld [vmem:[#allocation15 + $0x10] sm:$0xf]
          %v10077 = vld [vmem:[#allocation15 + $0x14] sm:$0xf]
          %v10078 = vld [vmem:[#allocation15 + $0x18] sm:$0xf]
          %v10079 = vld [vmem:[#allocation15 + $0x1c] sm:$0xf]
          %v10080 = vld [vmem:[#allocation15 + $0x20] sm:$0xf]
          %v10081 = vld [vmem:[#allocation15 + $0x24] sm:$0xf]
          %v10082 = vld [vmem:[#allocation15 + $0x28] sm:$0xf]
          %v10083 = vld [vmem:[#allocation15 + $0x2c] sm:$0xf]
          %v10084 = vld [vmem:[#allocation15 + $0x30] sm:$0xf]
          %v10085 = vld [vmem:[#allocation15 + $0x34] sm:$0xf]
          %v10086 = vld [vmem:[#allocation15 + $0x38] sm:$0xf]
          %v10087 = vld [vmem:[#allocation15 + $0x3c] sm:$0xf]
          %v10088 = vld [vmem:[#allocation16] sm:$0x1]
          %v10090 = vlaneseq
          %v10091 = vshrl.u32 %v10090, 7
          %v10092 = vsub.s32 0, %v10091
          %v10093 = vrot.slane %v10088, %v10092
          %v10111 = vunpack.c.l.b16 %v10072
          %v10112 = vunpack.c.l.b16 %v10073
          %v10113 = vunpack.c.l.b16 %v10074
          %v10114 = vunpack.c.l.b16 %v10075
          %v10115 = vunpack.c.l.b16 %v10076
          %v10116 = vunpack.c.l.b16 %v10077
          %v10117 = vunpack.c.l.b16 %v10078
          %v10118 = vunpack.c.l.b16 %v10079
          %v10119 = vunpack.c.l.b16 %v10080
          %v10120 = vunpack.c.l.b16 %v10081
          %v10121 = vunpack.c.l.b16 %v10082
          %v10122 = vunpack.c.l.b16 %v10083
          %v10123 = vunpack.c.l.b16 %v10084
          %v10124 = vunpack.c.l.b16 %v10085
          %v10125 = vunpack.c.l.b16 %v10086
          %v10126 = vunpack.c.l.b16 %v10087
          %v10127 = vpack.c.b16 %v10112, %v10111
          %v10128 = vpack.c.b16 %v10114, %v10113
          %v10129 = vpack.c.b16 %v10116, %v10115
          %v10130 = vpack.c.b16 %v10118, %v10117
          %v10131 = vpack.c.b16 %v10120, %v10119
          %v10132 = vpack.c.b16 %v10122, %v10121
          %v10133 = vpack.c.b16 %v10124, %v10123
          %v10134 = vpack.c.b16 %v10126, %v10125
          %10143 = vmatprep.subr.bf16.mxu0 0
          %10144 = vmatpush1.bf16.msra.mxu0 %v10134
          %10145 = vmatprep.subr.bf16.mxu0 0
          %10146 = vmatpush1.bf16.msra.mxu0 %v10133
          %10147 = vmatprep.subr.bf16.mxu0 0
          %10148 = vmatpush1.bf16.msra.mxu0 %v10132
          %10149 = vmatprep.subr.bf16.mxu0 0
          %10150 = vmatpush1.bf16.msra.mxu0 %v10131
          %10151 = vmatprep.subr.bf16.mxu0 0
          %10152 = vmatpush1.bf16.msra.mxu0 %v10130
          %10153 = vmatprep.subr.bf16.mxu0 0
          %10154 = vmatpush1.bf16.msra.mxu0 %v10129
          %10155 = vmatprep.subr.bf16.mxu0 0
          %10156 = vmatpush1.bf16.msra.mxu0 %v10128
          %10157 = vmatprep.subr.bf16.mxu0 0
          %10158 = vmatpush1.bf16.msra.mxu0 %v10127
          %10159 = vmatprep.subr.bf16.mxu0 0
          %10160 = vmatpush2.bf16.msra.mxu0 0
          %10161 = vmatprep.subr.bf16.mxu0 0
          %10162 = vmatpush2.bf16.msra.mxu0 0
          %10163 = vmatprep.subr.bf16.mxu0 0
          %10164 = vmatpush2.bf16.msra.mxu0 0
          %10165 = vmatprep.subr.bf16.mxu0 0
          %10166 = vmatpush2.bf16.msra.mxu0 0
          %10167 = vmatprep.subr.bf16.mxu0 0
          %10168 = vmatpush2.bf16.msra.mxu0 0
          %10169 = vmatprep.subr.bf16.mxu0 0
          %10170 = vmatpush2.bf16.msra.mxu0 0
          %10171 = vmatprep.subr.bf16.mxu0 0
          %10172 = vmatpush2.bf16.msra.mxu0 0
          %10173 = vmatprep.subr.bf16.mxu0 0
          %10174 = vmatpush2.bf16.msra.mxu0 0
          %10175 = vmatprep.mubr.bf16.mxu0 0
          %10176 = vmatmul.mubr.bf16.gmra.mxu0 %v10071
          %v10177 = vpop.f32.mrf.mxu0
          %v10178 = vadd.f32 %v10093, %v10177
          %v10179 = vpop.f32.mrf.mxu0
          %v10180 = vpop.f32.mrf.mxu0
          %v10181 = vpop.f32.mrf.mxu0
          %10182 = vdwg.mxu0
          %v10183 = vmax.f32 %v10178, 0.0
          %v10184 = vpack.c.bf16 %v10183, %v10183
          %v10185 = vld [vmem:[#allocation18] sm:$0xf]
          %v10186 = vld [vmem:[#allocation18 + $0x4] sm:$0xf]
          %v10187 = vld [vmem:[#allocation18 + $0x8] sm:$0xf]
          %v10188 = vld [vmem:[#allocation18 + $0xc] sm:$0xf]
          %v10189 = vld [vmem:[#allocation18 + $0x10] sm:$0xf]
          %v10190 = vld [vmem:[#allocation18 + $0x14] sm:$0xf]
          %v10191 = vld [vmem:[#allocation18 + $0x18] sm:$0xf]
          %v10192 = vld [vmem:[#allocation18 + $0x1c] sm:$0xf]
          %v10193 = vld [vmem:[#allocation18 + $0x20] sm:$0xf]
          %v10194 = vld [vmem:[#allocation18 + $0x24] sm:$0xf]
          %v10195 = vld [vmem:[#allocation18 + $0x28] sm:$0xf]
          %v10196 = vld [vmem:[#allocation18 + $0x2c] sm:$0xf]
          %v10197 = vld [vmem:[#allocation18 + $0x30] sm:$0xf]
          %v10198 = vld [vmem:[#allocation18 + $0x34] sm:$0xf]
          %v10199 = vld [vmem:[#allocation18 + $0x38] sm:$0xf]
          %v10200 = vld [vmem:[#allocation18 + $0x3c] sm:$0xf]
          %v10201 = vld [vmem:[#allocation19] sm:$0x1]
          %v10203 = vlaneseq
          %v10204 = vshrl.u32 %v10203, 7
          %v10205 = vsub.s32 0, %v10204
          %v10206 = vrot.slane %v10201, %v10205
          %v10224 = vunpack.c.l.b16 %v10185
          %v10225 = vunpack.c.l.b16 %v10186
          %v10226 = vunpack.c.l.b16 %v10187
          %v10227 = vunpack.c.l.b16 %v10188
          %v10228 = vunpack.c.l.b16 %v10189
          %v10229 = vunpack.c.l.b16 %v10190
          %v10230 = vunpack.c.l.b16 %v10191
          %v10231 = vunpack.c.l.b16 %v10192
          %v10232 = vunpack.c.l.b16 %v10193
          %v10233 = vunpack.c.l.b16 %v10194
          %v10234 = vunpack.c.l.b16 %v10195
          %v10235 = vunpack.c.l.b16 %v10196
          %v10236 = vunpack.c.l.b16 %v10197
          %v10237 = vunpack.c.l.b16 %v10198
          %v10238 = vunpack.c.l.b16 %v10199
          %v10239 = vunpack.c.l.b16 %v10200
          %v10240 = vpack.c.b16 %v10225, %v10224
          %v10241 = vpack.c.b16 %v10227, %v10226
          %v10242 = vpack.c.b16 %v10229, %v10228
          %v10243 = vpack.c.b16 %v10231, %v10230
          %v10244 = vpack.c.b16 %v10233, %v10232
          %v10245 = vpack.c.b16 %v10235, %v10234
          %v10246 = vpack.c.b16 %v10237, %v10236
          %v10247 = vpack.c.b16 %v10239, %v10238
          %10256 = vmatprep.subr.bf16.mxu0 0
          %10257 = vmatpush1.bf16.msra.mxu0 %v10247
          %10258 = vmatprep.subr.bf16.mxu0 0
          %10259 = vmatpush1.bf16.msra.mxu0 %v10246
          %10260 = vmatprep.subr.bf16.mxu0 0
          %10261 = vmatpush1.bf16.msra.mxu0 %v10245
          %10262 = vmatprep.subr.bf16.mxu0 0
          %10263 = vmatpush1.bf16.msra.mxu0 %v10244
          %10264 = vmatprep.subr.bf16.mxu0 0
          %10265 = vmatpush1.bf16.msra.mxu0 %v10243
          %10266 = vmatprep.subr.bf16.mxu0 0
          %10267 = vmatpush1.bf16.msra.mxu0 %v10242
          %10268 = vmatprep.subr.bf16.mxu0 0
          %10269 = vmatpush1.bf16.msra.mxu0 %v10241
          %10270 = vmatprep.subr.bf16.mxu0 0
          %10271 = vmatpush1.bf16.msra.mxu0 %v10240
          %10272 = vmatprep.subr.bf16.mxu0 0
          %10273 = vmatpush2.bf16.msra.mxu0 0
          %10274 = vmatprep.subr.bf16.mxu0 0
          %10275 = vmatpush2.bf16.msra.mxu0 0
          %10276 = vmatprep.subr.bf16.mxu0 0
          %10277 = vmatpush2.bf16.msra.mxu0 0
          %10278 = vmatprep.subr.bf16.mxu0 0
          %10279 = vmatpush2.bf16.msra.mxu0 0
          %10280 = vmatprep.subr.bf16.mxu0 0
          %10281 = vmatpush2.bf16.msra.mxu0 0
          %10282 = vmatprep.subr.bf16.mxu0 0
          %10283 = vmatpush2.bf16.msra.mxu0 0
          %10284 = vmatprep.subr.bf16.mxu0 0
          %10285 = vmatpush2.bf16.msra.mxu0 0
          %10286 = vmatprep.subr.bf16.mxu0 0
          %10287 = vmatpush2.bf16.msra.mxu0 0
          %10288 = vmatprep.mubr.bf16.mxu0 0
          %10289 = vmatmul.mubr.bf16.gmra.mxu0 %v10184
          %v10290 = vpop.f32.mrf.mxu0
          %v10291 = vadd.f32 %v10206, %v10290
          %v10292 = vpop.f32.mrf.mxu0
          %v10293 = vpop.f32.mrf.mxu0
          %v10294 = vpop.f32.mrf.mxu0
          %10295 = vdwg.mxu0
          %v10296 = vmax.f32 %v10291, 0.0
          %v10297 = vpack.c.bf16 %v10296, %v10296
          %v10298 = vld [vmem:[#allocation21] sm:$0xf]
          %v10299 = vld [vmem:[#allocation21 + $0x4] sm:$0xf]
          %v10300 = vld [vmem:[#allocation21 + $0x8] sm:$0xf]
          %v10301 = vld [vmem:[#allocation21 + $0xc] sm:$0xf]
          %v10302 = vld [vmem:[#allocation21 + $0x10] sm:$0xf]
          %v10303 = vld [vmem:[#allocation21 + $0x14] sm:$0xf]
          %v10304 = vld [vmem:[#allocation21 + $0x18] sm:$0xf]
          %v10305 = vld [vmem:[#allocation21 + $0x1c] sm:$0xf]
          %v10306 = vld [vmem:[#allocation21 + $0x20] sm:$0xf]
          %v10307 = vld [vmem:[#allocation21 + $0x24] sm:$0xf]
          %v10308 = vld [vmem:[#allocation21 + $0x28] sm:$0xf]
          %v10309 = vld [vmem:[#allocation21 + $0x2c] sm:$0xf]
          %v10310 = vld [vmem:[#allocation21 + $0x30] sm:$0xf]
          %v10311 = vld [vmem:[#allocation21 + $0x34] sm:$0xf]
          %v10312 = vld [vmem:[#allocation21 + $0x38] sm:$0xf]
          %v10313 = vld [vmem:[#allocation21 + $0x3c] sm:$0xf]
          %v10314 = vld [vmem:[#allocation22] sm:$0x1]
          %v10316 = vlaneseq
          %v10317 = vshrl.u32 %v10316, 7
          %v10318 = vsub.s32 0, %v10317
          %v10319 = vrot.slane %v10314, %v10318
          %v10337 = vunpack.c.l.b16 %v10298
          %v10338 = vunpack.c.l.b16 %v10299
          %v10339 = vunpack.c.l.b16 %v10300
          %v10340 = vunpack.c.l.b16 %v10301
          %v10341 = vunpack.c.l.b16 %v10302
          %v10342 = vunpack.c.l.b16 %v10303
          %v10343 = vunpack.c.l.b16 %v10304
          %v10344 = vunpack.c.l.b16 %v10305
          %v10345 = vunpack.c.l.b16 %v10306
          %v10346 = vunpack.c.l.b16 %v10307
          %v10347 = vunpack.c.l.b16 %v10308
          %v10348 = vunpack.c.l.b16 %v10309
          %v10349 = vunpack.c.l.b16 %v10310
          %v10350 = vunpack.c.l.b16 %v10311
          %v10351 = vunpack.c.l.b16 %v10312
          %v10352 = vunpack.c.l.b16 %v10313
          %v10353 = vpack.c.b16 %v10338, %v10337
          %v10354 = vpack.c.b16 %v10340, %v10339
          %v10355 = vpack.c.b16 %v10342, %v10341
          %v10356 = vpack.c.b16 %v10344, %v10343
          %v10357 = vpack.c.b16 %v10346, %v10345
          %v10358 = vpack.c.b16 %v10348, %v10347
          %v10359 = vpack.c.b16 %v10350, %v10349
          %v10360 = vpack.c.b16 %v10352, %v10351
          %10369 = vmatprep.subr.bf16.mxu0 0
          %10370 = vmatpush1.bf16.msra.mxu0 %v10360
          %10371 = vmatprep.subr.bf16.mxu0 0
          %10372 = vmatpush1.bf16.msra.mxu0 %v10359
          %10373 = vmatprep.subr.bf16.mxu0 0
          %10374 = vmatpush1.bf16.msra.mxu0 %v10358
          %10375 = vmatprep.subr.bf16.mxu0 0
          %10376 = vmatpush1.bf16.msra.mxu0 %v10357
          %10377 = vmatprep.subr.bf16.mxu0 0
          %10378 = vmatpush1.bf16.msra.mxu0 %v10356
          %10379 = vmatprep.subr.bf16.mxu0 0
          %10380 = vmatpush1.bf16.msra.mxu0 %v10355
          %10381 = vmatprep.subr.bf16.mxu0 0
          %10382 = vmatpush1.bf16.msra.mxu0 %v10354
          %10383 = vmatprep.subr.bf16.mxu0 0
          %10384 = vmatpush1.bf16.msra.mxu0 %v10353
          %10385 = vmatprep.subr.bf16.mxu0 0
          %10386 = vmatpush2.bf16.msra.mxu0 0
          %10387 = vmatprep.subr.bf16.mxu0 0
          %10388 = vmatpush2.bf16.msra.mxu0 0
          %10389 = vmatprep.subr.bf16.mxu0 0
          %10390 = vmatpush2.bf16.msra.mxu0 0
          %10391 = vmatprep.subr.bf16.mxu0 0
          %10392 = vmatpush2.bf16.msra.mxu0 0
          %10393 = vmatprep.subr.bf16.mxu0 0
          %10394 = vmatpush2.bf16.msra.mxu0 0
          %10395 = vmatprep.subr.bf16.mxu0 0
          %10396 = vmatpush2.bf16.msra.mxu0 0
          %10397 = vmatprep.subr.bf16.mxu0 0
          %10398 = vmatpush2.bf16.msra.mxu0 0
          %10399 = vmatprep.subr.bf16.mxu0 0
          %10400 = vmatpush2.bf16.msra.mxu0 0
          %10401 = vmatprep.mubr.bf16.mxu0 0
          %10402 = vmatmul.mubr.bf16.gmra.mxu0 %v10297
          %v10403 = vpop.f32.mrf.mxu0
          %v10404 = vadd.f32 %v10319, %v10403
          %v10405 = vpop.f32.mrf.mxu0
          %v10406 = vpop.f32.mrf.mxu0
          %v10407 = vpop.f32.mrf.mxu0
          %10408 = vdwg.mxu0
          %v10409 = vld [vmem:[#allocation24] sm:$0xff]
          %vm10410 = vcmp.gt.f32.partialorder %v10409, 0.0
          %v10411 = vsel %vm10410, %v10404, -1e+09
          %10412 = vst [vmem:[#allocation25] sm:$0xff] %v10411
        $region132: #{tpu_custom_call.1} parent=71 // pred_fallthru
          _
        // Predicated region
        $region133: #{tpu_custom_call.1} parent=71 // pred_check
          %p10413 = pneg %p337
        $region134: #{tpu_custom_call.1} parent=71 // pred_check_branch
          %10415 = sbr.rel (%p10413) target = $region136
        $region135: #{tpu_custom_call.1} parent=71 // pred_region
          %s10417 = ssub.s32 128, 128
          %10418 = vsyncadd [#allocation6], %s10417
          %s10420 = sshll.u32 [#allocation25], 4
          %s10421 = int_to_ptr.vmem [resolvable:$true] %s10420
          %10423 = dma.vmem_to_hbm [thread:$0]  %s10421, 128, %s13, [#allocation6]
        $region136: #{tpu_custom_call.1} parent=71 // pred_fallthru
          _
        // Predicated region
        $region137: #{tpu_custom_call.1} parent=71 // pred_check
          %p10424 = pneg %p337
        $region138: #{tpu_custom_call.1} parent=71 // pred_check_branch
          %10426 = sbr.rel (%p10424) target = $region140
        $region139: #{tpu_custom_call.1} parent=71 // pred_region
          %10427 = dma.done [#allocation6], 128
        $region140: #{tpu_custom_call.1} parent=71 // pred_fallthru
          _
      $region72: #{tpu_custom_call.1} parent=5 // pred_fallthru
        _
      %p10428 = scmp.le.s32.totalorder 2, %s31
      // Predicated region
      $region141: #{tpu_custom_call.1} parent=5 // pred_check
        %p10429 = pneg %p10428
      $region142: #{tpu_custom_call.1} parent=5 // pred_check_branch
        %10431 = sbr.rel (%p10429) target = $region144
      $region143: #{tpu_custom_call.1} parent=5 // pred_region
        %s10432 = ssub.s32 %s31, 2
      $region144: #{tpu_custom_call.1} parent=5 // pred_fallthru
        _
    $region6: #{tpu_custom_call.1} parent=1 // loop_footer
      %s35 = sadd.s32 1, %s31
    $region7: #{tpu_custom_call.1} parent=1 // loop_footer_branch
      %30 = sbr.rel target = $region3
    $region8: #{tpu_custom_call.1} parent=1 // loop_exit
      _
    %10433 = vsyncpa [#allocation5], 1
    %s10434 = scalar_lea.sflag [#allocation5], 1
    %10435 = vsyncpa %s10434, 1
    %10436 = vsyncpa [#allocation8], 1
    %s10437 = scalar_lea.sflag [#allocation8], 1
    %10438 = vsyncpa %s10437, 1
    %10439 = vsyncpa [#allocation11], 1
    %s10440 = scalar_lea.sflag [#allocation11], 1
    %10441 = vsyncpa %s10440, 1
    %10442 = vsyncpa [#allocation14], 1
    %10443 = vsyncpa [#allocation17], 1
    %10444 = vsyncpa [#allocation20], 1
    %10445 = vsyncpa [#allocation23], 1
    %10446 = vsyncpa [#allocation6], 1
    %s10447 = scalar_lea.sflag [#allocation6], 1
    %10448 = vsyncpa %s10447, 1

</llo_original>
